<compile_context>
chip_gen: v5e
topology: v5e:2x2
jax: 0.10.0
libtpu: 0.0.40
codegen_flags: <defaults>
</compile_context>

<pallas_src>
import jax
import jax.numpy as jnp
from jax.experimental import pallas as pl
from jax.experimental.pallas import tpu as pltpu

NEG_SLOPE = 0.01   # nn.LeakyReLU default negative_slope
BN_EPS = 1e-5      # nn.BatchNorm1d default eps
LANE = 128


def _round_up(x, m):
    return (x + m - 1) // m * m


# ------------------------------- geometry ----------------------------------

class _Geom:
    """Static geometry of the padded, flattened, channels-first voxel store."""

    def __init__(self, N, D, H, W, tm_min=512):
        self.N, self.D, self.H, self.W = N, D, H, W
        self.Dp, self.Hp, self.Wp = D + 2, H + 2, W + 2
        self.plane = self.Hp * self.Wp
        halo_req = self.plane + self.Wp + 1            # largest |tap shift|
        self.halo = _round_up(halo_req, LANE)          # keep slab DMA lane-aligned
        self.tm = max(_round_up(tm_min, LANE), self.halo)
        self.Mp = N * self.Dp * self.plane
        self.num_tiles = -(-self.Mp // self.tm)
        self.Mtot = (self.num_tiles + 2) * self.tm     # one pad tile each side
        self.n_real = N * D * H * W

    def tap_offsets(self, kd, kh, kw):
        pd, ph, pw = (kd - 1) // 2, (kh - 1) // 2, (kw - 1) // 2
        offs = []
        for a in range(kd):
            for b in range(kh):
                for c in range(kw):
                    offs.append((a - pd) * self.plane
                                + (b - ph) * self.Wp + (c - pw))
        return tuple(offs)


# --------------------------- store conversions ------------------------------

def _to_store(x_ndhwc, g):
    """(N,D,H,W,C) -> (C+1, Mtot) bf16 channels-first padded flat store.
    Last row is the 0/1 validity mask; padding / round-up columns are zero."""
    N, D, H, W, C = x_ndhwc.shape
    xc = jnp.moveaxis(x_ndhwc, -1, 0)                       # (C,N,D,H,W)
    mask = jnp.ones((1, N, D, H, W), x_ndhwc.dtype)
    xa = jnp.concatenate([xc, mask], axis=0)                # (C+1,N,D,H,W)
    xa = jnp.pad(xa, ((0, 0), (0, 0), (1, 1), (1, 1), (1, 1)))
    xf = xa.reshape(C + 1, g.Mp)
    xf = jnp.pad(xf, ((0, 0), (g.tm, g.Mtot - g.Mp - g.tm)))
    return xf.astype(jnp.bfloat16)


def _from_store(y_store, cout, g):
    body = y_store[:cout, g.tm:g.tm + g.Mp].astype(jnp.float32)
    vol = body.reshape(cout, g.N, g.Dp, g.Hp, g.Wp)
    vol = vol[:, :, 1:1 + g.D, 1:1 + g.H, 1:1 + g.W]
    return jnp.moveaxis(vol, 0, -1)                         # (N,D,H,W,C)


# --------------------------- BN folding helpers ------------------------------

def _fold_bn_into_weights(w, mean, inv):
    """w: (kd,kh,kw,Cin,Cout) f32 -> (ntaps, Cout, Cin+1) bf16 with the
    input-side BatchNorm (x - mean) * inv folded in: the scale multiplies the
    weights, the -mean*inv shift rides on the mask channel (last column)."""
    kd, kh, kw, cin, cout = w.shape
    if mean is None:
        mean = jnp.zeros((cin,), jnp.float32)
        inv = jnp.ones((cin,), jnp.float32)
    w_s = w * inv[None, None, None, :, None]
    bias = -jnp.einsum('abcio,i->abco', w_s, mean)          # (kd,kh,kw,Cout)
    w_aug = jnp.concatenate([w_s, bias[:, :, :, None, :]], axis=3)
    w_aug = w_aug.reshape(kd * kh * kw, cin + 1, cout).transpose(0, 2, 1)
    return w_aug.astype(jnp.bfloat16)


def _finish_bn_stats(stats, cout, n_real):
    s = jnp.sum(stats[:, :cout, 0], axis=0)
    sq = jnp.sum(stats[:, cout:, 0], axis=0)
    mean = s / n_real
    var = jnp.maximum(sq / n_real - mean * mean, 0.0)       # biased, like torch
    inv = jax.lax.rsqrt(var + BN_EPS)
    return mean, inv


# ------------------------------ Pallas kernel --------------------------------

def _make_conv_kernel(taps, cout, cin_aug, tm, halo, apply_act, has_res):
    slope = NEG_SLOPE
    slab_w = tm + 2 * halo

    def kernel(*refs):
        if has_res:
            x_hbm, w_ref, r_ref, o_ref, stat_ref, slab, sem = refs
        else:
            x_hbm, w_ref, o_ref, stat_ref, slab, sem = refs
            r_ref = None

        i = pl.program_id(0)
        # Real tile i occupies store columns [(i+1)*tm, (i+2)*tm); fetch it
        # plus a halo of the largest tap shift on each side in one DMA.
        start = pl.multiple_of((i + 1) * tm - halo, LANE)
        cp = pltpu.make_async_copy(x_hbm.at[:, pl.ds(start, slab_w)], slab, sem)
        cp.start()
        cp.wait()
        # TODO(synk): double-buffer this slab DMA; kept per-step synchronous so
        # the grid axis can stay "parallel" (no cross-step scratch carry).

        acc = jnp.zeros((cout, tm), jnp.float32)
        for t, off in enumerate(taps):                      # unrolled taps
            xt = slab[:, pl.ds(halo + off, tm)]             # (Cin+1, tm) bf16
            acc = acc + jnp.dot(w_ref[t], xt,
                                preferred_element_type=jnp.float32)

        if has_res:
            acc = acc + r_ref[pl.ds(0, cout), :].astype(jnp.float32)
        if apply_act:
            acc = jnp.where(acc >= 0, acc, slope * acc)

        # Zero out non-voxel (padding / round-up) columns; jnp.where (not *)
        # so garbage read from never-written halo tiles cannot propagate.
        mask = slab[pl.ds(cin_aug - 1, 1), pl.ds(halo, tm)] > 0     # (1, tm)
        y = jnp.where(mask, acc, 0.0)
        mrow = jnp.where(mask, 1.0, 0.0)

        o_ref[...] = jnp.concatenate([y, mrow], axis=0).astype(o_ref.dtype)

        # Per-tile BN partial statistics (lane-broadcast; consumer reads lane 0).
        s1 = jnp.sum(y, axis=1, keepdims=True)              # (Cout, 1)
        s2 = jnp.sum(y * y, axis=1, keepdims=True)
        stat_ref[0] = jnp.broadcast_to(
            jnp.concatenate([s1, s2], axis=0), (2 * cout, LANE))

    return kernel


def _conv_layer(x_store, w_aug, g, taps, *, apply_act, residual=None):
    ntaps, cout, cin_aug = w_aug.shape
    assert (2 * cout) % 8 == 0 and g.tm % LANE == 0

    kern = _make_conv_kernel(taps, cout, cin_aug, g.tm, g.halo,
                             apply_act, residual is not None)

    in_specs = [
        pl.BlockSpec(memory_space=pl.ANY),                             # HBM store
        pl.BlockSpec((ntaps, cout, cin_aug), lambda i: (0, 0, 0)),     # resident W
    ]
    inputs = [x_store, w_aug]
    if residual is not None:
        in_specs.append(pl.BlockSpec((cout + 1, g.tm), lambda i: (0, i + 1)))
        inputs.append(residual)

    out_specs = [
        pl.BlockSpec((cout + 1, g.tm), lambda i: (0, i + 1)),
        pl.BlockSpec((1, 2 * cout, LANE), lambda i: (i, 0, 0)),
    ]
    out_shape = [
        jax.ShapeDtypeStruct((cout + 1, g.Mtot), jnp.bfloat16),
        jax.ShapeDtypeStruct((g.num_tiles, 2 * cout, LANE), jnp.float32),
    ]

    y, stats = pl.pallas_call(
        kern,
        grid=(g.num_tiles,),
        in_specs=in_specs,
        out_specs=out_specs,
        out_shape=out_shape,
        scratch_shapes=[
            pltpu.VMEM((cin_aug, g.tm + 2 * g.halo), jnp.bfloat16),
            pltpu.SemaphoreType.DMA,
        ],
        compiler_params=pltpu.CompilerParams(
            dimension_semantics=("parallel",)),
    )(*inputs)
    return y, stats


# ------------------------------- UpBlock model -------------------------------

def init_upblock_params(key, in_filters, out_filters):
    ks = jax.random.split(key, 5)

    def w(k, shape):
        fan_in = shape[0] * shape[1] * shape[2] * shape[3]
        return jax.random.normal(k, shape, jnp.float32) / jnp.sqrt(fan_in)

    w_up = w(ks[1], (3, 3, 3, out_filters, out_filters))
    return {
        "w_trans": w(ks[0], (3, 3, 3, in_filters, out_filters)),
        # SparseInverseConv3d dense analogue uses the spatially flipped kernel;
        # flip hoisted to init (perf-review item).
        "w_up_flipped": w_up[::-1, ::-1, ::-1, :, :],
        "w1": w(ks[2], (1, 3, 3, out_filters, out_filters)),
        "w2": w(ks[3], (3, 1, 3, out_filters, out_filters)),
        "w3": w(ks[4], (3, 3, 3, out_filters, out_filters)),
    }


def upblock_forward(params, x, skip):
    N, D, H, W, _ = x.shape
    cout = params["w_trans"].shape[-1]
    g = _Geom(N, D, H, W)

    x_store = _to_store(x, g)
    skip_store = _to_store(skip, g)

    taps333 = g.tap_offsets(3, 3, 3)
    taps133 = g.tap_offsets(1, 3, 3)
    taps313 = g.tap_offsets(3, 1, 3)

    # trans_dilao (3x3x3) + LeakyReLU          [trans_bn folded into up_subm]
    w_aug = _fold_bn_into_weights(params["w_trans"], None, None)
    y1, st1 = _conv_layer(x_store, w_aug, g, taps333, apply_act=True)
    mean1, inv1 = _finish_bn_stats(st1, cout, g.n_real)

    # up_subm (flipped 3x3x3 dense analogue), trans_bn folded in, + skip fused
    w_aug = _fold_bn_into_weights(params["w_up_flipped"], mean1, inv1)
    y2, _ = _conv_layer(y1, w_aug, g, taps333, apply_act=False,
                        residual=skip_store)

    # conv1 (1x3x3) + LeakyReLU                [bn1 folded into conv2]
    w_aug = _fold_bn_into_weights(params["w1"], None, None)
    y3, st3 = _conv_layer(y2, w_aug, g, taps133, apply_act=True)
    mean3, inv3 = _finish_bn_stats(st3, cout, g.n_real)

    # conv2 (3x1x3) + LeakyReLU                [bn2 folded into conv3]
    w_aug = _fold_bn_into_weights(params["w2"], mean3, inv3)
    y4, st4 = _conv_layer(y3, w_aug, g, taps313, apply_act=True)
    mean4, inv4 = _finish_bn_stats(st4, cout, g.n_real)

    # conv3 (3x3x3) + LeakyReLU                [bn3 applied at extraction]
    w_aug = _fold_bn_into_weights(params["w3"], mean4, inv4)
    y5, st5 = _conv_layer(y4, w_aug, g, taps333, apply_act=True)
    mean5, inv5 = _finish_bn_stats(st5, cout, g.n_real)

    out = _from_store(y5, cout, g)
    return (out - mean5) * inv5


# ------------------------------------ main ------------------------------------

if __name__ == "__main__":
    key = jax.random.PRNGKey(0)
    k_par, k_x, k_skip = jax.random.split(key, 3)

    N, D, H, W = 2, 8, 8, 8
    in_filters, out_filters = 8, 8

    params = init_upblock_params(k_par, in_filters, out_filters)
    x = jax.random.normal(k_x, (N, D, H, W, in_filters), jnp.float32)
    skip = jax.random.normal(k_skip, (N, D, H, W, out_filters), jnp.float32)

    fwd = jax.jit(upblock_forward)
    out = jax.block_until_ready(fwd(params, x, skip))

    assert out.shape == (N, D, H, W, out_filters)
    assert bool(jnp.all(jnp.isfinite(out)))
    print("KERNEL_OK")
</pallas_src>

<mosaic_0001>
module attributes {stable_mosaic.version = 11 : i64} {
  func.func @kernel(%arg0: i32, %arg1: memref<9x3072xbf16, #tpu.memory_space<any>>, %arg2: memref<27x8x9xbf16, #tpu.memory_space<vmem>>, %arg3: memref<9x512xbf16, #tpu.memory_space<vmem>>, %arg4: memref<1x16x128xf32, #tpu.memory_space<vmem>>, %arg5: memref<9x768xbf16, #tpu.memory_space<vmem>>, %arg6: memref<!tpu.dma_semaphore, #tpu.memory_space<semaphore_mem>>) attributes {dimension_semantics = [#tpu.dimension_semantics<parallel>], iteration_bounds = array<i64: 4>, scalar_prefetch = 0 : i64, scratch_operands = 2 : i64, tpu.core_type = #tpu.core_type<tc>, window_params = [{}, {pipeline_mode = #tpu.pipeline_mode<synchronous>, transform_indices = @transform_1, window_bounds = array<i64: 27, 8, 9>}, {transform_indices = @transform_2, window_bounds = array<i64: 9, 512>}, {transform_indices = @transform_3, window_bounds = array<i64: 1, 16, 128>}]} {
    %c1_i32 = arith.constant 1 : i32
    %0 = arith.addi %arg0, %c1_i32 : i32
    %c512_i32 = arith.constant 512 : i32
    %1 = arith.muli %0, %c512_i32 : i32
    %c128_i32 = arith.constant 128 : i32
    %2 = arith.subi %1, %c128_i32 : i32
    %3 = tpu.assume_multiple %2, 128 : i32
    %c0_i32 = arith.constant 0 : i32
    %4 = tpu.memref_slice %arg1[%c0_i32, %3] : memref<9x3072xbf16, #tpu.memory_space<any>> -> memref<9x768xbf16, #tpu.memory_space<any>>
    tpu.enqueue_dma source(%4 : memref<9x768xbf16, #tpu.memory_space<any>>) target(%arg5 : memref<9x768xbf16, #tpu.memory_space<vmem>>) target_semaphore(%arg6 : memref<!tpu.dma_semaphore, #tpu.memory_space<semaphore_mem>>)
    %c0_i32_0 = arith.constant 0 : i32
    %5 = tpu.memref_slice %arg1[%c0_i32_0, %3] : memref<9x3072xbf16, #tpu.memory_space<any>> -> memref<9x768xbf16, #tpu.memory_space<any>>
    tpu.wait_dma2 semaphore(%arg6 : memref<!tpu.dma_semaphore, #tpu.memory_space<semaphore_mem>>) src(%5 : memref<9x768xbf16, #tpu.memory_space<any>>) dst(%arg5 : memref<9x768xbf16, #tpu.memory_space<vmem>>)
    %cst = arith.constant 0.000000e+00 : f32
    %6 = vector.broadcast %cst : f32 to vector<8x512xf32>
    %c0 = arith.constant 0 : index
    %c17 = arith.constant 17 : index
    %7 = vector.load %arg5[%c0, %c17] : memref<9x768xbf16, #tpu.memory_space<vmem>>, vector<9x512xbf16>
    %c0_1 = arith.constant 0 : index
    %c0_2 = arith.constant 0 : index
    %c0_3 = arith.constant 0 : index
    %8 = vector.load %arg2[%c0_1, %c0_2, %c0_3] : memref<27x8x9xbf16, #tpu.memory_space<vmem>>, vector<1x8x9xbf16>
    %9 = vector.shape_cast %8 : vector<1x8x9xbf16> to vector<8x9xbf16>
    %cst_4 = arith.constant dense<0.000000e+00> : vector<8x512xf32>
    %10 = tpu.matmul %9, %7, %cst_4 {dimension_numbers = #tpu.dot_dimension_numbers<[1], [0], [0], [1], [0, 0, 1, 1], [], []>} : vector<8x9xbf16>, vector<9x512xbf16>, vector<8x512xf32> -> vector<8x512xf32>
    %11 = arith.addf %6, %10 : vector<8x512xf32>
    %c0_5 = arith.constant 0 : index
    %c18 = arith.constant 18 : index
    %12 = vector.load %arg5[%c0_5, %c18] : memref<9x768xbf16, #tpu.memory_space<vmem>>, vector<9x512xbf16>
    %c1 = arith.constant 1 : index
    %c0_6 = arith.constant 0 : index
    %c0_7 = arith.constant 0 : index
    %13 = vector.load %arg2[%c1, %c0_6, %c0_7] : memref<27x8x9xbf16, #tpu.memory_space<vmem>>, vector<1x8x9xbf16>
    %14 = vector.shape_cast %13 : vector<1x8x9xbf16> to vector<8x9xbf16>
    %cst_8 = arith.constant dense<0.000000e+00> : vector<8x512xf32>
    %15 = tpu.matmul %14, %12, %cst_8 {dimension_numbers = #tpu.dot_dimension_numbers<[1], [0], [0], [1], [0, 0, 1, 1], [], []>} : vector<8x9xbf16>, vector<9x512xbf16>, vector<8x512xf32> -> vector<8x512xf32>
    %16 = arith.addf %11, %15 : vector<8x512xf32>
    %c0_9 = arith.constant 0 : index
    %c19 = arith.constant 19 : index
    %17 = vector.load %arg5[%c0_9, %c19] : memref<9x768xbf16, #tpu.memory_space<vmem>>, vector<9x512xbf16>
    %c2 = arith.constant 2 : index
    %c0_10 = arith.constant 0 : index
    %c0_11 = arith.constant 0 : index
    %18 = vector.load %arg2[%c2, %c0_10, %c0_11] : memref<27x8x9xbf16, #tpu.memory_space<vmem>>, vector<1x8x9xbf16>
    %19 = vector.shape_cast %18 : vector<1x8x9xbf16> to vector<8x9xbf16>
    %cst_12 = arith.constant dense<0.000000e+00> : vector<8x512xf32>
    %20 = tpu.matmul %19, %17, %cst_12 {dimension_numbers = #tpu.dot_dimension_numbers<[1], [0], [0], [1], [0, 0, 1, 1], [], []>} : vector<8x9xbf16>, vector<9x512xbf16>, vector<8x512xf32> -> vector<8x512xf32>
    %21 = arith.addf %16, %20 : vector<8x512xf32>
    %c0_13 = arith.constant 0 : index
    %c27 = arith.constant 27 : index
    %22 = vector.load %arg5[%c0_13, %c27] : memref<9x768xbf16, #tpu.memory_space<vmem>>, vector<9x512xbf16>
    %c3 = arith.constant 3 : index
    %c0_14 = arith.constant 0 : index
    %c0_15 = arith.constant 0 : index
    %23 = vector.load %arg2[%c3, %c0_14, %c0_15] : memref<27x8x9xbf16, #tpu.memory_space<vmem>>, vector<1x8x9xbf16>
    %24 = vector.shape_cast %23 : vector<1x8x9xbf16> to vector<8x9xbf16>
    %cst_16 = arith.constant dense<0.000000e+00> : vector<8x512xf32>
    %25 = tpu.matmul %24, %22, %cst_16 {dimension_numbers = #tpu.dot_dimension_numbers<[1], [0], [0], [1], [0, 0, 1, 1], [], []>} : vector<8x9xbf16>, vector<9x512xbf16>, vector<8x512xf32> -> vector<8x512xf32>
    %26 = arith.addf %21, %25 : vector<8x512xf32>
    %c0_17 = arith.constant 0 : index
    %c28 = arith.constant 28 : index
    %27 = vector.load %arg5[%c0_17, %c28] : memref<9x768xbf16, #tpu.memory_space<vmem>>, vector<9x512xbf16>
    %c4 = arith.constant 4 : index
    %c0_18 = arith.constant 0 : index
    %c0_19 = arith.constant 0 : index
    %28 = vector.load %arg2[%c4, %c0_18, %c0_19] : memref<27x8x9xbf16, #tpu.memory_space<vmem>>, vector<1x8x9xbf16>
    %29 = vector.shape_cast %28 : vector<1x8x9xbf16> to vector<8x9xbf16>
    %cst_20 = arith.constant dense<0.000000e+00> : vector<8x512xf32>
    %30 = tpu.matmul %29, %27, %cst_20 {dimension_numbers = #tpu.dot_dimension_numbers<[1], [0], [0], [1], [0, 0, 1, 1], [], []>} : vector<8x9xbf16>, vector<9x512xbf16>, vector<8x512xf32> -> vector<8x512xf32>
    %31 = arith.addf %26, %30 : vector<8x512xf32>
    %c0_21 = arith.constant 0 : index
    %c29 = arith.constant 29 : index
    %32 = vector.load %arg5[%c0_21, %c29] : memref<9x768xbf16, #tpu.memory_space<vmem>>, vector<9x512xbf16>
    %c5 = arith.constant 5 : index
    %c0_22 = arith.constant 0 : index
    %c0_23 = arith.constant 0 : index
    %33 = vector.load %arg2[%c5, %c0_22, %c0_23] : memref<27x8x9xbf16, #tpu.memory_space<vmem>>, vector<1x8x9xbf16>
    %34 = vector.shape_cast %33 : vector<1x8x9xbf16> to vector<8x9xbf16>
    %cst_24 = arith.constant dense<0.000000e+00> : vector<8x512xf32>
    %35 = tpu.matmul %34, %32, %cst_24 {dimension_numbers = #tpu.dot_dimension_numbers<[1], [0], [0], [1], [0, 0, 1, 1], [], []>} : vector<8x9xbf16>, vector<9x512xbf16>, vector<8x512xf32> -> vector<8x512xf32>
    %36 = arith.addf %31, %35 : vector<8x512xf32>
    %c0_25 = arith.constant 0 : index
    %c37 = arith.constant 37 : index
    %37 = vector.load %arg5[%c0_25, %c37] : memref<9x768xbf16, #tpu.memory_space<vmem>>, vector<9x512xbf16>
    %c6 = arith.constant 6 : index
    %c0_26 = arith.constant 0 : index
    %c0_27 = arith.constant 0 : index
    %38 = vector.load %arg2[%c6, %c0_26, %c0_27] : memref<27x8x9xbf16, #tpu.memory_space<vmem>>, vector<1x8x9xbf16>
    %39 = vector.shape_cast %38 : vector<1x8x9xbf16> to vector<8x9xbf16>
    %cst_28 = arith.constant dense<0.000000e+00> : vector<8x512xf32>
    %40 = tpu.matmul %39, %37, %cst_28 {dimension_numbers = #tpu.dot_dimension_numbers<[1], [0], [0], [1], [0, 0, 1, 1], [], []>} : vector<8x9xbf16>, vector<9x512xbf16>, vector<8x512xf32> -> vector<8x512xf32>
    %41 = arith.addf %36, %40 : vector<8x512xf32>
    %c0_29 = arith.constant 0 : index
    %c38 = arith.constant 38 : index
    %42 = vector.load %arg5[%c0_29, %c38] : memref<9x768xbf16, #tpu.memory_space<vmem>>, vector<9x512xbf16>
    %c7 = arith.constant 7 : index
    %c0_30 = arith.constant 0 : index
    %c0_31 = arith.constant 0 : index
    %43 = vector.load %arg2[%c7, %c0_30, %c0_31] : memref<27x8x9xbf16, #tpu.memory_space<vmem>>, vector<1x8x9xbf16>
    %44 = vector.shape_cast %43 : vector<1x8x9xbf16> to vector<8x9xbf16>
    %cst_32 = arith.constant dense<0.000000e+00> : vector<8x512xf32>
    %45 = tpu.matmul %44, %42, %cst_32 {dimension_numbers = #tpu.dot_dimension_numbers<[1], [0], [0], [1], [0, 0, 1, 1], [], []>} : vector<8x9xbf16>, vector<9x512xbf16>, vector<8x512xf32> -> vector<8x512xf32>
    %46 = arith.addf %41, %45 : vector<8x512xf32>
    %c0_33 = arith.constant 0 : index
    %c39 = arith.constant 39 : index
    %47 = vector.load %arg5[%c0_33, %c39] : memref<9x768xbf16, #tpu.memory_space<vmem>>, vector<9x512xbf16>
    %c8 = arith.constant 8 : index
    %c0_34 = arith.constant 0 : index
    %c0_35 = arith.constant 0 : index
    %48 = vector.load %arg2[%c8, %c0_34, %c0_35] : memref<27x8x9xbf16, #tpu.memory_space<vmem>>, vector<1x8x9xbf16>
    %49 = vector.shape_cast %48 : vector<1x8x9xbf16> to vector<8x9xbf16>
    %cst_36 = arith.constant dense<0.000000e+00> : vector<8x512xf32>
    %50 = tpu.matmul %49, %47, %cst_36 {dimension_numbers = #tpu.dot_dimension_numbers<[1], [0], [0], [1], [0, 0, 1, 1], [], []>} : vector<8x9xbf16>, vector<9x512xbf16>, vector<8x512xf32> -> vector<8x512xf32>
    %51 = arith.addf %46, %50 : vector<8x512xf32>
    %c0_37 = arith.constant 0 : index
    %c117 = arith.constant 117 : index
    %52 = vector.load %arg5[%c0_37, %c117] : memref<9x768xbf16, #tpu.memory_space<vmem>>, vector<9x512xbf16>
    %c9 = arith.constant 9 : index
    %c0_38 = arith.constant 0 : index
    %c0_39 = arith.constant 0 : index
    %53 = vector.load %arg2[%c9, %c0_38, %c0_39] : memref<27x8x9xbf16, #tpu.memory_space<vmem>>, vector<1x8x9xbf16>
    %54 = vector.shape_cast %53 : vector<1x8x9xbf16> to vector<8x9xbf16>
    %cst_40 = arith.constant dense<0.000000e+00> : vector<8x512xf32>
    %55 = tpu.matmul %54, %52, %cst_40 {dimension_numbers = #tpu.dot_dimension_numbers<[1], [0], [0], [1], [0, 0, 1, 1], [], []>} : vector<8x9xbf16>, vector<9x512xbf16>, vector<8x512xf32> -> vector<8x512xf32>
    %56 = arith.addf %51, %55 : vector<8x512xf32>
    %c0_41 = arith.constant 0 : index
    %c118 = arith.constant 118 : index
    %57 = vector.load %arg5[%c0_41, %c118] : memref<9x768xbf16, #tpu.memory_space<vmem>>, vector<9x512xbf16>
    %c10 = arith.constant 10 : index
    %c0_42 = arith.constant 0 : index
    %c0_43 = arith.constant 0 : index
    %58 = vector.load %arg2[%c10, %c0_42, %c0_43] : memref<27x8x9xbf16, #tpu.memory_space<vmem>>, vector<1x8x9xbf16>
    %59 = vector.shape_cast %58 : vector<1x8x9xbf16> to vector<8x9xbf16>
    %cst_44 = arith.constant dense<0.000000e+00> : vector<8x512xf32>
    %60 = tpu.matmul %59, %57, %cst_44 {dimension_numbers = #tpu.dot_dimension_numbers<[1], [0], [0], [1], [0, 0, 1, 1], [], []>} : vector<8x9xbf16>, vector<9x512xbf16>, vector<8x512xf32> -> vector<8x512xf32>
    %61 = arith.addf %56, %60 : vector<8x512xf32>
    %c0_45 = arith.constant 0 : index
    %c119 = arith.constant 119 : index
    %62 = vector.load %arg5[%c0_45, %c119] : memref<9x768xbf16, #tpu.memory_space<vmem>>, vector<9x512xbf16>
    %c11 = arith.constant 11 : index
    %c0_46 = arith.constant 0 : index
    %c0_47 = arith.constant 0 : index
    %63 = vector.load %arg2[%c11, %c0_46, %c0_47] : memref<27x8x9xbf16, #tpu.memory_space<vmem>>, vector<1x8x9xbf16>
    %64 = vector.shape_cast %63 : vector<1x8x9xbf16> to vector<8x9xbf16>
    %cst_48 = arith.constant dense<0.000000e+00> : vector<8x512xf32>
    %65 = tpu.matmul %64, %62, %cst_48 {dimension_numbers = #tpu.dot_dimension_numbers<[1], [0], [0], [1], [0, 0, 1, 1], [], []>} : vector<8x9xbf16>, vector<9x512xbf16>, vector<8x512xf32> -> vector<8x512xf32>
    %66 = arith.addf %61, %65 : vector<8x512xf32>
    %c0_49 = arith.constant 0 : index
    %c127 = arith.constant 127 : index
    %67 = vector.load %arg5[%c0_49, %c127] : memref<9x768xbf16, #tpu.memory_space<vmem>>, vector<9x512xbf16>
    %c12 = arith.constant 12 : index
    %c0_50 = arith.constant 0 : index
    %c0_51 = arith.constant 0 : index
    %68 = vector.load %arg2[%c12, %c0_50, %c0_51] : memref<27x8x9xbf16, #tpu.memory_space<vmem>>, vector<1x8x9xbf16>
    %69 = vector.shape_cast %68 : vector<1x8x9xbf16> to vector<8x9xbf16>
    %cst_52 = arith.constant dense<0.000000e+00> : vector<8x512xf32>
    %70 = tpu.matmul %69, %67, %cst_52 {dimension_numbers = #tpu.dot_dimension_numbers<[1], [0], [0], [1], [0, 0, 1, 1], [], []>} : vector<8x9xbf16>, vector<9x512xbf16>, vector<8x512xf32> -> vector<8x512xf32>
    %71 = arith.addf %66, %70 : vector<8x512xf32>
    %c0_53 = arith.constant 0 : index
    %c128 = arith.constant 128 : index
    %72 = vector.load %arg5[%c0_53, %c128] : memref<9x768xbf16, #tpu.memory_space<vmem>>, vector<9x512xbf16>
    %c13 = arith.constant 13 : index
    %c0_54 = arith.constant 0 : index
    %c0_55 = arith.constant 0 : index
    %73 = vector.load %arg2[%c13, %c0_54, %c0_55] : memref<27x8x9xbf16, #tpu.memory_space<vmem>>, vector<1x8x9xbf16>
    %74 = vector.shape_cast %73 : vector<1x8x9xbf16> to vector<8x9xbf16>
    %cst_56 = arith.constant dense<0.000000e+00> : vector<8x512xf32>
    %75 = tpu.matmul %74, %72, %cst_56 {dimension_numbers = #tpu.dot_dimension_numbers<[1], [0], [0], [1], [0, 0, 1, 1], [], []>} : vector<8x9xbf16>, vector<9x512xbf16>, vector<8x512xf32> -> vector<8x512xf32>
    %76 = arith.addf %71, %75 : vector<8x512xf32>
    %c0_57 = arith.constant 0 : index
    %c129 = arith.constant 129 : index
    %77 = vector.load %arg5[%c0_57, %c129] : memref<9x768xbf16, #tpu.memory_space<vmem>>, vector<9x512xbf16>
    %c14 = arith.constant 14 : index
    %c0_58 = arith.constant 0 : index
    %c0_59 = arith.constant 0 : index
    %78 = vector.load %arg2[%c14, %c0_58, %c0_59] : memref<27x8x9xbf16, #tpu.memory_space<vmem>>, vector<1x8x9xbf16>
    %79 = vector.shape_cast %78 : vector<1x8x9xbf16> to vector<8x9xbf16>
    %cst_60 = arith.constant dense<0.000000e+00> : vector<8x512xf32>
    %80 = tpu.matmul %79, %77, %cst_60 {dimension_numbers = #tpu.dot_dimension_numbers<[1], [0], [0], [1], [0, 0, 1, 1], [], []>} : vector<8x9xbf16>, vector<9x512xbf16>, vector<8x512xf32> -> vector<8x512xf32>
    %81 = arith.addf %76, %80 : vector<8x512xf32>
    %c0_61 = arith.constant 0 : index
    %c137 = arith.constant 137 : index
    %82 = vector.load %arg5[%c0_61, %c137] : memref<9x768xbf16, #tpu.memory_space<vmem>>, vector<9x512xbf16>
    %c15 = arith.constant 15 : index
    %c0_62 = arith.constant 0 : index
    %c0_63 = arith.constant 0 : index
    %83 = vector.load %arg2[%c15, %c0_62, %c0_63] : memref<27x8x9xbf16, #tpu.memory_space<vmem>>, vector<1x8x9xbf16>
    %84 = vector.shape_cast %83 : vector<1x8x9xbf16> to vector<8x9xbf16>
    %cst_64 = arith.constant dense<0.000000e+00> : vector<8x512xf32>
    %85 = tpu.matmul %84, %82, %cst_64 {dimension_numbers = #tpu.dot_dimension_numbers<[1], [0], [0], [1], [0, 0, 1, 1], [], []>} : vector<8x9xbf16>, vector<9x512xbf16>, vector<8x512xf32> -> vector<8x512xf32>
    %86 = arith.addf %81, %85 : vector<8x512xf32>
    %c0_65 = arith.constant 0 : index
    %c138 = arith.constant 138 : index
    %87 = vector.load %arg5[%c0_65, %c138] : memref<9x768xbf16, #tpu.memory_space<vmem>>, vector<9x512xbf16>
    %c16 = arith.constant 16 : index
    %c0_66 = arith.constant 0 : index
    %c0_67 = arith.constant 0 : index
    %88 = vector.load %arg2[%c16, %c0_66, %c0_67] : memref<27x8x9xbf16, #tpu.memory_space<vmem>>, vector<1x8x9xbf16>
    %89 = vector.shape_cast %88 : vector<1x8x9xbf16> to vector<8x9xbf16>
    %cst_68 = arith.constant dense<0.000000e+00> : vector<8x512xf32>
    %90 = tpu.matmul %89, %87, %cst_68 {dimension_numbers = #tpu.dot_dimension_numbers<[1], [0], [0], [1], [0, 0, 1, 1], [], []>} : vector<8x9xbf16>, vector<9x512xbf16>, vector<8x512xf32> -> vector<8x512xf32>
    %91 = arith.addf %86, %90 : vector<8x512xf32>
    %c0_69 = arith.constant 0 : index
    %c139 = arith.constant 139 : index
    %92 = vector.load %arg5[%c0_69, %c139] : memref<9x768xbf16, #tpu.memory_space<vmem>>, vector<9x512xbf16>
    %c17_70 = arith.constant 17 : index
    %c0_71 = arith.constant 0 : index
    %c0_72 = arith.constant 0 : index
    %93 = vector.load %arg2[%c17_70, %c0_71, %c0_72] : memref<27x8x9xbf16, #tpu.memory_space<vmem>>, vector<1x8x9xbf16>
    %94 = vector.shape_cast %93 : vector<1x8x9xbf16> to vector<8x9xbf16>
    %cst_73 = arith.constant dense<0.000000e+00> : vector<8x512xf32>
    %95 = tpu.matmul %94, %92, %cst_73 {dimension_numbers = #tpu.dot_dimension_numbers<[1], [0], [0], [1], [0, 0, 1, 1], [], []>} : vector<8x9xbf16>, vector<9x512xbf16>, vector<8x512xf32> -> vector<8x512xf32>
    %96 = arith.addf %91, %95 : vector<8x512xf32>
    %c0_74 = arith.constant 0 : index
    %c217 = arith.constant 217 : index
    %97 = vector.load %arg5[%c0_74, %c217] : memref<9x768xbf16, #tpu.memory_space<vmem>>, vector<9x512xbf16>
    %c18_75 = arith.constant 18 : index
    %c0_76 = arith.constant 0 : index
    %c0_77 = arith.constant 0 : index
    %98 = vector.load %arg2[%c18_75, %c0_76, %c0_77] : memref<27x8x9xbf16, #tpu.memory_space<vmem>>, vector<1x8x9xbf16>
    %99 = vector.shape_cast %98 : vector<1x8x9xbf16> to vector<8x9xbf16>
    %cst_78 = arith.constant dense<0.000000e+00> : vector<8x512xf32>
    %100 = tpu.matmul %99, %97, %cst_78 {dimension_numbers = #tpu.dot_dimension_numbers<[1], [0], [0], [1], [0, 0, 1, 1], [], []>} : vector<8x9xbf16>, vector<9x512xbf16>, vector<8x512xf32> -> vector<8x512xf32>
    %101 = arith.addf %96, %100 : vector<8x512xf32>
    %c0_79 = arith.constant 0 : index
    %c218 = arith.constant 218 : index
    %102 = vector.load %arg5[%c0_79, %c218] : memref<9x768xbf16, #tpu.memory_space<vmem>>, vector<9x512xbf16>
    %c19_80 = arith.constant 19 : index
    %c0_81 = arith.constant 0 : index
    %c0_82 = arith.constant 0 : index
    %103 = vector.load %arg2[%c19_80, %c0_81, %c0_82] : memref<27x8x9xbf16, #tpu.memory_space<vmem>>, vector<1x8x9xbf16>
    %104 = vector.shape_cast %103 : vector<1x8x9xbf16> to vector<8x9xbf16>
    %cst_83 = arith.constant dense<0.000000e+00> : vector<8x512xf32>
    %105 = tpu.matmul %104, %102, %cst_83 {dimension_numbers = #tpu.dot_dimension_numbers<[1], [0], [0], [1], [0, 0, 1, 1], [], []>} : vector<8x9xbf16>, vector<9x512xbf16>, vector<8x512xf32> -> vector<8x512xf32>
    %106 = arith.addf %101, %105 : vector<8x512xf32>
    %c0_84 = arith.constant 0 : index
    %c219 = arith.constant 219 : index
    %107 = vector.load %arg5[%c0_84, %c219] : memref<9x768xbf16, #tpu.memory_space<vmem>>, vector<9x512xbf16>
    %c20 = arith.constant 20 : index
    %c0_85 = arith.constant 0 : index
    %c0_86 = arith.constant 0 : index
    %108 = vector.load %arg2[%c20, %c0_85, %c0_86] : memref<27x8x9xbf16, #tpu.memory_space<vmem>>, vector<1x8x9xbf16>
    %109 = vector.shape_cast %108 : vector<1x8x9xbf16> to vector<8x9xbf16>
    %cst_87 = arith.constant dense<0.000000e+00> : vector<8x512xf32>
    %110 = tpu.matmul %109, %107, %cst_87 {dimension_numbers = #tpu.dot_dimension_numbers<[1], [0], [0], [1], [0, 0, 1, 1], [], []>} : vector<8x9xbf16>, vector<9x512xbf16>, vector<8x512xf32> -> vector<8x512xf32>
    %111 = arith.addf %106, %110 : vector<8x512xf32>
    %c0_88 = arith.constant 0 : index
    %c227 = arith.constant 227 : index
    %112 = vector.load %arg5[%c0_88, %c227] : memref<9x768xbf16, #tpu.memory_space<vmem>>, vector<9x512xbf16>
    %c21 = arith.constant 21 : index
    %c0_89 = arith.constant 0 : index
    %c0_90 = arith.constant 0 : index
    %113 = vector.load %arg2[%c21, %c0_89, %c0_90] : memref<27x8x9xbf16, #tpu.memory_space<vmem>>, vector<1x8x9xbf16>
    %114 = vector.shape_cast %113 : vector<1x8x9xbf16> to vector<8x9xbf16>
    %cst_91 = arith.constant dense<0.000000e+00> : vector<8x512xf32>
    %115 = tpu.matmul %114, %112, %cst_91 {dimension_numbers = #tpu.dot_dimension_numbers<[1], [0], [0], [1], [0, 0, 1, 1], [], []>} : vector<8x9xbf16>, vector<9x512xbf16>, vector<8x512xf32> -> vector<8x512xf32>
    %116 = arith.addf %111, %115 : vector<8x512xf32>
    %c0_92 = arith.constant 0 : index
    %c228 = arith.constant 228 : index
    %117 = vector.load %arg5[%c0_92, %c228] : memref<9x768xbf16, #tpu.memory_space<vmem>>, vector<9x512xbf16>
    %c22 = arith.constant 22 : index
    %c0_93 = arith.constant 0 : index
    %c0_94 = arith.constant 0 : index
    %118 = vector.load %arg2[%c22, %c0_93, %c0_94] : memref<27x8x9xbf16, #tpu.memory_space<vmem>>, vector<1x8x9xbf16>
    %119 = vector.shape_cast %118 : vector<1x8x9xbf16> to vector<8x9xbf16>
    %cst_95 = arith.constant dense<0.000000e+00> : vector<8x512xf32>
    %120 = tpu.matmul %119, %117, %cst_95 {dimension_numbers = #tpu.dot_dimension_numbers<[1], [0], [0], [1], [0, 0, 1, 1], [], []>} : vector<8x9xbf16>, vector<9x512xbf16>, vector<8x512xf32> -> vector<8x512xf32>
    %121 = arith.addf %116, %120 : vector<8x512xf32>
    %c0_96 = arith.constant 0 : index
    %c229 = arith.constant 229 : index
    %122 = vector.load %arg5[%c0_96, %c229] : memref<9x768xbf16, #tpu.memory_space<vmem>>, vector<9x512xbf16>
    %c23 = arith.constant 23 : index
    %c0_97 = arith.constant 0 : index
    %c0_98 = arith.constant 0 : index
    %123 = vector.load %arg2[%c23, %c0_97, %c0_98] : memref<27x8x9xbf16, #tpu.memory_space<vmem>>, vector<1x8x9xbf16>
    %124 = vector.shape_cast %123 : vector<1x8x9xbf16> to vector<8x9xbf16>
    %cst_99 = arith.constant dense<0.000000e+00> : vector<8x512xf32>
    %125 = tpu.matmul %124, %122, %cst_99 {dimension_numbers = #tpu.dot_dimension_numbers<[1], [0], [0], [1], [0, 0, 1, 1], [], []>} : vector<8x9xbf16>, vector<9x512xbf16>, vector<8x512xf32> -> vector<8x512xf32>
    %126 = arith.addf %121, %125 : vector<8x512xf32>
    %c0_100 = arith.constant 0 : index
    %c237 = arith.constant 237 : index
    %127 = vector.load %arg5[%c0_100, %c237] : memref<9x768xbf16, #tpu.memory_space<vmem>>, vector<9x512xbf16>
    %c24 = arith.constant 24 : index
    %c0_101 = arith.constant 0 : index
    %c0_102 = arith.constant 0 : index
    %128 = vector.load %arg2[%c24, %c0_101, %c0_102] : memref<27x8x9xbf16, #tpu.memory_space<vmem>>, vector<1x8x9xbf16>
    %129 = vector.shape_cast %128 : vector<1x8x9xbf16> to vector<8x9xbf16>
    %cst_103 = arith.constant dense<0.000000e+00> : vector<8x512xf32>
    %130 = tpu.matmul %129, %127, %cst_103 {dimension_numbers = #tpu.dot_dimension_numbers<[1], [0], [0], [1], [0, 0, 1, 1], [], []>} : vector<8x9xbf16>, vector<9x512xbf16>, vector<8x512xf32> -> vector<8x512xf32>
    %131 = arith.addf %126, %130 : vector<8x512xf32>
    %c0_104 = arith.constant 0 : index
    %c238 = arith.constant 238 : index
    %132 = vector.load %arg5[%c0_104, %c238] : memref<9x768xbf16, #tpu.memory_space<vmem>>, vector<9x512xbf16>
    %c25 = arith.constant 25 : index
    %c0_105 = arith.constant 0 : index
    %c0_106 = arith.constant 0 : index
    %133 = vector.load %arg2[%c25, %c0_105, %c0_106] : memref<27x8x9xbf16, #tpu.memory_space<vmem>>, vector<1x8x9xbf16>
    %134 = vector.shape_cast %133 : vector<1x8x9xbf16> to vector<8x9xbf16>
    %cst_107 = arith.constant dense<0.000000e+00> : vector<8x512xf32>
    %135 = tpu.matmul %134, %132, %cst_107 {dimension_numbers = #tpu.dot_dimension_numbers<[1], [0], [0], [1], [0, 0, 1, 1], [], []>} : vector<8x9xbf16>, vector<9x512xbf16>, vector<8x512xf32> -> vector<8x512xf32>
    %136 = arith.addf %131, %135 : vector<8x512xf32>
    %c0_108 = arith.constant 0 : index
    %c239 = arith.constant 239 : index
    %137 = vector.load %arg5[%c0_108, %c239] : memref<9x768xbf16, #tpu.memory_space<vmem>>, vector<9x512xbf16>
    %c26 = arith.constant 26 : index
    %c0_109 = arith.constant 0 : index
    %c0_110 = arith.constant 0 : index
    %138 = vector.load %arg2[%c26, %c0_109, %c0_110] : memref<27x8x9xbf16, #tpu.memory_space<vmem>>, vector<1x8x9xbf16>
    %139 = vector.shape_cast %138 : vector<1x8x9xbf16> to vector<8x9xbf16>
    %cst_111 = arith.constant dense<0.000000e+00> : vector<8x512xf32>
    %140 = tpu.matmul %139, %137, %cst_111 {dimension_numbers = #tpu.dot_dimension_numbers<[1], [0], [0], [1], [0, 0, 1, 1], [], []>} : vector<8x9xbf16>, vector<9x512xbf16>, vector<8x512xf32> -> vector<8x512xf32>
    %141 = arith.addf %136, %140 : vector<8x512xf32>
    %cst_112 = arith.constant 0.000000e+00 : f32
    %142 = vector.broadcast %cst_112 : f32 to vector<8x512xf32>
    %143 = arith.cmpf oge, %141, %142 : vector<8x512xf32>
    %cst_113 = arith.constant 0.00999999977 : f32
    %144 = vector.broadcast %cst_113 : f32 to vector<8x512xf32>
    %145 = arith.mulf %144, %141 : vector<8x512xf32>
    %146 = arith.select %143, %141, %145 : vector<8x512xi1>, vector<8x512xf32>
    %c8_114 = arith.constant 8 : index
    %c128_115 = arith.constant 128 : index
    %147 = vector.load %arg5[%c8_114, %c128_115] : memref<9x768xbf16, #tpu.memory_space<vmem>>, vector<1x512xbf16>
    %cst_116 = arith.constant 0.000000e+00 : bf16
    %148 = vector.broadcast %cst_116 : bf16 to vector<1x512xbf16>
    %149 = arith.cmpf ogt, %147, %148 : vector<1x512xbf16>
    %cst_117 = arith.constant 0.000000e+00 : f32
    %150 = vector.shape_cast %149 : vector<1x512xi1> to vector<1x512xi1>
    %151 = vector.broadcast %150 : vector<1x512xi1> to vector<8x512xi1>
    %152 = vector.broadcast %cst_117 : f32 to vector<8x512xf32>
    %153 = arith.select %151, %146, %152 : vector<8x512xi1>, vector<8x512xf32>
    %cst_118 = arith.constant 1.000000e+00 : f32
    %cst_119 = arith.constant 0.000000e+00 : f32
    %154 = vector.broadcast %cst_118 : f32 to vector<1x512xf32>
    %155 = vector.broadcast %cst_119 : f32 to vector<1x512xf32>
    %156 = arith.select %149, %154, %155 : vector<1x512xi1>, vector<1x512xf32>
    %157 = tpu.concatenate %153, %156 in 0 : vector<8x512xf32>, vector<1x512xf32> -> vector<9x512xf32>
    %158 = arith.truncf %157 : vector<9x512xf32> to vector<9x512xbf16>
    %c0_120 = arith.constant 0 : index
    %c0_121 = arith.constant 0 : index
    %159 = vector.load %arg3[%c0_120, %c0_121] : memref<9x512xbf16, #tpu.memory_space<vmem>>, vector<9x512xbf16>
    tpu.vector_store %arg3[%c0_120, %c0_121], %158 {strides = array<i32>} : memref<9x512xbf16, #tpu.memory_space<vmem>>, vector<9x512xbf16>,
    %cst_122 = arith.constant dense<0.000000e+00> : vector<8xf32>
    %160 = vector.multi_reduction <add>, %153, %cst_122 [1] : vector<8x512xf32> to vector<8xf32>
    %161 = vector.shape_cast %160 : vector<8xf32> to vector<8x1xf32>
    %162 = arith.mulf %153, %153 : vector<8x512xf32>
    %cst_123 = arith.constant dense<0.000000e+00> : vector<8xf32>
    %163 = vector.multi_reduction <add>, %162, %cst_123 [1] : vector<8x512xf32> to vector<8xf32>
    %164 = vector.shape_cast %163 : vector<8xf32> to vector<8x1xf32>
    %165 = tpu.concatenate %161, %164 in 0 : vector<8x1xf32>, vector<8x1xf32> -> vector<16x1xf32>
    %166 = vector.shape_cast %165 : vector<16x1xf32> to vector<16x1xf32>
    %167 = vector.broadcast %166 : vector<16x1xf32> to vector<16x128xf32>
    %c0_124 = arith.constant 0 : index
    %c0_125 = arith.constant 0 : index
    %c0_126 = arith.constant 0 : index
    %168 = vector.load %arg4[%c0_124, %c0_125, %c0_126] : memref<1x16x128xf32, #tpu.memory_space<vmem>>, vector<1x16x128xf32>
    %169 = vector.shape_cast %168 : vector<1x16x128xf32> to vector<16x128xf32>
    %170 = vector.shape_cast %167 : vector<16x128xf32> to vector<1x16x128xf32>
    tpu.vector_store %arg4[%c0_124, %c0_125, %c0_126], %170 {strides = array<i32>} : memref<1x16x128xf32, #tpu.memory_space<vmem>>, vector<1x16x128xf32>,
    return
  }
  func.func @transform_1(%arg0: i32) -> (i32, i32, i32) {
    %c0_i32 = arith.constant 0 : i32
    %c0_i32_0 = arith.constant 0 : i32
    %c0_i32_1 = arith.constant 0 : i32
    %c0_i32_2 = arith.constant 0 : i32
    return %c0_i32, %c0_i32_0, %c0_i32_1 : i32, i32, i32
  }
  func.func @transform_2(%arg0: i32) -> (i32, i32) {
    %c1_i32 = arith.constant 1 : i32
    %0 = arith.addi %arg0, %c1_i32 : i32
    %c0_i32 = arith.constant 0 : i32
    %c0_i32_0 = arith.constant 0 : i32
    return %c0_i32, %0 : i32, i32
  }
  func.func @transform_3(%arg0: i32) -> (i32, i32, i32) {
    %c0_i32 = arith.constant 0 : i32
    %c0_i32_0 = arith.constant 0 : i32
    %c0_i32_1 = arith.constant 0 : i32
    return %arg0, %c0_i32, %c0_i32_0 : i32, i32, i32
  }
}

module attributes {stable_mosaic.version = 11 : i64} {
  func.func @kernel(%arg0: i32, %arg1: memref<9x3072xbf16, #tpu.memory_space<any>>, %arg2: memref<27x8x9xbf16, #tpu.memory_space<vmem>>, %arg3: memref<9x512xbf16, #tpu.memory_space<vmem>>, %arg4: memref<9x512xbf16, #tpu.memory_space<vmem>>, %arg5: memref<1x16x128xf32, #tpu.memory_space<vmem>>, %arg6: memref<9x768xbf16, #tpu.memory_space<vmem>>, %arg7: memref<!tpu.dma_semaphore, #tpu.memory_space<semaphore_mem>>) attributes {dimension_semantics = [#tpu.dimension_semantics<parallel>], iteration_bounds = array<i64: 4>, scalar_prefetch = 0 : i64, scratch_operands = 2 : i64, tpu.core_type = #tpu.core_type<tc>, window_params = [{}, {pipeline_mode = #tpu.pipeline_mode<synchronous>, transform_indices = @transform_1, window_bounds = array<i64: 27, 8, 9>}, {transform_indices = @transform_2, window_bounds = array<i64: 9, 512>}, {transform_indices = @transform_3, window_bounds = array<i64: 9, 512>}, {transform_indices = @transform_4, window_bounds = array<i64: 1, 16, 128>}]} {
    %c1_i32 = arith.constant 1 : i32
    %0 = arith.addi %arg0, %c1_i32 : i32
    %c512_i32 = arith.constant 512 : i32
    %1 = arith.muli %0, %c512_i32 : i32
    %c128_i32 = arith.constant 128 : i32
    %2 = arith.subi %1, %c128_i32 : i32
    %3 = tpu.assume_multiple %2, 128 : i32
    %c0_i32 = arith.constant 0 : i32
    %4 = tpu.memref_slice %arg1[%c0_i32, %3] : memref<9x3072xbf16, #tpu.memory_space<any>> -> memref<9x768xbf16, #tpu.memory_space<any>>
    tpu.enqueue_dma source(%4 : memref<9x768xbf16, #tpu.memory_space<any>>) target(%arg6 : memref<9x768xbf16, #tpu.memory_space<vmem>>) target_semaphore(%arg7 : memref<!tpu.dma_semaphore, #tpu.memory_space<semaphore_mem>>)
    %c0_i32_0 = arith.constant 0 : i32
    %5 = tpu.memref_slice %arg1[%c0_i32_0, %3] : memref<9x3072xbf16, #tpu.memory_space<any>> -> memref<9x768xbf16, #tpu.memory_space<any>>
    tpu.wait_dma2 semaphore(%arg7 : memref<!tpu.dma_semaphore, #tpu.memory_space<semaphore_mem>>) src(%5 : memref<9x768xbf16, #tpu.memory_space<any>>) dst(%arg6 : memref<9x768xbf16, #tpu.memory_space<vmem>>)
    %cst = arith.constant 0.000000e+00 : f32
    %6 = vector.broadcast %cst : f32 to vector<8x512xf32>
    %c0 = arith.constant 0 : index
    %c17 = arith.constant 17 : index
    %7 = vector.load %arg6[%c0, %c17] : memref<9x768xbf16, #tpu.memory_space<vmem>>, vector<9x512xbf16>
    %c0_1 = arith.constant 0 : index
    %c0_2 = arith.constant 0 : index
    %c0_3 = arith.constant 0 : index
    %8 = vector.load %arg2[%c0_1, %c0_2, %c0_3] : memref<27x8x9xbf16, #tpu.memory_space<vmem>>, vector<1x8x9xbf16>
    %9 = vector.shape_cast %8 : vector<1x8x9xbf16> to vector<8x9xbf16>
    %cst_4 = arith.constant dense<0.000000e+00> : vector<8x512xf32>
    %10 = tpu.matmul %9, %7, %cst_4 {dimension_numbers = #tpu.dot_dimension_numbers<[1], [0], [0], [1], [0, 0, 1, 1], [], []>} : vector<8x9xbf16>, vector<9x512xbf16>, vector<8x512xf32> -> vector<8x512xf32>
    %11 = arith.addf %6, %10 : vector<8x512xf32>
    %c0_5 = arith.constant 0 : index
    %c18 = arith.constant 18 : index
    %12 = vector.load %arg6[%c0_5, %c18] : memref<9x768xbf16, #tpu.memory_space<vmem>>, vector<9x512xbf16>
    %c1 = arith.constant 1 : index
    %c0_6 = arith.constant 0 : index
    %c0_7 = arith.constant 0 : index
    %13 = vector.load %arg2[%c1, %c0_6, %c0_7] : memref<27x8x9xbf16, #tpu.memory_space<vmem>>, vector<1x8x9xbf16>
    %14 = vector.shape_cast %13 : vector<1x8x9xbf16> to vector<8x9xbf16>
    %cst_8 = arith.constant dense<0.000000e+00> : vector<8x512xf32>
    %15 = tpu.matmul %14, %12, %cst_8 {dimension_numbers = #tpu.dot_dimension_numbers<[1], [0], [0], [1], [0, 0, 1, 1], [], []>} : vector<8x9xbf16>, vector<9x512xbf16>, vector<8x512xf32> -> vector<8x512xf32>
    %16 = arith.addf %11, %15 : vector<8x512xf32>
    %c0_9 = arith.constant 0 : index
    %c19 = arith.constant 19 : index
    %17 = vector.load %arg6[%c0_9, %c19] : memref<9x768xbf16, #tpu.memory_space<vmem>>, vector<9x512xbf16>
    %c2 = arith.constant 2 : index
    %c0_10 = arith.constant 0 : index
    %c0_11 = arith.constant 0 : index
    %18 = vector.load %arg2[%c2, %c0_10, %c0_11] : memref<27x8x9xbf16, #tpu.memory_space<vmem>>, vector<1x8x9xbf16>
    %19 = vector.shape_cast %18 : vector<1x8x9xbf16> to vector<8x9xbf16>
    %cst_12 = arith.constant dense<0.000000e+00> : vector<8x512xf32>
    %20 = tpu.matmul %19, %17, %cst_12 {dimension_numbers = #tpu.dot_dimension_numbers<[1], [0], [0], [1], [0, 0, 1, 1], [], []>} : vector<8x9xbf16>, vector<9x512xbf16>, vector<8x512xf32> -> vector<8x512xf32>
    %21 = arith.addf %16, %20 : vector<8x512xf32>
    %c0_13 = arith.constant 0 : index
    %c27 = arith.constant 27 : index
    %22 = vector.load %arg6[%c0_13, %c27] : memref<9x768xbf16, #tpu.memory_space<vmem>>, vector<9x512xbf16>
    %c3 = arith.constant 3 : index
    %c0_14 = arith.constant 0 : index
    %c0_15 = arith.constant 0 : index
    %23 = vector.load %arg2[%c3, %c0_14, %c0_15] : memref<27x8x9xbf16, #tpu.memory_space<vmem>>, vector<1x8x9xbf16>
    %24 = vector.shape_cast %23 : vector<1x8x9xbf16> to vector<8x9xbf16>
    %cst_16 = arith.constant dense<0.000000e+00> : vector<8x512xf32>
    %25 = tpu.matmul %24, %22, %cst_16 {dimension_numbers = #tpu.dot_dimension_numbers<[1], [0], [0], [1], [0, 0, 1, 1], [], []>} : vector<8x9xbf16>, vector<9x512xbf16>, vector<8x512xf32> -> vector<8x512xf32>
    %26 = arith.addf %21, %25 : vector<8x512xf32>
    %c0_17 = arith.constant 0 : index
    %c28 = arith.constant 28 : index
    %27 = vector.load %arg6[%c0_17, %c28] : memref<9x768xbf16, #tpu.memory_space<vmem>>, vector<9x512xbf16>
    %c4 = arith.constant 4 : index
    %c0_18 = arith.constant 0 : index
    %c0_19 = arith.constant 0 : index
    %28 = vector.load %arg2[%c4, %c0_18, %c0_19] : memref<27x8x9xbf16, #tpu.memory_space<vmem>>, vector<1x8x9xbf16>
    %29 = vector.shape_cast %28 : vector<1x8x9xbf16> to vector<8x9xbf16>
    %cst_20 = arith.constant dense<0.000000e+00> : vector<8x512xf32>
    %30 = tpu.matmul %29, %27, %cst_20 {dimension_numbers = #tpu.dot_dimension_numbers<[1], [0], [0], [1], [0, 0, 1, 1], [], []>} : vector<8x9xbf16>, vector<9x512xbf16>, vector<8x512xf32> -> vector<8x512xf32>
    %31 = arith.addf %26, %30 : vector<8x512xf32>
    %c0_21 = arith.constant 0 : index
    %c29 = arith.constant 29 : index
    %32 = vector.load %arg6[%c0_21, %c29] : memref<9x768xbf16, #tpu.memory_space<vmem>>, vector<9x512xbf16>
    %c5 = arith.constant 5 : index
    %c0_22 = arith.constant 0 : index
    %c0_23 = arith.constant 0 : index
    %33 = vector.load %arg2[%c5, %c0_22, %c0_23] : memref<27x8x9xbf16, #tpu.memory_space<vmem>>, vector<1x8x9xbf16>
    %34 = vector.shape_cast %33 : vector<1x8x9xbf16> to vector<8x9xbf16>
    %cst_24 = arith.constant dense<0.000000e+00> : vector<8x512xf32>
    %35 = tpu.matmul %34, %32, %cst_24 {dimension_numbers = #tpu.dot_dimension_numbers<[1], [0], [0], [1], [0, 0, 1, 1], [], []>} : vector<8x9xbf16>, vector<9x512xbf16>, vector<8x512xf32> -> vector<8x512xf32>
    %36 = arith.addf %31, %35 : vector<8x512xf32>
    %c0_25 = arith.constant 0 : index
    %c37 = arith.constant 37 : index
    %37 = vector.load %arg6[%c0_25, %c37] : memref<9x768xbf16, #tpu.memory_space<vmem>>, vector<9x512xbf16>
    %c6 = arith.constant 6 : index
    %c0_26 = arith.constant 0 : index
    %c0_27 = arith.constant 0 : index
    %38 = vector.load %arg2[%c6, %c0_26, %c0_27] : memref<27x8x9xbf16, #tpu.memory_space<vmem>>, vector<1x8x9xbf16>
    %39 = vector.shape_cast %38 : vector<1x8x9xbf16> to vector<8x9xbf16>
    %cst_28 = arith.constant dense<0.000000e+00> : vector<8x512xf32>
    %40 = tpu.matmul %39, %37, %cst_28 {dimension_numbers = #tpu.dot_dimension_numbers<[1], [0], [0], [1], [0, 0, 1, 1], [], []>} : vector<8x9xbf16>, vector<9x512xbf16>, vector<8x512xf32> -> vector<8x512xf32>
    %41 = arith.addf %36, %40 : vector<8x512xf32>
    %c0_29 = arith.constant 0 : index
    %c38 = arith.constant 38 : index
    %42 = vector.load %arg6[%c0_29, %c38] : memref<9x768xbf16, #tpu.memory_space<vmem>>, vector<9x512xbf16>
    %c7 = arith.constant 7 : index
    %c0_30 = arith.constant 0 : index
    %c0_31 = arith.constant 0 : index
    %43 = vector.load %arg2[%c7, %c0_30, %c0_31] : memref<27x8x9xbf16, #tpu.memory_space<vmem>>, vector<1x8x9xbf16>
    %44 = vector.shape_cast %43 : vector<1x8x9xbf16> to vector<8x9xbf16>
    %cst_32 = arith.constant dense<0.000000e+00> : vector<8x512xf32>
    %45 = tpu.matmul %44, %42, %cst_32 {dimension_numbers = #tpu.dot_dimension_numbers<[1], [0], [0], [1], [0, 0, 1, 1], [], []>} : vector<8x9xbf16>, vector<9x512xbf16>, vector<8x512xf32> -> vector<8x512xf32>
    %46 = arith.addf %41, %45 : vector<8x512xf32>
    %c0_33 = arith.constant 0 : index
    %c39 = arith.constant 39 : index
    %47 = vector.load %arg6[%c0_33, %c39] : memref<9x768xbf16, #tpu.memory_space<vmem>>, vector<9x512xbf16>
    %c8 = arith.constant 8 : index
    %c0_34 = arith.constant 0 : index
    %c0_35 = arith.constant 0 : index
    %48 = vector.load %arg2[%c8, %c0_34, %c0_35] : memref<27x8x9xbf16, #tpu.memory_space<vmem>>, vector<1x8x9xbf16>
    %49 = vector.shape_cast %48 : vector<1x8x9xbf16> to vector<8x9xbf16>
    %cst_36 = arith.constant dense<0.000000e+00> : vector<8x512xf32>
    %50 = tpu.matmul %49, %47, %cst_36 {dimension_numbers = #tpu.dot_dimension_numbers<[1], [0], [0], [1], [0, 0, 1, 1], [], []>} : vector<8x9xbf16>, vector<9x512xbf16>, vector<8x512xf32> -> vector<8x512xf32>
    %51 = arith.addf %46, %50 : vector<8x512xf32>
    %c0_37 = arith.constant 0 : index
    %c117 = arith.constant 117 : index
    %52 = vector.load %arg6[%c0_37, %c117] : memref<9x768xbf16, #tpu.memory_space<vmem>>, vector<9x512xbf16>
    %c9 = arith.constant 9 : index
    %c0_38 = arith.constant 0 : index
    %c0_39 = arith.constant 0 : index
    %53 = vector.load %arg2[%c9, %c0_38, %c0_39] : memref<27x8x9xbf16, #tpu.memory_space<vmem>>, vector<1x8x9xbf16>
    %54 = vector.shape_cast %53 : vector<1x8x9xbf16> to vector<8x9xbf16>
    %cst_40 = arith.constant dense<0.000000e+00> : vector<8x512xf32>
    %55 = tpu.matmul %54, %52, %cst_40 {dimension_numbers = #tpu.dot_dimension_numbers<[1], [0], [0], [1], [0, 0, 1, 1], [], []>} : vector<8x9xbf16>, vector<9x512xbf16>, vector<8x512xf32> -> vector<8x512xf32>
    %56 = arith.addf %51, %55 : vector<8x512xf32>
    %c0_41 = arith.constant 0 : index
    %c118 = arith.constant 118 : index
    %57 = vector.load %arg6[%c0_41, %c118] : memref<9x768xbf16, #tpu.memory_space<vmem>>, vector<9x512xbf16>
    %c10 = arith.constant 10 : index
    %c0_42 = arith.constant 0 : index
    %c0_43 = arith.constant 0 : index
    %58 = vector.load %arg2[%c10, %c0_42, %c0_43] : memref<27x8x9xbf16, #tpu.memory_space<vmem>>, vector<1x8x9xbf16>
    %59 = vector.shape_cast %58 : vector<1x8x9xbf16> to vector<8x9xbf16>
    %cst_44 = arith.constant dense<0.000000e+00> : vector<8x512xf32>
    %60 = tpu.matmul %59, %57, %cst_44 {dimension_numbers = #tpu.dot_dimension_numbers<[1], [0], [0], [1], [0, 0, 1, 1], [], []>} : vector<8x9xbf16>, vector<9x512xbf16>, vector<8x512xf32> -> vector<8x512xf32>
    %61 = arith.addf %56, %60 : vector<8x512xf32>
    %c0_45 = arith.constant 0 : index
    %c119 = arith.constant 119 : index
    %62 = vector.load %arg6[%c0_45, %c119] : memref<9x768xbf16, #tpu.memory_space<vmem>>, vector<9x512xbf16>
    %c11 = arith.constant 11 : index
    %c0_46 = arith.constant 0 : index
    %c0_47 = arith.constant 0 : index
    %63 = vector.load %arg2[%c11, %c0_46, %c0_47] : memref<27x8x9xbf16, #tpu.memory_space<vmem>>, vector<1x8x9xbf16>
    %64 = vector.shape_cast %63 : vector<1x8x9xbf16> to vector<8x9xbf16>
    %cst_48 = arith.constant dense<0.000000e+00> : vector<8x512xf32>
    %65 = tpu.matmul %64, %62, %cst_48 {dimension_numbers = #tpu.dot_dimension_numbers<[1], [0], [0], [1], [0, 0, 1, 1], [], []>} : vector<8x9xbf16>, vector<9x512xbf16>, vector<8x512xf32> -> vector<8x512xf32>
    %66 = arith.addf %61, %65 : vector<8x512xf32>
    %c0_49 = arith.constant 0 : index
    %c127 = arith.constant 127 : index
    %67 = vector.load %arg6[%c0_49, %c127] : memref<9x768xbf16, #tpu.memory_space<vmem>>, vector<9x512xbf16>
    %c12 = arith.constant 12 : index
    %c0_50 = arith.constant 0 : index
    %c0_51 = arith.constant 0 : index
    %68 = vector.load %arg2[%c12, %c0_50, %c0_51] : memref<27x8x9xbf16, #tpu.memory_space<vmem>>, vector<1x8x9xbf16>
    %69 = vector.shape_cast %68 : vector<1x8x9xbf16> to vector<8x9xbf16>
    %cst_52 = arith.constant dense<0.000000e+00> : vector<8x512xf32>
    %70 = tpu.matmul %69, %67, %cst_52 {dimension_numbers = #tpu.dot_dimension_numbers<[1], [0], [0], [1], [0, 0, 1, 1], [], []>} : vector<8x9xbf16>, vector<9x512xbf16>, vector<8x512xf32> -> vector<8x512xf32>
    %71 = arith.addf %66, %70 : vector<8x512xf32>
    %c0_53 = arith.constant 0 : index
    %c128 = arith.constant 128 : index
    %72 = vector.load %arg6[%c0_53, %c128] : memref<9x768xbf16, #tpu.memory_space<vmem>>, vector<9x512xbf16>
    %c13 = arith.constant 13 : index
    %c0_54 = arith.constant 0 : index
    %c0_55 = arith.constant 0 : index
    %73 = vector.load %arg2[%c13, %c0_54, %c0_55] : memref<27x8x9xbf16, #tpu.memory_space<vmem>>, vector<1x8x9xbf16>
    %74 = vector.shape_cast %73 : vector<1x8x9xbf16> to vector<8x9xbf16>
    %cst_56 = arith.constant dense<0.000000e+00> : vector<8x512xf32>
    %75 = tpu.matmul %74, %72, %cst_56 {dimension_numbers = #tpu.dot_dimension_numbers<[1], [0], [0], [1], [0, 0, 1, 1], [], []>} : vector<8x9xbf16>, vector<9x512xbf16>, vector<8x512xf32> -> vector<8x512xf32>
    %76 = arith.addf %71, %75 : vector<8x512xf32>
    %c0_57 = arith.constant 0 : index
    %c129 = arith.constant 129 : index
    %77 = vector.load %arg6[%c0_57, %c129] : memref<9x768xbf16, #tpu.memory_space<vmem>>, vector<9x512xbf16>
    %c14 = arith.constant 14 : index
    %c0_58 = arith.constant 0 : index
    %c0_59 = arith.constant 0 : index
    %78 = vector.load %arg2[%c14, %c0_58, %c0_59] : memref<27x8x9xbf16, #tpu.memory_space<vmem>>, vector<1x8x9xbf16>
    %79 = vector.shape_cast %78 : vector<1x8x9xbf16> to vector<8x9xbf16>
    %cst_60 = arith.constant dense<0.000000e+00> : vector<8x512xf32>
    %80 = tpu.matmul %79, %77, %cst_60 {dimension_numbers = #tpu.dot_dimension_numbers<[1], [0], [0], [1], [0, 0, 1, 1], [], []>} : vector<8x9xbf16>, vector<9x512xbf16>, vector<8x512xf32> -> vector<8x512xf32>
    %81 = arith.addf %76, %80 : vector<8x512xf32>
    %c0_61 = arith.constant 0 : index
    %c137 = arith.constant 137 : index
    %82 = vector.load %arg6[%c0_61, %c137] : memref<9x768xbf16, #tpu.memory_space<vmem>>, vector<9x512xbf16>
    %c15 = arith.constant 15 : index
    %c0_62 = arith.constant 0 : index
    %c0_63 = arith.constant 0 : index
    %83 = vector.load %arg2[%c15, %c0_62, %c0_63] : memref<27x8x9xbf16, #tpu.memory_space<vmem>>, vector<1x8x9xbf16>
    %84 = vector.shape_cast %83 : vector<1x8x9xbf16> to vector<8x9xbf16>
    %cst_64 = arith.constant dense<0.000000e+00> : vector<8x512xf32>
    %85 = tpu.matmul %84, %82, %cst_64 {dimension_numbers = #tpu.dot_dimension_numbers<[1], [0], [0], [1], [0, 0, 1, 1], [], []>} : vector<8x9xbf16>, vector<9x512xbf16>, vector<8x512xf32> -> vector<8x512xf32>
    %86 = arith.addf %81, %85 : vector<8x512xf32>
    %c0_65 = arith.constant 0 : index
    %c138 = arith.constant 138 : index
    %87 = vector.load %arg6[%c0_65, %c138] : memref<9x768xbf16, #tpu.memory_space<vmem>>, vector<9x512xbf16>
    %c16 = arith.constant 16 : index
    %c0_66 = arith.constant 0 : index
    %c0_67 = arith.constant 0 : index
    %88 = vector.load %arg2[%c16, %c0_66, %c0_67] : memref<27x8x9xbf16, #tpu.memory_space<vmem>>, vector<1x8x9xbf16>
    %89 = vector.shape_cast %88 : vector<1x8x9xbf16> to vector<8x9xbf16>
    %cst_68 = arith.constant dense<0.000000e+00> : vector<8x512xf32>
    %90 = tpu.matmul %89, %87, %cst_68 {dimension_numbers = #tpu.dot_dimension_numbers<[1], [0], [0], [1], [0, 0, 1, 1], [], []>} : vector<8x9xbf16>, vector<9x512xbf16>, vector<8x512xf32> -> vector<8x512xf32>
    %91 = arith.addf %86, %90 : vector<8x512xf32>
    %c0_69 = arith.constant 0 : index
    %c139 = arith.constant 139 : index
    %92 = vector.load %arg6[%c0_69, %c139] : memref<9x768xbf16, #tpu.memory_space<vmem>>, vector<9x512xbf16>
    %c17_70 = arith.constant 17 : index
    %c0_71 = arith.constant 0 : index
    %c0_72 = arith.constant 0 : index
    %93 = vector.load %arg2[%c17_70, %c0_71, %c0_72] : memref<27x8x9xbf16, #tpu.memory_space<vmem>>, vector<1x8x9xbf16>
    %94 = vector.shape_cast %93 : vector<1x8x9xbf16> to vector<8x9xbf16>
    %cst_73 = arith.constant dense<0.000000e+00> : vector<8x512xf32>
    %95 = tpu.matmul %94, %92, %cst_73 {dimension_numbers = #tpu.dot_dimension_numbers<[1], [0], [0], [1], [0, 0, 1, 1], [], []>} : vector<8x9xbf16>, vector<9x512xbf16>, vector<8x512xf32> -> vector<8x512xf32>
    %96 = arith.addf %91, %95 : vector<8x512xf32>
    %c0_74 = arith.constant 0 : index
    %c217 = arith.constant 217 : index
    %97 = vector.load %arg6[%c0_74, %c217] : memref<9x768xbf16, #tpu.memory_space<vmem>>, vector<9x512xbf16>
    %c18_75 = arith.constant 18 : index
    %c0_76 = arith.constant 0 : index
    %c0_77 = arith.constant 0 : index
    %98 = vector.load %arg2[%c18_75, %c0_76, %c0_77] : memref<27x8x9xbf16, #tpu.memory_space<vmem>>, vector<1x8x9xbf16>
    %99 = vector.shape_cast %98 : vector<1x8x9xbf16> to vector<8x9xbf16>
    %cst_78 = arith.constant dense<0.000000e+00> : vector<8x512xf32>
    %100 = tpu.matmul %99, %97, %cst_78 {dimension_numbers = #tpu.dot_dimension_numbers<[1], [0], [0], [1], [0, 0, 1, 1], [], []>} : vector<8x9xbf16>, vector<9x512xbf16>, vector<8x512xf32> -> vector<8x512xf32>
    %101 = arith.addf %96, %100 : vector<8x512xf32>
    %c0_79 = arith.constant 0 : index
    %c218 = arith.constant 218 : index
    %102 = vector.load %arg6[%c0_79, %c218] : memref<9x768xbf16, #tpu.memory_space<vmem>>, vector<9x512xbf16>
    %c19_80 = arith.constant 19 : index
    %c0_81 = arith.constant 0 : index
    %c0_82 = arith.constant 0 : index
    %103 = vector.load %arg2[%c19_80, %c0_81, %c0_82] : memref<27x8x9xbf16, #tpu.memory_space<vmem>>, vector<1x8x9xbf16>
    %104 = vector.shape_cast %103 : vector<1x8x9xbf16> to vector<8x9xbf16>
    %cst_83 = arith.constant dense<0.000000e+00> : vector<8x512xf32>
    %105 = tpu.matmul %104, %102, %cst_83 {dimension_numbers = #tpu.dot_dimension_numbers<[1], [0], [0], [1], [0, 0, 1, 1], [], []>} : vector<8x9xbf16>, vector<9x512xbf16>, vector<8x512xf32> -> vector<8x512xf32>
    %106 = arith.addf %101, %105 : vector<8x512xf32>
    %c0_84 = arith.constant 0 : index
    %c219 = arith.constant 219 : index
    %107 = vector.load %arg6[%c0_84, %c219] : memref<9x768xbf16, #tpu.memory_space<vmem>>, vector<9x512xbf16>
    %c20 = arith.constant 20 : index
    %c0_85 = arith.constant 0 : index
    %c0_86 = arith.constant 0 : index
    %108 = vector.load %arg2[%c20, %c0_85, %c0_86] : memref<27x8x9xbf16, #tpu.memory_space<vmem>>, vector<1x8x9xbf16>
    %109 = vector.shape_cast %108 : vector<1x8x9xbf16> to vector<8x9xbf16>
    %cst_87 = arith.constant dense<0.000000e+00> : vector<8x512xf32>
    %110 = tpu.matmul %109, %107, %cst_87 {dimension_numbers = #tpu.dot_dimension_numbers<[1], [0], [0], [1], [0, 0, 1, 1], [], []>} : vector<8x9xbf16>, vector<9x512xbf16>, vector<8x512xf32> -> vector<8x512xf32>
    %111 = arith.addf %106, %110 : vector<8x512xf32>
    %c0_88 = arith.constant 0 : index
    %c227 = arith.constant 227 : index
    %112 = vector.load %arg6[%c0_88, %c227] : memref<9x768xbf16, #tpu.memory_space<vmem>>, vector<9x512xbf16>
    %c21 = arith.constant 21 : index
    %c0_89 = arith.constant 0 : index
    %c0_90 = arith.constant 0 : index
    %113 = vector.load %arg2[%c21, %c0_89, %c0_90] : memref<27x8x9xbf16, #tpu.memory_space<vmem>>, vector<1x8x9xbf16>
    %114 = vector.shape_cast %113 : vector<1x8x9xbf16> to vector<8x9xbf16>
    %cst_91 = arith.constant dense<0.000000e+00> : vector<8x512xf32>
    %115 = tpu.matmul %114, %112, %cst_91 {dimension_numbers = #tpu.dot_dimension_numbers<[1], [0], [0], [1], [0, 0, 1, 1], [], []>} : vector<8x9xbf16>, vector<9x512xbf16>, vector<8x512xf32> -> vector<8x512xf32>
    %116 = arith.addf %111, %115 : vector<8x512xf32>
    %c0_92 = arith.constant 0 : index
    %c228 = arith.constant 228 : index
    %117 = vector.load %arg6[%c0_92, %c228] : memref<9x768xbf16, #tpu.memory_space<vmem>>, vector<9x512xbf16>
    %c22 = arith.constant 22 : index
    %c0_93 = arith.constant 0 : index
    %c0_94 = arith.constant 0 : index
    %118 = vector.load %arg2[%c22, %c0_93, %c0_94] : memref<27x8x9xbf16, #tpu.memory_space<vmem>>, vector<1x8x9xbf16>
    %119 = vector.shape_cast %118 : vector<1x8x9xbf16> to vector<8x9xbf16>
    %cst_95 = arith.constant dense<0.000000e+00> : vector<8x512xf32>
    %120 = tpu.matmul %119, %117, %cst_95 {dimension_numbers = #tpu.dot_dimension_numbers<[1], [0], [0], [1], [0, 0, 1, 1], [], []>} : vector<8x9xbf16>, vector<9x512xbf16>, vector<8x512xf32> -> vector<8x512xf32>
    %121 = arith.addf %116, %120 : vector<8x512xf32>
    %c0_96 = arith.constant 0 : index
    %c229 = arith.constant 229 : index
    %122 = vector.load %arg6[%c0_96, %c229] : memref<9x768xbf16, #tpu.memory_space<vmem>>, vector<9x512xbf16>
    %c23 = arith.constant 23 : index
    %c0_97 = arith.constant 0 : index
    %c0_98 = arith.constant 0 : index
    %123 = vector.load %arg2[%c23, %c0_97, %c0_98] : memref<27x8x9xbf16, #tpu.memory_space<vmem>>, vector<1x8x9xbf16>
    %124 = vector.shape_cast %123 : vector<1x8x9xbf16> to vector<8x9xbf16>
    %cst_99 = arith.constant dense<0.000000e+00> : vector<8x512xf32>
    %125 = tpu.matmul %124, %122, %cst_99 {dimension_numbers = #tpu.dot_dimension_numbers<[1], [0], [0], [1], [0, 0, 1, 1], [], []>} : vector<8x9xbf16>, vector<9x512xbf16>, vector<8x512xf32> -> vector<8x512xf32>
    %126 = arith.addf %121, %125 : vector<8x512xf32>
    %c0_100 = arith.constant 0 : index
    %c237 = arith.constant 237 : index
    %127 = vector.load %arg6[%c0_100, %c237] : memref<9x768xbf16, #tpu.memory_space<vmem>>, vector<9x512xbf16>
    %c24 = arith.constant 24 : index
    %c0_101 = arith.constant 0 : index
    %c0_102 = arith.constant 0 : index
    %128 = vector.load %arg2[%c24, %c0_101, %c0_102] : memref<27x8x9xbf16, #tpu.memory_space<vmem>>, vector<1x8x9xbf16>
    %129 = vector.shape_cast %128 : vector<1x8x9xbf16> to vector<8x9xbf16>
    %cst_103 = arith.constant dense<0.000000e+00> : vector<8x512xf32>
    %130 = tpu.matmul %129, %127, %cst_103 {dimension_numbers = #tpu.dot_dimension_numbers<[1], [0], [0], [1], [0, 0, 1, 1], [], []>} : vector<8x9xbf16>, vector<9x512xbf16>, vector<8x512xf32> -> vector<8x512xf32>
    %131 = arith.addf %126, %130 : vector<8x512xf32>
    %c0_104 = arith.constant 0 : index
    %c238 = arith.constant 238 : index
    %132 = vector.load %arg6[%c0_104, %c238] : memref<9x768xbf16, #tpu.memory_space<vmem>>, vector<9x512xbf16>
    %c25 = arith.constant 25 : index
    %c0_105 = arith.constant 0 : index
    %c0_106 = arith.constant 0 : index
    %133 = vector.load %arg2[%c25, %c0_105, %c0_106] : memref<27x8x9xbf16, #tpu.memory_space<vmem>>, vector<1x8x9xbf16>
    %134 = vector.shape_cast %133 : vector<1x8x9xbf16> to vector<8x9xbf16>
    %cst_107 = arith.constant dense<0.000000e+00> : vector<8x512xf32>
    %135 = tpu.matmul %134, %132, %cst_107 {dimension_numbers = #tpu.dot_dimension_numbers<[1], [0], [0], [1], [0, 0, 1, 1], [], []>} : vector<8x9xbf16>, vector<9x512xbf16>, vector<8x512xf32> -> vector<8x512xf32>
    %136 = arith.addf %131, %135 : vector<8x512xf32>
    %c0_108 = arith.constant 0 : index
    %c239 = arith.constant 239 : index
    %137 = vector.load %arg6[%c0_108, %c239] : memref<9x768xbf16, #tpu.memory_space<vmem>>, vector<9x512xbf16>
    %c26 = arith.constant 26 : index
    %c0_109 = arith.constant 0 : index
    %c0_110 = arith.constant 0 : index
    %138 = vector.load %arg2[%c26, %c0_109, %c0_110] : memref<27x8x9xbf16, #tpu.memory_space<vmem>>, vector<1x8x9xbf16>
    %139 = vector.shape_cast %138 : vector<1x8x9xbf16> to vector<8x9xbf16>
    %cst_111 = arith.constant dense<0.000000e+00> : vector<8x512xf32>
    %140 = tpu.matmul %139, %137, %cst_111 {dimension_numbers = #tpu.dot_dimension_numbers<[1], [0], [0], [1], [0, 0, 1, 1], [], []>} : vector<8x9xbf16>, vector<9x512xbf16>, vector<8x512xf32> -> vector<8x512xf32>
    %141 = arith.addf %136, %140 : vector<8x512xf32>
    %c0_112 = arith.constant 0 : index
    %c0_113 = arith.constant 0 : index
    %142 = vector.load %arg3[%c0_112, %c0_113] : memref<9x512xbf16, #tpu.memory_space<vmem>>, vector<8x512xbf16>
    %143 = arith.extf %142 : vector<8x512xbf16> to vector<8x512xf32>
    %144 = arith.addf %141, %143 : vector<8x512xf32>
    %c8_114 = arith.constant 8 : index
    %c128_115 = arith.constant 128 : index
    %145 = vector.load %arg6[%c8_114, %c128_115] : memref<9x768xbf16, #tpu.memory_space<vmem>>, vector<1x512xbf16>
    %cst_116 = arith.constant 0.000000e+00 : bf16
    %146 = vector.broadcast %cst_116 : bf16 to vector<1x512xbf16>
    %147 = arith.cmpf ogt, %145, %146 : vector<1x512xbf16>
    %cst_117 = arith.constant 0.000000e+00 : f32
    %148 = vector.shape_cast %147 : vector<1x512xi1> to vector<1x512xi1>
    %149 = vector.broadcast %148 : vector<1x512xi1> to vector<8x512xi1>
    %150 = vector.broadcast %cst_117 : f32 to vector<8x512xf32>
    %151 = arith.select %149, %144, %150 : vector<8x512xi1>, vector<8x512xf32>
    %cst_118 = arith.constant 1.000000e+00 : f32
    %cst_119 = arith.constant 0.000000e+00 : f32
    %152 = vector.broadcast %cst_118 : f32 to vector<1x512xf32>
    %153 = vector.broadcast %cst_119 : f32 to vector<1x512xf32>
    %154 = arith.select %147, %152, %153 : vector<1x512xi1>, vector<1x512xf32>
    %155 = tpu.concatenate %151, %154 in 0 : vector<8x512xf32>, vector<1x512xf32> -> vector<9x512xf32>
    %156 = arith.truncf %155 : vector<9x512xf32> to vector<9x512xbf16>
    %c0_120 = arith.constant 0 : index
    %c0_121 = arith.constant 0 : index
    %157 = vector.load %arg4[%c0_120, %c0_121] : memref<9x512xbf16, #tpu.memory_space<vmem>>, vector<9x512xbf16>
    tpu.vector_store %arg4[%c0_120, %c0_121], %156 {strides = array<i32>} : memref<9x512xbf16, #tpu.memory_space<vmem>>, vector<9x512xbf16>,
    %cst_122 = arith.constant dense<0.000000e+00> : vector<8xf32>
    %158 = vector.multi_reduction <add>, %151, %cst_122 [1] : vector<8x512xf32> to vector<8xf32>
    %159 = vector.shape_cast %158 : vector<8xf32> to vector<8x1xf32>
    %160 = arith.mulf %151, %151 : vector<8x512xf32>
    %cst_123 = arith.constant dense<0.000000e+00> : vector<8xf32>
    %161 = vector.multi_reduction <add>, %160, %cst_123 [1] : vector<8x512xf32> to vector<8xf32>
    %162 = vector.shape_cast %161 : vector<8xf32> to vector<8x1xf32>
    %163 = tpu.concatenate %159, %162 in 0 : vector<8x1xf32>, vector<8x1xf32> -> vector<16x1xf32>
    %164 = vector.shape_cast %163 : vector<16x1xf32> to vector<16x1xf32>
    %165 = vector.broadcast %164 : vector<16x1xf32> to vector<16x128xf32>
    %c0_124 = arith.constant 0 : index
    %c0_125 = arith.constant 0 : index
    %c0_126 = arith.constant 0 : index
    %166 = vector.load %arg5[%c0_124, %c0_125, %c0_126] : memref<1x16x128xf32, #tpu.memory_space<vmem>>, vector<1x16x128xf32>
    %167 = vector.shape_cast %166 : vector<1x16x128xf32> to vector<16x128xf32>
    %168 = vector.shape_cast %165 : vector<16x128xf32> to vector<1x16x128xf32>
    tpu.vector_store %arg5[%c0_124, %c0_125, %c0_126], %168 {strides = array<i32>} : memref<1x16x128xf32, #tpu.memory_space<vmem>>, vector<1x16x128xf32>,
    return
  }
  func.func @transform_1(%arg0: i32) -> (i32, i32, i32) {
    %c0_i32 = arith.constant 0 : i32
    %c0_i32_0 = arith.constant 0 : i32
    %c0_i32_1 = arith.constant 0 : i32
    %c0_i32_2 = arith.constant 0 : i32
    return %c0_i32, %c0_i32_0, %c0_i32_1 : i32, i32, i32
  }
  func.func @transform_2(%arg0: i32) -> (i32, i32) {
    %c1_i32 = arith.constant 1 : i32
    %0 = arith.addi %arg0, %c1_i32 : i32
    %c0_i32 = arith.constant 0 : i32
    %c0_i32_0 = arith.constant 0 : i32
    return %c0_i32, %0 : i32, i32
  }
  func.func @transform_3(%arg0: i32) -> (i32, i32) {
    %c1_i32 = arith.constant 1 : i32
    %0 = arith.addi %arg0, %c1_i32 : i32
    %c0_i32 = arith.constant 0 : i32
    %c0_i32_0 = arith.constant 0 : i32
    return %c0_i32, %0 : i32, i32
  }
  func.func @transform_4(%arg0: i32) -> (i32, i32, i32) {
    %c0_i32 = arith.constant 0 : i32
    %c0_i32_0 = arith.constant 0 : i32
    %c0_i32_1 = arith.constant 0 : i32
    return %arg0, %c0_i32, %c0_i32_0 : i32, i32, i32
  }
}

module attributes {stable_mosaic.version = 11 : i64} {
  func.func @kernel(%arg0: i32, %arg1: memref<9x3072xbf16, #tpu.memory_space<any>>, %arg2: memref<9x8x9xbf16, #tpu.memory_space<vmem>>, %arg3: memref<9x512xbf16, #tpu.memory_space<vmem>>, %arg4: memref<1x16x128xf32, #tpu.memory_space<vmem>>, %arg5: memref<9x768xbf16, #tpu.memory_space<vmem>>, %arg6: memref<!tpu.dma_semaphore, #tpu.memory_space<semaphore_mem>>) attributes {dimension_semantics = [#tpu.dimension_semantics<parallel>], iteration_bounds = array<i64: 4>, scalar_prefetch = 0 : i64, scratch_operands = 2 : i64, tpu.core_type = #tpu.core_type<tc>, window_params = [{}, {pipeline_mode = #tpu.pipeline_mode<synchronous>, transform_indices = @transform_1, window_bounds = array<i64: 9, 8, 9>}, {transform_indices = @transform_2, window_bounds = array<i64: 9, 512>}, {transform_indices = @transform_3, window_bounds = array<i64: 1, 16, 128>}]} {
    %c1_i32 = arith.constant 1 : i32
    %0 = arith.addi %arg0, %c1_i32 : i32
    %c512_i32 = arith.constant 512 : i32
    %1 = arith.muli %0, %c512_i32 : i32
    %c128_i32 = arith.constant 128 : i32
    %2 = arith.subi %1, %c128_i32 : i32
    %3 = tpu.assume_multiple %2, 128 : i32
    %c0_i32 = arith.constant 0 : i32
    %4 = tpu.memref_slice %arg1[%c0_i32, %3] : memref<9x3072xbf16, #tpu.memory_space<any>> -> memref<9x768xbf16, #tpu.memory_space<any>>
    tpu.enqueue_dma source(%4 : memref<9x768xbf16, #tpu.memory_space<any>>) target(%arg5 : memref<9x768xbf16, #tpu.memory_space<vmem>>) target_semaphore(%arg6 : memref<!tpu.dma_semaphore, #tpu.memory_space<semaphore_mem>>)
    %c0_i32_0 = arith.constant 0 : i32
    %5 = tpu.memref_slice %arg1[%c0_i32_0, %3] : memref<9x3072xbf16, #tpu.memory_space<any>> -> memref<9x768xbf16, #tpu.memory_space<any>>
    tpu.wait_dma2 semaphore(%arg6 : memref<!tpu.dma_semaphore, #tpu.memory_space<semaphore_mem>>) src(%5 : memref<9x768xbf16, #tpu.memory_space<any>>) dst(%arg5 : memref<9x768xbf16, #tpu.memory_space<vmem>>)
    %cst = arith.constant 0.000000e+00 : f32
    %6 = vector.broadcast %cst : f32 to vector<8x512xf32>
    %c0 = arith.constant 0 : index
    %c117 = arith.constant 117 : index
    %7 = vector.load %arg5[%c0, %c117] : memref<9x768xbf16, #tpu.memory_space<vmem>>, vector<9x512xbf16>
    %c0_1 = arith.constant 0 : index
    %c0_2 = arith.constant 0 : index
    %c0_3 = arith.constant 0 : index
    %8 = vector.load %arg2[%c0_1, %c0_2, %c0_3] : memref<9x8x9xbf16, #tpu.memory_space<vmem>>, vector<1x8x9xbf16>
    %9 = vector.shape_cast %8 : vector<1x8x9xbf16> to vector<8x9xbf16>
    %cst_4 = arith.constant dense<0.000000e+00> : vector<8x512xf32>
    %10 = tpu.matmul %9, %7, %cst_4 {dimension_numbers = #tpu.dot_dimension_numbers<[1], [0], [0], [1], [0, 0, 1, 1], [], []>} : vector<8x9xbf16>, vector<9x512xbf16>, vector<8x512xf32> -> vector<8x512xf32>
    %11 = arith.addf %6, %10 : vector<8x512xf32>
    %c0_5 = arith.constant 0 : index
    %c118 = arith.constant 118 : index
    %12 = vector.load %arg5[%c0_5, %c118] : memref<9x768xbf16, #tpu.memory_space<vmem>>, vector<9x512xbf16>
    %c1 = arith.constant 1 : index
    %c0_6 = arith.constant 0 : index
    %c0_7 = arith.constant 0 : index
    %13 = vector.load %arg2[%c1, %c0_6, %c0_7] : memref<9x8x9xbf16, #tpu.memory_space<vmem>>, vector<1x8x9xbf16>
    %14 = vector.shape_cast %13 : vector<1x8x9xbf16> to vector<8x9xbf16>
    %cst_8 = arith.constant dense<0.000000e+00> : vector<8x512xf32>
    %15 = tpu.matmul %14, %12, %cst_8 {dimension_numbers = #tpu.dot_dimension_numbers<[1], [0], [0], [1], [0, 0, 1, 1], [], []>} : vector<8x9xbf16>, vector<9x512xbf16>, vector<8x512xf32> -> vector<8x512xf32>
    %16 = arith.addf %11, %15 : vector<8x512xf32>
    %c0_9 = arith.constant 0 : index
    %c119 = arith.constant 119 : index
    %17 = vector.load %arg5[%c0_9, %c119] : memref<9x768xbf16, #tpu.memory_space<vmem>>, vector<9x512xbf16>
    %c2 = arith.constant 2 : index
    %c0_10 = arith.constant 0 : index
    %c0_11 = arith.constant 0 : index
    %18 = vector.load %arg2[%c2, %c0_10, %c0_11] : memref<9x8x9xbf16, #tpu.memory_space<vmem>>, vector<1x8x9xbf16>
    %19 = vector.shape_cast %18 : vector<1x8x9xbf16> to vector<8x9xbf16>
    %cst_12 = arith.constant dense<0.000000e+00> : vector<8x512xf32>
    %20 = tpu.matmul %19, %17, %cst_12 {dimension_numbers = #tpu.dot_dimension_numbers<[1], [0], [0], [1], [0, 0, 1, 1], [], []>} : vector<8x9xbf16>, vector<9x512xbf16>, vector<8x512xf32> -> vector<8x512xf32>
    %21 = arith.addf %16, %20 : vector<8x512xf32>
    %c0_13 = arith.constant 0 : index
    %c127 = arith.constant 127 : index
    %22 = vector.load %arg5[%c0_13, %c127] : memref<9x768xbf16, #tpu.memory_space<vmem>>, vector<9x512xbf16>
    %c3 = arith.constant 3 : index
    %c0_14 = arith.constant 0 : index
    %c0_15 = arith.constant 0 : index
    %23 = vector.load %arg2[%c3, %c0_14, %c0_15] : memref<9x8x9xbf16, #tpu.memory_space<vmem>>, vector<1x8x9xbf16>
    %24 = vector.shape_cast %23 : vector<1x8x9xbf16> to vector<8x9xbf16>
    %cst_16 = arith.constant dense<0.000000e+00> : vector<8x512xf32>
    %25 = tpu.matmul %24, %22, %cst_16 {dimension_numbers = #tpu.dot_dimension_numbers<[1], [0], [0], [1], [0, 0, 1, 1], [], []>} : vector<8x9xbf16>, vector<9x512xbf16>, vector<8x512xf32> -> vector<8x512xf32>
    %26 = arith.addf %21, %25 : vector<8x512xf32>
    %c0_17 = arith.constant 0 : index
    %c128 = arith.constant 128 : index
    %27 = vector.load %arg5[%c0_17, %c128] : memref<9x768xbf16, #tpu.memory_space<vmem>>, vector<9x512xbf16>
    %c4 = arith.constant 4 : index
    %c0_18 = arith.constant 0 : index
    %c0_19 = arith.constant 0 : index
    %28 = vector.load %arg2[%c4, %c0_18, %c0_19] : memref<9x8x9xbf16, #tpu.memory_space<vmem>>, vector<1x8x9xbf16>
    %29 = vector.shape_cast %28 : vector<1x8x9xbf16> to vector<8x9xbf16>
    %cst_20 = arith.constant dense<0.000000e+00> : vector<8x512xf32>
    %30 = tpu.matmul %29, %27, %cst_20 {dimension_numbers = #tpu.dot_dimension_numbers<[1], [0], [0], [1], [0, 0, 1, 1], [], []>} : vector<8x9xbf16>, vector<9x512xbf16>, vector<8x512xf32> -> vector<8x512xf32>
    %31 = arith.addf %26, %30 : vector<8x512xf32>
    %c0_21 = arith.constant 0 : index
    %c129 = arith.constant 129 : index
    %32 = vector.load %arg5[%c0_21, %c129] : memref<9x768xbf16, #tpu.memory_space<vmem>>, vector<9x512xbf16>
    %c5 = arith.constant 5 : index
    %c0_22 = arith.constant 0 : index
    %c0_23 = arith.constant 0 : index
    %33 = vector.load %arg2[%c5, %c0_22, %c0_23] : memref<9x8x9xbf16, #tpu.memory_space<vmem>>, vector<1x8x9xbf16>
    %34 = vector.shape_cast %33 : vector<1x8x9xbf16> to vector<8x9xbf16>
    %cst_24 = arith.constant dense<0.000000e+00> : vector<8x512xf32>
    %35 = tpu.matmul %34, %32, %cst_24 {dimension_numbers = #tpu.dot_dimension_numbers<[1], [0], [0], [1], [0, 0, 1, 1], [], []>} : vector<8x9xbf16>, vector<9x512xbf16>, vector<8x512xf32> -> vector<8x512xf32>
    %36 = arith.addf %31, %35 : vector<8x512xf32>
    %c0_25 = arith.constant 0 : index
    %c137 = arith.constant 137 : index
    %37 = vector.load %arg5[%c0_25, %c137] : memref<9x768xbf16, #tpu.memory_space<vmem>>, vector<9x512xbf16>
    %c6 = arith.constant 6 : index
    %c0_26 = arith.constant 0 : index
    %c0_27 = arith.constant 0 : index
    %38 = vector.load %arg2[%c6, %c0_26, %c0_27] : memref<9x8x9xbf16, #tpu.memory_space<vmem>>, vector<1x8x9xbf16>
    %39 = vector.shape_cast %38 : vector<1x8x9xbf16> to vector<8x9xbf16>
    %cst_28 = arith.constant dense<0.000000e+00> : vector<8x512xf32>
    %40 = tpu.matmul %39, %37, %cst_28 {dimension_numbers = #tpu.dot_dimension_numbers<[1], [0], [0], [1], [0, 0, 1, 1], [], []>} : vector<8x9xbf16>, vector<9x512xbf16>, vector<8x512xf32> -> vector<8x512xf32>
    %41 = arith.addf %36, %40 : vector<8x512xf32>
    %c0_29 = arith.constant 0 : index
    %c138 = arith.constant 138 : index
    %42 = vector.load %arg5[%c0_29, %c138] : memref<9x768xbf16, #tpu.memory_space<vmem>>, vector<9x512xbf16>
    %c7 = arith.constant 7 : index
    %c0_30 = arith.constant 0 : index
    %c0_31 = arith.constant 0 : index
    %43 = vector.load %arg2[%c7, %c0_30, %c0_31] : memref<9x8x9xbf16, #tpu.memory_space<vmem>>, vector<1x8x9xbf16>
    %44 = vector.shape_cast %43 : vector<1x8x9xbf16> to vector<8x9xbf16>
    %cst_32 = arith.constant dense<0.000000e+00> : vector<8x512xf32>
    %45 = tpu.matmul %44, %42, %cst_32 {dimension_numbers = #tpu.dot_dimension_numbers<[1], [0], [0], [1], [0, 0, 1, 1], [], []>} : vector<8x9xbf16>, vector<9x512xbf16>, vector<8x512xf32> -> vector<8x512xf32>
    %46 = arith.addf %41, %45 : vector<8x512xf32>
    %c0_33 = arith.constant 0 : index
    %c139 = arith.constant 139 : index
    %47 = vector.load %arg5[%c0_33, %c139] : memref<9x768xbf16, #tpu.memory_space<vmem>>, vector<9x512xbf16>
    %c8 = arith.constant 8 : index
    %c0_34 = arith.constant 0 : index
    %c0_35 = arith.constant 0 : index
    %48 = vector.load %arg2[%c8, %c0_34, %c0_35] : memref<9x8x9xbf16, #tpu.memory_space<vmem>>, vector<1x8x9xbf16>
    %49 = vector.shape_cast %48 : vector<1x8x9xbf16> to vector<8x9xbf16>
    %cst_36 = arith.constant dense<0.000000e+00> : vector<8x512xf32>
    %50 = tpu.matmul %49, %47, %cst_36 {dimension_numbers = #tpu.dot_dimension_numbers<[1], [0], [0], [1], [0, 0, 1, 1], [], []>} : vector<8x9xbf16>, vector<9x512xbf16>, vector<8x512xf32> -> vector<8x512xf32>
    %51 = arith.addf %46, %50 : vector<8x512xf32>
    %cst_37 = arith.constant 0.000000e+00 : f32
    %52 = vector.broadcast %cst_37 : f32 to vector<8x512xf32>
    %53 = arith.cmpf oge, %51, %52 : vector<8x512xf32>
    %cst_38 = arith.constant 0.00999999977 : f32
    %54 = vector.broadcast %cst_38 : f32 to vector<8x512xf32>
    %55 = arith.mulf %54, %51 : vector<8x512xf32>
    %56 = arith.select %53, %51, %55 : vector<8x512xi1>, vector<8x512xf32>
    %c8_39 = arith.constant 8 : index
    %c128_40 = arith.constant 128 : index
    %57 = vector.load %arg5[%c8_39, %c128_40] : memref<9x768xbf16, #tpu.memory_space<vmem>>, vector<1x512xbf16>
    %cst_41 = arith.constant 0.000000e+00 : bf16
    %58 = vector.broadcast %cst_41 : bf16 to vector<1x512xbf16>
    %59 = arith.cmpf ogt, %57, %58 : vector<1x512xbf16>
    %cst_42 = arith.constant 0.000000e+00 : f32
    %60 = vector.shape_cast %59 : vector<1x512xi1> to vector<1x512xi1>
    %61 = vector.broadcast %60 : vector<1x512xi1> to vector<8x512xi1>
    %62 = vector.broadcast %cst_42 : f32 to vector<8x512xf32>
    %63 = arith.select %61, %56, %62 : vector<8x512xi1>, vector<8x512xf32>
    %cst_43 = arith.constant 1.000000e+00 : f32
    %cst_44 = arith.constant 0.000000e+00 : f32
    %64 = vector.broadcast %cst_43 : f32 to vector<1x512xf32>
    %65 = vector.broadcast %cst_44 : f32 to vector<1x512xf32>
    %66 = arith.select %59, %64, %65 : vector<1x512xi1>, vector<1x512xf32>
    %67 = tpu.concatenate %63, %66 in 0 : vector<8x512xf32>, vector<1x512xf32> -> vector<9x512xf32>
    %68 = arith.truncf %67 : vector<9x512xf32> to vector<9x512xbf16>
    %c0_45 = arith.constant 0 : index
    %c0_46 = arith.constant 0 : index
    %69 = vector.load %arg3[%c0_45, %c0_46] : memref<9x512xbf16, #tpu.memory_space<vmem>>, vector<9x512xbf16>
    tpu.vector_store %arg3[%c0_45, %c0_46], %68 {strides = array<i32>} : memref<9x512xbf16, #tpu.memory_space<vmem>>, vector<9x512xbf16>,
    %cst_47 = arith.constant dense<0.000000e+00> : vector<8xf32>
    %70 = vector.multi_reduction <add>, %63, %cst_47 [1] : vector<8x512xf32> to vector<8xf32>
    %71 = vector.shape_cast %70 : vector<8xf32> to vector<8x1xf32>
    %72 = arith.mulf %63, %63 : vector<8x512xf32>
    %cst_48 = arith.constant dense<0.000000e+00> : vector<8xf32>
    %73 = vector.multi_reduction <add>, %72, %cst_48 [1] : vector<8x512xf32> to vector<8xf32>
    %74 = vector.shape_cast %73 : vector<8xf32> to vector<8x1xf32>
    %75 = tpu.concatenate %71, %74 in 0 : vector<8x1xf32>, vector<8x1xf32> -> vector<16x1xf32>
    %76 = vector.shape_cast %75 : vector<16x1xf32> to vector<16x1xf32>
    %77 = vector.broadcast %76 : vector<16x1xf32> to vector<16x128xf32>
    %c0_49 = arith.constant 0 : index
    %c0_50 = arith.constant 0 : index
    %c0_51 = arith.constant 0 : index
    %78 = vector.load %arg4[%c0_49, %c0_50, %c0_51] : memref<1x16x128xf32, #tpu.memory_space<vmem>>, vector<1x16x128xf32>
    %79 = vector.shape_cast %78 : vector<1x16x128xf32> to vector<16x128xf32>
    %80 = vector.shape_cast %77 : vector<16x128xf32> to vector<1x16x128xf32>
    tpu.vector_store %arg4[%c0_49, %c0_50, %c0_51], %80 {strides = array<i32>} : memref<1x16x128xf32, #tpu.memory_space<vmem>>, vector<1x16x128xf32>,
    return
  }
  func.func @transform_1(%arg0: i32) -> (i32, i32, i32) {
    %c0_i32 = arith.constant 0 : i32
    %c0_i32_0 = arith.constant 0 : i32
    %c0_i32_1 = arith.constant 0 : i32
    %c0_i32_2 = arith.constant 0 : i32
    return %c0_i32, %c0_i32_0, %c0_i32_1 : i32, i32, i32
  }
  func.func @transform_2(%arg0: i32) -> (i32, i32) {
    %c1_i32 = arith.constant 1 : i32
    %0 = arith.addi %arg0, %c1_i32 : i32
    %c0_i32 = arith.constant 0 : i32
    %c0_i32_0 = arith.constant 0 : i32
    return %c0_i32, %0 : i32, i32
  }
  func.func @transform_3(%arg0: i32) -> (i32, i32, i32) {
    %c0_i32 = arith.constant 0 : i32
    %c0_i32_0 = arith.constant 0 : i32
    %c0_i32_1 = arith.constant 0 : i32
    return %arg0, %c0_i32, %c0_i32_0 : i32, i32, i32
  }
}

module attributes {stable_mosaic.version = 11 : i64} {
  func.func @kernel(%arg0: i32, %arg1: memref<9x3072xbf16, #tpu.memory_space<any>>, %arg2: memref<9x8x9xbf16, #tpu.memory_space<vmem>>, %arg3: memref<9x512xbf16, #tpu.memory_space<vmem>>, %arg4: memref<1x16x128xf32, #tpu.memory_space<vmem>>, %arg5: memref<9x768xbf16, #tpu.memory_space<vmem>>, %arg6: memref<!tpu.dma_semaphore, #tpu.memory_space<semaphore_mem>>) attributes {dimension_semantics = [#tpu.dimension_semantics<parallel>], iteration_bounds = array<i64: 4>, scalar_prefetch = 0 : i64, scratch_operands = 2 : i64, tpu.core_type = #tpu.core_type<tc>, window_params = [{}, {pipeline_mode = #tpu.pipeline_mode<synchronous>, transform_indices = @transform_1, window_bounds = array<i64: 9, 8, 9>}, {transform_indices = @transform_2, window_bounds = array<i64: 9, 512>}, {transform_indices = @transform_3, window_bounds = array<i64: 1, 16, 128>}]} {
    %c1_i32 = arith.constant 1 : i32
    %0 = arith.addi %arg0, %c1_i32 : i32
    %c512_i32 = arith.constant 512 : i32
    %1 = arith.muli %0, %c512_i32 : i32
    %c128_i32 = arith.constant 128 : i32
    %2 = arith.subi %1, %c128_i32 : i32
    %3 = tpu.assume_multiple %2, 128 : i32
    %c0_i32 = arith.constant 0 : i32
    %4 = tpu.memref_slice %arg1[%c0_i32, %3] : memref<9x3072xbf16, #tpu.memory_space<any>> -> memref<9x768xbf16, #tpu.memory_space<any>>
    tpu.enqueue_dma source(%4 : memref<9x768xbf16, #tpu.memory_space<any>>) target(%arg5 : memref<9x768xbf16, #tpu.memory_space<vmem>>) target_semaphore(%arg6 : memref<!tpu.dma_semaphore, #tpu.memory_space<semaphore_mem>>)
    %c0_i32_0 = arith.constant 0 : i32
    %5 = tpu.memref_slice %arg1[%c0_i32_0, %3] : memref<9x3072xbf16, #tpu.memory_space<any>> -> memref<9x768xbf16, #tpu.memory_space<any>>
    tpu.wait_dma2 semaphore(%arg6 : memref<!tpu.dma_semaphore, #tpu.memory_space<semaphore_mem>>) src(%5 : memref<9x768xbf16, #tpu.memory_space<any>>) dst(%arg5 : memref<9x768xbf16, #tpu.memory_space<vmem>>)
    %cst = arith.constant 0.000000e+00 : f32
    %6 = vector.broadcast %cst : f32 to vector<8x512xf32>
    %c0 = arith.constant 0 : index
    %c27 = arith.constant 27 : index
    %7 = vector.load %arg5[%c0, %c27] : memref<9x768xbf16, #tpu.memory_space<vmem>>, vector<9x512xbf16>
    %c0_1 = arith.constant 0 : index
    %c0_2 = arith.constant 0 : index
    %c0_3 = arith.constant 0 : index
    %8 = vector.load %arg2[%c0_1, %c0_2, %c0_3] : memref<9x8x9xbf16, #tpu.memory_space<vmem>>, vector<1x8x9xbf16>
    %9 = vector.shape_cast %8 : vector<1x8x9xbf16> to vector<8x9xbf16>
    %cst_4 = arith.constant dense<0.000000e+00> : vector<8x512xf32>
    %10 = tpu.matmul %9, %7, %cst_4 {dimension_numbers = #tpu.dot_dimension_numbers<[1], [0], [0], [1], [0, 0, 1, 1], [], []>} : vector<8x9xbf16>, vector<9x512xbf16>, vector<8x512xf32> -> vector<8x512xf32>
    %11 = arith.addf %6, %10 : vector<8x512xf32>
    %c0_5 = arith.constant 0 : index
    %c28 = arith.constant 28 : index
    %12 = vector.load %arg5[%c0_5, %c28] : memref<9x768xbf16, #tpu.memory_space<vmem>>, vector<9x512xbf16>
    %c1 = arith.constant 1 : index
    %c0_6 = arith.constant 0 : index
    %c0_7 = arith.constant 0 : index
    %13 = vector.load %arg2[%c1, %c0_6, %c0_7] : memref<9x8x9xbf16, #tpu.memory_space<vmem>>, vector<1x8x9xbf16>
    %14 = vector.shape_cast %13 : vector<1x8x9xbf16> to vector<8x9xbf16>
    %cst_8 = arith.constant dense<0.000000e+00> : vector<8x512xf32>
    %15 = tpu.matmul %14, %12, %cst_8 {dimension_numbers = #tpu.dot_dimension_numbers<[1], [0], [0], [1], [0, 0, 1, 1], [], []>} : vector<8x9xbf16>, vector<9x512xbf16>, vector<8x512xf32> -> vector<8x512xf32>
    %16 = arith.addf %11, %15 : vector<8x512xf32>
    %c0_9 = arith.constant 0 : index
    %c29 = arith.constant 29 : index
    %17 = vector.load %arg5[%c0_9, %c29] : memref<9x768xbf16, #tpu.memory_space<vmem>>, vector<9x512xbf16>
    %c2 = arith.constant 2 : index
    %c0_10 = arith.constant 0 : index
    %c0_11 = arith.constant 0 : index
    %18 = vector.load %arg2[%c2, %c0_10, %c0_11] : memref<9x8x9xbf16, #tpu.memory_space<vmem>>, vector<1x8x9xbf16>
    %19 = vector.shape_cast %18 : vector<1x8x9xbf16> to vector<8x9xbf16>
    %cst_12 = arith.constant dense<0.000000e+00> : vector<8x512xf32>
    %20 = tpu.matmul %19, %17, %cst_12 {dimension_numbers = #tpu.dot_dimension_numbers<[1], [0], [0], [1], [0, 0, 1, 1], [], []>} : vector<8x9xbf16>, vector<9x512xbf16>, vector<8x512xf32> -> vector<8x512xf32>
    %21 = arith.addf %16, %20 : vector<8x512xf32>
    %c0_13 = arith.constant 0 : index
    %c127 = arith.constant 127 : index
    %22 = vector.load %arg5[%c0_13, %c127] : memref<9x768xbf16, #tpu.memory_space<vmem>>, vector<9x512xbf16>
    %c3 = arith.constant 3 : index
    %c0_14 = arith.constant 0 : index
    %c0_15 = arith.constant 0 : index
    %23 = vector.load %arg2[%c3, %c0_14, %c0_15] : memref<9x8x9xbf16, #tpu.memory_space<vmem>>, vector<1x8x9xbf16>
    %24 = vector.shape_cast %23 : vector<1x8x9xbf16> to vector<8x9xbf16>
    %cst_16 = arith.constant dense<0.000000e+00> : vector<8x512xf32>
    %25 = tpu.matmul %24, %22, %cst_16 {dimension_numbers = #tpu.dot_dimension_numbers<[1], [0], [0], [1], [0, 0, 1, 1], [], []>} : vector<8x9xbf16>, vector<9x512xbf16>, vector<8x512xf32> -> vector<8x512xf32>
    %26 = arith.addf %21, %25 : vector<8x512xf32>
    %c0_17 = arith.constant 0 : index
    %c128 = arith.constant 128 : index
    %27 = vector.load %arg5[%c0_17, %c128] : memref<9x768xbf16, #tpu.memory_space<vmem>>, vector<9x512xbf16>
    %c4 = arith.constant 4 : index
    %c0_18 = arith.constant 0 : index
    %c0_19 = arith.constant 0 : index
    %28 = vector.load %arg2[%c4, %c0_18, %c0_19] : memref<9x8x9xbf16, #tpu.memory_space<vmem>>, vector<1x8x9xbf16>
    %29 = vector.shape_cast %28 : vector<1x8x9xbf16> to vector<8x9xbf16>
    %cst_20 = arith.constant dense<0.000000e+00> : vector<8x512xf32>
    %30 = tpu.matmul %29, %27, %cst_20 {dimension_numbers = #tpu.dot_dimension_numbers<[1], [0], [0], [1], [0, 0, 1, 1], [], []>} : vector<8x9xbf16>, vector<9x512xbf16>, vector<8x512xf32> -> vector<8x512xf32>
    %31 = arith.addf %26, %30 : vector<8x512xf32>
    %c0_21 = arith.constant 0 : index
    %c129 = arith.constant 129 : index
    %32 = vector.load %arg5[%c0_21, %c129] : memref<9x768xbf16, #tpu.memory_space<vmem>>, vector<9x512xbf16>
    %c5 = arith.constant 5 : index
    %c0_22 = arith.constant 0 : index
    %c0_23 = arith.constant 0 : index
    %33 = vector.load %arg2[%c5, %c0_22, %c0_23] : memref<9x8x9xbf16, #tpu.memory_space<vmem>>, vector<1x8x9xbf16>
    %34 = vector.shape_cast %33 : vector<1x8x9xbf16> to vector<8x9xbf16>
    %cst_24 = arith.constant dense<0.000000e+00> : vector<8x512xf32>
    %35 = tpu.matmul %34, %32, %cst_24 {dimension_numbers = #tpu.dot_dimension_numbers<[1], [0], [0], [1], [0, 0, 1, 1], [], []>} : vector<8x9xbf16>, vector<9x512xbf16>, vector<8x512xf32> -> vector<8x512xf32>
    %36 = arith.addf %31, %35 : vector<8x512xf32>
    %c0_25 = arith.constant 0 : index
    %c227 = arith.constant 227 : index
    %37 = vector.load %arg5[%c0_25, %c227] : memref<9x768xbf16, #tpu.memory_space<vmem>>, vector<9x512xbf16>
    %c6 = arith.constant 6 : index
    %c0_26 = arith.constant 0 : index
    %c0_27 = arith.constant 0 : index
    %38 = vector.load %arg2[%c6, %c0_26, %c0_27] : memref<9x8x9xbf16, #tpu.memory_space<vmem>>, vector<1x8x9xbf16>
    %39 = vector.shape_cast %38 : vector<1x8x9xbf16> to vector<8x9xbf16>
    %cst_28 = arith.constant dense<0.000000e+00> : vector<8x512xf32>
    %40 = tpu.matmul %39, %37, %cst_28 {dimension_numbers = #tpu.dot_dimension_numbers<[1], [0], [0], [1], [0, 0, 1, 1], [], []>} : vector<8x9xbf16>, vector<9x512xbf16>, vector<8x512xf32> -> vector<8x512xf32>
    %41 = arith.addf %36, %40 : vector<8x512xf32>
    %c0_29 = arith.constant 0 : index
    %c228 = arith.constant 228 : index
    %42 = vector.load %arg5[%c0_29, %c228] : memref<9x768xbf16, #tpu.memory_space<vmem>>, vector<9x512xbf16>
    %c7 = arith.constant 7 : index
    %c0_30 = arith.constant 0 : index
    %c0_31 = arith.constant 0 : index
    %43 = vector.load %arg2[%c7, %c0_30, %c0_31] : memref<9x8x9xbf16, #tpu.memory_space<vmem>>, vector<1x8x9xbf16>
    %44 = vector.shape_cast %43 : vector<1x8x9xbf16> to vector<8x9xbf16>
    %cst_32 = arith.constant dense<0.000000e+00> : vector<8x512xf32>
    %45 = tpu.matmul %44, %42, %cst_32 {dimension_numbers = #tpu.dot_dimension_numbers<[1], [0], [0], [1], [0, 0, 1, 1], [], []>} : vector<8x9xbf16>, vector<9x512xbf16>, vector<8x512xf32> -> vector<8x512xf32>
    %46 = arith.addf %41, %45 : vector<8x512xf32>
    %c0_33 = arith.constant 0 : index
    %c229 = arith.constant 229 : index
    %47 = vector.load %arg5[%c0_33, %c229] : memref<9x768xbf16, #tpu.memory_space<vmem>>, vector<9x512xbf16>
    %c8 = arith.constant 8 : index
    %c0_34 = arith.constant 0 : index
    %c0_35 = arith.constant 0 : index
    %48 = vector.load %arg2[%c8, %c0_34, %c0_35] : memref<9x8x9xbf16, #tpu.memory_space<vmem>>, vector<1x8x9xbf16>
    %49 = vector.shape_cast %48 : vector<1x8x9xbf16> to vector<8x9xbf16>
    %cst_36 = arith.constant dense<0.000000e+00> : vector<8x512xf32>
    %50 = tpu.matmul %49, %47, %cst_36 {dimension_numbers = #tpu.dot_dimension_numbers<[1], [0], [0], [1], [0, 0, 1, 1], [], []>} : vector<8x9xbf16>, vector<9x512xbf16>, vector<8x512xf32> -> vector<8x512xf32>
    %51 = arith.addf %46, %50 : vector<8x512xf32>
    %cst_37 = arith.constant 0.000000e+00 : f32
    %52 = vector.broadcast %cst_37 : f32 to vector<8x512xf32>
    %53 = arith.cmpf oge, %51, %52 : vector<8x512xf32>
    %cst_38 = arith.constant 0.00999999977 : f32
    %54 = vector.broadcast %cst_38 : f32 to vector<8x512xf32>
    %55 = arith.mulf %54, %51 : vector<8x512xf32>
    %56 = arith.select %53, %51, %55 : vector<8x512xi1>, vector<8x512xf32>
    %c8_39 = arith.constant 8 : index
    %c128_40 = arith.constant 128 : index
    %57 = vector.load %arg5[%c8_39, %c128_40] : memref<9x768xbf16, #tpu.memory_space<vmem>>, vector<1x512xbf16>
    %cst_41 = arith.constant 0.000000e+00 : bf16
    %58 = vector.broadcast %cst_41 : bf16 to vector<1x512xbf16>
    %59 = arith.cmpf ogt, %57, %58 : vector<1x512xbf16>
    %cst_42 = arith.constant 0.000000e+00 : f32
    %60 = vector.shape_cast %59 : vector<1x512xi1> to vector<1x512xi1>
    %61 = vector.broadcast %60 : vector<1x512xi1> to vector<8x512xi1>
    %62 = vector.broadcast %cst_42 : f32 to vector<8x512xf32>
    %63 = arith.select %61, %56, %62 : vector<8x512xi1>, vector<8x512xf32>
    %cst_43 = arith.constant 1.000000e+00 : f32
    %cst_44 = arith.constant 0.000000e+00 : f32
    %64 = vector.broadcast %cst_43 : f32 to vector<1x512xf32>
    %65 = vector.broadcast %cst_44 : f32 to vector<1x512xf32>
    %66 = arith.select %59, %64, %65 : vector<1x512xi1>, vector<1x512xf32>
    %67 = tpu.concatenate %63, %66 in 0 : vector<8x512xf32>, vector<1x512xf32> -> vector<9x512xf32>
    %68 = arith.truncf %67 : vector<9x512xf32> to vector<9x512xbf16>
    %c0_45 = arith.constant 0 : index
    %c0_46 = arith.constant 0 : index
    %69 = vector.load %arg3[%c0_45, %c0_46] : memref<9x512xbf16, #tpu.memory_space<vmem>>, vector<9x512xbf16>
    tpu.vector_store %arg3[%c0_45, %c0_46], %68 {strides = array<i32>} : memref<9x512xbf16, #tpu.memory_space<vmem>>, vector<9x512xbf16>,
    %cst_47 = arith.constant dense<0.000000e+00> : vector<8xf32>
    %70 = vector.multi_reduction <add>, %63, %cst_47 [1] : vector<8x512xf32> to vector<8xf32>
    %71 = vector.shape_cast %70 : vector<8xf32> to vector<8x1xf32>
    %72 = arith.mulf %63, %63 : vector<8x512xf32>
    %cst_48 = arith.constant dense<0.000000e+00> : vector<8xf32>
    %73 = vector.multi_reduction <add>, %72, %cst_48 [1] : vector<8x512xf32> to vector<8xf32>
    %74 = vector.shape_cast %73 : vector<8xf32> to vector<8x1xf32>
    %75 = tpu.concatenate %71, %74 in 0 : vector<8x1xf32>, vector<8x1xf32> -> vector<16x1xf32>
    %76 = vector.shape_cast %75 : vector<16x1xf32> to vector<16x1xf32>
    %77 = vector.broadcast %76 : vector<16x1xf32> to vector<16x128xf32>
    %c0_49 = arith.constant 0 : index
    %c0_50 = arith.constant 0 : index
    %c0_51 = arith.constant 0 : index
    %78 = vector.load %arg4[%c0_49, %c0_50, %c0_51] : memref<1x16x128xf32, #tpu.memory_space<vmem>>, vector<1x16x128xf32>
    %79 = vector.shape_cast %78 : vector<1x16x128xf32> to vector<16x128xf32>
    %80 = vector.shape_cast %77 : vector<16x128xf32> to vector<1x16x128xf32>
    tpu.vector_store %arg4[%c0_49, %c0_50, %c0_51], %80 {strides = array<i32>} : memref<1x16x128xf32, #tpu.memory_space<vmem>>, vector<1x16x128xf32>,
    return
  }
  func.func @transform_1(%arg0: i32) -> (i32, i32, i32) {
    %c0_i32 = arith.constant 0 : i32
    %c0_i32_0 = arith.constant 0 : i32
    %c0_i32_1 = arith.constant 0 : i32
    %c0_i32_2 = arith.constant 0 : i32
    return %c0_i32, %c0_i32_0, %c0_i32_1 : i32, i32, i32
  }
  func.func @transform_2(%arg0: i32) -> (i32, i32) {
    %c1_i32 = arith.constant 1 : i32
    %0 = arith.addi %arg0, %c1_i32 : i32
    %c0_i32 = arith.constant 0 : i32
    %c0_i32_0 = arith.constant 0 : i32
    return %c0_i32, %0 : i32, i32
  }
  func.func @transform_3(%arg0: i32) -> (i32, i32, i32) {
    %c0_i32 = arith.constant 0 : i32
    %c0_i32_0 = arith.constant 0 : i32
    %c0_i32_1 = arith.constant 0 : i32
    return %arg0, %c0_i32, %c0_i32_0 : i32, i32, i32
  }
}

</mosaic_0001>

<llo_original>
// kernel: upblock_forward.6
$region0: #{upblock_forward.6}
  #allocation0 [shape = 'u32[]', space=smem, size = 0x4, offset = 0x4, fixed_abs, tag = 'smem constant byte address 0x4 - core index']
  #allocation1 [shape = 'u32[72,128]{1,0:T(1,128)}', space=vmem, size = 0x9000, scoped, tag = 'internal scratch']
  #allocation2 [shape = 'bf16[9,768]{1,0:T(8,128)(2,1)}', space=vmem, size = 0x6000, scoped, tag = 'scratch operand']
  #allocation3 [shape = 's32[1]{0}', space=sflag, size = 0x4, scoped, tag = 'scratch operand']
  #allocation8 [shape = 's32[]', space=sflag, size = 0x4, offset = 0, fixed_abs, tag = 'sflag constant byte address 0x0 - dummy sync flag']
  %s0 = inlined_call_operand.vmem [shape: bf16[9,3072], index: 0, kind: input, shape index: {}]
  %s1 = inlined_call_operand.vmem [shape: bf16[27,8,9], index: 1, kind: input, shape index: {}]
  %s2 = inlined_call_operand.vmem [shape: bf16[9,3072], index: 2, kind: input, shape index: {}]
  %s3 = inlined_call_operand.vmem [shape: bf16[9,3072], index: 3, kind: output, shape index: {0}]
  %s4 = inlined_call_operand.hbm [shape: f32[4,16,128], index: 4, kind: output, shape index: {1}]
  %5 = xla_tuple %s3, %s4
  %s6 = sld [smem:[#allocation0]]
  $region110: #{upblock_forward.6} parent=0
    _
  %s8 = ssub.s32 1, %s6
  %s9 = scalar_select 0, %s8, %s6
  $region1: #{upblock_forward.6} parent=0
    #allocation4 [shape = 'u8[32768]{0}', space=vmem, size = 0x8000, scoped, tag = 'input window, operand 2']
    #allocation5 [shape = 'u8[32768]{0}', space=vmem, size = 0x8000, scoped, tag = 'output window, operand 0']
    #allocation6 [shape = 'u8[16384]{0}', space=vmem, size = 0x4000, scoped, tag = 'output window, operand 1']
    #allocation7 [shape = 's32[2]{0}', space=sflag, size = 0x8, scoped, tag = 'scoped memory for upblock_forward.6']
    %10 = vsyncpa [#allocation7], 0
    %s11 = scalar_lea.sflag [#allocation7], 1
    %12 = vsyncpa %s11, 0
    loop: start=0, step=1, limit=6
    $region2: #{upblock_forward.6} parent=1 // loop_pre_header
      _
    $region3: #{upblock_forward.6} parent=1 // loop_header
      %s14 = sphi 0, %s18
      %p15 = scmp.ge.s32.totalorder %s14, 6
      %s22 = sphi 0, %s22
      %s24 = sphi 0, %s22
      %s25 = sphi 0, %s24
      %s39 = sphi 0, %s25
      %s47 = sphi 0, %s49
      %s50 = sphi 0, %s47
      %s51 = sphi 0, %s50
      %s67 = sphi 0, %s51
      %s75 = sphi 0, %s77
      %s78 = sphi 0, %s75
      %s79 = sphi 0, %s78
      %s95 = sphi 0, %s79
      %s101 = sphi 0, %s103
      %s104 = sphi 0, %s101
      %s105 = sphi 0, %s104
      %s121 = sphi 0, %s105
    $region4: #{upblock_forward.6} parent=1 // loop_header_branch
      %17 = sbr.rel (%p15) target = $region8
    $region5: #{upblock_forward.6} parent=1 // loop_body
      %s19 = ssub.s32 %s14, 1
      %s20 = ssub.s32 %s14, 2
      %s21 = sadd.s32 %s14, 1
      %s23 = sadd.s32 %s22, 1
      %p26 = scmp.eq.s32.totalorder %s14, 3
      %p27 = scmp.ne.s32.totalorder %s22, %s24
      %p28 = scmp.eq.s32.totalorder %s14, 0
      %p29 = por %p27, %p28
      %p30 = scmp.ne.s32.totalorder %s22, %s24
      %p31 = scmp.eq.s32.totalorder %s19, 3
      %p32 = por %p30, %p31
      %p33 = scmp.ne.s32.totalorder %s24, %s25
      %p34 = scmp.eq.s32.totalorder %s19, 0
      %p35 = por %p33, %p34
      %p36 = scmp.ne.s32.totalorder %s24, %s25
      %p37 = scmp.eq.s32.totalorder %s20, 3
      %p38 = por %p36, %p37
      %p40 = scmp.ne.s32.totalorder %s25, %s39
      %p41 = scmp.eq.s32.totalorder %s20, 0
      %p42 = por %p40, %p41
      %s43 = sadd.s32 %s14, 1
      %s44 = sadd.s32 %s21, 1
      %s45 = ssub.s32 %s43, %s44
      %p46 = scmp.eq.s32.totalorder %s45, 0
      %s48 = sadd.s32 %s47, 1
      %s49 = scalar_select %p46, %s47, %s48
      %p52 = pneg %p46
      %p53 = scmp.eq.s32.totalorder %s14, 3
      %p54 = por %p52, %p53
      %p55 = scmp.ne.s32.totalorder %s47, %s50
      %p56 = scmp.eq.s32.totalorder %s14, 0
      %p57 = por %p55, %p56
      %p58 = scmp.ne.s32.totalorder %s47, %s50
      %p59 = scmp.eq.s32.totalorder %s19, 3
      %p60 = por %p58, %p59
      %p61 = scmp.ne.s32.totalorder %s50, %s51
      %p62 = scmp.eq.s32.totalorder %s19, 0
      %p63 = por %p61, %p62
      %p64 = scmp.ne.s32.totalorder %s50, %s51
      %p65 = scmp.eq.s32.totalorder %s20, 3
      %p66 = por %p64, %p65
      %p68 = scmp.ne.s32.totalorder %s51, %s67
      %p69 = scmp.eq.s32.totalorder %s20, 0
      %p70 = por %p68, %p69
      %s71 = sadd.s32 %s14, 1
      %s72 = sadd.s32 %s21, 1
      %s73 = ssub.s32 %s71, %s72
      %p74 = scmp.eq.s32.totalorder %s73, 0
      %s76 = sadd.s32 %s75, 1
      %s77 = scalar_select %p74, %s75, %s76
      %p80 = pneg %p74
      %p81 = scmp.eq.s32.totalorder %s14, 3
      %p82 = por %p80, %p81
      %p83 = scmp.ne.s32.totalorder %s75, %s78
      %p84 = scmp.eq.s32.totalorder %s14, 0
      %p85 = por %p83, %p84
      %p86 = scmp.ne.s32.totalorder %s75, %s78
      %p87 = scmp.eq.s32.totalorder %s19, 3
      %p88 = por %p86, %p87
      %p89 = scmp.ne.s32.totalorder %s78, %s79
      %p90 = scmp.eq.s32.totalorder %s19, 0
      %p91 = por %p89, %p90
      %p92 = scmp.ne.s32.totalorder %s78, %s79
      %p93 = scmp.eq.s32.totalorder %s20, 3
      %p94 = por %p92, %p93
      %p96 = scmp.ne.s32.totalorder %s79, %s95
      %p97 = scmp.eq.s32.totalorder %s20, 0
      %p98 = por %p96, %p97
      %s99 = ssub.s32 %s14, %s21
      %p100 = scmp.eq.s32.totalorder %s99, 0
      %s102 = sadd.s32 %s101, 1
      %s103 = scalar_select %p100, %s101, %s102
      %p106 = pneg %p100
      %p107 = scmp.eq.s32.totalorder %s14, 3
      %p108 = por %p106, %p107
      %p109 = scmp.ne.s32.totalorder %s101, %s104
      %p110 = scmp.eq.s32.totalorder %s14, 0
      %p111 = por %p109, %p110
      %p112 = scmp.ne.s32.totalorder %s101, %s104
      %p113 = scmp.eq.s32.totalorder %s19, 3
      %p114 = por %p112, %p113
      %p115 = scmp.ne.s32.totalorder %s104, %s105
      %p116 = scmp.eq.s32.totalorder %s19, 0
      %p117 = por %p115, %p116
      %p118 = scmp.ne.s32.totalorder %s104, %s105
      %p119 = scmp.eq.s32.totalorder %s20, 3
      %p120 = por %p118, %p119
      %p122 = scmp.ne.s32.totalorder %s105, %s121
      %p123 = scmp.eq.s32.totalorder %s20, 0
      %p124 = por %p122, %p123
      %p125 = scmp.le.s32.totalorder 1, %s14
      %p126 = scmp.lt.s32.totalorder %s14, 5
      %p127 = pnand %p125, %p126
      %p128 = pneg %p127
      // Predicated region
      $region9: #{upblock_forward.6} parent=5 // pred_check
        _
      $region10: #{upblock_forward.6} parent=5 // pred_check_branch
        %130 = sbr.rel (%p127) target = $region12
      $region11: #{upblock_forward.6} parent=5 // pred_region
        %s131 = ssub.s32 %s14, 1
        // Predicated region
        $region13: #{upblock_forward.6} parent=11 // pred_check
          %p132 = pneg %p35
        $region14: #{upblock_forward.6} parent=11 // pred_check_branch
          %134 = sbr.rel (%p132) target = $region16
        $region15: #{upblock_forward.6} parent=11 // pred_region
          _
        $region16: #{upblock_forward.6} parent=11 // pred_fallthru
          _
      $region12: #{upblock_forward.6} parent=5 // pred_fallthru
        _
      %p135 = scmp.lt.s32.totalorder %s14, 4
      // Predicated region
      $region17: #{upblock_forward.6} parent=5 // pred_check
        %p136 = pneg %p135
      $region18: #{upblock_forward.6} parent=5 // pred_check_branch
        %138 = sbr.rel (%p136) target = $region20
      $region19: #{upblock_forward.6} parent=5 // pred_region
        // Predicated region
        $region21: #{upblock_forward.6} parent=19 // pred_check
          %p139 = pneg %p57
        $region22: #{upblock_forward.6} parent=19 // pred_check_branch
          %141 = sbr.rel (%p139) target = $region24
        $region23: #{upblock_forward.6} parent=19 // pred_region
          %s142 = sand.u32 %s47, 1
          %s143 = sand.u32 %s47, 1
          %s144 = smul.addr %s143, 32
          %s145 = scalar_lea.vmem [#allocation4], %s144
          %s146 = sadd.s32 %s14, 1
          %s147 = smul.u32 4, %s146
          %s148 = smul.addr %s147, 4
          %s149 = scalar_lea.vmem %s2, %s148
          // Predicated region
          $region25: #{upblock_forward.6} parent=23 // pred_check
            _
          $region26: #{upblock_forward.6} parent=23 // pred_check_branch
            %151 = sbr.rel (0) target = $region28
          $region27: #{upblock_forward.6} parent=23 // pred_region
            // Predicated region
            $region29: #{upblock_forward.6} parent=27 // pred_check
              _
            $region30: #{upblock_forward.6} parent=27 // pred_check_branch
              %153 = sbr.rel (0) target = $region32
            $region31: #{upblock_forward.6} parent=27 // pred_region
              loop: start=0, step=1, limit=1
              $region33: #{upblock_forward.6} parent=31 // loop_pre_header
                _
              $region34: #{upblock_forward.6} parent=31 // loop_header
                %s155 = sphi 0, %s159
                %p156 = scmp.ge.s32.totalorder %s155, 1
                %s160 = sphi %s149, %s149
                %s161 = sphi %s145, %s145
              $region35: #{upblock_forward.6} parent=31 // loop_header_branch
                %158 = sbr.rel (%p156) target = $region39
              $region36: #{upblock_forward.6} parent=31 // loop_body
                %v162 = vld [vmem:[%s160] sm:$0xff]
                %163 = vst [vmem:[%s161] sm:$0xff] %v162
                %v164 = vld [vmem:[%s160 + $0x8] sm:$0xff]
                %165 = vst [vmem:[%s161 + $0x8] sm:$0xff] %v164
                %v166 = vld [vmem:[%s160 + $0x60] sm:$0xff]
                %167 = vst [vmem:[%s161 + $0x10] sm:$0xff] %v166
                %v168 = vld [vmem:[%s160 + $0x68] sm:$0xff]
                %169 = vst [vmem:[%s161 + $0x18] sm:$0xff] %v168
              $region37: #{upblock_forward.6} parent=31 // loop_footer
                %s159 = sadd.s32 1, %s155
              $region38: #{upblock_forward.6} parent=31 // loop_footer_branch
                %154 = sbr.rel target = $region34
              $region39: #{upblock_forward.6} parent=31 // loop_exit
                _
            $region32: #{upblock_forward.6} parent=27 // pred_fallthru
              _
            // Predicated region
            $region40: #{upblock_forward.6} parent=27 // pred_check
              _
            $region41: #{upblock_forward.6} parent=27 // pred_check_branch
              %171 = sbr.rel target = $region43
            $region42: #{upblock_forward.6} parent=27 // pred_region
              _
            $region43: #{upblock_forward.6} parent=27 // pred_fallthru
              _
          $region28: #{upblock_forward.6} parent=23 // pred_fallthru
            _
          %172 = vnop
        $region24: #{upblock_forward.6} parent=19 // pred_fallthru
          _
      $region20: #{upblock_forward.6} parent=5 // pred_fallthru
        _
      %p173 = scmp.le.s32.totalorder 1, %s14
      %p174 = scmp.lt.s32.totalorder %s14, 5
      %p175 = pnand %p173, %p174
      %p176 = pneg %p175
      // Predicated region
      $region44: #{upblock_forward.6} parent=5 // pred_check
        _
      $region45: #{upblock_forward.6} parent=5 // pred_check_branch
        %178 = sbr.rel (%p175) target = $region47
      $region46: #{upblock_forward.6} parent=5 // pred_region
        %s179 = ssub.s32 %s14, 1
        %s180 = sand.u32 %s50, 1
        %s181 = sand.u32 %s50, 1
        %s182 = smul.addr %s181, 32
        %s183 = scalar_lea.vmem [#allocation4], %s182
        // Predicated region
        $region48: #{upblock_forward.6} parent=46 // pred_check
          %p184 = pneg %p63
        $region49: #{upblock_forward.6} parent=46 // pred_check_branch
          %186 = sbr.rel (%p184) target = $region51
        $region50: #{upblock_forward.6} parent=46 // pred_region
          _
        $region51: #{upblock_forward.6} parent=46 // pred_fallthru
          _
        %p187 = pneg %p35
        %p188 = pneg %p32
        %s189 = sand.u32 %s50, 1
        %s190 = sand.u32 %s50, 1
        %s191 = smul.addr %s190, 32
        %s192 = scalar_lea.vmem [#allocation4], %s191
        %p193 = pneg %p63
        %p194 = pneg %p60
        %p195 = pneg %p91
        %p196 = pneg %p88
        %s197 = sand.u32 %s78, 1
        %s198 = sand.u32 %s78, 1
        %s199 = smul.addr %s198, 32
        %s200 = scalar_lea.vmem [#allocation5], %s199
        %p201 = pneg %p117
        %p202 = pneg %p114
        %s203 = sand.u32 %s104, 1
        %s204 = scalar_lea.sflag [#allocation7], %s203
        %s205 = sand.u32 %s104, 1
        %s206 = smul.addr %s205, 16
        %s207 = scalar_lea.vmem [#allocation6], %s206
        %s208 = sadd.s32 %s19, 1
        %s209 = smul.u32 4, %s208
        %s210 = sadd.s32 %s19, 1
        %s211 = smul.u32 4, %s210
        %s213 = sadd.s32 %s19, 1
        %s214 = smul.u32 %s213, 512
        %s215 = ssub.s32 %s214, 128
        %s216 = sshra.s32 %s215, 7
        %s217 = sand.u32 %s215, 127
        %s218 = smul.addr %s216, 4
        %s219 = scalar_lea.vmem %s0, %s218
        // Predicated region
        $region52: #{upblock_forward.6} parent=46 // pred_check
          _
        $region53: #{upblock_forward.6} parent=46 // pred_check_branch
          %221 = sbr.rel (0) target = $region55
        $region54: #{upblock_forward.6} parent=46 // pred_region
          loop: start=0, step=1, limit=1
          $region56: #{upblock_forward.6} parent=54 // loop_pre_header
            _
          $region57: #{upblock_forward.6} parent=54 // loop_header
            %s223 = sphi 0, %s227
            %p224 = scmp.ge.s32.totalorder %s223, 1
            %s228 = sphi %s219, %s219
            %s229 = sphi [#allocation2], [#allocation2]
          $region58: #{upblock_forward.6} parent=54 // loop_header_branch
            %226 = sbr.rel (%p224) target = $region62
          $region59: #{upblock_forward.6} parent=54 // loop_body
            %v230 = vld [vmem:[%s228] sm:$0xff]
            %231 = vst [vmem:[%s229] sm:$0xff] %v230
            %v232 = vld [vmem:[%s228 + $0x8] sm:$0xff]
            %233 = vst [vmem:[%s229 + $0x8] sm:$0xff] %v232
            %v234 = vld [vmem:[%s228 + $0x10] sm:$0xff]
            %235 = vst [vmem:[%s229 + $0x10] sm:$0xff] %v234
            %v236 = vld [vmem:[%s228 + $0x60] sm:$0xff]
            %237 = vst [vmem:[%s229 + $0x18] sm:$0xff] %v236
            %v238 = vld [vmem:[%s228 + $0x68] sm:$0xff]
            %239 = vst [vmem:[%s229 + $0x20] sm:$0xff] %v238
            %v240 = vld [vmem:[%s228 + $0x70] sm:$0xff]
            %241 = vst [vmem:[%s229 + $0x28] sm:$0xff] %v240
          $region60: #{upblock_forward.6} parent=54 // loop_footer
            %s227 = sadd.s32 1, %s223
          $region61: #{upblock_forward.6} parent=54 // loop_footer_branch
            %222 = sbr.rel target = $region57
          $region62: #{upblock_forward.6} parent=54 // loop_exit
            _
        $region55: #{upblock_forward.6} parent=46 // pred_fallthru
          _
        // Predicated region
        $region63: #{upblock_forward.6} parent=46 // pred_check
          _
        $region64: #{upblock_forward.6} parent=46 // pred_check_branch
          %243 = sbr.rel target = $region66
        $region65: #{upblock_forward.6} parent=46 // pred_region
          _
        $region66: #{upblock_forward.6} parent=46 // pred_fallthru
          _
        // Predicated region
        $region67: #{upblock_forward.6} parent=46 // pred_check
          _
        $region68: #{upblock_forward.6} parent=46 // pred_check_branch
          %246 = sbr.rel (0) target = $region70
        $region69: #{upblock_forward.6} parent=46 // pred_region
          %247 = vsyncadd [#allocation3], 768
        $region70: #{upblock_forward.6} parent=46 // pred_fallthru
          _
        %s248 = smul.u32 4, 2
        %s249 = smul.u32 %s248, 6
        %s250 = sshll.u32 %s249, 4
        %251 = dma.done [#allocation3], %s250
        %v252 = vld [vmem:[#allocation2] sm:$0xff]
        %v253 = vld [vmem:[#allocation2 + $0x8] sm:$0xff]
        %v254 = vld [vmem:[#allocation2 + $0x10] sm:$0xf]
        %v255 = vld [vmem:[#allocation2 + $0x18] sm:$0x11]
        %v256 = vld [vmem:[#allocation2 + $0x20] sm:$0x11]
        %v257 = vld [vmem:[#allocation2 + $0x28] sm:$0x1]
        %v258 = vld [vmem:[%s1] sm:$0xf]
        %s259 = scalar_lea.vmem %s1, 4
        %v260 = vld [vmem:[%s259] sm:$0xf]
        %v267 = vunpack.c.l.b16 %v252
        %v268 = vunpack.c.h.b16 %v252
        %v269 = vunpack.c.l.b16 %v253
        %v270 = vunpack.c.h.b16 %v253
        %v271 = vunpack.c.l.b16 %v254
        %v272 = vunpack.c.l.b16 %v255
        %v273 = vunpack.c.h.b16 %v255
        %v274 = vunpack.c.l.b16 %v256
        %v275 = vunpack.c.h.b16 %v256
        %v276 = vunpack.c.l.b16 %v257
        %v277 = vpack.c.b16 %v272, %v267
        %v278 = vpack.c.b16 %v273, %v268
        %v279 = vpack.c.b16 %v274, %v269
        %v280 = vpack.c.b16 %v275, %v270
        %v281 = vpack.c.b16 %v276, %v271
        %282 = vrot.lane.b32.xlu0 %v277, 110
        %v283 = vpop.permute.xlu0 %282
        %284 = vrot.lane.b32.xlu0 %v278, 110
        %v285 = vpop.permute.xlu0 %284
        %286 = vrot.lane.b32.xlu0 %v279, 110
        %v287 = vpop.permute.xlu0 %286
        %288 = vrot.lane.b32.xlu0 %v280, 110
        %v289 = vpop.permute.xlu0 %288
        %290 = vrot.lane.b32.xlu0 %v281, 110
        %v291 = vpop.permute.xlu0 %290
        %vm292 = vcmask 900096
        %v293 = vsel %vm292, %v283, %v285
        %v294 = vsel %vm292, %v285, %v287
        %v295 = vsel %vm292, %v287, %v289
        %v296 = vsel %vm292, %v289, %v291
        %vm297 = vcmask 72704
        %v299 = vsel %vm297, %v260, 0
        %vm301 = vcmask 1043456
        %vm302 = vcmask 1044480
        %v303 = vsel %vm301, 4294967295, 65535
        %v304 = vsel %vm302, %v303, 0
        %v306 = vand.u32 %v293, %v304
        %v309 = vand.u32 %v294, %v304
        %v312 = vand.u32 %v295, %v304
        %v315 = vand.u32 %v296, %v304
        %317 = vmatpush.bf16.msra.mxu0 0
        %318 = vmatpush.bf16.msra.mxu0 0
        %319 = vmatpush.bf16.msra.mxu0 0
        %320 = vmatpush.bf16.msra.mxu0 0
        %321 = vmatpush.bf16.msra.mxu0 0
        %322 = vmatpush.bf16.msra.mxu0 0
        %323 = vmatpush.bf16.msra.mxu0 0
        %324 = vmatpush.bf16.msra.mxu0 %v306
        %325 = vmatmul.bf16.gmra.mxu0 %v299
        %v326 = vpop.f32.mrf.mxu0
        %v327 = vadd.f32 0.0, %v326
        %v328 = vpop.f32.mrf.mxu0
        %329 = vdwg.mxu0
        %330 = vmatpush.bf16.msra.mxu0 0
        %331 = vmatpush.bf16.msra.mxu0 0
        %332 = vmatpush.bf16.msra.mxu0 0
        %333 = vmatpush.bf16.msra.mxu0 0
        %334 = vmatpush.bf16.msra.mxu0 0
        %335 = vmatpush.bf16.msra.mxu0 0
        %336 = vmatpush.bf16.msra.mxu0 0
        %337 = vmatpush.bf16.msra.mxu0 %v309
        %338 = vmatmul.bf16.gmra.mxu0 %v299
        %v339 = vpop.f32.mrf.mxu0
        %v340 = vadd.f32 0.0, %v339
        %v341 = vpop.f32.mrf.mxu0
        %342 = vdwg.mxu0
        %343 = vmatpush.bf16.msra.mxu0 0
        %344 = vmatpush.bf16.msra.mxu0 0
        %345 = vmatpush.bf16.msra.mxu0 0
        %346 = vmatpush.bf16.msra.mxu0 0
        %347 = vmatpush.bf16.msra.mxu0 0
        %348 = vmatpush.bf16.msra.mxu0 0
        %349 = vmatpush.bf16.msra.mxu0 0
        %350 = vmatpush.bf16.msra.mxu0 %v312
        %351 = vmatmul.bf16.gmra.mxu0 %v299
        %v352 = vpop.f32.mrf.mxu0
        %v353 = vadd.f32 0.0, %v352
        %v354 = vpop.f32.mrf.mxu0
        %355 = vdwg.mxu0
        %356 = vmatpush.bf16.msra.mxu0 0
        %357 = vmatpush.bf16.msra.mxu0 0
        %358 = vmatpush.bf16.msra.mxu0 0
        %359 = vmatpush.bf16.msra.mxu0 0
        %360 = vmatpush.bf16.msra.mxu0 0
        %361 = vmatpush.bf16.msra.mxu0 0
        %362 = vmatpush.bf16.msra.mxu0 0
        %363 = vmatpush.bf16.msra.mxu0 %v315
        %364 = vmatmul.bf16.gmra.mxu0 %v299
        %v365 = vpop.f32.mrf.mxu0
        %v366 = vadd.f32 0.0, %v365
        %v367 = vpop.f32.mrf.mxu0
        %368 = vdwg.mxu0
        %369 = vrot.lane.b32.xlu0 %v277, 111
        %v370 = vpop.permute.xlu0 %369
        %371 = vrot.lane.b32.xlu0 %v278, 111
        %v372 = vpop.permute.xlu0 %371
        %373 = vrot.lane.b32.xlu0 %v279, 111
        %v374 = vpop.permute.xlu0 %373
        %375 = vrot.lane.b32.xlu0 %v280, 111
        %v376 = vpop.permute.xlu0 %375
        %377 = vrot.lane.b32.xlu0 %v281, 111
        %v378 = vpop.permute.xlu0 %377
        %vm379 = vcmask 908288
        %v380 = vsel %vm379, %v370, %v372
        %v381 = vsel %vm379, %v372, %v374
        %v382 = vsel %vm379, %v374, %v376
        %v383 = vsel %vm379, %v376, %v378
        %v385 = vsel %vm297, %v258, 0
        %v388 = vand.u32 %v380, %v304
        %v391 = vand.u32 %v381, %v304
        %v394 = vand.u32 %v382, %v304
        %v397 = vand.u32 %v383, %v304
        %399 = vmatpush.bf16.msra.mxu0 0
        %400 = vmatpush.bf16.msra.mxu0 0
        %401 = vmatpush.bf16.msra.mxu0 0
        %402 = vmatpush.bf16.msra.mxu0 0
        %403 = vmatpush.bf16.msra.mxu0 0
        %404 = vmatpush.bf16.msra.mxu0 0
        %405 = vmatpush.bf16.msra.mxu0 0
        %406 = vmatpush.bf16.msra.mxu0 %v388
        %407 = vmatmul.bf16.gmra.mxu0 %v385
        %v408 = vpop.f32.mrf.mxu0
        %v409 = vadd.f32 %v327, %v408
        %v410 = vpop.f32.mrf.mxu0
        %411 = vdwg.mxu0
        %412 = vmatpush.bf16.msra.mxu0 0
        %413 = vmatpush.bf16.msra.mxu0 0
        %414 = vmatpush.bf16.msra.mxu0 0
        %415 = vmatpush.bf16.msra.mxu0 0
        %416 = vmatpush.bf16.msra.mxu0 0
        %417 = vmatpush.bf16.msra.mxu0 0
        %418 = vmatpush.bf16.msra.mxu0 0
        %419 = vmatpush.bf16.msra.mxu0 %v391
        %420 = vmatmul.bf16.gmra.mxu0 %v385
        %v421 = vpop.f32.mrf.mxu0
        %v422 = vadd.f32 %v340, %v421
        %v423 = vpop.f32.mrf.mxu0
        %424 = vdwg.mxu0
        %425 = vmatpush.bf16.msra.mxu0 0
        %426 = vmatpush.bf16.msra.mxu0 0
        %427 = vmatpush.bf16.msra.mxu0 0
        %428 = vmatpush.bf16.msra.mxu0 0
        %429 = vmatpush.bf16.msra.mxu0 0
        %430 = vmatpush.bf16.msra.mxu0 0
        %431 = vmatpush.bf16.msra.mxu0 0
        %432 = vmatpush.bf16.msra.mxu0 %v394
        %433 = vmatmul.bf16.gmra.mxu0 %v385
        %v434 = vpop.f32.mrf.mxu0
        %v435 = vadd.f32 %v353, %v434
        %v436 = vpop.f32.mrf.mxu0
        %437 = vdwg.mxu0
        %438 = vmatpush.bf16.msra.mxu0 0
        %439 = vmatpush.bf16.msra.mxu0 0
        %440 = vmatpush.bf16.msra.mxu0 0
        %441 = vmatpush.bf16.msra.mxu0 0
        %442 = vmatpush.bf16.msra.mxu0 0
        %443 = vmatpush.bf16.msra.mxu0 0
        %444 = vmatpush.bf16.msra.mxu0 0
        %445 = vmatpush.bf16.msra.mxu0 %v397
        %446 = vmatmul.bf16.gmra.mxu0 %v385
        %v447 = vpop.f32.mrf.mxu0
        %v448 = vadd.f32 %v366, %v447
        %v449 = vpop.f32.mrf.mxu0
        %450 = vdwg.mxu0
        %s451 = scalar_lea.vmem %s1, 8
        %v452 = vld [vmem:[%s451] sm:$0xf]
        %453 = vrot.lane.b32.xlu0 %v277, 109
        %v454 = vpop.permute.xlu0 %453
        %455 = vrot.lane.b32.xlu0 %v278, 109
        %v456 = vpop.permute.xlu0 %455
        %457 = vrot.lane.b32.xlu0 %v279, 109
        %v458 = vpop.permute.xlu0 %457
        %459 = vrot.lane.b32.xlu0 %v280, 109
        %v460 = vpop.permute.xlu0 %459
        %461 = vrot.lane.b32.xlu0 %v281, 109
        %v462 = vpop.permute.xlu0 %461
        %vm463 = vcmask 891904
        %v464 = vsel %vm463, %v454, %v456
        %v465 = vsel %vm463, %v456, %v458
        %v466 = vsel %vm463, %v458, %v460
        %v467 = vsel %vm463, %v460, %v462
        %v469 = vsel %vm297, %v452, 0
        %v472 = vand.u32 %v464, %v304
        %v475 = vand.u32 %v465, %v304
        %v478 = vand.u32 %v466, %v304
        %v481 = vand.u32 %v467, %v304
        %483 = vmatpush.bf16.msra.mxu0 0
        %484 = vmatpush.bf16.msra.mxu0 0
        %485 = vmatpush.bf16.msra.mxu0 0
        %486 = vmatpush.bf16.msra.mxu0 0
        %487 = vmatpush.bf16.msra.mxu0 0
        %488 = vmatpush.bf16.msra.mxu0 0
        %489 = vmatpush.bf16.msra.mxu0 0
        %490 = vmatpush.bf16.msra.mxu0 %v472
        %491 = vmatmul.bf16.gmra.mxu0 %v469
        %v492 = vpop.f32.mrf.mxu0
        %v493 = vadd.f32 0.0, %v492
        %v494 = vpop.f32.mrf.mxu0
        %495 = vdwg.mxu0
        %496 = vmatpush.bf16.msra.mxu0 0
        %497 = vmatpush.bf16.msra.mxu0 0
        %498 = vmatpush.bf16.msra.mxu0 0
        %499 = vmatpush.bf16.msra.mxu0 0
        %500 = vmatpush.bf16.msra.mxu0 0
        %501 = vmatpush.bf16.msra.mxu0 0
        %502 = vmatpush.bf16.msra.mxu0 0
        %503 = vmatpush.bf16.msra.mxu0 %v475
        %504 = vmatmul.bf16.gmra.mxu0 %v469
        %v505 = vpop.f32.mrf.mxu0
        %v506 = vadd.f32 0.0, %v505
        %v507 = vpop.f32.mrf.mxu0
        %508 = vdwg.mxu0
        %509 = vmatpush.bf16.msra.mxu0 0
        %510 = vmatpush.bf16.msra.mxu0 0
        %511 = vmatpush.bf16.msra.mxu0 0
        %512 = vmatpush.bf16.msra.mxu0 0
        %513 = vmatpush.bf16.msra.mxu0 0
        %514 = vmatpush.bf16.msra.mxu0 0
        %515 = vmatpush.bf16.msra.mxu0 0
        %516 = vmatpush.bf16.msra.mxu0 %v478
        %517 = vmatmul.bf16.gmra.mxu0 %v469
        %v518 = vpop.f32.mrf.mxu0
        %v519 = vadd.f32 0.0, %v518
        %v520 = vpop.f32.mrf.mxu0
        %521 = vdwg.mxu0
        %522 = vmatpush.bf16.msra.mxu0 0
        %523 = vmatpush.bf16.msra.mxu0 0
        %524 = vmatpush.bf16.msra.mxu0 0
        %525 = vmatpush.bf16.msra.mxu0 0
        %526 = vmatpush.bf16.msra.mxu0 0
        %527 = vmatpush.bf16.msra.mxu0 0
        %528 = vmatpush.bf16.msra.mxu0 0
        %529 = vmatpush.bf16.msra.mxu0 %v481
        %530 = vmatmul.bf16.gmra.mxu0 %v469
        %v531 = vpop.f32.mrf.mxu0
        %v532 = vadd.f32 0.0, %v531
        %v533 = vpop.f32.mrf.mxu0
        %534 = vdwg.mxu0
        %v535 = vadd.f32 %v409, %v493
        %v536 = vadd.f32 %v422, %v506
        %v537 = vadd.f32 %v435, %v519
        %v538 = vadd.f32 %v448, %v532
        %s539 = scalar_lea.vmem %s1, 12
        %v540 = vld [vmem:[%s539] sm:$0xf]
        %541 = vrot.lane.b32.xlu0 %v277, 101
        %v542 = vpop.permute.xlu0 %541
        %543 = vrot.lane.b32.xlu0 %v278, 101
        %v544 = vpop.permute.xlu0 %543
        %545 = vrot.lane.b32.xlu0 %v279, 101
        %v546 = vpop.permute.xlu0 %545
        %547 = vrot.lane.b32.xlu0 %v280, 101
        %v548 = vpop.permute.xlu0 %547
        %549 = vrot.lane.b32.xlu0 %v281, 101
        %v550 = vpop.permute.xlu0 %549
        %vm551 = vcmask 826368
        %v552 = vsel %vm551, %v542, %v544
        %v553 = vsel %vm551, %v544, %v546
        %v554 = vsel %vm551, %v546, %v548
        %v555 = vsel %vm551, %v548, %v550
        %v557 = vsel %vm297, %v540, 0
        %v560 = vand.u32 %v552, %v304
        %v563 = vand.u32 %v553, %v304
        %v566 = vand.u32 %v554, %v304
        %v569 = vand.u32 %v555, %v304
        %571 = vmatpush.bf16.msra.mxu0 0
        %572 = vmatpush.bf16.msra.mxu0 0
        %573 = vmatpush.bf16.msra.mxu0 0
        %574 = vmatpush.bf16.msra.mxu0 0
        %575 = vmatpush.bf16.msra.mxu0 0
        %576 = vmatpush.bf16.msra.mxu0 0
        %577 = vmatpush.bf16.msra.mxu0 0
        %578 = vmatpush.bf16.msra.mxu0 %v560
        %579 = vmatmul.bf16.gmra.mxu0 %v557
        %v580 = vpop.f32.mrf.mxu0
        %v581 = vadd.f32 0.0, %v580
        %v582 = vpop.f32.mrf.mxu0
        %583 = vdwg.mxu0
        %584 = vmatpush.bf16.msra.mxu0 0
        %585 = vmatpush.bf16.msra.mxu0 0
        %586 = vmatpush.bf16.msra.mxu0 0
        %587 = vmatpush.bf16.msra.mxu0 0
        %588 = vmatpush.bf16.msra.mxu0 0
        %589 = vmatpush.bf16.msra.mxu0 0
        %590 = vmatpush.bf16.msra.mxu0 0
        %591 = vmatpush.bf16.msra.mxu0 %v563
        %592 = vmatmul.bf16.gmra.mxu0 %v557
        %v593 = vpop.f32.mrf.mxu0
        %v594 = vadd.f32 0.0, %v593
        %v595 = vpop.f32.mrf.mxu0
        %596 = vdwg.mxu0
        %597 = vmatpush.bf16.msra.mxu0 0
        %598 = vmatpush.bf16.msra.mxu0 0
        %599 = vmatpush.bf16.msra.mxu0 0
        %600 = vmatpush.bf16.msra.mxu0 0
        %601 = vmatpush.bf16.msra.mxu0 0
        %602 = vmatpush.bf16.msra.mxu0 0
        %603 = vmatpush.bf16.msra.mxu0 0
        %604 = vmatpush.bf16.msra.mxu0 %v566
        %605 = vmatmul.bf16.gmra.mxu0 %v557
        %v606 = vpop.f32.mrf.mxu0
        %v607 = vadd.f32 0.0, %v606
        %v608 = vpop.f32.mrf.mxu0
        %609 = vdwg.mxu0
        %610 = vmatpush.bf16.msra.mxu0 0
        %611 = vmatpush.bf16.msra.mxu0 0
        %612 = vmatpush.bf16.msra.mxu0 0
        %613 = vmatpush.bf16.msra.mxu0 0
        %614 = vmatpush.bf16.msra.mxu0 0
        %615 = vmatpush.bf16.msra.mxu0 0
        %616 = vmatpush.bf16.msra.mxu0 0
        %617 = vmatpush.bf16.msra.mxu0 %v569
        %618 = vmatmul.bf16.gmra.mxu0 %v557
        %v619 = vpop.f32.mrf.mxu0
        %v620 = vadd.f32 0.0, %v619
        %v621 = vpop.f32.mrf.mxu0
        %622 = vdwg.mxu0
        %v623 = vadd.f32 %v535, %v581
        %v624 = vadd.f32 %v536, %v594
        %v625 = vadd.f32 %v537, %v607
        %v626 = vadd.f32 %v538, %v620
        %s627 = scalar_lea.vmem %s1, 16
        %v628 = vld [vmem:[%s627] sm:$0xf]
        %629 = vrot.lane.b32.xlu0 %v277, 100
        %v630 = vpop.permute.xlu0 %629
        %631 = vrot.lane.b32.xlu0 %v278, 100
        %v632 = vpop.permute.xlu0 %631
        %633 = vrot.lane.b32.xlu0 %v279, 100
        %v634 = vpop.permute.xlu0 %633
        %635 = vrot.lane.b32.xlu0 %v280, 100
        %v636 = vpop.permute.xlu0 %635
        %637 = vrot.lane.b32.xlu0 %v281, 100
        %v638 = vpop.permute.xlu0 %637
        %vm639 = vcmask 818176
        %v640 = vsel %vm639, %v630, %v632
        %v641 = vsel %vm639, %v632, %v634
        %v642 = vsel %vm639, %v634, %v636
        %v643 = vsel %vm639, %v636, %v638
        %v645 = vsel %vm297, %v628, 0
        %v648 = vand.u32 %v640, %v304
        %v651 = vand.u32 %v641, %v304
        %v654 = vand.u32 %v642, %v304
        %v657 = vand.u32 %v643, %v304
        %659 = vmatpush.bf16.msra.mxu0 0
        %660 = vmatpush.bf16.msra.mxu0 0
        %661 = vmatpush.bf16.msra.mxu0 0
        %662 = vmatpush.bf16.msra.mxu0 0
        %663 = vmatpush.bf16.msra.mxu0 0
        %664 = vmatpush.bf16.msra.mxu0 0
        %665 = vmatpush.bf16.msra.mxu0 0
        %666 = vmatpush.bf16.msra.mxu0 %v648
        %667 = vmatmul.bf16.gmra.mxu0 %v645
        %v668 = vpop.f32.mrf.mxu0
        %v669 = vadd.f32 0.0, %v668
        %v670 = vpop.f32.mrf.mxu0
        %671 = vdwg.mxu0
        %672 = vmatpush.bf16.msra.mxu0 0
        %673 = vmatpush.bf16.msra.mxu0 0
        %674 = vmatpush.bf16.msra.mxu0 0
        %675 = vmatpush.bf16.msra.mxu0 0
        %676 = vmatpush.bf16.msra.mxu0 0
        %677 = vmatpush.bf16.msra.mxu0 0
        %678 = vmatpush.bf16.msra.mxu0 0
        %679 = vmatpush.bf16.msra.mxu0 %v651
        %680 = vmatmul.bf16.gmra.mxu0 %v645
        %v681 = vpop.f32.mrf.mxu0
        %v682 = vadd.f32 0.0, %v681
        %v683 = vpop.f32.mrf.mxu0
        %684 = vdwg.mxu0
        %685 = vmatpush.bf16.msra.mxu0 0
        %686 = vmatpush.bf16.msra.mxu0 0
        %687 = vmatpush.bf16.msra.mxu0 0
        %688 = vmatpush.bf16.msra.mxu0 0
        %689 = vmatpush.bf16.msra.mxu0 0
        %690 = vmatpush.bf16.msra.mxu0 0
        %691 = vmatpush.bf16.msra.mxu0 0
        %692 = vmatpush.bf16.msra.mxu0 %v654
        %693 = vmatmul.bf16.gmra.mxu0 %v645
        %v694 = vpop.f32.mrf.mxu0
        %v695 = vadd.f32 0.0, %v694
        %v696 = vpop.f32.mrf.mxu0
        %697 = vdwg.mxu0
        %698 = vmatpush.bf16.msra.mxu0 0
        %699 = vmatpush.bf16.msra.mxu0 0
        %700 = vmatpush.bf16.msra.mxu0 0
        %701 = vmatpush.bf16.msra.mxu0 0
        %702 = vmatpush.bf16.msra.mxu0 0
        %703 = vmatpush.bf16.msra.mxu0 0
        %704 = vmatpush.bf16.msra.mxu0 0
        %705 = vmatpush.bf16.msra.mxu0 %v657
        %706 = vmatmul.bf16.gmra.mxu0 %v645
        %v707 = vpop.f32.mrf.mxu0
        %v708 = vadd.f32 0.0, %v707
        %v709 = vpop.f32.mrf.mxu0
        %710 = vdwg.mxu0
        %v711 = vadd.f32 %v623, %v669
        %v712 = vadd.f32 %v624, %v682
        %v713 = vadd.f32 %v625, %v695
        %v714 = vadd.f32 %v626, %v708
        %s715 = scalar_lea.vmem %s1, 20
        %v716 = vld [vmem:[%s715] sm:$0xf]
        %717 = vrot.lane.b32.xlu0 %v277, 99
        %v718 = vpop.permute.xlu0 %717
        %719 = vrot.lane.b32.xlu0 %v278, 99
        %v720 = vpop.permute.xlu0 %719
        %721 = vrot.lane.b32.xlu0 %v279, 99
        %v722 = vpop.permute.xlu0 %721
        %723 = vrot.lane.b32.xlu0 %v280, 99
        %v724 = vpop.permute.xlu0 %723
        %725 = vrot.lane.b32.xlu0 %v281, 99
        %v726 = vpop.permute.xlu0 %725
        %vm727 = vcmask 809984
        %v728 = vsel %vm727, %v718, %v720
        %v729 = vsel %vm727, %v720, %v722
        %v730 = vsel %vm727, %v722, %v724
        %v731 = vsel %vm727, %v724, %v726
        %v733 = vsel %vm297, %v716, 0
        %v736 = vand.u32 %v728, %v304
        %v739 = vand.u32 %v729, %v304
        %v742 = vand.u32 %v730, %v304
        %v745 = vand.u32 %v731, %v304
        %747 = vmatpush.bf16.msra.mxu0 0
        %748 = vmatpush.bf16.msra.mxu0 0
        %749 = vmatpush.bf16.msra.mxu0 0
        %750 = vmatpush.bf16.msra.mxu0 0
        %751 = vmatpush.bf16.msra.mxu0 0
        %752 = vmatpush.bf16.msra.mxu0 0
        %753 = vmatpush.bf16.msra.mxu0 0
        %754 = vmatpush.bf16.msra.mxu0 %v736
        %755 = vmatmul.bf16.gmra.mxu0 %v733
        %v756 = vpop.f32.mrf.mxu0
        %v757 = vadd.f32 0.0, %v756
        %v758 = vpop.f32.mrf.mxu0
        %759 = vdwg.mxu0
        %760 = vmatpush.bf16.msra.mxu0 0
        %761 = vmatpush.bf16.msra.mxu0 0
        %762 = vmatpush.bf16.msra.mxu0 0
        %763 = vmatpush.bf16.msra.mxu0 0
        %764 = vmatpush.bf16.msra.mxu0 0
        %765 = vmatpush.bf16.msra.mxu0 0
        %766 = vmatpush.bf16.msra.mxu0 0
        %767 = vmatpush.bf16.msra.mxu0 %v739
        %768 = vmatmul.bf16.gmra.mxu0 %v733
        %v769 = vpop.f32.mrf.mxu0
        %v770 = vadd.f32 0.0, %v769
        %v771 = vpop.f32.mrf.mxu0
        %772 = vdwg.mxu0
        %773 = vmatpush.bf16.msra.mxu0 0
        %774 = vmatpush.bf16.msra.mxu0 0
        %775 = vmatpush.bf16.msra.mxu0 0
        %776 = vmatpush.bf16.msra.mxu0 0
        %777 = vmatpush.bf16.msra.mxu0 0
        %778 = vmatpush.bf16.msra.mxu0 0
        %779 = vmatpush.bf16.msra.mxu0 0
        %780 = vmatpush.bf16.msra.mxu0 %v742
        %781 = vmatmul.bf16.gmra.mxu0 %v733
        %v782 = vpop.f32.mrf.mxu0
        %v783 = vadd.f32 0.0, %v782
        %v784 = vpop.f32.mrf.mxu0
        %785 = vdwg.mxu0
        %786 = vmatpush.bf16.msra.mxu0 0
        %787 = vmatpush.bf16.msra.mxu0 0
        %788 = vmatpush.bf16.msra.mxu0 0
        %789 = vmatpush.bf16.msra.mxu0 0
        %790 = vmatpush.bf16.msra.mxu0 0
        %791 = vmatpush.bf16.msra.mxu0 0
        %792 = vmatpush.bf16.msra.mxu0 0
        %793 = vmatpush.bf16.msra.mxu0 %v745
        %794 = vmatmul.bf16.gmra.mxu0 %v733
        %v795 = vpop.f32.mrf.mxu0
        %v796 = vadd.f32 0.0, %v795
        %v797 = vpop.f32.mrf.mxu0
        %798 = vdwg.mxu0
        %v799 = vadd.f32 %v711, %v757
        %v800 = vadd.f32 %v712, %v770
        %v801 = vadd.f32 %v713, %v783
        %v802 = vadd.f32 %v714, %v796
        %s803 = scalar_lea.vmem %s1, 24
        %v804 = vld [vmem:[%s803] sm:$0xf]
        %805 = vrot.lane.b32.xlu0 %v277, 91
        %v806 = vpop.permute.xlu0 %805
        %807 = vrot.lane.b32.xlu0 %v278, 91
        %v808 = vpop.permute.xlu0 %807
        %809 = vrot.lane.b32.xlu0 %v279, 91
        %v810 = vpop.permute.xlu0 %809
        %811 = vrot.lane.b32.xlu0 %v280, 91
        %v812 = vpop.permute.xlu0 %811
        %813 = vrot.lane.b32.xlu0 %v281, 91
        %v814 = vpop.permute.xlu0 %813
        %vm815 = vcmask 744448
        %v816 = vsel %vm815, %v806, %v808
        %v817 = vsel %vm815, %v808, %v810
        %v818 = vsel %vm815, %v810, %v812
        %v819 = vsel %vm815, %v812, %v814
        %v821 = vsel %vm297, %v804, 0
        %v824 = vand.u32 %v816, %v304
        %v827 = vand.u32 %v817, %v304
        %v830 = vand.u32 %v818, %v304
        %v833 = vand.u32 %v819, %v304
        %835 = vmatpush.bf16.msra.mxu0 0
        %836 = vmatpush.bf16.msra.mxu0 0
        %837 = vmatpush.bf16.msra.mxu0 0
        %838 = vmatpush.bf16.msra.mxu0 0
        %839 = vmatpush.bf16.msra.mxu0 0
        %840 = vmatpush.bf16.msra.mxu0 0
        %841 = vmatpush.bf16.msra.mxu0 0
        %842 = vmatpush.bf16.msra.mxu0 %v824
        %843 = vmatmul.bf16.gmra.mxu0 %v821
        %v844 = vpop.f32.mrf.mxu0
        %v845 = vadd.f32 0.0, %v844
        %v846 = vpop.f32.mrf.mxu0
        %847 = vdwg.mxu0
        %848 = vmatpush.bf16.msra.mxu0 0
        %849 = vmatpush.bf16.msra.mxu0 0
        %850 = vmatpush.bf16.msra.mxu0 0
        %851 = vmatpush.bf16.msra.mxu0 0
        %852 = vmatpush.bf16.msra.mxu0 0
        %853 = vmatpush.bf16.msra.mxu0 0
        %854 = vmatpush.bf16.msra.mxu0 0
        %855 = vmatpush.bf16.msra.mxu0 %v827
        %856 = vmatmul.bf16.gmra.mxu0 %v821
        %v857 = vpop.f32.mrf.mxu0
        %v858 = vadd.f32 0.0, %v857
        %v859 = vpop.f32.mrf.mxu0
        %860 = vdwg.mxu0
        %861 = vmatpush.bf16.msra.mxu0 0
        %862 = vmatpush.bf16.msra.mxu0 0
        %863 = vmatpush.bf16.msra.mxu0 0
        %864 = vmatpush.bf16.msra.mxu0 0
        %865 = vmatpush.bf16.msra.mxu0 0
        %866 = vmatpush.bf16.msra.mxu0 0
        %867 = vmatpush.bf16.msra.mxu0 0
        %868 = vmatpush.bf16.msra.mxu0 %v830
        %869 = vmatmul.bf16.gmra.mxu0 %v821
        %v870 = vpop.f32.mrf.mxu0
        %v871 = vadd.f32 0.0, %v870
        %v872 = vpop.f32.mrf.mxu0
        %873 = vdwg.mxu0
        %874 = vmatpush.bf16.msra.mxu0 0
        %875 = vmatpush.bf16.msra.mxu0 0
        %876 = vmatpush.bf16.msra.mxu0 0
        %877 = vmatpush.bf16.msra.mxu0 0
        %878 = vmatpush.bf16.msra.mxu0 0
        %879 = vmatpush.bf16.msra.mxu0 0
        %880 = vmatpush.bf16.msra.mxu0 0
        %881 = vmatpush.bf16.msra.mxu0 %v833
        %882 = vmatmul.bf16.gmra.mxu0 %v821
        %v883 = vpop.f32.mrf.mxu0
        %v884 = vadd.f32 0.0, %v883
        %v885 = vpop.f32.mrf.mxu0
        %886 = vdwg.mxu0
        %v887 = vadd.f32 %v799, %v845
        %v888 = vadd.f32 %v800, %v858
        %v889 = vadd.f32 %v801, %v871
        %v890 = vadd.f32 %v802, %v884
        %s891 = scalar_lea.vmem %s1, 28
        %v892 = vld [vmem:[%s891] sm:$0xf]
        %893 = vrot.lane.b32.xlu0 %v277, 90
        %v894 = vpop.permute.xlu0 %893
        %895 = vrot.lane.b32.xlu0 %v278, 90
        %v896 = vpop.permute.xlu0 %895
        %897 = vrot.lane.b32.xlu0 %v279, 90
        %v898 = vpop.permute.xlu0 %897
        %899 = vrot.lane.b32.xlu0 %v280, 90
        %v900 = vpop.permute.xlu0 %899
        %901 = vrot.lane.b32.xlu0 %v281, 90
        %v902 = vpop.permute.xlu0 %901
        %vm903 = vcmask 736256
        %v904 = vsel %vm903, %v894, %v896
        %v905 = vsel %vm903, %v896, %v898
        %v906 = vsel %vm903, %v898, %v900
        %v907 = vsel %vm903, %v900, %v902
        %v909 = vsel %vm297, %v892, 0
        %v912 = vand.u32 %v904, %v304
        %v915 = vand.u32 %v905, %v304
        %v918 = vand.u32 %v906, %v304
        %v921 = vand.u32 %v907, %v304
        %923 = vmatpush.bf16.msra.mxu0 0
        %924 = vmatpush.bf16.msra.mxu0 0
        %925 = vmatpush.bf16.msra.mxu0 0
        %926 = vmatpush.bf16.msra.mxu0 0
        %927 = vmatpush.bf16.msra.mxu0 0
        %928 = vmatpush.bf16.msra.mxu0 0
        %929 = vmatpush.bf16.msra.mxu0 0
        %930 = vmatpush.bf16.msra.mxu0 %v912
        %931 = vmatmul.bf16.gmra.mxu0 %v909
        %v932 = vpop.f32.mrf.mxu0
        %v933 = vadd.f32 0.0, %v932
        %v934 = vpop.f32.mrf.mxu0
        %935 = vdwg.mxu0
        %936 = vmatpush.bf16.msra.mxu0 0
        %937 = vmatpush.bf16.msra.mxu0 0
        %938 = vmatpush.bf16.msra.mxu0 0
        %939 = vmatpush.bf16.msra.mxu0 0
        %940 = vmatpush.bf16.msra.mxu0 0
        %941 = vmatpush.bf16.msra.mxu0 0
        %942 = vmatpush.bf16.msra.mxu0 0
        %943 = vmatpush.bf16.msra.mxu0 %v915
        %944 = vmatmul.bf16.gmra.mxu0 %v909
        %v945 = vpop.f32.mrf.mxu0
        %v946 = vadd.f32 0.0, %v945
        %v947 = vpop.f32.mrf.mxu0
        %948 = vdwg.mxu0
        %949 = vmatpush.bf16.msra.mxu0 0
        %950 = vmatpush.bf16.msra.mxu0 0
        %951 = vmatpush.bf16.msra.mxu0 0
        %952 = vmatpush.bf16.msra.mxu0 0
        %953 = vmatpush.bf16.msra.mxu0 0
        %954 = vmatpush.bf16.msra.mxu0 0
        %955 = vmatpush.bf16.msra.mxu0 0
        %956 = vmatpush.bf16.msra.mxu0 %v918
        %957 = vmatmul.bf16.gmra.mxu0 %v909
        %v958 = vpop.f32.mrf.mxu0
        %v959 = vadd.f32 0.0, %v958
        %v960 = vpop.f32.mrf.mxu0
        %961 = vdwg.mxu0
        %962 = vmatpush.bf16.msra.mxu0 0
        %963 = vmatpush.bf16.msra.mxu0 0
        %964 = vmatpush.bf16.msra.mxu0 0
        %965 = vmatpush.bf16.msra.mxu0 0
        %966 = vmatpush.bf16.msra.mxu0 0
        %967 = vmatpush.bf16.msra.mxu0 0
        %968 = vmatpush.bf16.msra.mxu0 0
        %969 = vmatpush.bf16.msra.mxu0 %v921
        %970 = vmatmul.bf16.gmra.mxu0 %v909
        %v971 = vpop.f32.mrf.mxu0
        %v972 = vadd.f32 0.0, %v971
        %v973 = vpop.f32.mrf.mxu0
        %974 = vdwg.mxu0
        %v975 = vadd.f32 %v887, %v933
        %v976 = vadd.f32 %v888, %v946
        %v977 = vadd.f32 %v889, %v959
        %v978 = vadd.f32 %v890, %v972
        %s979 = scalar_lea.vmem %s1, 32
        %v980 = vld [vmem:[%s979] sm:$0xf]
        %981 = vrot.lane.b32.xlu0 %v277, 89
        %v982 = vpop.permute.xlu0 %981
        %983 = vrot.lane.b32.xlu0 %v278, 89
        %v984 = vpop.permute.xlu0 %983
        %985 = vrot.lane.b32.xlu0 %v279, 89
        %v986 = vpop.permute.xlu0 %985
        %987 = vrot.lane.b32.xlu0 %v280, 89
        %v988 = vpop.permute.xlu0 %987
        %989 = vrot.lane.b32.xlu0 %v281, 89
        %v990 = vpop.permute.xlu0 %989
        %vm991 = vcmask 728064
        %v992 = vsel %vm991, %v982, %v984
        %v993 = vsel %vm991, %v984, %v986
        %v994 = vsel %vm991, %v986, %v988
        %v995 = vsel %vm991, %v988, %v990
        %v997 = vsel %vm297, %v980, 0
        %v1000 = vand.u32 %v992, %v304
        %v1003 = vand.u32 %v993, %v304
        %v1006 = vand.u32 %v994, %v304
        %v1009 = vand.u32 %v995, %v304
        %1011 = vmatpush.bf16.msra.mxu0 0
        %1012 = vmatpush.bf16.msra.mxu0 0
        %1013 = vmatpush.bf16.msra.mxu0 0
        %1014 = vmatpush.bf16.msra.mxu0 0
        %1015 = vmatpush.bf16.msra.mxu0 0
        %1016 = vmatpush.bf16.msra.mxu0 0
        %1017 = vmatpush.bf16.msra.mxu0 0
        %1018 = vmatpush.bf16.msra.mxu0 %v1000
        %1019 = vmatmul.bf16.gmra.mxu0 %v997
        %v1020 = vpop.f32.mrf.mxu0
        %v1021 = vadd.f32 0.0, %v1020
        %v1022 = vpop.f32.mrf.mxu0
        %1023 = vdwg.mxu0
        %1024 = vmatpush.bf16.msra.mxu0 0
        %1025 = vmatpush.bf16.msra.mxu0 0
        %1026 = vmatpush.bf16.msra.mxu0 0
        %1027 = vmatpush.bf16.msra.mxu0 0
        %1028 = vmatpush.bf16.msra.mxu0 0
        %1029 = vmatpush.bf16.msra.mxu0 0
        %1030 = vmatpush.bf16.msra.mxu0 0
        %1031 = vmatpush.bf16.msra.mxu0 %v1003
        %1032 = vmatmul.bf16.gmra.mxu0 %v997
        %v1033 = vpop.f32.mrf.mxu0
        %v1034 = vadd.f32 0.0, %v1033
        %v1035 = vpop.f32.mrf.mxu0
        %1036 = vdwg.mxu0
        %1037 = vmatpush.bf16.msra.mxu0 0
        %1038 = vmatpush.bf16.msra.mxu0 0
        %1039 = vmatpush.bf16.msra.mxu0 0
        %1040 = vmatpush.bf16.msra.mxu0 0
        %1041 = vmatpush.bf16.msra.mxu0 0
        %1042 = vmatpush.bf16.msra.mxu0 0
        %1043 = vmatpush.bf16.msra.mxu0 0
        %1044 = vmatpush.bf16.msra.mxu0 %v1006
        %1045 = vmatmul.bf16.gmra.mxu0 %v997
        %v1046 = vpop.f32.mrf.mxu0
        %v1047 = vadd.f32 0.0, %v1046
        %v1048 = vpop.f32.mrf.mxu0
        %1049 = vdwg.mxu0
        %1050 = vmatpush.bf16.msra.mxu0 0
        %1051 = vmatpush.bf16.msra.mxu0 0
        %1052 = vmatpush.bf16.msra.mxu0 0
        %1053 = vmatpush.bf16.msra.mxu0 0
        %1054 = vmatpush.bf16.msra.mxu0 0
        %1055 = vmatpush.bf16.msra.mxu0 0
        %1056 = vmatpush.bf16.msra.mxu0 0
        %1057 = vmatpush.bf16.msra.mxu0 %v1009
        %1058 = vmatmul.bf16.gmra.mxu0 %v997
        %v1059 = vpop.f32.mrf.mxu0
        %v1060 = vadd.f32 0.0, %v1059
        %v1061 = vpop.f32.mrf.mxu0
        %1062 = vdwg.mxu0
        %v1063 = vadd.f32 %v975, %v1021
        %v1064 = vadd.f32 %v976, %v1034
        %v1065 = vadd.f32 %v977, %v1047
        %v1066 = vadd.f32 %v978, %v1060
        %s1067 = scalar_lea.vmem %s1, 36
        %v1068 = vld [vmem:[%s1067] sm:$0xf]
        %1069 = vrot.lane.b32.xlu0 %v277, 11
        %v1070 = vpop.permute.xlu0 %1069
        %1071 = vrot.lane.b32.xlu0 %v278, 11
        %v1072 = vpop.permute.xlu0 %1071
        %1073 = vrot.lane.b32.xlu0 %v279, 11
        %v1074 = vpop.permute.xlu0 %1073
        %1075 = vrot.lane.b32.xlu0 %v280, 11
        %v1076 = vpop.permute.xlu0 %1075
        %1077 = vrot.lane.b32.xlu0 %v281, 11
        %v1078 = vpop.permute.xlu0 %1077
        %vm1079 = vcmask 89088
        %v1080 = vsel %vm1079, %v1070, %v1072
        %v1081 = vsel %vm1079, %v1072, %v1074
        %v1082 = vsel %vm1079, %v1074, %v1076
        %v1083 = vsel %vm1079, %v1076, %v1078
        %v1085 = vsel %vm297, %v1068, 0
        %v1088 = vand.u32 %v1080, %v304
        %v1091 = vand.u32 %v1081, %v304
        %v1094 = vand.u32 %v1082, %v304
        %v1097 = vand.u32 %v1083, %v304
        %1099 = vmatpush.bf16.msra.mxu0 0
        %1100 = vmatpush.bf16.msra.mxu0 0
        %1101 = vmatpush.bf16.msra.mxu0 0
        %1102 = vmatpush.bf16.msra.mxu0 0
        %1103 = vmatpush.bf16.msra.mxu0 0
        %1104 = vmatpush.bf16.msra.mxu0 0
        %1105 = vmatpush.bf16.msra.mxu0 0
        %1106 = vmatpush.bf16.msra.mxu0 %v1088
        %1107 = vmatmul.bf16.gmra.mxu0 %v1085
        %v1108 = vpop.f32.mrf.mxu0
        %v1109 = vadd.f32 0.0, %v1108
        %v1110 = vpop.f32.mrf.mxu0
        %1111 = vdwg.mxu0
        %1112 = vmatpush.bf16.msra.mxu0 0
        %1113 = vmatpush.bf16.msra.mxu0 0
        %1114 = vmatpush.bf16.msra.mxu0 0
        %1115 = vmatpush.bf16.msra.mxu0 0
        %1116 = vmatpush.bf16.msra.mxu0 0
        %1117 = vmatpush.bf16.msra.mxu0 0
        %1118 = vmatpush.bf16.msra.mxu0 0
        %1119 = vmatpush.bf16.msra.mxu0 %v1091
        %1120 = vmatmul.bf16.gmra.mxu0 %v1085
        %v1121 = vpop.f32.mrf.mxu0
        %v1122 = vadd.f32 0.0, %v1121
        %v1123 = vpop.f32.mrf.mxu0
        %1124 = vdwg.mxu0
        %1125 = vmatpush.bf16.msra.mxu0 0
        %1126 = vmatpush.bf16.msra.mxu0 0
        %1127 = vmatpush.bf16.msra.mxu0 0
        %1128 = vmatpush.bf16.msra.mxu0 0
        %1129 = vmatpush.bf16.msra.mxu0 0
        %1130 = vmatpush.bf16.msra.mxu0 0
        %1131 = vmatpush.bf16.msra.mxu0 0
        %1132 = vmatpush.bf16.msra.mxu0 %v1094
        %1133 = vmatmul.bf16.gmra.mxu0 %v1085
        %v1134 = vpop.f32.mrf.mxu0
        %v1135 = vadd.f32 0.0, %v1134
        %v1136 = vpop.f32.mrf.mxu0
        %1137 = vdwg.mxu0
        %1138 = vmatpush.bf16.msra.mxu0 0
        %1139 = vmatpush.bf16.msra.mxu0 0
        %1140 = vmatpush.bf16.msra.mxu0 0
        %1141 = vmatpush.bf16.msra.mxu0 0
        %1142 = vmatpush.bf16.msra.mxu0 0
        %1143 = vmatpush.bf16.msra.mxu0 0
        %1144 = vmatpush.bf16.msra.mxu0 0
        %1145 = vmatpush.bf16.msra.mxu0 %v1097
        %1146 = vmatmul.bf16.gmra.mxu0 %v1085
        %v1147 = vpop.f32.mrf.mxu0
        %v1148 = vadd.f32 0.0, %v1147
        %v1149 = vpop.f32.mrf.mxu0
        %1150 = vdwg.mxu0
        %v1151 = vadd.f32 %v1063, %v1109
        %v1152 = vadd.f32 %v1064, %v1122
        %v1153 = vadd.f32 %v1065, %v1135
        %v1154 = vadd.f32 %v1066, %v1148
        %s1155 = scalar_lea.vmem %s1, 40
        %v1156 = vld [vmem:[%s1155] sm:$0xf]
        %1157 = vrot.lane.b32.xlu0 %v277, 10
        %v1158 = vpop.permute.xlu0 %1157
        %1159 = vrot.lane.b32.xlu0 %v278, 10
        %v1160 = vpop.permute.xlu0 %1159
        %1161 = vrot.lane.b32.xlu0 %v279, 10
        %v1162 = vpop.permute.xlu0 %1161
        %1163 = vrot.lane.b32.xlu0 %v280, 10
        %v1164 = vpop.permute.xlu0 %1163
        %1165 = vrot.lane.b32.xlu0 %v281, 10
        %v1166 = vpop.permute.xlu0 %1165
        %vm1167 = vcmask 80896
        %v1168 = vsel %vm1167, %v1158, %v1160
        %v1169 = vsel %vm1167, %v1160, %v1162
        %v1170 = vsel %vm1167, %v1162, %v1164
        %v1171 = vsel %vm1167, %v1164, %v1166
        %v1173 = vsel %vm297, %v1156, 0
        %v1176 = vand.u32 %v1168, %v304
        %v1179 = vand.u32 %v1169, %v304
        %v1182 = vand.u32 %v1170, %v304
        %v1185 = vand.u32 %v1171, %v304
        %1187 = vmatpush.bf16.msra.mxu0 0
        %1188 = vmatpush.bf16.msra.mxu0 0
        %1189 = vmatpush.bf16.msra.mxu0 0
        %1190 = vmatpush.bf16.msra.mxu0 0
        %1191 = vmatpush.bf16.msra.mxu0 0
        %1192 = vmatpush.bf16.msra.mxu0 0
        %1193 = vmatpush.bf16.msra.mxu0 0
        %1194 = vmatpush.bf16.msra.mxu0 %v1176
        %1195 = vmatmul.bf16.gmra.mxu0 %v1173
        %v1196 = vpop.f32.mrf.mxu0
        %v1197 = vadd.f32 0.0, %v1196
        %v1198 = vpop.f32.mrf.mxu0
        %1199 = vdwg.mxu0
        %1200 = vmatpush.bf16.msra.mxu0 0
        %1201 = vmatpush.bf16.msra.mxu0 0
        %1202 = vmatpush.bf16.msra.mxu0 0
        %1203 = vmatpush.bf16.msra.mxu0 0
        %1204 = vmatpush.bf16.msra.mxu0 0
        %1205 = vmatpush.bf16.msra.mxu0 0
        %1206 = vmatpush.bf16.msra.mxu0 0
        %1207 = vmatpush.bf16.msra.mxu0 %v1179
        %1208 = vmatmul.bf16.gmra.mxu0 %v1173
        %v1209 = vpop.f32.mrf.mxu0
        %v1210 = vadd.f32 0.0, %v1209
        %v1211 = vpop.f32.mrf.mxu0
        %1212 = vdwg.mxu0
        %1213 = vmatpush.bf16.msra.mxu0 0
        %1214 = vmatpush.bf16.msra.mxu0 0
        %1215 = vmatpush.bf16.msra.mxu0 0
        %1216 = vmatpush.bf16.msra.mxu0 0
        %1217 = vmatpush.bf16.msra.mxu0 0
        %1218 = vmatpush.bf16.msra.mxu0 0
        %1219 = vmatpush.bf16.msra.mxu0 0
        %1220 = vmatpush.bf16.msra.mxu0 %v1182
        %1221 = vmatmul.bf16.gmra.mxu0 %v1173
        %v1222 = vpop.f32.mrf.mxu0
        %v1223 = vadd.f32 0.0, %v1222
        %v1224 = vpop.f32.mrf.mxu0
        %1225 = vdwg.mxu0
        %1226 = vmatpush.bf16.msra.mxu0 0
        %1227 = vmatpush.bf16.msra.mxu0 0
        %1228 = vmatpush.bf16.msra.mxu0 0
        %1229 = vmatpush.bf16.msra.mxu0 0
        %1230 = vmatpush.bf16.msra.mxu0 0
        %1231 = vmatpush.bf16.msra.mxu0 0
        %1232 = vmatpush.bf16.msra.mxu0 0
        %1233 = vmatpush.bf16.msra.mxu0 %v1185
        %1234 = vmatmul.bf16.gmra.mxu0 %v1173
        %v1235 = vpop.f32.mrf.mxu0
        %v1236 = vadd.f32 0.0, %v1235
        %v1237 = vpop.f32.mrf.mxu0
        %1238 = vdwg.mxu0
        %v1239 = vadd.f32 %v1151, %v1197
        %v1240 = vadd.f32 %v1152, %v1210
        %v1241 = vadd.f32 %v1153, %v1223
        %v1242 = vadd.f32 %v1154, %v1236
        %s1243 = scalar_lea.vmem %s1, 44
        %v1244 = vld [vmem:[%s1243] sm:$0xf]
        %1245 = vrot.lane.b32.xlu0 %v277, 9
        %v1246 = vpop.permute.xlu0 %1245
        %1247 = vrot.lane.b32.xlu0 %v278, 9
        %v1248 = vpop.permute.xlu0 %1247
        %1249 = vrot.lane.b32.xlu0 %v279, 9
        %v1250 = vpop.permute.xlu0 %1249
        %1251 = vrot.lane.b32.xlu0 %v280, 9
        %v1252 = vpop.permute.xlu0 %1251
        %1253 = vrot.lane.b32.xlu0 %v281, 9
        %v1254 = vpop.permute.xlu0 %1253
        %vm1255 = vcmask 72704
        %v1256 = vsel %vm1255, %v1246, %v1248
        %v1257 = vsel %vm1255, %v1248, %v1250
        %v1258 = vsel %vm1255, %v1250, %v1252
        %v1259 = vsel %vm1255, %v1252, %v1254
        %v1261 = vsel %vm297, %v1244, 0
        %v1264 = vand.u32 %v1256, %v304
        %v1267 = vand.u32 %v1257, %v304
        %v1270 = vand.u32 %v1258, %v304
        %v1273 = vand.u32 %v1259, %v304
        %1275 = vmatpush.bf16.msra.mxu0 0
        %1276 = vmatpush.bf16.msra.mxu0 0
        %1277 = vmatpush.bf16.msra.mxu0 0
        %1278 = vmatpush.bf16.msra.mxu0 0
        %1279 = vmatpush.bf16.msra.mxu0 0
        %1280 = vmatpush.bf16.msra.mxu0 0
        %1281 = vmatpush.bf16.msra.mxu0 0
        %1282 = vmatpush.bf16.msra.mxu0 %v1264
        %1283 = vmatmul.bf16.gmra.mxu0 %v1261
        %v1284 = vpop.f32.mrf.mxu0
        %v1285 = vadd.f32 0.0, %v1284
        %v1286 = vpop.f32.mrf.mxu0
        %1287 = vdwg.mxu0
        %1288 = vmatpush.bf16.msra.mxu0 0
        %1289 = vmatpush.bf16.msra.mxu0 0
        %1290 = vmatpush.bf16.msra.mxu0 0
        %1291 = vmatpush.bf16.msra.mxu0 0
        %1292 = vmatpush.bf16.msra.mxu0 0
        %1293 = vmatpush.bf16.msra.mxu0 0
        %1294 = vmatpush.bf16.msra.mxu0 0
        %1295 = vmatpush.bf16.msra.mxu0 %v1267
        %1296 = vmatmul.bf16.gmra.mxu0 %v1261
        %v1297 = vpop.f32.mrf.mxu0
        %v1298 = vadd.f32 0.0, %v1297
        %v1299 = vpop.f32.mrf.mxu0
        %1300 = vdwg.mxu0
        %1301 = vmatpush.bf16.msra.mxu0 0
        %1302 = vmatpush.bf16.msra.mxu0 0
        %1303 = vmatpush.bf16.msra.mxu0 0
        %1304 = vmatpush.bf16.msra.mxu0 0
        %1305 = vmatpush.bf16.msra.mxu0 0
        %1306 = vmatpush.bf16.msra.mxu0 0
        %1307 = vmatpush.bf16.msra.mxu0 0
        %1308 = vmatpush.bf16.msra.mxu0 %v1270
        %1309 = vmatmul.bf16.gmra.mxu0 %v1261
        %v1310 = vpop.f32.mrf.mxu0
        %v1311 = vadd.f32 0.0, %v1310
        %v1312 = vpop.f32.mrf.mxu0
        %1313 = vdwg.mxu0
        %1314 = vmatpush.bf16.msra.mxu0 0
        %1315 = vmatpush.bf16.msra.mxu0 0
        %1316 = vmatpush.bf16.msra.mxu0 0
        %1317 = vmatpush.bf16.msra.mxu0 0
        %1318 = vmatpush.bf16.msra.mxu0 0
        %1319 = vmatpush.bf16.msra.mxu0 0
        %1320 = vmatpush.bf16.msra.mxu0 0
        %1321 = vmatpush.bf16.msra.mxu0 %v1273
        %1322 = vmatmul.bf16.gmra.mxu0 %v1261
        %v1323 = vpop.f32.mrf.mxu0
        %v1324 = vadd.f32 0.0, %v1323
        %v1325 = vpop.f32.mrf.mxu0
        %1326 = vdwg.mxu0
        %v1327 = vadd.f32 %v1239, %v1285
        %v1328 = vadd.f32 %v1240, %v1298
        %v1329 = vadd.f32 %v1241, %v1311
        %v1330 = vadd.f32 %v1242, %v1324
        %s1331 = scalar_lea.vmem %s1, 48
        %v1332 = vld [vmem:[%s1331] sm:$0xf]
        %1333 = vrot.lane.b32.xlu0 %v277, 1
        %v1334 = vpop.permute.xlu0 %1333
        %1335 = vrot.lane.b32.xlu0 %v278, 1
        %v1336 = vpop.permute.xlu0 %1335
        %1337 = vrot.lane.b32.xlu0 %v279, 1
        %v1338 = vpop.permute.xlu0 %1337
        %1339 = vrot.lane.b32.xlu0 %v280, 1
        %v1340 = vpop.permute.xlu0 %1339
        %1341 = vrot.lane.b32.xlu0 %v281, 1
        %v1342 = vpop.permute.xlu0 %1341
        %vm1343 = vcmask 7168
        %v1344 = vsel %vm1343, %v1334, %v1336
        %v1345 = vsel %vm1343, %v1336, %v1338
        %v1346 = vsel %vm1343, %v1338, %v1340
        %v1347 = vsel %vm1343, %v1340, %v1342
        %v1349 = vsel %vm297, %v1332, 0
        %v1352 = vand.u32 %v1344, %v304
        %v1355 = vand.u32 %v1345, %v304
        %v1358 = vand.u32 %v1346, %v304
        %v1361 = vand.u32 %v1347, %v304
        %1363 = vmatpush.bf16.msra.mxu0 0
        %1364 = vmatpush.bf16.msra.mxu0 0
        %1365 = vmatpush.bf16.msra.mxu0 0
        %1366 = vmatpush.bf16.msra.mxu0 0
        %1367 = vmatpush.bf16.msra.mxu0 0
        %1368 = vmatpush.bf16.msra.mxu0 0
        %1369 = vmatpush.bf16.msra.mxu0 0
        %1370 = vmatpush.bf16.msra.mxu0 %v1352
        %1371 = vmatmul.bf16.gmra.mxu0 %v1349
        %v1372 = vpop.f32.mrf.mxu0
        %v1373 = vadd.f32 0.0, %v1372
        %v1374 = vpop.f32.mrf.mxu0
        %1375 = vdwg.mxu0
        %1376 = vmatpush.bf16.msra.mxu0 0
        %1377 = vmatpush.bf16.msra.mxu0 0
        %1378 = vmatpush.bf16.msra.mxu0 0
        %1379 = vmatpush.bf16.msra.mxu0 0
        %1380 = vmatpush.bf16.msra.mxu0 0
        %1381 = vmatpush.bf16.msra.mxu0 0
        %1382 = vmatpush.bf16.msra.mxu0 0
        %1383 = vmatpush.bf16.msra.mxu0 %v1355
        %1384 = vmatmul.bf16.gmra.mxu0 %v1349
        %v1385 = vpop.f32.mrf.mxu0
        %v1386 = vadd.f32 0.0, %v1385
        %v1387 = vpop.f32.mrf.mxu0
        %1388 = vdwg.mxu0
        %1389 = vmatpush.bf16.msra.mxu0 0
        %1390 = vmatpush.bf16.msra.mxu0 0
        %1391 = vmatpush.bf16.msra.mxu0 0
        %1392 = vmatpush.bf16.msra.mxu0 0
        %1393 = vmatpush.bf16.msra.mxu0 0
        %1394 = vmatpush.bf16.msra.mxu0 0
        %1395 = vmatpush.bf16.msra.mxu0 0
        %1396 = vmatpush.bf16.msra.mxu0 %v1358
        %1397 = vmatmul.bf16.gmra.mxu0 %v1349
        %v1398 = vpop.f32.mrf.mxu0
        %v1399 = vadd.f32 0.0, %v1398
        %v1400 = vpop.f32.mrf.mxu0
        %1401 = vdwg.mxu0
        %1402 = vmatpush.bf16.msra.mxu0 0
        %1403 = vmatpush.bf16.msra.mxu0 0
        %1404 = vmatpush.bf16.msra.mxu0 0
        %1405 = vmatpush.bf16.msra.mxu0 0
        %1406 = vmatpush.bf16.msra.mxu0 0
        %1407 = vmatpush.bf16.msra.mxu0 0
        %1408 = vmatpush.bf16.msra.mxu0 0
        %1409 = vmatpush.bf16.msra.mxu0 %v1361
        %1410 = vmatmul.bf16.gmra.mxu0 %v1349
        %v1411 = vpop.f32.mrf.mxu0
        %v1412 = vadd.f32 0.0, %v1411
        %v1413 = vpop.f32.mrf.mxu0
        %1414 = vdwg.mxu0
        %v1415 = vadd.f32 %v1327, %v1373
        %v1416 = vadd.f32 %v1328, %v1386
        %v1417 = vadd.f32 %v1329, %v1399
        %v1418 = vadd.f32 %v1330, %v1412
        %v1419 = vld [vmem:[#allocation2 + $0x4] sm:$0xff]
        %v1420 = vld [vmem:[#allocation2 + $0xc] sm:$0xff]
        %v1421 = vld [vmem:[#allocation2 + $0x1c] sm:$0x11]
        %v1422 = vld [vmem:[#allocation2 + $0x24] sm:$0x11]
        %s1423 = scalar_lea.vmem %s1, 52
        %v1424 = vld [vmem:[%s1423] sm:$0xf]
        %v1429 = vunpack.c.l.b16 %v1419
        %v1430 = vunpack.c.h.b16 %v1419
        %v1431 = vunpack.c.l.b16 %v1420
        %v1432 = vunpack.c.h.b16 %v1420
        %v1433 = vunpack.c.l.b16 %v1421
        %v1434 = vunpack.c.h.b16 %v1421
        %v1435 = vunpack.c.l.b16 %v1422
        %v1436 = vunpack.c.h.b16 %v1422
        %v1437 = vpack.c.b16 %v1433, %v1429
        %v1438 = vpack.c.b16 %v1434, %v1430
        %v1439 = vpack.c.b16 %v1435, %v1431
        %v1440 = vpack.c.b16 %v1436, %v1432
        %v1442 = vsel %vm297, %v1424, 0
        %v1445 = vand.u32 %v1437, %v304
        %v1448 = vand.u32 %v1438, %v304
        %v1451 = vand.u32 %v1439, %v304
        %v1454 = vand.u32 %v1440, %v304
        %1456 = vmatpush.bf16.msra.mxu0 0
        %1457 = vmatpush.bf16.msra.mxu0 0
        %1458 = vmatpush.bf16.msra.mxu0 0
        %1459 = vmatpush.bf16.msra.mxu0 0
        %1460 = vmatpush.bf16.msra.mxu0 0
        %1461 = vmatpush.bf16.msra.mxu0 0
        %1462 = vmatpush.bf16.msra.mxu0 0
        %1463 = vmatpush.bf16.msra.mxu0 %v1445
        %1464 = vmatmul.bf16.gmra.mxu0 %v1442
        %v1465 = vpop.f32.mrf.mxu0
        %v1466 = vadd.f32 0.0, %v1465
        %v1467 = vpop.f32.mrf.mxu0
        %1468 = vdwg.mxu0
        %1469 = vmatpush.bf16.msra.mxu0 0
        %1470 = vmatpush.bf16.msra.mxu0 0
        %1471 = vmatpush.bf16.msra.mxu0 0
        %1472 = vmatpush.bf16.msra.mxu0 0
        %1473 = vmatpush.bf16.msra.mxu0 0
        %1474 = vmatpush.bf16.msra.mxu0 0
        %1475 = vmatpush.bf16.msra.mxu0 0
        %1476 = vmatpush.bf16.msra.mxu0 %v1448
        %1477 = vmatmul.bf16.gmra.mxu0 %v1442
        %v1478 = vpop.f32.mrf.mxu0
        %v1479 = vadd.f32 0.0, %v1478
        %v1480 = vpop.f32.mrf.mxu0
        %1481 = vdwg.mxu0
        %1482 = vmatpush.bf16.msra.mxu0 0
        %1483 = vmatpush.bf16.msra.mxu0 0
        %1484 = vmatpush.bf16.msra.mxu0 0
        %1485 = vmatpush.bf16.msra.mxu0 0
        %1486 = vmatpush.bf16.msra.mxu0 0
        %1487 = vmatpush.bf16.msra.mxu0 0
        %1488 = vmatpush.bf16.msra.mxu0 0
        %1489 = vmatpush.bf16.msra.mxu0 %v1451
        %1490 = vmatmul.bf16.gmra.mxu0 %v1442
        %v1491 = vpop.f32.mrf.mxu0
        %v1492 = vadd.f32 0.0, %v1491
        %v1493 = vpop.f32.mrf.mxu0
        %1494 = vdwg.mxu0
        %1495 = vmatpush.bf16.msra.mxu0 0
        %1496 = vmatpush.bf16.msra.mxu0 0
        %1497 = vmatpush.bf16.msra.mxu0 0
        %1498 = vmatpush.bf16.msra.mxu0 0
        %1499 = vmatpush.bf16.msra.mxu0 0
        %1500 = vmatpush.bf16.msra.mxu0 0
        %1501 = vmatpush.bf16.msra.mxu0 0
        %1502 = vmatpush.bf16.msra.mxu0 %v1454
        %1503 = vmatmul.bf16.gmra.mxu0 %v1442
        %v1504 = vpop.f32.mrf.mxu0
        %v1505 = vadd.f32 0.0, %v1504
        %v1506 = vpop.f32.mrf.mxu0
        %1507 = vdwg.mxu0
        %v1508 = vadd.f32 %v1415, %v1466
        %v1509 = vadd.f32 %v1416, %v1479
        %v1510 = vadd.f32 %v1417, %v1492
        %v1511 = vadd.f32 %v1418, %v1505
        %v1512 = vld [vmem:[#allocation2 + $0x4] sm:$0xff]
        %v1513 = vld [vmem:[#allocation2 + $0xc] sm:$0xff]
        %v1514 = vld [vmem:[#allocation2 + $0x14] sm:$0xf]
        %v1515 = vld [vmem:[#allocation2 + $0x1c] sm:$0x11]
        %v1516 = vld [vmem:[#allocation2 + $0x24] sm:$0x11]
        %v1517 = vld [vmem:[#allocation2 + $0x2c] sm:$0x1]
        %s1518 = scalar_lea.vmem %s1, 56
        %v1519 = vld [vmem:[%s1518] sm:$0xf]
        %v1526 = vunpack.c.l.b16 %v1512
        %v1527 = vunpack.c.h.b16 %v1512
        %v1528 = vunpack.c.l.b16 %v1513
        %v1529 = vunpack.c.h.b16 %v1513
        %v1530 = vunpack.c.l.b16 %v1514
        %v1531 = vunpack.c.l.b16 %v1515
        %v1532 = vunpack.c.h.b16 %v1515
        %v1533 = vunpack.c.l.b16 %v1516
        %v1534 = vunpack.c.h.b16 %v1516
        %v1535 = vunpack.c.l.b16 %v1517
        %v1536 = vpack.c.b16 %v1531, %v1526
        %v1537 = vpack.c.b16 %v1532, %v1527
        %v1538 = vpack.c.b16 %v1533, %v1528
        %v1539 = vpack.c.b16 %v1534, %v1529
        %v1540 = vpack.c.b16 %v1535, %v1530
        %1541 = vrot.lane.b32.xlu0 %v1536, 127
        %v1542 = vpop.permute.xlu0 %1541
        %1543 = vrot.lane.b32.xlu0 %v1537, 127
        %v1544 = vpop.permute.xlu0 %1543
        %1545 = vrot.lane.b32.xlu0 %v1538, 127
        %v1546 = vpop.permute.xlu0 %1545
        %1547 = vrot.lane.b32.xlu0 %v1539, 127
        %v1548 = vpop.permute.xlu0 %1547
        %1549 = vrot.lane.b32.xlu0 %v1540, 127
        %v1550 = vpop.permute.xlu0 %1549
        %vm1551 = vcmask 1039360
        %v1552 = vsel %vm1551, %v1542, %v1544
        %v1553 = vsel %vm1551, %v1544, %v1546
        %v1554 = vsel %vm1551, %v1546, %v1548
        %v1555 = vsel %vm1551, %v1548, %v1550
        %v1557 = vsel %vm297, %v1519, 0
        %v1560 = vand.u32 %v1552, %v304
        %v1563 = vand.u32 %v1553, %v304
        %v1566 = vand.u32 %v1554, %v304
        %v1569 = vand.u32 %v1555, %v304
        %1571 = vmatpush.bf16.msra.mxu0 0
        %1572 = vmatpush.bf16.msra.mxu0 0
        %1573 = vmatpush.bf16.msra.mxu0 0
        %1574 = vmatpush.bf16.msra.mxu0 0
        %1575 = vmatpush.bf16.msra.mxu0 0
        %1576 = vmatpush.bf16.msra.mxu0 0
        %1577 = vmatpush.bf16.msra.mxu0 0
        %1578 = vmatpush.bf16.msra.mxu0 %v1560
        %1579 = vmatmul.bf16.gmra.mxu0 %v1557
        %v1580 = vpop.f32.mrf.mxu0
        %v1581 = vadd.f32 0.0, %v1580
        %v1582 = vpop.f32.mrf.mxu0
        %1583 = vdwg.mxu0
        %1584 = vmatpush.bf16.msra.mxu0 0
        %1585 = vmatpush.bf16.msra.mxu0 0
        %1586 = vmatpush.bf16.msra.mxu0 0
        %1587 = vmatpush.bf16.msra.mxu0 0
        %1588 = vmatpush.bf16.msra.mxu0 0
        %1589 = vmatpush.bf16.msra.mxu0 0
        %1590 = vmatpush.bf16.msra.mxu0 0
        %1591 = vmatpush.bf16.msra.mxu0 %v1563
        %1592 = vmatmul.bf16.gmra.mxu0 %v1557
        %v1593 = vpop.f32.mrf.mxu0
        %v1594 = vadd.f32 0.0, %v1593
        %v1595 = vpop.f32.mrf.mxu0
        %1596 = vdwg.mxu0
        %1597 = vmatpush.bf16.msra.mxu0 0
        %1598 = vmatpush.bf16.msra.mxu0 0
        %1599 = vmatpush.bf16.msra.mxu0 0
        %1600 = vmatpush.bf16.msra.mxu0 0
        %1601 = vmatpush.bf16.msra.mxu0 0
        %1602 = vmatpush.bf16.msra.mxu0 0
        %1603 = vmatpush.bf16.msra.mxu0 0
        %1604 = vmatpush.bf16.msra.mxu0 %v1566
        %1605 = vmatmul.bf16.gmra.mxu0 %v1557
        %v1606 = vpop.f32.mrf.mxu0
        %v1607 = vadd.f32 0.0, %v1606
        %v1608 = vpop.f32.mrf.mxu0
        %1609 = vdwg.mxu0
        %1610 = vmatpush.bf16.msra.mxu0 0
        %1611 = vmatpush.bf16.msra.mxu0 0
        %1612 = vmatpush.bf16.msra.mxu0 0
        %1613 = vmatpush.bf16.msra.mxu0 0
        %1614 = vmatpush.bf16.msra.mxu0 0
        %1615 = vmatpush.bf16.msra.mxu0 0
        %1616 = vmatpush.bf16.msra.mxu0 0
        %1617 = vmatpush.bf16.msra.mxu0 %v1569
        %1618 = vmatmul.bf16.gmra.mxu0 %v1557
        %v1619 = vpop.f32.mrf.mxu0
        %v1620 = vadd.f32 0.0, %v1619
        %v1621 = vpop.f32.mrf.mxu0
        %1622 = vdwg.mxu0
        %v1623 = vadd.f32 %v1508, %v1581
        %v1624 = vadd.f32 %v1509, %v1594
        %v1625 = vadd.f32 %v1510, %v1607
        %v1626 = vadd.f32 %v1511, %v1620
        %s1627 = scalar_lea.vmem %s1, 60
        %v1628 = vld [vmem:[%s1627] sm:$0xf]
        %1629 = vrot.lane.b32.xlu0 %v1536, 119
        %v1630 = vpop.permute.xlu0 %1629
        %1631 = vrot.lane.b32.xlu0 %v1537, 119
        %v1632 = vpop.permute.xlu0 %1631
        %1633 = vrot.lane.b32.xlu0 %v1538, 119
        %v1634 = vpop.permute.xlu0 %1633
        %1635 = vrot.lane.b32.xlu0 %v1539, 119
        %v1636 = vpop.permute.xlu0 %1635
        %1637 = vrot.lane.b32.xlu0 %v1540, 119
        %v1638 = vpop.permute.xlu0 %1637
        %vm1639 = vcmask 973824
        %v1640 = vsel %vm1639, %v1630, %v1632
        %v1641 = vsel %vm1639, %v1632, %v1634
        %v1642 = vsel %vm1639, %v1634, %v1636
        %v1643 = vsel %vm1639, %v1636, %v1638
        %v1645 = vsel %vm297, %v1628, 0
        %v1648 = vand.u32 %v1640, %v304
        %v1651 = vand.u32 %v1641, %v304
        %v1654 = vand.u32 %v1642, %v304
        %v1657 = vand.u32 %v1643, %v304
        %1659 = vmatpush.bf16.msra.mxu0 0
        %1660 = vmatpush.bf16.msra.mxu0 0
        %1661 = vmatpush.bf16.msra.mxu0 0
        %1662 = vmatpush.bf16.msra.mxu0 0
        %1663 = vmatpush.bf16.msra.mxu0 0
        %1664 = vmatpush.bf16.msra.mxu0 0
        %1665 = vmatpush.bf16.msra.mxu0 0
        %1666 = vmatpush.bf16.msra.mxu0 %v1648
        %1667 = vmatmul.bf16.gmra.mxu0 %v1645
        %v1668 = vpop.f32.mrf.mxu0
        %v1669 = vadd.f32 0.0, %v1668
        %v1670 = vpop.f32.mrf.mxu0
        %1671 = vdwg.mxu0
        %1672 = vmatpush.bf16.msra.mxu0 0
        %1673 = vmatpush.bf16.msra.mxu0 0
        %1674 = vmatpush.bf16.msra.mxu0 0
        %1675 = vmatpush.bf16.msra.mxu0 0
        %1676 = vmatpush.bf16.msra.mxu0 0
        %1677 = vmatpush.bf16.msra.mxu0 0
        %1678 = vmatpush.bf16.msra.mxu0 0
        %1679 = vmatpush.bf16.msra.mxu0 %v1651
        %1680 = vmatmul.bf16.gmra.mxu0 %v1645
        %v1681 = vpop.f32.mrf.mxu0
        %v1682 = vadd.f32 0.0, %v1681
        %v1683 = vpop.f32.mrf.mxu0
        %1684 = vdwg.mxu0
        %1685 = vmatpush.bf16.msra.mxu0 0
        %1686 = vmatpush.bf16.msra.mxu0 0
        %1687 = vmatpush.bf16.msra.mxu0 0
        %1688 = vmatpush.bf16.msra.mxu0 0
        %1689 = vmatpush.bf16.msra.mxu0 0
        %1690 = vmatpush.bf16.msra.mxu0 0
        %1691 = vmatpush.bf16.msra.mxu0 0
        %1692 = vmatpush.bf16.msra.mxu0 %v1654
        %1693 = vmatmul.bf16.gmra.mxu0 %v1645
        %v1694 = vpop.f32.mrf.mxu0
        %v1695 = vadd.f32 0.0, %v1694
        %v1696 = vpop.f32.mrf.mxu0
        %1697 = vdwg.mxu0
        %1698 = vmatpush.bf16.msra.mxu0 0
        %1699 = vmatpush.bf16.msra.mxu0 0
        %1700 = vmatpush.bf16.msra.mxu0 0
        %1701 = vmatpush.bf16.msra.mxu0 0
        %1702 = vmatpush.bf16.msra.mxu0 0
        %1703 = vmatpush.bf16.msra.mxu0 0
        %1704 = vmatpush.bf16.msra.mxu0 0
        %1705 = vmatpush.bf16.msra.mxu0 %v1657
        %1706 = vmatmul.bf16.gmra.mxu0 %v1645
        %v1707 = vpop.f32.mrf.mxu0
        %v1708 = vadd.f32 0.0, %v1707
        %v1709 = vpop.f32.mrf.mxu0
        %1710 = vdwg.mxu0
        %v1711 = vadd.f32 %v1623, %v1669
        %v1712 = vadd.f32 %v1624, %v1682
        %v1713 = vadd.f32 %v1625, %v1695
        %v1714 = vadd.f32 %v1626, %v1708
        %s1715 = scalar_lea.vmem %s1, 64
        %v1716 = vld [vmem:[%s1715] sm:$0xf]
        %1717 = vrot.lane.b32.xlu0 %v1536, 118
        %v1718 = vpop.permute.xlu0 %1717
        %1719 = vrot.lane.b32.xlu0 %v1537, 118
        %v1720 = vpop.permute.xlu0 %1719
        %1721 = vrot.lane.b32.xlu0 %v1538, 118
        %v1722 = vpop.permute.xlu0 %1721
        %1723 = vrot.lane.b32.xlu0 %v1539, 118
        %v1724 = vpop.permute.xlu0 %1723
        %1725 = vrot.lane.b32.xlu0 %v1540, 118
        %v1726 = vpop.permute.xlu0 %1725
        %vm1727 = vcmask 965632
        %v1728 = vsel %vm1727, %v1718, %v1720
        %v1729 = vsel %vm1727, %v1720, %v1722
        %v1730 = vsel %vm1727, %v1722, %v1724
        %v1731 = vsel %vm1727, %v1724, %v1726
        %v1733 = vsel %vm297, %v1716, 0
        %v1736 = vand.u32 %v1728, %v304
        %v1739 = vand.u32 %v1729, %v304
        %v1742 = vand.u32 %v1730, %v304
        %v1745 = vand.u32 %v1731, %v304
        %1747 = vmatpush.bf16.msra.mxu0 0
        %1748 = vmatpush.bf16.msra.mxu0 0
        %1749 = vmatpush.bf16.msra.mxu0 0
        %1750 = vmatpush.bf16.msra.mxu0 0
        %1751 = vmatpush.bf16.msra.mxu0 0
        %1752 = vmatpush.bf16.msra.mxu0 0
        %1753 = vmatpush.bf16.msra.mxu0 0
        %1754 = vmatpush.bf16.msra.mxu0 %v1736
        %1755 = vmatmul.bf16.gmra.mxu0 %v1733
        %v1756 = vpop.f32.mrf.mxu0
        %v1757 = vadd.f32 0.0, %v1756
        %v1758 = vpop.f32.mrf.mxu0
        %1759 = vdwg.mxu0
        %1760 = vmatpush.bf16.msra.mxu0 0
        %1761 = vmatpush.bf16.msra.mxu0 0
        %1762 = vmatpush.bf16.msra.mxu0 0
        %1763 = vmatpush.bf16.msra.mxu0 0
        %1764 = vmatpush.bf16.msra.mxu0 0
        %1765 = vmatpush.bf16.msra.mxu0 0
        %1766 = vmatpush.bf16.msra.mxu0 0
        %1767 = vmatpush.bf16.msra.mxu0 %v1739
        %1768 = vmatmul.bf16.gmra.mxu0 %v1733
        %v1769 = vpop.f32.mrf.mxu0
        %v1770 = vadd.f32 0.0, %v1769
        %v1771 = vpop.f32.mrf.mxu0
        %1772 = vdwg.mxu0
        %1773 = vmatpush.bf16.msra.mxu0 0
        %1774 = vmatpush.bf16.msra.mxu0 0
        %1775 = vmatpush.bf16.msra.mxu0 0
        %1776 = vmatpush.bf16.msra.mxu0 0
        %1777 = vmatpush.bf16.msra.mxu0 0
        %1778 = vmatpush.bf16.msra.mxu0 0
        %1779 = vmatpush.bf16.msra.mxu0 0
        %1780 = vmatpush.bf16.msra.mxu0 %v1742
        %1781 = vmatmul.bf16.gmra.mxu0 %v1733
        %v1782 = vpop.f32.mrf.mxu0
        %v1783 = vadd.f32 0.0, %v1782
        %v1784 = vpop.f32.mrf.mxu0
        %1785 = vdwg.mxu0
        %1786 = vmatpush.bf16.msra.mxu0 0
        %1787 = vmatpush.bf16.msra.mxu0 0
        %1788 = vmatpush.bf16.msra.mxu0 0
        %1789 = vmatpush.bf16.msra.mxu0 0
        %1790 = vmatpush.bf16.msra.mxu0 0
        %1791 = vmatpush.bf16.msra.mxu0 0
        %1792 = vmatpush.bf16.msra.mxu0 0
        %1793 = vmatpush.bf16.msra.mxu0 %v1745
        %1794 = vmatmul.bf16.gmra.mxu0 %v1733
        %v1795 = vpop.f32.mrf.mxu0
        %v1796 = vadd.f32 0.0, %v1795
        %v1797 = vpop.f32.mrf.mxu0
        %1798 = vdwg.mxu0
        %v1799 = vadd.f32 %v1711, %v1757
        %v1800 = vadd.f32 %v1712, %v1770
        %v1801 = vadd.f32 %v1713, %v1783
        %v1802 = vadd.f32 %v1714, %v1796
        %s1803 = scalar_lea.vmem %s1, 68
        %v1804 = vld [vmem:[%s1803] sm:$0xf]
        %1805 = vrot.lane.b32.xlu0 %v1536, 117
        %v1806 = vpop.permute.xlu0 %1805
        %1807 = vrot.lane.b32.xlu0 %v1537, 117
        %v1808 = vpop.permute.xlu0 %1807
        %1809 = vrot.lane.b32.xlu0 %v1538, 117
        %v1810 = vpop.permute.xlu0 %1809
        %1811 = vrot.lane.b32.xlu0 %v1539, 117
        %v1812 = vpop.permute.xlu0 %1811
        %1813 = vrot.lane.b32.xlu0 %v1540, 117
        %v1814 = vpop.permute.xlu0 %1813
        %vm1815 = vcmask 957440
        %v1816 = vsel %vm1815, %v1806, %v1808
        %v1817 = vsel %vm1815, %v1808, %v1810
        %v1818 = vsel %vm1815, %v1810, %v1812
        %v1819 = vsel %vm1815, %v1812, %v1814
        %v1821 = vsel %vm297, %v1804, 0
        %v1824 = vand.u32 %v1816, %v304
        %v1827 = vand.u32 %v1817, %v304
        %v1830 = vand.u32 %v1818, %v304
        %v1833 = vand.u32 %v1819, %v304
        %1835 = vmatpush.bf16.msra.mxu0 0
        %1836 = vmatpush.bf16.msra.mxu0 0
        %1837 = vmatpush.bf16.msra.mxu0 0
        %1838 = vmatpush.bf16.msra.mxu0 0
        %1839 = vmatpush.bf16.msra.mxu0 0
        %1840 = vmatpush.bf16.msra.mxu0 0
        %1841 = vmatpush.bf16.msra.mxu0 0
        %1842 = vmatpush.bf16.msra.mxu0 %v1824
        %1843 = vmatmul.bf16.gmra.mxu0 %v1821
        %v1844 = vpop.f32.mrf.mxu0
        %v1845 = vadd.f32 0.0, %v1844
        %v1846 = vpop.f32.mrf.mxu0
        %1847 = vdwg.mxu0
        %1848 = vmatpush.bf16.msra.mxu0 0
        %1849 = vmatpush.bf16.msra.mxu0 0
        %1850 = vmatpush.bf16.msra.mxu0 0
        %1851 = vmatpush.bf16.msra.mxu0 0
        %1852 = vmatpush.bf16.msra.mxu0 0
        %1853 = vmatpush.bf16.msra.mxu0 0
        %1854 = vmatpush.bf16.msra.mxu0 0
        %1855 = vmatpush.bf16.msra.mxu0 %v1827
        %1856 = vmatmul.bf16.gmra.mxu0 %v1821
        %v1857 = vpop.f32.mrf.mxu0
        %v1858 = vadd.f32 0.0, %v1857
        %v1859 = vpop.f32.mrf.mxu0
        %1860 = vdwg.mxu0
        %1861 = vmatpush.bf16.msra.mxu0 0
        %1862 = vmatpush.bf16.msra.mxu0 0
        %1863 = vmatpush.bf16.msra.mxu0 0
        %1864 = vmatpush.bf16.msra.mxu0 0
        %1865 = vmatpush.bf16.msra.mxu0 0
        %1866 = vmatpush.bf16.msra.mxu0 0
        %1867 = vmatpush.bf16.msra.mxu0 0
        %1868 = vmatpush.bf16.msra.mxu0 %v1830
        %1869 = vmatmul.bf16.gmra.mxu0 %v1821
        %v1870 = vpop.f32.mrf.mxu0
        %v1871 = vadd.f32 0.0, %v1870
        %v1872 = vpop.f32.mrf.mxu0
        %1873 = vdwg.mxu0
        %1874 = vmatpush.bf16.msra.mxu0 0
        %1875 = vmatpush.bf16.msra.mxu0 0
        %1876 = vmatpush.bf16.msra.mxu0 0
        %1877 = vmatpush.bf16.msra.mxu0 0
        %1878 = vmatpush.bf16.msra.mxu0 0
        %1879 = vmatpush.bf16.msra.mxu0 0
        %1880 = vmatpush.bf16.msra.mxu0 0
        %1881 = vmatpush.bf16.msra.mxu0 %v1833
        %1882 = vmatmul.bf16.gmra.mxu0 %v1821
        %v1883 = vpop.f32.mrf.mxu0
        %v1884 = vadd.f32 0.0, %v1883
        %v1885 = vpop.f32.mrf.mxu0
        %1886 = vdwg.mxu0
        %v1887 = vadd.f32 %v1799, %v1845
        %v1888 = vadd.f32 %v1800, %v1858
        %v1889 = vadd.f32 %v1801, %v1871
        %v1890 = vadd.f32 %v1802, %v1884
        %s1891 = scalar_lea.vmem %s1, 72
        %v1892 = vld [vmem:[%s1891] sm:$0xf]
        %1893 = vrot.lane.b32.xlu0 %v1536, 39
        %v1894 = vpop.permute.xlu0 %1893
        %1895 = vrot.lane.b32.xlu0 %v1537, 39
        %v1896 = vpop.permute.xlu0 %1895
        %1897 = vrot.lane.b32.xlu0 %v1538, 39
        %v1898 = vpop.permute.xlu0 %1897
        %1899 = vrot.lane.b32.xlu0 %v1539, 39
        %v1900 = vpop.permute.xlu0 %1899
        %1901 = vrot.lane.b32.xlu0 %v1540, 39
        %v1902 = vpop.permute.xlu0 %1901
        %vm1903 = vcmask 318464
        %v1904 = vsel %vm1903, %v1894, %v1896
        %v1905 = vsel %vm1903, %v1896, %v1898
        %v1906 = vsel %vm1903, %v1898, %v1900
        %v1907 = vsel %vm1903, %v1900, %v1902
        %v1909 = vsel %vm297, %v1892, 0
        %v1912 = vand.u32 %v1904, %v304
        %v1915 = vand.u32 %v1905, %v304
        %v1918 = vand.u32 %v1906, %v304
        %v1921 = vand.u32 %v1907, %v304
        %1923 = vmatpush.bf16.msra.mxu0 0
        %1924 = vmatpush.bf16.msra.mxu0 0
        %1925 = vmatpush.bf16.msra.mxu0 0
        %1926 = vmatpush.bf16.msra.mxu0 0
        %1927 = vmatpush.bf16.msra.mxu0 0
        %1928 = vmatpush.bf16.msra.mxu0 0
        %1929 = vmatpush.bf16.msra.mxu0 0
        %1930 = vmatpush.bf16.msra.mxu0 %v1912
        %1931 = vmatmul.bf16.gmra.mxu0 %v1909
        %v1932 = vpop.f32.mrf.mxu0
        %v1933 = vadd.f32 0.0, %v1932
        %v1934 = vpop.f32.mrf.mxu0
        %1935 = vdwg.mxu0
        %1936 = vmatpush.bf16.msra.mxu0 0
        %1937 = vmatpush.bf16.msra.mxu0 0
        %1938 = vmatpush.bf16.msra.mxu0 0
        %1939 = vmatpush.bf16.msra.mxu0 0
        %1940 = vmatpush.bf16.msra.mxu0 0
        %1941 = vmatpush.bf16.msra.mxu0 0
        %1942 = vmatpush.bf16.msra.mxu0 0
        %1943 = vmatpush.bf16.msra.mxu0 %v1915
        %1944 = vmatmul.bf16.gmra.mxu0 %v1909
        %v1945 = vpop.f32.mrf.mxu0
        %v1946 = vadd.f32 0.0, %v1945
        %v1947 = vpop.f32.mrf.mxu0
        %1948 = vdwg.mxu0
        %1949 = vmatpush.bf16.msra.mxu0 0
        %1950 = vmatpush.bf16.msra.mxu0 0
        %1951 = vmatpush.bf16.msra.mxu0 0
        %1952 = vmatpush.bf16.msra.mxu0 0
        %1953 = vmatpush.bf16.msra.mxu0 0
        %1954 = vmatpush.bf16.msra.mxu0 0
        %1955 = vmatpush.bf16.msra.mxu0 0
        %1956 = vmatpush.bf16.msra.mxu0 %v1918
        %1957 = vmatmul.bf16.gmra.mxu0 %v1909
        %v1958 = vpop.f32.mrf.mxu0
        %v1959 = vadd.f32 0.0, %v1958
        %v1960 = vpop.f32.mrf.mxu0
        %1961 = vdwg.mxu0
        %1962 = vmatpush.bf16.msra.mxu0 0
        %1963 = vmatpush.bf16.msra.mxu0 0
        %1964 = vmatpush.bf16.msra.mxu0 0
        %1965 = vmatpush.bf16.msra.mxu0 0
        %1966 = vmatpush.bf16.msra.mxu0 0
        %1967 = vmatpush.bf16.msra.mxu0 0
        %1968 = vmatpush.bf16.msra.mxu0 0
        %1969 = vmatpush.bf16.msra.mxu0 %v1921
        %1970 = vmatmul.bf16.gmra.mxu0 %v1909
        %v1971 = vpop.f32.mrf.mxu0
        %v1972 = vadd.f32 0.0, %v1971
        %v1973 = vpop.f32.mrf.mxu0
        %1974 = vdwg.mxu0
        %v1975 = vadd.f32 %v1887, %v1933
        %v1976 = vadd.f32 %v1888, %v1946
        %v1977 = vadd.f32 %v1889, %v1959
        %v1978 = vadd.f32 %v1890, %v1972
        %s1979 = scalar_lea.vmem %s1, 76
        %v1980 = vld [vmem:[%s1979] sm:$0xf]
        %1981 = vrot.lane.b32.xlu0 %v1536, 38
        %v1982 = vpop.permute.xlu0 %1981
        %1983 = vrot.lane.b32.xlu0 %v1537, 38
        %v1984 = vpop.permute.xlu0 %1983
        %1985 = vrot.lane.b32.xlu0 %v1538, 38
        %v1986 = vpop.permute.xlu0 %1985
        %1987 = vrot.lane.b32.xlu0 %v1539, 38
        %v1988 = vpop.permute.xlu0 %1987
        %1989 = vrot.lane.b32.xlu0 %v1540, 38
        %v1990 = vpop.permute.xlu0 %1989
        %vm1991 = vcmask 310272
        %v1992 = vsel %vm1991, %v1982, %v1984
        %v1993 = vsel %vm1991, %v1984, %v1986
        %v1994 = vsel %vm1991, %v1986, %v1988
        %v1995 = vsel %vm1991, %v1988, %v1990
        %v1997 = vsel %vm297, %v1980, 0
        %v2000 = vand.u32 %v1992, %v304
        %v2003 = vand.u32 %v1993, %v304
        %v2006 = vand.u32 %v1994, %v304
        %v2009 = vand.u32 %v1995, %v304
        %2011 = vmatpush.bf16.msra.mxu0 0
        %2012 = vmatpush.bf16.msra.mxu0 0
        %2013 = vmatpush.bf16.msra.mxu0 0
        %2014 = vmatpush.bf16.msra.mxu0 0
        %2015 = vmatpush.bf16.msra.mxu0 0
        %2016 = vmatpush.bf16.msra.mxu0 0
        %2017 = vmatpush.bf16.msra.mxu0 0
        %2018 = vmatpush.bf16.msra.mxu0 %v2000
        %2019 = vmatmul.bf16.gmra.mxu0 %v1997
        %v2020 = vpop.f32.mrf.mxu0
        %v2021 = vadd.f32 0.0, %v2020
        %v2022 = vpop.f32.mrf.mxu0
        %2023 = vdwg.mxu0
        %2024 = vmatpush.bf16.msra.mxu0 0
        %2025 = vmatpush.bf16.msra.mxu0 0
        %2026 = vmatpush.bf16.msra.mxu0 0
        %2027 = vmatpush.bf16.msra.mxu0 0
        %2028 = vmatpush.bf16.msra.mxu0 0
        %2029 = vmatpush.bf16.msra.mxu0 0
        %2030 = vmatpush.bf16.msra.mxu0 0
        %2031 = vmatpush.bf16.msra.mxu0 %v2003
        %2032 = vmatmul.bf16.gmra.mxu0 %v1997
        %v2033 = vpop.f32.mrf.mxu0
        %v2034 = vadd.f32 0.0, %v2033
        %v2035 = vpop.f32.mrf.mxu0
        %2036 = vdwg.mxu0
        %2037 = vmatpush.bf16.msra.mxu0 0
        %2038 = vmatpush.bf16.msra.mxu0 0
        %2039 = vmatpush.bf16.msra.mxu0 0
        %2040 = vmatpush.bf16.msra.mxu0 0
        %2041 = vmatpush.bf16.msra.mxu0 0
        %2042 = vmatpush.bf16.msra.mxu0 0
        %2043 = vmatpush.bf16.msra.mxu0 0
        %2044 = vmatpush.bf16.msra.mxu0 %v2006
        %2045 = vmatmul.bf16.gmra.mxu0 %v1997
        %v2046 = vpop.f32.mrf.mxu0
        %v2047 = vadd.f32 0.0, %v2046
        %v2048 = vpop.f32.mrf.mxu0
        %2049 = vdwg.mxu0
        %2050 = vmatpush.bf16.msra.mxu0 0
        %2051 = vmatpush.bf16.msra.mxu0 0
        %2052 = vmatpush.bf16.msra.mxu0 0
        %2053 = vmatpush.bf16.msra.mxu0 0
        %2054 = vmatpush.bf16.msra.mxu0 0
        %2055 = vmatpush.bf16.msra.mxu0 0
        %2056 = vmatpush.bf16.msra.mxu0 0
        %2057 = vmatpush.bf16.msra.mxu0 %v2009
        %2058 = vmatmul.bf16.gmra.mxu0 %v1997
        %v2059 = vpop.f32.mrf.mxu0
        %v2060 = vadd.f32 0.0, %v2059
        %v2061 = vpop.f32.mrf.mxu0
        %2062 = vdwg.mxu0
        %v2063 = vadd.f32 %v1975, %v2021
        %v2064 = vadd.f32 %v1976, %v2034
        %v2065 = vadd.f32 %v1977, %v2047
        %v2066 = vadd.f32 %v1978, %v2060
        %s2067 = scalar_lea.vmem %s1, 80
        %v2068 = vld [vmem:[%s2067] sm:$0xf]
        %2069 = vrot.lane.b32.xlu0 %v1536, 37
        %v2070 = vpop.permute.xlu0 %2069
        %2071 = vrot.lane.b32.xlu0 %v1537, 37
        %v2072 = vpop.permute.xlu0 %2071
        %2073 = vrot.lane.b32.xlu0 %v1538, 37
        %v2074 = vpop.permute.xlu0 %2073
        %2075 = vrot.lane.b32.xlu0 %v1539, 37
        %v2076 = vpop.permute.xlu0 %2075
        %2077 = vrot.lane.b32.xlu0 %v1540, 37
        %v2078 = vpop.permute.xlu0 %2077
        %vm2079 = vcmask 302080
        %v2080 = vsel %vm2079, %v2070, %v2072
        %v2081 = vsel %vm2079, %v2072, %v2074
        %v2082 = vsel %vm2079, %v2074, %v2076
        %v2083 = vsel %vm2079, %v2076, %v2078
        %v2085 = vsel %vm297, %v2068, 0
        %v2088 = vand.u32 %v2080, %v304
        %v2091 = vand.u32 %v2081, %v304
        %v2094 = vand.u32 %v2082, %v304
        %v2097 = vand.u32 %v2083, %v304
        %2099 = vmatpush.bf16.msra.mxu0 0
        %2100 = vmatpush.bf16.msra.mxu0 0
        %2101 = vmatpush.bf16.msra.mxu0 0
        %2102 = vmatpush.bf16.msra.mxu0 0
        %2103 = vmatpush.bf16.msra.mxu0 0
        %2104 = vmatpush.bf16.msra.mxu0 0
        %2105 = vmatpush.bf16.msra.mxu0 0
        %2106 = vmatpush.bf16.msra.mxu0 %v2088
        %2107 = vmatmul.bf16.gmra.mxu0 %v2085
        %v2108 = vpop.f32.mrf.mxu0
        %v2109 = vadd.f32 0.0, %v2108
        %v2110 = vpop.f32.mrf.mxu0
        %2111 = vdwg.mxu0
        %2112 = vmatpush.bf16.msra.mxu0 0
        %2113 = vmatpush.bf16.msra.mxu0 0
        %2114 = vmatpush.bf16.msra.mxu0 0
        %2115 = vmatpush.bf16.msra.mxu0 0
        %2116 = vmatpush.bf16.msra.mxu0 0
        %2117 = vmatpush.bf16.msra.mxu0 0
        %2118 = vmatpush.bf16.msra.mxu0 0
        %2119 = vmatpush.bf16.msra.mxu0 %v2091
        %2120 = vmatmul.bf16.gmra.mxu0 %v2085
        %v2121 = vpop.f32.mrf.mxu0
        %v2122 = vadd.f32 0.0, %v2121
        %v2123 = vpop.f32.mrf.mxu0
        %2124 = vdwg.mxu0
        %2125 = vmatpush.bf16.msra.mxu0 0
        %2126 = vmatpush.bf16.msra.mxu0 0
        %2127 = vmatpush.bf16.msra.mxu0 0
        %2128 = vmatpush.bf16.msra.mxu0 0
        %2129 = vmatpush.bf16.msra.mxu0 0
        %2130 = vmatpush.bf16.msra.mxu0 0
        %2131 = vmatpush.bf16.msra.mxu0 0
        %2132 = vmatpush.bf16.msra.mxu0 %v2094
        %2133 = vmatmul.bf16.gmra.mxu0 %v2085
        %v2134 = vpop.f32.mrf.mxu0
        %v2135 = vadd.f32 0.0, %v2134
        %v2136 = vpop.f32.mrf.mxu0
        %2137 = vdwg.mxu0
        %2138 = vmatpush.bf16.msra.mxu0 0
        %2139 = vmatpush.bf16.msra.mxu0 0
        %2140 = vmatpush.bf16.msra.mxu0 0
        %2141 = vmatpush.bf16.msra.mxu0 0
        %2142 = vmatpush.bf16.msra.mxu0 0
        %2143 = vmatpush.bf16.msra.mxu0 0
        %2144 = vmatpush.bf16.msra.mxu0 0
        %2145 = vmatpush.bf16.msra.mxu0 %v2097
        %2146 = vmatmul.bf16.gmra.mxu0 %v2085
        %v2147 = vpop.f32.mrf.mxu0
        %v2148 = vadd.f32 0.0, %v2147
        %v2149 = vpop.f32.mrf.mxu0
        %2150 = vdwg.mxu0
        %v2151 = vadd.f32 %v2063, %v2109
        %v2152 = vadd.f32 %v2064, %v2122
        %v2153 = vadd.f32 %v2065, %v2135
        %v2154 = vadd.f32 %v2066, %v2148
        %s2155 = scalar_lea.vmem %s1, 84
        %v2156 = vld [vmem:[%s2155] sm:$0xf]
        %2157 = vrot.lane.b32.xlu0 %v1536, 29
        %v2158 = vpop.permute.xlu0 %2157
        %2159 = vrot.lane.b32.xlu0 %v1537, 29
        %v2160 = vpop.permute.xlu0 %2159
        %2161 = vrot.lane.b32.xlu0 %v1538, 29
        %v2162 = vpop.permute.xlu0 %2161
        %2163 = vrot.lane.b32.xlu0 %v1539, 29
        %v2164 = vpop.permute.xlu0 %2163
        %2165 = vrot.lane.b32.xlu0 %v1540, 29
        %v2166 = vpop.permute.xlu0 %2165
        %vm2167 = vcmask 236544
        %v2168 = vsel %vm2167, %v2158, %v2160
        %v2169 = vsel %vm2167, %v2160, %v2162
        %v2170 = vsel %vm2167, %v2162, %v2164
        %v2171 = vsel %vm2167, %v2164, %v2166
        %v2173 = vsel %vm297, %v2156, 0
        %v2176 = vand.u32 %v2168, %v304
        %v2179 = vand.u32 %v2169, %v304
        %v2182 = vand.u32 %v2170, %v304
        %v2185 = vand.u32 %v2171, %v304
        %2187 = vmatpush.bf16.msra.mxu0 0
        %2188 = vmatpush.bf16.msra.mxu0 0
        %2189 = vmatpush.bf16.msra.mxu0 0
        %2190 = vmatpush.bf16.msra.mxu0 0
        %2191 = vmatpush.bf16.msra.mxu0 0
        %2192 = vmatpush.bf16.msra.mxu0 0
        %2193 = vmatpush.bf16.msra.mxu0 0
        %2194 = vmatpush.bf16.msra.mxu0 %v2176
        %2195 = vmatmul.bf16.gmra.mxu0 %v2173
        %v2196 = vpop.f32.mrf.mxu0
        %v2197 = vadd.f32 0.0, %v2196
        %v2198 = vpop.f32.mrf.mxu0
        %2199 = vdwg.mxu0
        %2200 = vmatpush.bf16.msra.mxu0 0
        %2201 = vmatpush.bf16.msra.mxu0 0
        %2202 = vmatpush.bf16.msra.mxu0 0
        %2203 = vmatpush.bf16.msra.mxu0 0
        %2204 = vmatpush.bf16.msra.mxu0 0
        %2205 = vmatpush.bf16.msra.mxu0 0
        %2206 = vmatpush.bf16.msra.mxu0 0
        %2207 = vmatpush.bf16.msra.mxu0 %v2179
        %2208 = vmatmul.bf16.gmra.mxu0 %v2173
        %v2209 = vpop.f32.mrf.mxu0
        %v2210 = vadd.f32 0.0, %v2209
        %v2211 = vpop.f32.mrf.mxu0
        %2212 = vdwg.mxu0
        %2213 = vmatpush.bf16.msra.mxu0 0
        %2214 = vmatpush.bf16.msra.mxu0 0
        %2215 = vmatpush.bf16.msra.mxu0 0
        %2216 = vmatpush.bf16.msra.mxu0 0
        %2217 = vmatpush.bf16.msra.mxu0 0
        %2218 = vmatpush.bf16.msra.mxu0 0
        %2219 = vmatpush.bf16.msra.mxu0 0
        %2220 = vmatpush.bf16.msra.mxu0 %v2182
        %2221 = vmatmul.bf16.gmra.mxu0 %v2173
        %v2222 = vpop.f32.mrf.mxu0
        %v2223 = vadd.f32 0.0, %v2222
        %v2224 = vpop.f32.mrf.mxu0
        %2225 = vdwg.mxu0
        %2226 = vmatpush.bf16.msra.mxu0 0
        %2227 = vmatpush.bf16.msra.mxu0 0
        %2228 = vmatpush.bf16.msra.mxu0 0
        %2229 = vmatpush.bf16.msra.mxu0 0
        %2230 = vmatpush.bf16.msra.mxu0 0
        %2231 = vmatpush.bf16.msra.mxu0 0
        %2232 = vmatpush.bf16.msra.mxu0 0
        %2233 = vmatpush.bf16.msra.mxu0 %v2185
        %2234 = vmatmul.bf16.gmra.mxu0 %v2173
        %v2235 = vpop.f32.mrf.mxu0
        %v2236 = vadd.f32 0.0, %v2235
        %v2237 = vpop.f32.mrf.mxu0
        %2238 = vdwg.mxu0
        %v2239 = vadd.f32 %v2151, %v2197
        %v2240 = vadd.f32 %v2152, %v2210
        %v2241 = vadd.f32 %v2153, %v2223
        %v2242 = vadd.f32 %v2154, %v2236
        %s2243 = scalar_lea.vmem %s1, 88
        %v2244 = vld [vmem:[%s2243] sm:$0xf]
        %2245 = vrot.lane.b32.xlu0 %v1536, 28
        %v2246 = vpop.permute.xlu0 %2245
        %2247 = vrot.lane.b32.xlu0 %v1537, 28
        %v2248 = vpop.permute.xlu0 %2247
        %2249 = vrot.lane.b32.xlu0 %v1538, 28
        %v2250 = vpop.permute.xlu0 %2249
        %2251 = vrot.lane.b32.xlu0 %v1539, 28
        %v2252 = vpop.permute.xlu0 %2251
        %2253 = vrot.lane.b32.xlu0 %v1540, 28
        %v2254 = vpop.permute.xlu0 %2253
        %vm2255 = vcmask 228352
        %v2256 = vsel %vm2255, %v2246, %v2248
        %v2257 = vsel %vm2255, %v2248, %v2250
        %v2258 = vsel %vm2255, %v2250, %v2252
        %v2259 = vsel %vm2255, %v2252, %v2254
        %v2261 = vsel %vm297, %v2244, 0
        %v2264 = vand.u32 %v2256, %v304
        %v2267 = vand.u32 %v2257, %v304
        %v2270 = vand.u32 %v2258, %v304
        %v2273 = vand.u32 %v2259, %v304
        %2275 = vmatpush.bf16.msra.mxu0 0
        %2276 = vmatpush.bf16.msra.mxu0 0
        %2277 = vmatpush.bf16.msra.mxu0 0
        %2278 = vmatpush.bf16.msra.mxu0 0
        %2279 = vmatpush.bf16.msra.mxu0 0
        %2280 = vmatpush.bf16.msra.mxu0 0
        %2281 = vmatpush.bf16.msra.mxu0 0
        %2282 = vmatpush.bf16.msra.mxu0 %v2264
        %2283 = vmatmul.bf16.gmra.mxu0 %v2261
        %v2284 = vpop.f32.mrf.mxu0
        %v2285 = vadd.f32 0.0, %v2284
        %v2286 = vpop.f32.mrf.mxu0
        %2287 = vdwg.mxu0
        %2288 = vmatpush.bf16.msra.mxu0 0
        %2289 = vmatpush.bf16.msra.mxu0 0
        %2290 = vmatpush.bf16.msra.mxu0 0
        %2291 = vmatpush.bf16.msra.mxu0 0
        %2292 = vmatpush.bf16.msra.mxu0 0
        %2293 = vmatpush.bf16.msra.mxu0 0
        %2294 = vmatpush.bf16.msra.mxu0 0
        %2295 = vmatpush.bf16.msra.mxu0 %v2267
        %2296 = vmatmul.bf16.gmra.mxu0 %v2261
        %v2297 = vpop.f32.mrf.mxu0
        %v2298 = vadd.f32 0.0, %v2297
        %v2299 = vpop.f32.mrf.mxu0
        %2300 = vdwg.mxu0
        %2301 = vmatpush.bf16.msra.mxu0 0
        %2302 = vmatpush.bf16.msra.mxu0 0
        %2303 = vmatpush.bf16.msra.mxu0 0
        %2304 = vmatpush.bf16.msra.mxu0 0
        %2305 = vmatpush.bf16.msra.mxu0 0
        %2306 = vmatpush.bf16.msra.mxu0 0
        %2307 = vmatpush.bf16.msra.mxu0 0
        %2308 = vmatpush.bf16.msra.mxu0 %v2270
        %2309 = vmatmul.bf16.gmra.mxu0 %v2261
        %v2310 = vpop.f32.mrf.mxu0
        %v2311 = vadd.f32 0.0, %v2310
        %v2312 = vpop.f32.mrf.mxu0
        %2313 = vdwg.mxu0
        %2314 = vmatpush.bf16.msra.mxu0 0
        %2315 = vmatpush.bf16.msra.mxu0 0
        %2316 = vmatpush.bf16.msra.mxu0 0
        %2317 = vmatpush.bf16.msra.mxu0 0
        %2318 = vmatpush.bf16.msra.mxu0 0
        %2319 = vmatpush.bf16.msra.mxu0 0
        %2320 = vmatpush.bf16.msra.mxu0 0
        %2321 = vmatpush.bf16.msra.mxu0 %v2273
        %2322 = vmatmul.bf16.gmra.mxu0 %v2261
        %v2323 = vpop.f32.mrf.mxu0
        %v2324 = vadd.f32 0.0, %v2323
        %v2325 = vpop.f32.mrf.mxu0
        %2326 = vdwg.mxu0
        %v2327 = vadd.f32 %v2239, %v2285
        %v2328 = vadd.f32 %v2240, %v2298
        %v2329 = vadd.f32 %v2241, %v2311
        %v2330 = vadd.f32 %v2242, %v2324
        %s2331 = scalar_lea.vmem %s1, 92
        %v2332 = vld [vmem:[%s2331] sm:$0xf]
        %2333 = vrot.lane.b32.xlu0 %v1536, 27
        %v2334 = vpop.permute.xlu0 %2333
        %2335 = vrot.lane.b32.xlu0 %v1537, 27
        %v2336 = vpop.permute.xlu0 %2335
        %2337 = vrot.lane.b32.xlu0 %v1538, 27
        %v2338 = vpop.permute.xlu0 %2337
        %2339 = vrot.lane.b32.xlu0 %v1539, 27
        %v2340 = vpop.permute.xlu0 %2339
        %2341 = vrot.lane.b32.xlu0 %v1540, 27
        %v2342 = vpop.permute.xlu0 %2341
        %vm2343 = vcmask 220160
        %v2344 = vsel %vm2343, %v2334, %v2336
        %v2345 = vsel %vm2343, %v2336, %v2338
        %v2346 = vsel %vm2343, %v2338, %v2340
        %v2347 = vsel %vm2343, %v2340, %v2342
        %v2349 = vsel %vm297, %v2332, 0
        %v2352 = vand.u32 %v2344, %v304
        %v2355 = vand.u32 %v2345, %v304
        %v2358 = vand.u32 %v2346, %v304
        %v2361 = vand.u32 %v2347, %v304
        %2363 = vmatpush.bf16.msra.mxu0 0
        %2364 = vmatpush.bf16.msra.mxu0 0
        %2365 = vmatpush.bf16.msra.mxu0 0
        %2366 = vmatpush.bf16.msra.mxu0 0
        %2367 = vmatpush.bf16.msra.mxu0 0
        %2368 = vmatpush.bf16.msra.mxu0 0
        %2369 = vmatpush.bf16.msra.mxu0 0
        %2370 = vmatpush.bf16.msra.mxu0 %v2352
        %2371 = vmatmul.bf16.gmra.mxu0 %v2349
        %v2372 = vpop.f32.mrf.mxu0
        %v2373 = vadd.f32 0.0, %v2372
        %v2374 = vpop.f32.mrf.mxu0
        %2375 = vdwg.mxu0
        %2376 = vmatpush.bf16.msra.mxu0 0
        %2377 = vmatpush.bf16.msra.mxu0 0
        %2378 = vmatpush.bf16.msra.mxu0 0
        %2379 = vmatpush.bf16.msra.mxu0 0
        %2380 = vmatpush.bf16.msra.mxu0 0
        %2381 = vmatpush.bf16.msra.mxu0 0
        %2382 = vmatpush.bf16.msra.mxu0 0
        %2383 = vmatpush.bf16.msra.mxu0 %v2355
        %2384 = vmatmul.bf16.gmra.mxu0 %v2349
        %v2385 = vpop.f32.mrf.mxu0
        %v2386 = vadd.f32 0.0, %v2385
        %v2387 = vpop.f32.mrf.mxu0
        %2388 = vdwg.mxu0
        %2389 = vmatpush.bf16.msra.mxu0 0
        %2390 = vmatpush.bf16.msra.mxu0 0
        %2391 = vmatpush.bf16.msra.mxu0 0
        %2392 = vmatpush.bf16.msra.mxu0 0
        %2393 = vmatpush.bf16.msra.mxu0 0
        %2394 = vmatpush.bf16.msra.mxu0 0
        %2395 = vmatpush.bf16.msra.mxu0 0
        %2396 = vmatpush.bf16.msra.mxu0 %v2358
        %2397 = vmatmul.bf16.gmra.mxu0 %v2349
        %v2398 = vpop.f32.mrf.mxu0
        %v2399 = vadd.f32 0.0, %v2398
        %v2400 = vpop.f32.mrf.mxu0
        %2401 = vdwg.mxu0
        %2402 = vmatpush.bf16.msra.mxu0 0
        %2403 = vmatpush.bf16.msra.mxu0 0
        %2404 = vmatpush.bf16.msra.mxu0 0
        %2405 = vmatpush.bf16.msra.mxu0 0
        %2406 = vmatpush.bf16.msra.mxu0 0
        %2407 = vmatpush.bf16.msra.mxu0 0
        %2408 = vmatpush.bf16.msra.mxu0 0
        %2409 = vmatpush.bf16.msra.mxu0 %v2361
        %2410 = vmatmul.bf16.gmra.mxu0 %v2349
        %v2411 = vpop.f32.mrf.mxu0
        %v2412 = vadd.f32 0.0, %v2411
        %v2413 = vpop.f32.mrf.mxu0
        %2414 = vdwg.mxu0
        %v2415 = vadd.f32 %v2327, %v2373
        %v2416 = vadd.f32 %v2328, %v2386
        %v2417 = vadd.f32 %v2329, %v2399
        %v2418 = vadd.f32 %v2330, %v2412
        %s2419 = scalar_lea.vmem %s1, 96
        %v2420 = vld [vmem:[%s2419] sm:$0xf]
        %2421 = vrot.lane.b32.xlu0 %v1536, 19
        %v2422 = vpop.permute.xlu0 %2421
        %2423 = vrot.lane.b32.xlu0 %v1537, 19
        %v2424 = vpop.permute.xlu0 %2423
        %2425 = vrot.lane.b32.xlu0 %v1538, 19
        %v2426 = vpop.permute.xlu0 %2425
        %2427 = vrot.lane.b32.xlu0 %v1539, 19
        %v2428 = vpop.permute.xlu0 %2427
        %2429 = vrot.lane.b32.xlu0 %v1540, 19
        %v2430 = vpop.permute.xlu0 %2429
        %vm2431 = vcmask 154624
        %v2432 = vsel %vm2431, %v2422, %v2424
        %v2433 = vsel %vm2431, %v2424, %v2426
        %v2434 = vsel %vm2431, %v2426, %v2428
        %v2435 = vsel %vm2431, %v2428, %v2430
        %v2437 = vsel %vm297, %v2420, 0
        %v2440 = vand.u32 %v2432, %v304
        %v2443 = vand.u32 %v2433, %v304
        %v2446 = vand.u32 %v2434, %v304
        %v2449 = vand.u32 %v2435, %v304
        %2451 = vmatpush.bf16.msra.mxu0 0
        %2452 = vmatpush.bf16.msra.mxu0 0
        %2453 = vmatpush.bf16.msra.mxu0 0
        %2454 = vmatpush.bf16.msra.mxu0 0
        %2455 = vmatpush.bf16.msra.mxu0 0
        %2456 = vmatpush.bf16.msra.mxu0 0
        %2457 = vmatpush.bf16.msra.mxu0 0
        %2458 = vmatpush.bf16.msra.mxu0 %v2440
        %2459 = vmatmul.bf16.gmra.mxu0 %v2437
        %v2460 = vpop.f32.mrf.mxu0
        %v2461 = vadd.f32 0.0, %v2460
        %v2462 = vpop.f32.mrf.mxu0
        %2463 = vdwg.mxu0
        %2464 = vmatpush.bf16.msra.mxu0 0
        %2465 = vmatpush.bf16.msra.mxu0 0
        %2466 = vmatpush.bf16.msra.mxu0 0
        %2467 = vmatpush.bf16.msra.mxu0 0
        %2468 = vmatpush.bf16.msra.mxu0 0
        %2469 = vmatpush.bf16.msra.mxu0 0
        %2470 = vmatpush.bf16.msra.mxu0 0
        %2471 = vmatpush.bf16.msra.mxu0 %v2443
        %2472 = vmatmul.bf16.gmra.mxu0 %v2437
        %v2473 = vpop.f32.mrf.mxu0
        %v2474 = vadd.f32 0.0, %v2473
        %v2475 = vpop.f32.mrf.mxu0
        %2476 = vdwg.mxu0
        %2477 = vmatpush.bf16.msra.mxu0 0
        %2478 = vmatpush.bf16.msra.mxu0 0
        %2479 = vmatpush.bf16.msra.mxu0 0
        %2480 = vmatpush.bf16.msra.mxu0 0
        %2481 = vmatpush.bf16.msra.mxu0 0
        %2482 = vmatpush.bf16.msra.mxu0 0
        %2483 = vmatpush.bf16.msra.mxu0 0
        %2484 = vmatpush.bf16.msra.mxu0 %v2446
        %2485 = vmatmul.bf16.gmra.mxu0 %v2437
        %v2486 = vpop.f32.mrf.mxu0
        %v2487 = vadd.f32 0.0, %v2486
        %v2488 = vpop.f32.mrf.mxu0
        %2489 = vdwg.mxu0
        %2490 = vmatpush.bf16.msra.mxu0 0
        %2491 = vmatpush.bf16.msra.mxu0 0
        %2492 = vmatpush.bf16.msra.mxu0 0
        %2493 = vmatpush.bf16.msra.mxu0 0
        %2494 = vmatpush.bf16.msra.mxu0 0
        %2495 = vmatpush.bf16.msra.mxu0 0
        %2496 = vmatpush.bf16.msra.mxu0 0
        %2497 = vmatpush.bf16.msra.mxu0 %v2449
        %2498 = vmatmul.bf16.gmra.mxu0 %v2437
        %v2499 = vpop.f32.mrf.mxu0
        %v2500 = vadd.f32 0.0, %v2499
        %v2501 = vpop.f32.mrf.mxu0
        %2502 = vdwg.mxu0
        %v2503 = vadd.f32 %v2415, %v2461
        %v2504 = vadd.f32 %v2416, %v2474
        %v2505 = vadd.f32 %v2417, %v2487
        %v2506 = vadd.f32 %v2418, %v2500
        %s2507 = scalar_lea.vmem %s1, 100
        %v2508 = vld [vmem:[%s2507] sm:$0xf]
        %2509 = vrot.lane.b32.xlu0 %v1536, 18
        %v2510 = vpop.permute.xlu0 %2509
        %2511 = vrot.lane.b32.xlu0 %v1537, 18
        %v2512 = vpop.permute.xlu0 %2511
        %2513 = vrot.lane.b32.xlu0 %v1538, 18
        %v2514 = vpop.permute.xlu0 %2513
        %2515 = vrot.lane.b32.xlu0 %v1539, 18
        %v2516 = vpop.permute.xlu0 %2515
        %2517 = vrot.lane.b32.xlu0 %v1540, 18
        %v2518 = vpop.permute.xlu0 %2517
        %vm2519 = vcmask 146432
        %v2520 = vsel %vm2519, %v2510, %v2512
        %v2521 = vsel %vm2519, %v2512, %v2514
        %v2522 = vsel %vm2519, %v2514, %v2516
        %v2523 = vsel %vm2519, %v2516, %v2518
        %v2525 = vsel %vm297, %v2508, 0
        %v2528 = vand.u32 %v2520, %v304
        %v2531 = vand.u32 %v2521, %v304
        %v2534 = vand.u32 %v2522, %v304
        %v2537 = vand.u32 %v2523, %v304
        %2539 = vmatpush.bf16.msra.mxu0 0
        %2540 = vmatpush.bf16.msra.mxu0 0
        %2541 = vmatpush.bf16.msra.mxu0 0
        %2542 = vmatpush.bf16.msra.mxu0 0
        %2543 = vmatpush.bf16.msra.mxu0 0
        %2544 = vmatpush.bf16.msra.mxu0 0
        %2545 = vmatpush.bf16.msra.mxu0 0
        %2546 = vmatpush.bf16.msra.mxu0 %v2528
        %2547 = vmatmul.bf16.gmra.mxu0 %v2525
        %v2548 = vpop.f32.mrf.mxu0
        %v2549 = vadd.f32 0.0, %v2548
        %v2550 = vpop.f32.mrf.mxu0
        %2551 = vdwg.mxu0
        %2552 = vmatpush.bf16.msra.mxu0 0
        %2553 = vmatpush.bf16.msra.mxu0 0
        %2554 = vmatpush.bf16.msra.mxu0 0
        %2555 = vmatpush.bf16.msra.mxu0 0
        %2556 = vmatpush.bf16.msra.mxu0 0
        %2557 = vmatpush.bf16.msra.mxu0 0
        %2558 = vmatpush.bf16.msra.mxu0 0
        %2559 = vmatpush.bf16.msra.mxu0 %v2531
        %2560 = vmatmul.bf16.gmra.mxu0 %v2525
        %v2561 = vpop.f32.mrf.mxu0
        %v2562 = vadd.f32 0.0, %v2561
        %v2563 = vpop.f32.mrf.mxu0
        %2564 = vdwg.mxu0
        %2565 = vmatpush.bf16.msra.mxu0 0
        %2566 = vmatpush.bf16.msra.mxu0 0
        %2567 = vmatpush.bf16.msra.mxu0 0
        %2568 = vmatpush.bf16.msra.mxu0 0
        %2569 = vmatpush.bf16.msra.mxu0 0
        %2570 = vmatpush.bf16.msra.mxu0 0
        %2571 = vmatpush.bf16.msra.mxu0 0
        %2572 = vmatpush.bf16.msra.mxu0 %v2534
        %2573 = vmatmul.bf16.gmra.mxu0 %v2525
        %v2574 = vpop.f32.mrf.mxu0
        %v2575 = vadd.f32 0.0, %v2574
        %v2576 = vpop.f32.mrf.mxu0
        %2577 = vdwg.mxu0
        %2578 = vmatpush.bf16.msra.mxu0 0
        %2579 = vmatpush.bf16.msra.mxu0 0
        %2580 = vmatpush.bf16.msra.mxu0 0
        %2581 = vmatpush.bf16.msra.mxu0 0
        %2582 = vmatpush.bf16.msra.mxu0 0
        %2583 = vmatpush.bf16.msra.mxu0 0
        %2584 = vmatpush.bf16.msra.mxu0 0
        %2585 = vmatpush.bf16.msra.mxu0 %v2537
        %2586 = vmatmul.bf16.gmra.mxu0 %v2525
        %v2587 = vpop.f32.mrf.mxu0
        %v2588 = vadd.f32 0.0, %v2587
        %v2589 = vpop.f32.mrf.mxu0
        %2590 = vdwg.mxu0
        %v2591 = vadd.f32 %v2503, %v2549
        %v2592 = vadd.f32 %v2504, %v2562
        %v2593 = vadd.f32 %v2505, %v2575
        %v2594 = vadd.f32 %v2506, %v2588
        %s2595 = scalar_lea.vmem %s1, 104
        %v2596 = vld [vmem:[%s2595] sm:$0xf]
        %2597 = vrot.lane.b32.xlu0 %v1536, 17
        %v2598 = vpop.permute.xlu0 %2597
        %2599 = vrot.lane.b32.xlu0 %v1537, 17
        %v2600 = vpop.permute.xlu0 %2599
        %2601 = vrot.lane.b32.xlu0 %v1538, 17
        %v2602 = vpop.permute.xlu0 %2601
        %2603 = vrot.lane.b32.xlu0 %v1539, 17
        %v2604 = vpop.permute.xlu0 %2603
        %2605 = vrot.lane.b32.xlu0 %v1540, 17
        %v2606 = vpop.permute.xlu0 %2605
        %vm2607 = vcmask 138240
        %v2608 = vsel %vm2607, %v2598, %v2600
        %v2609 = vsel %vm2607, %v2600, %v2602
        %v2610 = vsel %vm2607, %v2602, %v2604
        %v2611 = vsel %vm2607, %v2604, %v2606
        %v2613 = vsel %vm297, %v2596, 0
        %v2616 = vand.u32 %v2608, %v304
        %v2619 = vand.u32 %v2609, %v304
        %v2622 = vand.u32 %v2610, %v304
        %v2625 = vand.u32 %v2611, %v304
        %2627 = vmatpush.bf16.msra.mxu0 0
        %2628 = vmatpush.bf16.msra.mxu0 0
        %2629 = vmatpush.bf16.msra.mxu0 0
        %2630 = vmatpush.bf16.msra.mxu0 0
        %2631 = vmatpush.bf16.msra.mxu0 0
        %2632 = vmatpush.bf16.msra.mxu0 0
        %2633 = vmatpush.bf16.msra.mxu0 0
        %2634 = vmatpush.bf16.msra.mxu0 %v2616
        %2635 = vmatmul.bf16.gmra.mxu0 %v2613
        %v2636 = vpop.f32.mrf.mxu0
        %v2637 = vadd.f32 0.0, %v2636
        %v2638 = vpop.f32.mrf.mxu0
        %2639 = vdwg.mxu0
        %2640 = vmatpush.bf16.msra.mxu0 0
        %2641 = vmatpush.bf16.msra.mxu0 0
        %2642 = vmatpush.bf16.msra.mxu0 0
        %2643 = vmatpush.bf16.msra.mxu0 0
        %2644 = vmatpush.bf16.msra.mxu0 0
        %2645 = vmatpush.bf16.msra.mxu0 0
        %2646 = vmatpush.bf16.msra.mxu0 0
        %2647 = vmatpush.bf16.msra.mxu0 %v2619
        %2648 = vmatmul.bf16.gmra.mxu0 %v2613
        %v2649 = vpop.f32.mrf.mxu0
        %v2650 = vadd.f32 0.0, %v2649
        %v2651 = vpop.f32.mrf.mxu0
        %2652 = vdwg.mxu0
        %2653 = vmatpush.bf16.msra.mxu0 0
        %2654 = vmatpush.bf16.msra.mxu0 0
        %2655 = vmatpush.bf16.msra.mxu0 0
        %2656 = vmatpush.bf16.msra.mxu0 0
        %2657 = vmatpush.bf16.msra.mxu0 0
        %2658 = vmatpush.bf16.msra.mxu0 0
        %2659 = vmatpush.bf16.msra.mxu0 0
        %2660 = vmatpush.bf16.msra.mxu0 %v2622
        %2661 = vmatmul.bf16.gmra.mxu0 %v2613
        %v2662 = vpop.f32.mrf.mxu0
        %v2663 = vadd.f32 0.0, %v2662
        %v2664 = vpop.f32.mrf.mxu0
        %2665 = vdwg.mxu0
        %2666 = vmatpush.bf16.msra.mxu0 0
        %2667 = vmatpush.bf16.msra.mxu0 0
        %2668 = vmatpush.bf16.msra.mxu0 0
        %2669 = vmatpush.bf16.msra.mxu0 0
        %2670 = vmatpush.bf16.msra.mxu0 0
        %2671 = vmatpush.bf16.msra.mxu0 0
        %2672 = vmatpush.bf16.msra.mxu0 0
        %2673 = vmatpush.bf16.msra.mxu0 %v2625
        %2674 = vmatmul.bf16.gmra.mxu0 %v2613
        %v2675 = vpop.f32.mrf.mxu0
        %v2676 = vadd.f32 0.0, %v2675
        %v2677 = vpop.f32.mrf.mxu0
        %2678 = vdwg.mxu0
        %v2679 = vadd.f32 %v2591, %v2637
        %v2680 = vadd.f32 %v2592, %v2650
        %v2681 = vadd.f32 %v2593, %v2663
        %v2682 = vadd.f32 %v2594, %v2676
        %v2683 = vld [vmem:[%s183] sm:$0xff]
        %v2684 = vld [vmem:[%s183 + $0x8] sm:$0xff]
        %v2685 = vunpack.c.l.bf16 %v2683
        %v2686 = vunpack.c.h.bf16 %v2683
        %v2687 = vunpack.c.l.bf16 %v2684
        %v2688 = vunpack.c.h.bf16 %v2684
        %v2689 = vadd.f32 %v2679, %v2685
        %v2690 = vadd.f32 %v2680, %v2686
        %v2691 = vadd.f32 %v2681, %v2687
        %v2692 = vadd.f32 %v2682, %v2688
        %v2693 = vunpack.c.l.bf16 %v1421
        %v2694 = vunpack.c.h.bf16 %v1421
        %v2695 = vunpack.c.l.bf16 %v1422
        %v2696 = vunpack.c.h.bf16 %v1422
        %vm2697 = vcmp.gt.f32.partialorder %v2693, 0.0
        %vm2698 = vcmp.gt.f32.partialorder %v2694, 0.0
        %vm2699 = vcmp.gt.f32.partialorder %v2695, 0.0
        %vm2700 = vcmp.gt.f32.partialorder %v2696, 0.0
        %v2701 = vsel %vm2697, 1, 0
        %v2702 = vsel %vm2698, 1, 0
        %v2703 = vsel %vm2699, 1, 0
        %v2704 = vsel %vm2700, 1, 0
        %v2705 = vperm.slane %v2701, 0
        %v2706 = vperm.slane %v2702, 0
        %v2707 = vperm.slane %v2703, 0
        %v2708 = vperm.slane %v2704, 0
        %vm2709 = vcmp.eq.s32.totalorder %v2705, 1
        %vm2710 = vcmp.eq.s32.totalorder %v2706, 1
        %vm2711 = vcmp.eq.s32.totalorder %v2707, 1
        %vm2712 = vcmp.eq.s32.totalorder %v2708, 1
        %v2713 = vsel %vm2709, %v2689, 0.0
        %v2714 = vsel %vm2710, %v2690, 0.0
        %v2715 = vsel %vm2711, %v2691, 0.0
        %v2716 = vsel %vm2712, %v2692, 0.0
        %v2717 = vsel %vm2697, 1.0, 0.0
        %v2718 = vsel %vm2698, 1.0, 0.0
        %v2719 = vsel %vm2699, 1.0, 0.0
        %v2720 = vsel %vm2700, 1.0, 0.0
        %v2721 = vpack.c.bf16 %v2714, %v2713
        %v2722 = vpack.c.bf16 %v2716, %v2715
        %v2723 = vpack.c.bf16 %v2718, %v2717
        %v2724 = vpack.c.bf16 %v2720, %v2719
        %2725 = vst [vmem:[%s200] sm:$0xff] %v2721
        %2726 = vst [vmem:[%s200 + $0x8] sm:$0xff] %v2722
        %vm2727 = vcmask 1040384
        %vm2728 = vsmask.f32 256
        %vm2729 = vmand %vm2727, %vm2728
        %vm2730 = vcmask 1044484
        %vm2731 = vsmask.f32 4352
        %vm2732 = vmand %vm2730, %vm2731
        %vm2733 = vmor %vm2732, %vm2729
        %v2734 = vld [vmem:[%s200 + $0x10] sm:$0x11]
        %v2735 = vsel %vm2733, %v2723, %v2734
        %2736 = vst [vmem:[%s200 + $0x10] sm:$0x11] %v2735
        %v2737 = vld [vmem:[%s200 + $0x18] sm:$0x11]
        %v2738 = vsel %vm2733, %v2724, %v2737
        %2739 = vst [vmem:[%s200 + $0x18] sm:$0x11] %v2738
        %v2740 = vadd.f32 %v2713, %v2714
        %v2741 = vadd.f32 %v2740, %v2715
        %v2742 = vadd.f32 %v2741, %v2716
        %2743 = vadd.xlane.f32.xlu0 %v2742
        %v2744 = vpop.xlane.xlu0 %2743
        %v2745 = vmul.f32 %v2713, %v2713
        %v2746 = vmul.f32 %v2714, %v2714
        %v2747 = vmul.f32 %v2715, %v2715
        %v2748 = vmul.f32 %v2716, %v2716
        %v2749 = vadd.f32 %v2745, %v2746
        %v2750 = vadd.f32 %v2749, %v2747
        %v2751 = vadd.f32 %v2750, %v2748
        %2752 = vadd.xlane.f32.xlu0 %v2751
        %v2753 = vpop.xlane.xlu0 %2752
        %2755 = vset.pattern.permute.xlu0 0
        %2756 = vperm.xlu0 %2755, %v2744
        %v2757 = vpop.permute.xlu0 %2756
        %2760 = vset.pattern.permute.xlu0 0
        %2761 = vperm.xlu0 %2760, %v2753
        %v2762 = vpop.permute.xlu0 %2761
        %2764 = vst [vmem:[%s207] sm:$0xff] %v2757
        %2765 = vst [vmem:[%s207 + $0x8] sm:$0xff] %v2762
        %s2766 = sand.u32 %s78, 1
        %s2767 = sand.u32 %s78, 1
        %s2768 = smul.addr %s2767, 32
        %s2769 = scalar_lea.vmem [#allocation5], %s2768
        %s2770 = sand.u32 %s104, 1
        %s2771 = scalar_lea.sflag [#allocation7], %s2770
        %s2772 = sand.u32 %s104, 1
        %s2773 = smul.addr %s2772, 16
        %s2774 = scalar_lea.vmem [#allocation6], %s2773
        // Predicated region
        $region71: #{upblock_forward.6} parent=46 // pred_check
          %p2775 = pneg %p88
        $region72: #{upblock_forward.6} parent=46 // pred_check_branch
          %2777 = sbr.rel (%p2775) target = $region74
        $region73: #{upblock_forward.6} parent=46 // pred_region
          %s2778 = sadd.s32 %s19, 1
          %s2779 = smul.u32 4, %s2778
          %s2780 = smul.addr %s2779, 4
          %s2781 = scalar_lea.vmem %s3, %s2780
          // Predicated region
          $region75: #{upblock_forward.6} parent=73 // pred_check
            _
          $region76: #{upblock_forward.6} parent=73 // pred_check_branch
            %2783 = sbr.rel (0) target = $region78
          $region77: #{upblock_forward.6} parent=73 // pred_region
            // Predicated region
            $region79: #{upblock_forward.6} parent=77 // pred_check
              _
            $region80: #{upblock_forward.6} parent=77 // pred_check_branch
              %2785 = sbr.rel (0) target = $region82
            $region81: #{upblock_forward.6} parent=77 // pred_region
              loop: start=0, step=1, limit=1
              $region83: #{upblock_forward.6} parent=81 // loop_pre_header
                _
              $region84: #{upblock_forward.6} parent=81 // loop_header
                %s2787 = sphi 0, %s2791
                %p2788 = scmp.ge.s32.totalorder %s2787, 1
                %s2792 = sphi %s2769, %s2769
                %s2793 = sphi %s2781, %s2781
              $region85: #{upblock_forward.6} parent=81 // loop_header_branch
                %2790 = sbr.rel (%p2788) target = $region89
              $region86: #{upblock_forward.6} parent=81 // loop_body
                %v2794 = vld [vmem:[%s2792] sm:$0xff]
                %2795 = vst [vmem:[%s2793] sm:$0xff] %v2794
                %v2796 = vld [vmem:[%s2792 + $0x8] sm:$0xff]
                %2797 = vst [vmem:[%s2793 + $0x8] sm:$0xff] %v2796
                %v2798 = vld [vmem:[%s2792 + $0x10] sm:$0xff]
                %2799 = vst [vmem:[%s2793 + $0x60] sm:$0xff] %v2798
                %v2800 = vld [vmem:[%s2792 + $0x18] sm:$0xff]
                %2801 = vst [vmem:[%s2793 + $0x68] sm:$0xff] %v2800
              $region87: #{upblock_forward.6} parent=81 // loop_footer
                %s2791 = sadd.s32 1, %s2787
              $region88: #{upblock_forward.6} parent=81 // loop_footer_branch
                %2786 = sbr.rel target = $region84
              $region89: #{upblock_forward.6} parent=81 // loop_exit
                _
            $region82: #{upblock_forward.6} parent=77 // pred_fallthru
              _
            // Predicated region
            $region90: #{upblock_forward.6} parent=77 // pred_check
              _
            $region91: #{upblock_forward.6} parent=77 // pred_check_branch
              %2803 = sbr.rel target = $region93
            $region92: #{upblock_forward.6} parent=77 // pred_region
              _
            $region93: #{upblock_forward.6} parent=77 // pred_fallthru
              _
          $region78: #{upblock_forward.6} parent=73 // pred_fallthru
            _
          %2804 = vnop
        $region74: #{upblock_forward.6} parent=46 // pred_fallthru
          _
        // Predicated region
        $region94: #{upblock_forward.6} parent=46 // pred_check
          %p2805 = pneg %p114
        $region95: #{upblock_forward.6} parent=46 // pred_check_branch
          %2807 = sbr.rel (%p2805) target = $region97
        $region96: #{upblock_forward.6} parent=46 // pred_region
          %2809 = vsyncadd %s2771, 0
          %s2810 = smul.addr %s19, 2
          %s2811 = smul.addr %s2810, 8
          %s2812 = scalar_lea.hbm %s4, %s2811
          %s2813 = sshll.u32 %s2774, 4
          %s2814 = int_to_ptr.vmem [resolvable:$true] %s2813
          %s2815 = sshll.u32 %s2812, 4
          %s2816 = int_to_ptr.hbm [resolvable:$true] %s2815
          %2821 = dma.vmem_to_hbm [thread:$0]  %s2814, 256, %s2816, %s2771, 128, 128, 8
        $region97: #{upblock_forward.6} parent=46 // pred_fallthru
          _
      $region47: #{upblock_forward.6} parent=5 // pred_fallthru
        _
      %p2822 = scmp.le.s32.totalorder 2, %s14
      // Predicated region
      $region98: #{upblock_forward.6} parent=5 // pred_check
        %p2823 = pneg %p2822
      $region99: #{upblock_forward.6} parent=5 // pred_check_branch
        %2825 = sbr.rel (%p2823) target = $region101
      $region100: #{upblock_forward.6} parent=5 // pred_region
        %s2826 = ssub.s32 %s14, 2
        // Predicated region
        $region102: #{upblock_forward.6} parent=100 // pred_check
          %p2827 = pneg %p94
        $region103: #{upblock_forward.6} parent=100 // pred_check_branch
          %2829 = sbr.rel (%p2827) target = $region105
        $region104: #{upblock_forward.6} parent=100 // pred_region
          %s2830 = sand.u32 %s79, 1
          %s2831 = sand.u32 %s79, 1
          %s2832 = smul.addr %s2831, 32
          %s2833 = scalar_lea.vmem [#allocation5], %s2832
        $region105: #{upblock_forward.6} parent=100 // pred_fallthru
          _
        // Predicated region
        $region106: #{upblock_forward.6} parent=100 // pred_check
          %p2834 = pneg %p120
        $region107: #{upblock_forward.6} parent=100 // pred_check_branch
          %2836 = sbr.rel (%p2834) target = $region109
        $region108: #{upblock_forward.6} parent=100 // pred_region
          %s2837 = sand.u32 %s105, 1
          %s2838 = scalar_lea.sflag [#allocation7], %s2837
          %s2839 = sand.u32 %s105, 1
          %s2840 = smul.addr %s2839, 16
          %s2841 = scalar_lea.vmem [#allocation6], %s2840
          %2843 = dma.done %s2838, 256
        $region109: #{upblock_forward.6} parent=100 // pred_fallthru
          _
      $region101: #{upblock_forward.6} parent=5 // pred_fallthru
        _
    $region6: #{upblock_forward.6} parent=1 // loop_footer
      %s18 = sadd.s32 1, %s14
    $region7: #{upblock_forward.6} parent=1 // loop_footer_branch
      %13 = sbr.rel target = $region3
    $region8: #{upblock_forward.6} parent=1 // loop_exit
      _
    %2844 = vsyncpa [#allocation7], 1
    %s2845 = scalar_lea.sflag [#allocation7], 1
    %2846 = vsyncpa %s2845, 1
  %2847 = vsyncmov [#allocation3]
  %s2848 = vpop.sfrf %2847
  %p2849 = scmp.eq.s32.totalorder %s2848, 0
  %p2850 = pneg %p2849
  %2852 = shalt.err (%p2850)

// kernel: upblock_forward.5
$region0: #{upblock_forward.5}
  #allocation0 [shape = 'u32[]', space=smem, size = 0x4, offset = 0x4, fixed_abs, tag = 'smem constant byte address 0x4 - core index']
  #allocation1 [shape = 'u32[72,128]{1,0:T(1,128)}', space=vmem, size = 0x9000, scoped, tag = 'internal scratch']
  #allocation2 [shape = 'bf16[9,768]{1,0:T(8,128)(2,1)}', space=vmem, size = 0x6000, scoped, tag = 'scratch operand']
  #allocation3 [shape = 's32[1]{0}', space=sflag, size = 0x4, scoped, tag = 'scratch operand']
  #allocation5 [shape = 's32[]', space=sflag, size = 0x4, offset = 0, fixed_abs, tag = 'sflag constant byte address 0x0 - dummy sync flag']
  %s0 = inlined_call_operand.vmem [shape: bf16[9,3072], index: 0, kind: input, shape index: {}]
  %s1 = inlined_call_operand.vmem [shape: bf16[27,8,9], index: 1, kind: input, shape index: {}]
  %s2 = inlined_call_operand.vmem [shape: bf16[9,3072], index: 2, kind: output, shape index: {0}]
  %s3 = inlined_call_operand.vmem [shape: f32[4,16,128], index: 3, kind: output, shape index: {1}]
  %4 = xla_tuple %s2, %s3
  %s5 = sld [smem:[#allocation0]]
  $region83: #{upblock_forward.5} parent=0
    _
  %s7 = ssub.s32 1, %s5
  %s8 = scalar_select 0, %s7, %s5
  $region1: #{upblock_forward.5} parent=0
    #allocation4 [shape = 'u8[32768]{0}', space=vmem, size = 0x8000, scoped, tag = 'output window, operand 0']
    loop: start=0, step=1, limit=6
    $region2: #{upblock_forward.5} parent=1 // loop_pre_header
      _
    $region3: #{upblock_forward.5} parent=1 // loop_header
      %s10 = sphi 0, %s14
      %p11 = scmp.ge.s32.totalorder %s10, 6
      %s18 = sphi 0, %s18
      %s20 = sphi 0, %s18
      %s21 = sphi 0, %s20
      %s35 = sphi 0, %s21
      %s43 = sphi 0, %s45
      %s46 = sphi 0, %s43
      %s47 = sphi 0, %s46
      %s63 = sphi 0, %s47
      %s69 = sphi 0, %s71
      %s72 = sphi 0, %s69
      %s73 = sphi 0, %s72
      %s89 = sphi 0, %s73
    $region4: #{upblock_forward.5} parent=1 // loop_header_branch
      %13 = sbr.rel (%p11) target = $region8
    $region5: #{upblock_forward.5} parent=1 // loop_body
      %s15 = ssub.s32 %s10, 1
      %s16 = ssub.s32 %s10, 2
      %s17 = sadd.s32 %s10, 1
      %s19 = sadd.s32 %s18, 1
      %p22 = scmp.eq.s32.totalorder %s10, 3
      %p23 = scmp.ne.s32.totalorder %s18, %s20
      %p24 = scmp.eq.s32.totalorder %s10, 0
      %p25 = por %p23, %p24
      %p26 = scmp.ne.s32.totalorder %s18, %s20
      %p27 = scmp.eq.s32.totalorder %s15, 3
      %p28 = por %p26, %p27
      %p29 = scmp.ne.s32.totalorder %s20, %s21
      %p30 = scmp.eq.s32.totalorder %s15, 0
      %p31 = por %p29, %p30
      %p32 = scmp.ne.s32.totalorder %s20, %s21
      %p33 = scmp.eq.s32.totalorder %s16, 3
      %p34 = por %p32, %p33
      %p36 = scmp.ne.s32.totalorder %s21, %s35
      %p37 = scmp.eq.s32.totalorder %s16, 0
      %p38 = por %p36, %p37
      %s39 = sadd.s32 %s10, 1
      %s40 = sadd.s32 %s17, 1
      %s41 = ssub.s32 %s39, %s40
      %p42 = scmp.eq.s32.totalorder %s41, 0
      %s44 = sadd.s32 %s43, 1
      %s45 = scalar_select %p42, %s43, %s44
      %p48 = pneg %p42
      %p49 = scmp.eq.s32.totalorder %s10, 3
      %p50 = por %p48, %p49
      %p51 = scmp.ne.s32.totalorder %s43, %s46
      %p52 = scmp.eq.s32.totalorder %s10, 0
      %p53 = por %p51, %p52
      %p54 = scmp.ne.s32.totalorder %s43, %s46
      %p55 = scmp.eq.s32.totalorder %s15, 3
      %p56 = por %p54, %p55
      %p57 = scmp.ne.s32.totalorder %s46, %s47
      %p58 = scmp.eq.s32.totalorder %s15, 0
      %p59 = por %p57, %p58
      %p60 = scmp.ne.s32.totalorder %s46, %s47
      %p61 = scmp.eq.s32.totalorder %s16, 3
      %p62 = por %p60, %p61
      %p64 = scmp.ne.s32.totalorder %s47, %s63
      %p65 = scmp.eq.s32.totalorder %s16, 0
      %p66 = por %p64, %p65
      %s67 = ssub.s32 %s10, %s17
      %p68 = scmp.eq.s32.totalorder %s67, 0
      %s70 = sadd.s32 %s69, 1
      %s71 = scalar_select %p68, %s69, %s70
      %p74 = pneg %p68
      %p75 = scmp.eq.s32.totalorder %s10, 3
      %p76 = por %p74, %p75
      %p77 = scmp.ne.s32.totalorder %s69, %s72
      %p78 = scmp.eq.s32.totalorder %s10, 0
      %p79 = por %p77, %p78
      %p80 = scmp.ne.s32.totalorder %s69, %s72
      %p81 = scmp.eq.s32.totalorder %s15, 3
      %p82 = por %p80, %p81
      %p83 = scmp.ne.s32.totalorder %s72, %s73
      %p84 = scmp.eq.s32.totalorder %s15, 0
      %p85 = por %p83, %p84
      %p86 = scmp.ne.s32.totalorder %s72, %s73
      %p87 = scmp.eq.s32.totalorder %s16, 3
      %p88 = por %p86, %p87
      %p90 = scmp.ne.s32.totalorder %s73, %s89
      %p91 = scmp.eq.s32.totalorder %s16, 0
      %p92 = por %p90, %p91
      %p93 = scmp.le.s32.totalorder 1, %s10
      %p94 = scmp.lt.s32.totalorder %s10, 5
      %p95 = pnand %p93, %p94
      %p96 = pneg %p95
      // Predicated region
      $region9: #{upblock_forward.5} parent=5 // pred_check
        _
      $region10: #{upblock_forward.5} parent=5 // pred_check_branch
        %98 = sbr.rel (%p95) target = $region12
      $region11: #{upblock_forward.5} parent=5 // pred_region
        %s99 = ssub.s32 %s10, 1
        // Predicated region
        $region13: #{upblock_forward.5} parent=11 // pred_check
          %p100 = pneg %p31
        $region14: #{upblock_forward.5} parent=11 // pred_check_branch
          %102 = sbr.rel (%p100) target = $region16
        $region15: #{upblock_forward.5} parent=11 // pred_region
          _
        $region16: #{upblock_forward.5} parent=11 // pred_fallthru
          _
      $region12: #{upblock_forward.5} parent=5 // pred_fallthru
        _
      %p103 = scmp.lt.s32.totalorder %s10, 4
      // Predicated region
      $region17: #{upblock_forward.5} parent=5 // pred_check
        %p104 = pneg %p103
      $region18: #{upblock_forward.5} parent=5 // pred_check_branch
        %106 = sbr.rel (%p104) target = $region20
      $region19: #{upblock_forward.5} parent=5 // pred_region
        _
      $region20: #{upblock_forward.5} parent=5 // pred_fallthru
        _
      %p107 = scmp.le.s32.totalorder 1, %s10
      %p108 = scmp.lt.s32.totalorder %s10, 5
      %p109 = pnand %p107, %p108
      %p110 = pneg %p109
      // Predicated region
      $region21: #{upblock_forward.5} parent=5 // pred_check
        _
      $region22: #{upblock_forward.5} parent=5 // pred_check_branch
        %112 = sbr.rel (%p109) target = $region24
      $region23: #{upblock_forward.5} parent=5 // pred_region
        %s113 = ssub.s32 %s10, 1
        %p114 = pneg %p31
        %p115 = pneg %p28
        %p116 = pneg %p59
        %p117 = pneg %p56
        %s118 = sand.u32 %s46, 1
        %s119 = sand.u32 %s46, 1
        %s120 = smul.addr %s119, 32
        %s121 = scalar_lea.vmem [#allocation4], %s120
        %p122 = pneg %p85
        %p123 = pneg %p82
        %p124 = scmp.lt.s32.totalorder %s15, 3
        %s125 = scalar_select %p124, %s15, 3
        %s126 = smul.addr %s125, 2
        %s127 = smul.addr %s126, 8
        %s128 = scalar_lea.vmem %s3, %s127
        %s129 = sadd.s32 %s15, 1
        %s130 = smul.u32 4, %s129
        %p131 = scmp.lt.s32.totalorder %s15, 3
        %s132 = scalar_select %p131, %s15, 3
        %s133 = smul.addr %s132, 2
        %s134 = smul.addr %s133, 8
        %s135 = scalar_lea.vmem %s3, %s134
        %s137 = sadd.s32 %s15, 1
        %s138 = smul.u32 %s137, 512
        %s139 = ssub.s32 %s138, 128
        %s140 = sshra.s32 %s139, 7
        %s141 = sand.u32 %s139, 127
        %s142 = smul.addr %s140, 4
        %s143 = scalar_lea.vmem %s0, %s142
        // Predicated region
        $region25: #{upblock_forward.5} parent=23 // pred_check
          _
        $region26: #{upblock_forward.5} parent=23 // pred_check_branch
          %145 = sbr.rel (0) target = $region28
        $region27: #{upblock_forward.5} parent=23 // pred_region
          loop: start=0, step=1, limit=1
          $region29: #{upblock_forward.5} parent=27 // loop_pre_header
            _
          $region30: #{upblock_forward.5} parent=27 // loop_header
            %s147 = sphi 0, %s151
            %p148 = scmp.ge.s32.totalorder %s147, 1
            %s152 = sphi %s143, %s143
            %s153 = sphi [#allocation2], [#allocation2]
          $region31: #{upblock_forward.5} parent=27 // loop_header_branch
            %150 = sbr.rel (%p148) target = $region35
          $region32: #{upblock_forward.5} parent=27 // loop_body
            %v154 = vld [vmem:[%s152] sm:$0xff]
            %155 = vst [vmem:[%s153] sm:$0xff] %v154
            %v156 = vld [vmem:[%s152 + $0x8] sm:$0xff]
            %157 = vst [vmem:[%s153 + $0x8] sm:$0xff] %v156
            %v158 = vld [vmem:[%s152 + $0x10] sm:$0xff]
            %159 = vst [vmem:[%s153 + $0x10] sm:$0xff] %v158
            %v160 = vld [vmem:[%s152 + $0x60] sm:$0xff]
            %161 = vst [vmem:[%s153 + $0x18] sm:$0xff] %v160
            %v162 = vld [vmem:[%s152 + $0x68] sm:$0xff]
            %163 = vst [vmem:[%s153 + $0x20] sm:$0xff] %v162
            %v164 = vld [vmem:[%s152 + $0x70] sm:$0xff]
            %165 = vst [vmem:[%s153 + $0x28] sm:$0xff] %v164
          $region33: #{upblock_forward.5} parent=27 // loop_footer
            %s151 = sadd.s32 1, %s147
          $region34: #{upblock_forward.5} parent=27 // loop_footer_branch
            %146 = sbr.rel target = $region30
          $region35: #{upblock_forward.5} parent=27 // loop_exit
            _
        $region28: #{upblock_forward.5} parent=23 // pred_fallthru
          _
        // Predicated region
        $region36: #{upblock_forward.5} parent=23 // pred_check
          _
        $region37: #{upblock_forward.5} parent=23 // pred_check_branch
          %167 = sbr.rel target = $region39
        $region38: #{upblock_forward.5} parent=23 // pred_region
          _
        $region39: #{upblock_forward.5} parent=23 // pred_fallthru
          _
        // Predicated region
        $region40: #{upblock_forward.5} parent=23 // pred_check
          _
        $region41: #{upblock_forward.5} parent=23 // pred_check_branch
          %170 = sbr.rel (0) target = $region43
        $region42: #{upblock_forward.5} parent=23 // pred_region
          %171 = vsyncadd [#allocation3], 768
        $region43: #{upblock_forward.5} parent=23 // pred_fallthru
          _
        %s172 = smul.u32 4, 2
        %s173 = smul.u32 %s172, 6
        %s174 = sshll.u32 %s173, 4
        %175 = dma.done [#allocation3], %s174
        %v176 = vld [vmem:[#allocation2] sm:$0xff]
        %v177 = vld [vmem:[#allocation2 + $0x8] sm:$0xff]
        %v178 = vld [vmem:[#allocation2 + $0x10] sm:$0xf]
        %v179 = vld [vmem:[#allocation2 + $0x18] sm:$0x11]
        %v180 = vld [vmem:[#allocation2 + $0x20] sm:$0x11]
        %v181 = vld [vmem:[#allocation2 + $0x28] sm:$0x1]
        %v182 = vld [vmem:[%s1] sm:$0xf]
        %s183 = scalar_lea.vmem %s1, 4
        %v184 = vld [vmem:[%s183] sm:$0xf]
        %v191 = vunpack.c.l.b16 %v176
        %v192 = vunpack.c.h.b16 %v176
        %v193 = vunpack.c.l.b16 %v177
        %v194 = vunpack.c.h.b16 %v177
        %v195 = vunpack.c.l.b16 %v178
        %v196 = vunpack.c.l.b16 %v179
        %v197 = vunpack.c.h.b16 %v179
        %v198 = vunpack.c.l.b16 %v180
        %v199 = vunpack.c.h.b16 %v180
        %v200 = vunpack.c.l.b16 %v181
        %v201 = vpack.c.b16 %v196, %v191
        %v202 = vpack.c.b16 %v197, %v192
        %v203 = vpack.c.b16 %v198, %v193
        %v204 = vpack.c.b16 %v199, %v194
        %v205 = vpack.c.b16 %v200, %v195
        %206 = vrot.lane.b32.xlu0 %v201, 110
        %v207 = vpop.permute.xlu0 %206
        %208 = vrot.lane.b32.xlu0 %v202, 110
        %v209 = vpop.permute.xlu0 %208
        %210 = vrot.lane.b32.xlu0 %v203, 110
        %v211 = vpop.permute.xlu0 %210
        %212 = vrot.lane.b32.xlu0 %v204, 110
        %v213 = vpop.permute.xlu0 %212
        %214 = vrot.lane.b32.xlu0 %v205, 110
        %v215 = vpop.permute.xlu0 %214
        %vm216 = vcmask 900096
        %v217 = vsel %vm216, %v207, %v209
        %v218 = vsel %vm216, %v209, %v211
        %v219 = vsel %vm216, %v211, %v213
        %v220 = vsel %vm216, %v213, %v215
        %vm221 = vcmask 72704
        %v223 = vsel %vm221, %v184, 0
        %vm225 = vcmask 1043456
        %vm226 = vcmask 1044480
        %v227 = vsel %vm225, 4294967295, 65535
        %v228 = vsel %vm226, %v227, 0
        %v230 = vand.u32 %v217, %v228
        %v233 = vand.u32 %v218, %v228
        %v236 = vand.u32 %v219, %v228
        %v239 = vand.u32 %v220, %v228
        %241 = vmatpush.bf16.msra.mxu0 0
        %242 = vmatpush.bf16.msra.mxu0 0
        %243 = vmatpush.bf16.msra.mxu0 0
        %244 = vmatpush.bf16.msra.mxu0 0
        %245 = vmatpush.bf16.msra.mxu0 0
        %246 = vmatpush.bf16.msra.mxu0 0
        %247 = vmatpush.bf16.msra.mxu0 0
        %248 = vmatpush.bf16.msra.mxu0 %v230
        %249 = vmatmul.bf16.gmra.mxu0 %v223
        %v250 = vpop.f32.mrf.mxu0
        %v251 = vadd.f32 0.0, %v250
        %v252 = vpop.f32.mrf.mxu0
        %253 = vdwg.mxu0
        %254 = vmatpush.bf16.msra.mxu0 0
        %255 = vmatpush.bf16.msra.mxu0 0
        %256 = vmatpush.bf16.msra.mxu0 0
        %257 = vmatpush.bf16.msra.mxu0 0
        %258 = vmatpush.bf16.msra.mxu0 0
        %259 = vmatpush.bf16.msra.mxu0 0
        %260 = vmatpush.bf16.msra.mxu0 0
        %261 = vmatpush.bf16.msra.mxu0 %v233
        %262 = vmatmul.bf16.gmra.mxu0 %v223
        %v263 = vpop.f32.mrf.mxu0
        %v264 = vadd.f32 0.0, %v263
        %v265 = vpop.f32.mrf.mxu0
        %266 = vdwg.mxu0
        %267 = vmatpush.bf16.msra.mxu0 0
        %268 = vmatpush.bf16.msra.mxu0 0
        %269 = vmatpush.bf16.msra.mxu0 0
        %270 = vmatpush.bf16.msra.mxu0 0
        %271 = vmatpush.bf16.msra.mxu0 0
        %272 = vmatpush.bf16.msra.mxu0 0
        %273 = vmatpush.bf16.msra.mxu0 0
        %274 = vmatpush.bf16.msra.mxu0 %v236
        %275 = vmatmul.bf16.gmra.mxu0 %v223
        %v276 = vpop.f32.mrf.mxu0
        %v277 = vadd.f32 0.0, %v276
        %v278 = vpop.f32.mrf.mxu0
        %279 = vdwg.mxu0
        %280 = vmatpush.bf16.msra.mxu0 0
        %281 = vmatpush.bf16.msra.mxu0 0
        %282 = vmatpush.bf16.msra.mxu0 0
        %283 = vmatpush.bf16.msra.mxu0 0
        %284 = vmatpush.bf16.msra.mxu0 0
        %285 = vmatpush.bf16.msra.mxu0 0
        %286 = vmatpush.bf16.msra.mxu0 0
        %287 = vmatpush.bf16.msra.mxu0 %v239
        %288 = vmatmul.bf16.gmra.mxu0 %v223
        %v289 = vpop.f32.mrf.mxu0
        %v290 = vadd.f32 0.0, %v289
        %v291 = vpop.f32.mrf.mxu0
        %292 = vdwg.mxu0
        %293 = vrot.lane.b32.xlu0 %v201, 111
        %v294 = vpop.permute.xlu0 %293
        %295 = vrot.lane.b32.xlu0 %v202, 111
        %v296 = vpop.permute.xlu0 %295
        %297 = vrot.lane.b32.xlu0 %v203, 111
        %v298 = vpop.permute.xlu0 %297
        %299 = vrot.lane.b32.xlu0 %v204, 111
        %v300 = vpop.permute.xlu0 %299
        %301 = vrot.lane.b32.xlu0 %v205, 111
        %v302 = vpop.permute.xlu0 %301
        %vm303 = vcmask 908288
        %v304 = vsel %vm303, %v294, %v296
        %v305 = vsel %vm303, %v296, %v298
        %v306 = vsel %vm303, %v298, %v300
        %v307 = vsel %vm303, %v300, %v302
        %v309 = vsel %vm221, %v182, 0
        %v312 = vand.u32 %v304, %v228
        %v315 = vand.u32 %v305, %v228
        %v318 = vand.u32 %v306, %v228
        %v321 = vand.u32 %v307, %v228
        %323 = vmatpush.bf16.msra.mxu0 0
        %324 = vmatpush.bf16.msra.mxu0 0
        %325 = vmatpush.bf16.msra.mxu0 0
        %326 = vmatpush.bf16.msra.mxu0 0
        %327 = vmatpush.bf16.msra.mxu0 0
        %328 = vmatpush.bf16.msra.mxu0 0
        %329 = vmatpush.bf16.msra.mxu0 0
        %330 = vmatpush.bf16.msra.mxu0 %v312
        %331 = vmatmul.bf16.gmra.mxu0 %v309
        %v332 = vpop.f32.mrf.mxu0
        %v333 = vadd.f32 %v251, %v332
        %v334 = vpop.f32.mrf.mxu0
        %335 = vdwg.mxu0
        %336 = vmatpush.bf16.msra.mxu0 0
        %337 = vmatpush.bf16.msra.mxu0 0
        %338 = vmatpush.bf16.msra.mxu0 0
        %339 = vmatpush.bf16.msra.mxu0 0
        %340 = vmatpush.bf16.msra.mxu0 0
        %341 = vmatpush.bf16.msra.mxu0 0
        %342 = vmatpush.bf16.msra.mxu0 0
        %343 = vmatpush.bf16.msra.mxu0 %v315
        %344 = vmatmul.bf16.gmra.mxu0 %v309
        %v345 = vpop.f32.mrf.mxu0
        %v346 = vadd.f32 %v264, %v345
        %v347 = vpop.f32.mrf.mxu0
        %348 = vdwg.mxu0
        %349 = vmatpush.bf16.msra.mxu0 0
        %350 = vmatpush.bf16.msra.mxu0 0
        %351 = vmatpush.bf16.msra.mxu0 0
        %352 = vmatpush.bf16.msra.mxu0 0
        %353 = vmatpush.bf16.msra.mxu0 0
        %354 = vmatpush.bf16.msra.mxu0 0
        %355 = vmatpush.bf16.msra.mxu0 0
        %356 = vmatpush.bf16.msra.mxu0 %v318
        %357 = vmatmul.bf16.gmra.mxu0 %v309
        %v358 = vpop.f32.mrf.mxu0
        %v359 = vadd.f32 %v277, %v358
        %v360 = vpop.f32.mrf.mxu0
        %361 = vdwg.mxu0
        %362 = vmatpush.bf16.msra.mxu0 0
        %363 = vmatpush.bf16.msra.mxu0 0
        %364 = vmatpush.bf16.msra.mxu0 0
        %365 = vmatpush.bf16.msra.mxu0 0
        %366 = vmatpush.bf16.msra.mxu0 0
        %367 = vmatpush.bf16.msra.mxu0 0
        %368 = vmatpush.bf16.msra.mxu0 0
        %369 = vmatpush.bf16.msra.mxu0 %v321
        %370 = vmatmul.bf16.gmra.mxu0 %v309
        %v371 = vpop.f32.mrf.mxu0
        %v372 = vadd.f32 %v290, %v371
        %v373 = vpop.f32.mrf.mxu0
        %374 = vdwg.mxu0
        %s375 = scalar_lea.vmem %s1, 8
        %v376 = vld [vmem:[%s375] sm:$0xf]
        %377 = vrot.lane.b32.xlu0 %v201, 109
        %v378 = vpop.permute.xlu0 %377
        %379 = vrot.lane.b32.xlu0 %v202, 109
        %v380 = vpop.permute.xlu0 %379
        %381 = vrot.lane.b32.xlu0 %v203, 109
        %v382 = vpop.permute.xlu0 %381
        %383 = vrot.lane.b32.xlu0 %v204, 109
        %v384 = vpop.permute.xlu0 %383
        %385 = vrot.lane.b32.xlu0 %v205, 109
        %v386 = vpop.permute.xlu0 %385
        %vm387 = vcmask 891904
        %v388 = vsel %vm387, %v378, %v380
        %v389 = vsel %vm387, %v380, %v382
        %v390 = vsel %vm387, %v382, %v384
        %v391 = vsel %vm387, %v384, %v386
        %v393 = vsel %vm221, %v376, 0
        %v396 = vand.u32 %v388, %v228
        %v399 = vand.u32 %v389, %v228
        %v402 = vand.u32 %v390, %v228
        %v405 = vand.u32 %v391, %v228
        %407 = vmatpush.bf16.msra.mxu0 0
        %408 = vmatpush.bf16.msra.mxu0 0
        %409 = vmatpush.bf16.msra.mxu0 0
        %410 = vmatpush.bf16.msra.mxu0 0
        %411 = vmatpush.bf16.msra.mxu0 0
        %412 = vmatpush.bf16.msra.mxu0 0
        %413 = vmatpush.bf16.msra.mxu0 0
        %414 = vmatpush.bf16.msra.mxu0 %v396
        %415 = vmatmul.bf16.gmra.mxu0 %v393
        %v416 = vpop.f32.mrf.mxu0
        %v417 = vadd.f32 0.0, %v416
        %v418 = vpop.f32.mrf.mxu0
        %419 = vdwg.mxu0
        %420 = vmatpush.bf16.msra.mxu0 0
        %421 = vmatpush.bf16.msra.mxu0 0
        %422 = vmatpush.bf16.msra.mxu0 0
        %423 = vmatpush.bf16.msra.mxu0 0
        %424 = vmatpush.bf16.msra.mxu0 0
        %425 = vmatpush.bf16.msra.mxu0 0
        %426 = vmatpush.bf16.msra.mxu0 0
        %427 = vmatpush.bf16.msra.mxu0 %v399
        %428 = vmatmul.bf16.gmra.mxu0 %v393
        %v429 = vpop.f32.mrf.mxu0
        %v430 = vadd.f32 0.0, %v429
        %v431 = vpop.f32.mrf.mxu0
        %432 = vdwg.mxu0
        %433 = vmatpush.bf16.msra.mxu0 0
        %434 = vmatpush.bf16.msra.mxu0 0
        %435 = vmatpush.bf16.msra.mxu0 0
        %436 = vmatpush.bf16.msra.mxu0 0
        %437 = vmatpush.bf16.msra.mxu0 0
        %438 = vmatpush.bf16.msra.mxu0 0
        %439 = vmatpush.bf16.msra.mxu0 0
        %440 = vmatpush.bf16.msra.mxu0 %v402
        %441 = vmatmul.bf16.gmra.mxu0 %v393
        %v442 = vpop.f32.mrf.mxu0
        %v443 = vadd.f32 0.0, %v442
        %v444 = vpop.f32.mrf.mxu0
        %445 = vdwg.mxu0
        %446 = vmatpush.bf16.msra.mxu0 0
        %447 = vmatpush.bf16.msra.mxu0 0
        %448 = vmatpush.bf16.msra.mxu0 0
        %449 = vmatpush.bf16.msra.mxu0 0
        %450 = vmatpush.bf16.msra.mxu0 0
        %451 = vmatpush.bf16.msra.mxu0 0
        %452 = vmatpush.bf16.msra.mxu0 0
        %453 = vmatpush.bf16.msra.mxu0 %v405
        %454 = vmatmul.bf16.gmra.mxu0 %v393
        %v455 = vpop.f32.mrf.mxu0
        %v456 = vadd.f32 0.0, %v455
        %v457 = vpop.f32.mrf.mxu0
        %458 = vdwg.mxu0
        %v459 = vadd.f32 %v333, %v417
        %v460 = vadd.f32 %v346, %v430
        %v461 = vadd.f32 %v359, %v443
        %v462 = vadd.f32 %v372, %v456
        %s463 = scalar_lea.vmem %s1, 12
        %v464 = vld [vmem:[%s463] sm:$0xf]
        %465 = vrot.lane.b32.xlu0 %v201, 101
        %v466 = vpop.permute.xlu0 %465
        %467 = vrot.lane.b32.xlu0 %v202, 101
        %v468 = vpop.permute.xlu0 %467
        %469 = vrot.lane.b32.xlu0 %v203, 101
        %v470 = vpop.permute.xlu0 %469
        %471 = vrot.lane.b32.xlu0 %v204, 101
        %v472 = vpop.permute.xlu0 %471
        %473 = vrot.lane.b32.xlu0 %v205, 101
        %v474 = vpop.permute.xlu0 %473
        %vm475 = vcmask 826368
        %v476 = vsel %vm475, %v466, %v468
        %v477 = vsel %vm475, %v468, %v470
        %v478 = vsel %vm475, %v470, %v472
        %v479 = vsel %vm475, %v472, %v474
        %v481 = vsel %vm221, %v464, 0
        %v484 = vand.u32 %v476, %v228
        %v487 = vand.u32 %v477, %v228
        %v490 = vand.u32 %v478, %v228
        %v493 = vand.u32 %v479, %v228
        %495 = vmatpush.bf16.msra.mxu0 0
        %496 = vmatpush.bf16.msra.mxu0 0
        %497 = vmatpush.bf16.msra.mxu0 0
        %498 = vmatpush.bf16.msra.mxu0 0
        %499 = vmatpush.bf16.msra.mxu0 0
        %500 = vmatpush.bf16.msra.mxu0 0
        %501 = vmatpush.bf16.msra.mxu0 0
        %502 = vmatpush.bf16.msra.mxu0 %v484
        %503 = vmatmul.bf16.gmra.mxu0 %v481
        %v504 = vpop.f32.mrf.mxu0
        %v505 = vadd.f32 0.0, %v504
        %v506 = vpop.f32.mrf.mxu0
        %507 = vdwg.mxu0
        %508 = vmatpush.bf16.msra.mxu0 0
        %509 = vmatpush.bf16.msra.mxu0 0
        %510 = vmatpush.bf16.msra.mxu0 0
        %511 = vmatpush.bf16.msra.mxu0 0
        %512 = vmatpush.bf16.msra.mxu0 0
        %513 = vmatpush.bf16.msra.mxu0 0
        %514 = vmatpush.bf16.msra.mxu0 0
        %515 = vmatpush.bf16.msra.mxu0 %v487
        %516 = vmatmul.bf16.gmra.mxu0 %v481
        %v517 = vpop.f32.mrf.mxu0
        %v518 = vadd.f32 0.0, %v517
        %v519 = vpop.f32.mrf.mxu0
        %520 = vdwg.mxu0
        %521 = vmatpush.bf16.msra.mxu0 0
        %522 = vmatpush.bf16.msra.mxu0 0
        %523 = vmatpush.bf16.msra.mxu0 0
        %524 = vmatpush.bf16.msra.mxu0 0
        %525 = vmatpush.bf16.msra.mxu0 0
        %526 = vmatpush.bf16.msra.mxu0 0
        %527 = vmatpush.bf16.msra.mxu0 0
        %528 = vmatpush.bf16.msra.mxu0 %v490
        %529 = vmatmul.bf16.gmra.mxu0 %v481
        %v530 = vpop.f32.mrf.mxu0
        %v531 = vadd.f32 0.0, %v530
        %v532 = vpop.f32.mrf.mxu0
        %533 = vdwg.mxu0
        %534 = vmatpush.bf16.msra.mxu0 0
        %535 = vmatpush.bf16.msra.mxu0 0
        %536 = vmatpush.bf16.msra.mxu0 0
        %537 = vmatpush.bf16.msra.mxu0 0
        %538 = vmatpush.bf16.msra.mxu0 0
        %539 = vmatpush.bf16.msra.mxu0 0
        %540 = vmatpush.bf16.msra.mxu0 0
        %541 = vmatpush.bf16.msra.mxu0 %v493
        %542 = vmatmul.bf16.gmra.mxu0 %v481
        %v543 = vpop.f32.mrf.mxu0
        %v544 = vadd.f32 0.0, %v543
        %v545 = vpop.f32.mrf.mxu0
        %546 = vdwg.mxu0
        %v547 = vadd.f32 %v459, %v505
        %v548 = vadd.f32 %v460, %v518
        %v549 = vadd.f32 %v461, %v531
        %v550 = vadd.f32 %v462, %v544
        %s551 = scalar_lea.vmem %s1, 16
        %v552 = vld [vmem:[%s551] sm:$0xf]
        %553 = vrot.lane.b32.xlu0 %v201, 100
        %v554 = vpop.permute.xlu0 %553
        %555 = vrot.lane.b32.xlu0 %v202, 100
        %v556 = vpop.permute.xlu0 %555
        %557 = vrot.lane.b32.xlu0 %v203, 100
        %v558 = vpop.permute.xlu0 %557
        %559 = vrot.lane.b32.xlu0 %v204, 100
        %v560 = vpop.permute.xlu0 %559
        %561 = vrot.lane.b32.xlu0 %v205, 100
        %v562 = vpop.permute.xlu0 %561
        %vm563 = vcmask 818176
        %v564 = vsel %vm563, %v554, %v556
        %v565 = vsel %vm563, %v556, %v558
        %v566 = vsel %vm563, %v558, %v560
        %v567 = vsel %vm563, %v560, %v562
        %v569 = vsel %vm221, %v552, 0
        %v572 = vand.u32 %v564, %v228
        %v575 = vand.u32 %v565, %v228
        %v578 = vand.u32 %v566, %v228
        %v581 = vand.u32 %v567, %v228
        %583 = vmatpush.bf16.msra.mxu0 0
        %584 = vmatpush.bf16.msra.mxu0 0
        %585 = vmatpush.bf16.msra.mxu0 0
        %586 = vmatpush.bf16.msra.mxu0 0
        %587 = vmatpush.bf16.msra.mxu0 0
        %588 = vmatpush.bf16.msra.mxu0 0
        %589 = vmatpush.bf16.msra.mxu0 0
        %590 = vmatpush.bf16.msra.mxu0 %v572
        %591 = vmatmul.bf16.gmra.mxu0 %v569
        %v592 = vpop.f32.mrf.mxu0
        %v593 = vadd.f32 0.0, %v592
        %v594 = vpop.f32.mrf.mxu0
        %595 = vdwg.mxu0
        %596 = vmatpush.bf16.msra.mxu0 0
        %597 = vmatpush.bf16.msra.mxu0 0
        %598 = vmatpush.bf16.msra.mxu0 0
        %599 = vmatpush.bf16.msra.mxu0 0
        %600 = vmatpush.bf16.msra.mxu0 0
        %601 = vmatpush.bf16.msra.mxu0 0
        %602 = vmatpush.bf16.msra.mxu0 0
        %603 = vmatpush.bf16.msra.mxu0 %v575
        %604 = vmatmul.bf16.gmra.mxu0 %v569
        %v605 = vpop.f32.mrf.mxu0
        %v606 = vadd.f32 0.0, %v605
        %v607 = vpop.f32.mrf.mxu0
        %608 = vdwg.mxu0
        %609 = vmatpush.bf16.msra.mxu0 0
        %610 = vmatpush.bf16.msra.mxu0 0
        %611 = vmatpush.bf16.msra.mxu0 0
        %612 = vmatpush.bf16.msra.mxu0 0
        %613 = vmatpush.bf16.msra.mxu0 0
        %614 = vmatpush.bf16.msra.mxu0 0
        %615 = vmatpush.bf16.msra.mxu0 0
        %616 = vmatpush.bf16.msra.mxu0 %v578
        %617 = vmatmul.bf16.gmra.mxu0 %v569
        %v618 = vpop.f32.mrf.mxu0
        %v619 = vadd.f32 0.0, %v618
        %v620 = vpop.f32.mrf.mxu0
        %621 = vdwg.mxu0
        %622 = vmatpush.bf16.msra.mxu0 0
        %623 = vmatpush.bf16.msra.mxu0 0
        %624 = vmatpush.bf16.msra.mxu0 0
        %625 = vmatpush.bf16.msra.mxu0 0
        %626 = vmatpush.bf16.msra.mxu0 0
        %627 = vmatpush.bf16.msra.mxu0 0
        %628 = vmatpush.bf16.msra.mxu0 0
        %629 = vmatpush.bf16.msra.mxu0 %v581
        %630 = vmatmul.bf16.gmra.mxu0 %v569
        %v631 = vpop.f32.mrf.mxu0
        %v632 = vadd.f32 0.0, %v631
        %v633 = vpop.f32.mrf.mxu0
        %634 = vdwg.mxu0
        %v635 = vadd.f32 %v547, %v593
        %v636 = vadd.f32 %v548, %v606
        %v637 = vadd.f32 %v549, %v619
        %v638 = vadd.f32 %v550, %v632
        %s639 = scalar_lea.vmem %s1, 20
        %v640 = vld [vmem:[%s639] sm:$0xf]
        %641 = vrot.lane.b32.xlu0 %v201, 99
        %v642 = vpop.permute.xlu0 %641
        %643 = vrot.lane.b32.xlu0 %v202, 99
        %v644 = vpop.permute.xlu0 %643
        %645 = vrot.lane.b32.xlu0 %v203, 99
        %v646 = vpop.permute.xlu0 %645
        %647 = vrot.lane.b32.xlu0 %v204, 99
        %v648 = vpop.permute.xlu0 %647
        %649 = vrot.lane.b32.xlu0 %v205, 99
        %v650 = vpop.permute.xlu0 %649
        %vm651 = vcmask 809984
        %v652 = vsel %vm651, %v642, %v644
        %v653 = vsel %vm651, %v644, %v646
        %v654 = vsel %vm651, %v646, %v648
        %v655 = vsel %vm651, %v648, %v650
        %v657 = vsel %vm221, %v640, 0
        %v660 = vand.u32 %v652, %v228
        %v663 = vand.u32 %v653, %v228
        %v666 = vand.u32 %v654, %v228
        %v669 = vand.u32 %v655, %v228
        %671 = vmatpush.bf16.msra.mxu0 0
        %672 = vmatpush.bf16.msra.mxu0 0
        %673 = vmatpush.bf16.msra.mxu0 0
        %674 = vmatpush.bf16.msra.mxu0 0
        %675 = vmatpush.bf16.msra.mxu0 0
        %676 = vmatpush.bf16.msra.mxu0 0
        %677 = vmatpush.bf16.msra.mxu0 0
        %678 = vmatpush.bf16.msra.mxu0 %v660
        %679 = vmatmul.bf16.gmra.mxu0 %v657
        %v680 = vpop.f32.mrf.mxu0
        %v681 = vadd.f32 0.0, %v680
        %v682 = vpop.f32.mrf.mxu0
        %683 = vdwg.mxu0
        %684 = vmatpush.bf16.msra.mxu0 0
        %685 = vmatpush.bf16.msra.mxu0 0
        %686 = vmatpush.bf16.msra.mxu0 0
        %687 = vmatpush.bf16.msra.mxu0 0
        %688 = vmatpush.bf16.msra.mxu0 0
        %689 = vmatpush.bf16.msra.mxu0 0
        %690 = vmatpush.bf16.msra.mxu0 0
        %691 = vmatpush.bf16.msra.mxu0 %v663
        %692 = vmatmul.bf16.gmra.mxu0 %v657
        %v693 = vpop.f32.mrf.mxu0
        %v694 = vadd.f32 0.0, %v693
        %v695 = vpop.f32.mrf.mxu0
        %696 = vdwg.mxu0
        %697 = vmatpush.bf16.msra.mxu0 0
        %698 = vmatpush.bf16.msra.mxu0 0
        %699 = vmatpush.bf16.msra.mxu0 0
        %700 = vmatpush.bf16.msra.mxu0 0
        %701 = vmatpush.bf16.msra.mxu0 0
        %702 = vmatpush.bf16.msra.mxu0 0
        %703 = vmatpush.bf16.msra.mxu0 0
        %704 = vmatpush.bf16.msra.mxu0 %v666
        %705 = vmatmul.bf16.gmra.mxu0 %v657
        %v706 = vpop.f32.mrf.mxu0
        %v707 = vadd.f32 0.0, %v706
        %v708 = vpop.f32.mrf.mxu0
        %709 = vdwg.mxu0
        %710 = vmatpush.bf16.msra.mxu0 0
        %711 = vmatpush.bf16.msra.mxu0 0
        %712 = vmatpush.bf16.msra.mxu0 0
        %713 = vmatpush.bf16.msra.mxu0 0
        %714 = vmatpush.bf16.msra.mxu0 0
        %715 = vmatpush.bf16.msra.mxu0 0
        %716 = vmatpush.bf16.msra.mxu0 0
        %717 = vmatpush.bf16.msra.mxu0 %v669
        %718 = vmatmul.bf16.gmra.mxu0 %v657
        %v719 = vpop.f32.mrf.mxu0
        %v720 = vadd.f32 0.0, %v719
        %v721 = vpop.f32.mrf.mxu0
        %722 = vdwg.mxu0
        %v723 = vadd.f32 %v635, %v681
        %v724 = vadd.f32 %v636, %v694
        %v725 = vadd.f32 %v637, %v707
        %v726 = vadd.f32 %v638, %v720
        %s727 = scalar_lea.vmem %s1, 24
        %v728 = vld [vmem:[%s727] sm:$0xf]
        %729 = vrot.lane.b32.xlu0 %v201, 91
        %v730 = vpop.permute.xlu0 %729
        %731 = vrot.lane.b32.xlu0 %v202, 91
        %v732 = vpop.permute.xlu0 %731
        %733 = vrot.lane.b32.xlu0 %v203, 91
        %v734 = vpop.permute.xlu0 %733
        %735 = vrot.lane.b32.xlu0 %v204, 91
        %v736 = vpop.permute.xlu0 %735
        %737 = vrot.lane.b32.xlu0 %v205, 91
        %v738 = vpop.permute.xlu0 %737
        %vm739 = vcmask 744448
        %v740 = vsel %vm739, %v730, %v732
        %v741 = vsel %vm739, %v732, %v734
        %v742 = vsel %vm739, %v734, %v736
        %v743 = vsel %vm739, %v736, %v738
        %v745 = vsel %vm221, %v728, 0
        %v748 = vand.u32 %v740, %v228
        %v751 = vand.u32 %v741, %v228
        %v754 = vand.u32 %v742, %v228
        %v757 = vand.u32 %v743, %v228
        %759 = vmatpush.bf16.msra.mxu0 0
        %760 = vmatpush.bf16.msra.mxu0 0
        %761 = vmatpush.bf16.msra.mxu0 0
        %762 = vmatpush.bf16.msra.mxu0 0
        %763 = vmatpush.bf16.msra.mxu0 0
        %764 = vmatpush.bf16.msra.mxu0 0
        %765 = vmatpush.bf16.msra.mxu0 0
        %766 = vmatpush.bf16.msra.mxu0 %v748
        %767 = vmatmul.bf16.gmra.mxu0 %v745
        %v768 = vpop.f32.mrf.mxu0
        %v769 = vadd.f32 0.0, %v768
        %v770 = vpop.f32.mrf.mxu0
        %771 = vdwg.mxu0
        %772 = vmatpush.bf16.msra.mxu0 0
        %773 = vmatpush.bf16.msra.mxu0 0
        %774 = vmatpush.bf16.msra.mxu0 0
        %775 = vmatpush.bf16.msra.mxu0 0
        %776 = vmatpush.bf16.msra.mxu0 0
        %777 = vmatpush.bf16.msra.mxu0 0
        %778 = vmatpush.bf16.msra.mxu0 0
        %779 = vmatpush.bf16.msra.mxu0 %v751
        %780 = vmatmul.bf16.gmra.mxu0 %v745
        %v781 = vpop.f32.mrf.mxu0
        %v782 = vadd.f32 0.0, %v781
        %v783 = vpop.f32.mrf.mxu0
        %784 = vdwg.mxu0
        %785 = vmatpush.bf16.msra.mxu0 0
        %786 = vmatpush.bf16.msra.mxu0 0
        %787 = vmatpush.bf16.msra.mxu0 0
        %788 = vmatpush.bf16.msra.mxu0 0
        %789 = vmatpush.bf16.msra.mxu0 0
        %790 = vmatpush.bf16.msra.mxu0 0
        %791 = vmatpush.bf16.msra.mxu0 0
        %792 = vmatpush.bf16.msra.mxu0 %v754
        %793 = vmatmul.bf16.gmra.mxu0 %v745
        %v794 = vpop.f32.mrf.mxu0
        %v795 = vadd.f32 0.0, %v794
        %v796 = vpop.f32.mrf.mxu0
        %797 = vdwg.mxu0
        %798 = vmatpush.bf16.msra.mxu0 0
        %799 = vmatpush.bf16.msra.mxu0 0
        %800 = vmatpush.bf16.msra.mxu0 0
        %801 = vmatpush.bf16.msra.mxu0 0
        %802 = vmatpush.bf16.msra.mxu0 0
        %803 = vmatpush.bf16.msra.mxu0 0
        %804 = vmatpush.bf16.msra.mxu0 0
        %805 = vmatpush.bf16.msra.mxu0 %v757
        %806 = vmatmul.bf16.gmra.mxu0 %v745
        %v807 = vpop.f32.mrf.mxu0
        %v808 = vadd.f32 0.0, %v807
        %v809 = vpop.f32.mrf.mxu0
        %810 = vdwg.mxu0
        %v811 = vadd.f32 %v723, %v769
        %v812 = vadd.f32 %v724, %v782
        %v813 = vadd.f32 %v725, %v795
        %v814 = vadd.f32 %v726, %v808
        %s815 = scalar_lea.vmem %s1, 28
        %v816 = vld [vmem:[%s815] sm:$0xf]
        %817 = vrot.lane.b32.xlu0 %v201, 90
        %v818 = vpop.permute.xlu0 %817
        %819 = vrot.lane.b32.xlu0 %v202, 90
        %v820 = vpop.permute.xlu0 %819
        %821 = vrot.lane.b32.xlu0 %v203, 90
        %v822 = vpop.permute.xlu0 %821
        %823 = vrot.lane.b32.xlu0 %v204, 90
        %v824 = vpop.permute.xlu0 %823
        %825 = vrot.lane.b32.xlu0 %v205, 90
        %v826 = vpop.permute.xlu0 %825
        %vm827 = vcmask 736256
        %v828 = vsel %vm827, %v818, %v820
        %v829 = vsel %vm827, %v820, %v822
        %v830 = vsel %vm827, %v822, %v824
        %v831 = vsel %vm827, %v824, %v826
        %v833 = vsel %vm221, %v816, 0
        %v836 = vand.u32 %v828, %v228
        %v839 = vand.u32 %v829, %v228
        %v842 = vand.u32 %v830, %v228
        %v845 = vand.u32 %v831, %v228
        %847 = vmatpush.bf16.msra.mxu0 0
        %848 = vmatpush.bf16.msra.mxu0 0
        %849 = vmatpush.bf16.msra.mxu0 0
        %850 = vmatpush.bf16.msra.mxu0 0
        %851 = vmatpush.bf16.msra.mxu0 0
        %852 = vmatpush.bf16.msra.mxu0 0
        %853 = vmatpush.bf16.msra.mxu0 0
        %854 = vmatpush.bf16.msra.mxu0 %v836
        %855 = vmatmul.bf16.gmra.mxu0 %v833
        %v856 = vpop.f32.mrf.mxu0
        %v857 = vadd.f32 0.0, %v856
        %v858 = vpop.f32.mrf.mxu0
        %859 = vdwg.mxu0
        %860 = vmatpush.bf16.msra.mxu0 0
        %861 = vmatpush.bf16.msra.mxu0 0
        %862 = vmatpush.bf16.msra.mxu0 0
        %863 = vmatpush.bf16.msra.mxu0 0
        %864 = vmatpush.bf16.msra.mxu0 0
        %865 = vmatpush.bf16.msra.mxu0 0
        %866 = vmatpush.bf16.msra.mxu0 0
        %867 = vmatpush.bf16.msra.mxu0 %v839
        %868 = vmatmul.bf16.gmra.mxu0 %v833
        %v869 = vpop.f32.mrf.mxu0
        %v870 = vadd.f32 0.0, %v869
        %v871 = vpop.f32.mrf.mxu0
        %872 = vdwg.mxu0
        %873 = vmatpush.bf16.msra.mxu0 0
        %874 = vmatpush.bf16.msra.mxu0 0
        %875 = vmatpush.bf16.msra.mxu0 0
        %876 = vmatpush.bf16.msra.mxu0 0
        %877 = vmatpush.bf16.msra.mxu0 0
        %878 = vmatpush.bf16.msra.mxu0 0
        %879 = vmatpush.bf16.msra.mxu0 0
        %880 = vmatpush.bf16.msra.mxu0 %v842
        %881 = vmatmul.bf16.gmra.mxu0 %v833
        %v882 = vpop.f32.mrf.mxu0
        %v883 = vadd.f32 0.0, %v882
        %v884 = vpop.f32.mrf.mxu0
        %885 = vdwg.mxu0
        %886 = vmatpush.bf16.msra.mxu0 0
        %887 = vmatpush.bf16.msra.mxu0 0
        %888 = vmatpush.bf16.msra.mxu0 0
        %889 = vmatpush.bf16.msra.mxu0 0
        %890 = vmatpush.bf16.msra.mxu0 0
        %891 = vmatpush.bf16.msra.mxu0 0
        %892 = vmatpush.bf16.msra.mxu0 0
        %893 = vmatpush.bf16.msra.mxu0 %v845
        %894 = vmatmul.bf16.gmra.mxu0 %v833
        %v895 = vpop.f32.mrf.mxu0
        %v896 = vadd.f32 0.0, %v895
        %v897 = vpop.f32.mrf.mxu0
        %898 = vdwg.mxu0
        %v899 = vadd.f32 %v811, %v857
        %v900 = vadd.f32 %v812, %v870
        %v901 = vadd.f32 %v813, %v883
        %v902 = vadd.f32 %v814, %v896
        %s903 = scalar_lea.vmem %s1, 32
        %v904 = vld [vmem:[%s903] sm:$0xf]
        %905 = vrot.lane.b32.xlu0 %v201, 89
        %v906 = vpop.permute.xlu0 %905
        %907 = vrot.lane.b32.xlu0 %v202, 89
        %v908 = vpop.permute.xlu0 %907
        %909 = vrot.lane.b32.xlu0 %v203, 89
        %v910 = vpop.permute.xlu0 %909
        %911 = vrot.lane.b32.xlu0 %v204, 89
        %v912 = vpop.permute.xlu0 %911
        %913 = vrot.lane.b32.xlu0 %v205, 89
        %v914 = vpop.permute.xlu0 %913
        %vm915 = vcmask 728064
        %v916 = vsel %vm915, %v906, %v908
        %v917 = vsel %vm915, %v908, %v910
        %v918 = vsel %vm915, %v910, %v912
        %v919 = vsel %vm915, %v912, %v914
        %v921 = vsel %vm221, %v904, 0
        %v924 = vand.u32 %v916, %v228
        %v927 = vand.u32 %v917, %v228
        %v930 = vand.u32 %v918, %v228
        %v933 = vand.u32 %v919, %v228
        %935 = vmatpush.bf16.msra.mxu0 0
        %936 = vmatpush.bf16.msra.mxu0 0
        %937 = vmatpush.bf16.msra.mxu0 0
        %938 = vmatpush.bf16.msra.mxu0 0
        %939 = vmatpush.bf16.msra.mxu0 0
        %940 = vmatpush.bf16.msra.mxu0 0
        %941 = vmatpush.bf16.msra.mxu0 0
        %942 = vmatpush.bf16.msra.mxu0 %v924
        %943 = vmatmul.bf16.gmra.mxu0 %v921
        %v944 = vpop.f32.mrf.mxu0
        %v945 = vadd.f32 0.0, %v944
        %v946 = vpop.f32.mrf.mxu0
        %947 = vdwg.mxu0
        %948 = vmatpush.bf16.msra.mxu0 0
        %949 = vmatpush.bf16.msra.mxu0 0
        %950 = vmatpush.bf16.msra.mxu0 0
        %951 = vmatpush.bf16.msra.mxu0 0
        %952 = vmatpush.bf16.msra.mxu0 0
        %953 = vmatpush.bf16.msra.mxu0 0
        %954 = vmatpush.bf16.msra.mxu0 0
        %955 = vmatpush.bf16.msra.mxu0 %v927
        %956 = vmatmul.bf16.gmra.mxu0 %v921
        %v957 = vpop.f32.mrf.mxu0
        %v958 = vadd.f32 0.0, %v957
        %v959 = vpop.f32.mrf.mxu0
        %960 = vdwg.mxu0
        %961 = vmatpush.bf16.msra.mxu0 0
        %962 = vmatpush.bf16.msra.mxu0 0
        %963 = vmatpush.bf16.msra.mxu0 0
        %964 = vmatpush.bf16.msra.mxu0 0
        %965 = vmatpush.bf16.msra.mxu0 0
        %966 = vmatpush.bf16.msra.mxu0 0
        %967 = vmatpush.bf16.msra.mxu0 0
        %968 = vmatpush.bf16.msra.mxu0 %v930
        %969 = vmatmul.bf16.gmra.mxu0 %v921
        %v970 = vpop.f32.mrf.mxu0
        %v971 = vadd.f32 0.0, %v970
        %v972 = vpop.f32.mrf.mxu0
        %973 = vdwg.mxu0
        %974 = vmatpush.bf16.msra.mxu0 0
        %975 = vmatpush.bf16.msra.mxu0 0
        %976 = vmatpush.bf16.msra.mxu0 0
        %977 = vmatpush.bf16.msra.mxu0 0
        %978 = vmatpush.bf16.msra.mxu0 0
        %979 = vmatpush.bf16.msra.mxu0 0
        %980 = vmatpush.bf16.msra.mxu0 0
        %981 = vmatpush.bf16.msra.mxu0 %v933
        %982 = vmatmul.bf16.gmra.mxu0 %v921
        %v983 = vpop.f32.mrf.mxu0
        %v984 = vadd.f32 0.0, %v983
        %v985 = vpop.f32.mrf.mxu0
        %986 = vdwg.mxu0
        %v987 = vadd.f32 %v899, %v945
        %v988 = vadd.f32 %v900, %v958
        %v989 = vadd.f32 %v901, %v971
        %v990 = vadd.f32 %v902, %v984
        %s991 = scalar_lea.vmem %s1, 36
        %v992 = vld [vmem:[%s991] sm:$0xf]
        %993 = vrot.lane.b32.xlu0 %v201, 11
        %v994 = vpop.permute.xlu0 %993
        %995 = vrot.lane.b32.xlu0 %v202, 11
        %v996 = vpop.permute.xlu0 %995
        %997 = vrot.lane.b32.xlu0 %v203, 11
        %v998 = vpop.permute.xlu0 %997
        %999 = vrot.lane.b32.xlu0 %v204, 11
        %v1000 = vpop.permute.xlu0 %999
        %1001 = vrot.lane.b32.xlu0 %v205, 11
        %v1002 = vpop.permute.xlu0 %1001
        %vm1003 = vcmask 89088
        %v1004 = vsel %vm1003, %v994, %v996
        %v1005 = vsel %vm1003, %v996, %v998
        %v1006 = vsel %vm1003, %v998, %v1000
        %v1007 = vsel %vm1003, %v1000, %v1002
        %v1009 = vsel %vm221, %v992, 0
        %v1012 = vand.u32 %v1004, %v228
        %v1015 = vand.u32 %v1005, %v228
        %v1018 = vand.u32 %v1006, %v228
        %v1021 = vand.u32 %v1007, %v228
        %1023 = vmatpush.bf16.msra.mxu0 0
        %1024 = vmatpush.bf16.msra.mxu0 0
        %1025 = vmatpush.bf16.msra.mxu0 0
        %1026 = vmatpush.bf16.msra.mxu0 0
        %1027 = vmatpush.bf16.msra.mxu0 0
        %1028 = vmatpush.bf16.msra.mxu0 0
        %1029 = vmatpush.bf16.msra.mxu0 0
        %1030 = vmatpush.bf16.msra.mxu0 %v1012
        %1031 = vmatmul.bf16.gmra.mxu0 %v1009
        %v1032 = vpop.f32.mrf.mxu0
        %v1033 = vadd.f32 0.0, %v1032
        %v1034 = vpop.f32.mrf.mxu0
        %1035 = vdwg.mxu0
        %1036 = vmatpush.bf16.msra.mxu0 0
        %1037 = vmatpush.bf16.msra.mxu0 0
        %1038 = vmatpush.bf16.msra.mxu0 0
        %1039 = vmatpush.bf16.msra.mxu0 0
        %1040 = vmatpush.bf16.msra.mxu0 0
        %1041 = vmatpush.bf16.msra.mxu0 0
        %1042 = vmatpush.bf16.msra.mxu0 0
        %1043 = vmatpush.bf16.msra.mxu0 %v1015
        %1044 = vmatmul.bf16.gmra.mxu0 %v1009
        %v1045 = vpop.f32.mrf.mxu0
        %v1046 = vadd.f32 0.0, %v1045
        %v1047 = vpop.f32.mrf.mxu0
        %1048 = vdwg.mxu0
        %1049 = vmatpush.bf16.msra.mxu0 0
        %1050 = vmatpush.bf16.msra.mxu0 0
        %1051 = vmatpush.bf16.msra.mxu0 0
        %1052 = vmatpush.bf16.msra.mxu0 0
        %1053 = vmatpush.bf16.msra.mxu0 0
        %1054 = vmatpush.bf16.msra.mxu0 0
        %1055 = vmatpush.bf16.msra.mxu0 0
        %1056 = vmatpush.bf16.msra.mxu0 %v1018
        %1057 = vmatmul.bf16.gmra.mxu0 %v1009
        %v1058 = vpop.f32.mrf.mxu0
        %v1059 = vadd.f32 0.0, %v1058
        %v1060 = vpop.f32.mrf.mxu0
        %1061 = vdwg.mxu0
        %1062 = vmatpush.bf16.msra.mxu0 0
        %1063 = vmatpush.bf16.msra.mxu0 0
        %1064 = vmatpush.bf16.msra.mxu0 0
        %1065 = vmatpush.bf16.msra.mxu0 0
        %1066 = vmatpush.bf16.msra.mxu0 0
        %1067 = vmatpush.bf16.msra.mxu0 0
        %1068 = vmatpush.bf16.msra.mxu0 0
        %1069 = vmatpush.bf16.msra.mxu0 %v1021
        %1070 = vmatmul.bf16.gmra.mxu0 %v1009
        %v1071 = vpop.f32.mrf.mxu0
        %v1072 = vadd.f32 0.0, %v1071
        %v1073 = vpop.f32.mrf.mxu0
        %1074 = vdwg.mxu0
        %v1075 = vadd.f32 %v987, %v1033
        %v1076 = vadd.f32 %v988, %v1046
        %v1077 = vadd.f32 %v989, %v1059
        %v1078 = vadd.f32 %v990, %v1072
        %s1079 = scalar_lea.vmem %s1, 40
        %v1080 = vld [vmem:[%s1079] sm:$0xf]
        %1081 = vrot.lane.b32.xlu0 %v201, 10
        %v1082 = vpop.permute.xlu0 %1081
        %1083 = vrot.lane.b32.xlu0 %v202, 10
        %v1084 = vpop.permute.xlu0 %1083
        %1085 = vrot.lane.b32.xlu0 %v203, 10
        %v1086 = vpop.permute.xlu0 %1085
        %1087 = vrot.lane.b32.xlu0 %v204, 10
        %v1088 = vpop.permute.xlu0 %1087
        %1089 = vrot.lane.b32.xlu0 %v205, 10
        %v1090 = vpop.permute.xlu0 %1089
        %vm1091 = vcmask 80896
        %v1092 = vsel %vm1091, %v1082, %v1084
        %v1093 = vsel %vm1091, %v1084, %v1086
        %v1094 = vsel %vm1091, %v1086, %v1088
        %v1095 = vsel %vm1091, %v1088, %v1090
        %v1097 = vsel %vm221, %v1080, 0
        %v1100 = vand.u32 %v1092, %v228
        %v1103 = vand.u32 %v1093, %v228
        %v1106 = vand.u32 %v1094, %v228
        %v1109 = vand.u32 %v1095, %v228
        %1111 = vmatpush.bf16.msra.mxu0 0
        %1112 = vmatpush.bf16.msra.mxu0 0
        %1113 = vmatpush.bf16.msra.mxu0 0
        %1114 = vmatpush.bf16.msra.mxu0 0
        %1115 = vmatpush.bf16.msra.mxu0 0
        %1116 = vmatpush.bf16.msra.mxu0 0
        %1117 = vmatpush.bf16.msra.mxu0 0
        %1118 = vmatpush.bf16.msra.mxu0 %v1100
        %1119 = vmatmul.bf16.gmra.mxu0 %v1097
        %v1120 = vpop.f32.mrf.mxu0
        %v1121 = vadd.f32 0.0, %v1120
        %v1122 = vpop.f32.mrf.mxu0
        %1123 = vdwg.mxu0
        %1124 = vmatpush.bf16.msra.mxu0 0
        %1125 = vmatpush.bf16.msra.mxu0 0
        %1126 = vmatpush.bf16.msra.mxu0 0
        %1127 = vmatpush.bf16.msra.mxu0 0
        %1128 = vmatpush.bf16.msra.mxu0 0
        %1129 = vmatpush.bf16.msra.mxu0 0
        %1130 = vmatpush.bf16.msra.mxu0 0
        %1131 = vmatpush.bf16.msra.mxu0 %v1103
        %1132 = vmatmul.bf16.gmra.mxu0 %v1097
        %v1133 = vpop.f32.mrf.mxu0
        %v1134 = vadd.f32 0.0, %v1133
        %v1135 = vpop.f32.mrf.mxu0
        %1136 = vdwg.mxu0
        %1137 = vmatpush.bf16.msra.mxu0 0
        %1138 = vmatpush.bf16.msra.mxu0 0
        %1139 = vmatpush.bf16.msra.mxu0 0
        %1140 = vmatpush.bf16.msra.mxu0 0
        %1141 = vmatpush.bf16.msra.mxu0 0
        %1142 = vmatpush.bf16.msra.mxu0 0
        %1143 = vmatpush.bf16.msra.mxu0 0
        %1144 = vmatpush.bf16.msra.mxu0 %v1106
        %1145 = vmatmul.bf16.gmra.mxu0 %v1097
        %v1146 = vpop.f32.mrf.mxu0
        %v1147 = vadd.f32 0.0, %v1146
        %v1148 = vpop.f32.mrf.mxu0
        %1149 = vdwg.mxu0
        %1150 = vmatpush.bf16.msra.mxu0 0
        %1151 = vmatpush.bf16.msra.mxu0 0
        %1152 = vmatpush.bf16.msra.mxu0 0
        %1153 = vmatpush.bf16.msra.mxu0 0
        %1154 = vmatpush.bf16.msra.mxu0 0
        %1155 = vmatpush.bf16.msra.mxu0 0
        %1156 = vmatpush.bf16.msra.mxu0 0
        %1157 = vmatpush.bf16.msra.mxu0 %v1109
        %1158 = vmatmul.bf16.gmra.mxu0 %v1097
        %v1159 = vpop.f32.mrf.mxu0
        %v1160 = vadd.f32 0.0, %v1159
        %v1161 = vpop.f32.mrf.mxu0
        %1162 = vdwg.mxu0
        %v1163 = vadd.f32 %v1075, %v1121
        %v1164 = vadd.f32 %v1076, %v1134
        %v1165 = vadd.f32 %v1077, %v1147
        %v1166 = vadd.f32 %v1078, %v1160
        %s1167 = scalar_lea.vmem %s1, 44
        %v1168 = vld [vmem:[%s1167] sm:$0xf]
        %1169 = vrot.lane.b32.xlu0 %v201, 9
        %v1170 = vpop.permute.xlu0 %1169
        %1171 = vrot.lane.b32.xlu0 %v202, 9
        %v1172 = vpop.permute.xlu0 %1171
        %1173 = vrot.lane.b32.xlu0 %v203, 9
        %v1174 = vpop.permute.xlu0 %1173
        %1175 = vrot.lane.b32.xlu0 %v204, 9
        %v1176 = vpop.permute.xlu0 %1175
        %1177 = vrot.lane.b32.xlu0 %v205, 9
        %v1178 = vpop.permute.xlu0 %1177
        %vm1179 = vcmask 72704
        %v1180 = vsel %vm1179, %v1170, %v1172
        %v1181 = vsel %vm1179, %v1172, %v1174
        %v1182 = vsel %vm1179, %v1174, %v1176
        %v1183 = vsel %vm1179, %v1176, %v1178
        %v1185 = vsel %vm221, %v1168, 0
        %v1188 = vand.u32 %v1180, %v228
        %v1191 = vand.u32 %v1181, %v228
        %v1194 = vand.u32 %v1182, %v228
        %v1197 = vand.u32 %v1183, %v228
        %1199 = vmatpush.bf16.msra.mxu0 0
        %1200 = vmatpush.bf16.msra.mxu0 0
        %1201 = vmatpush.bf16.msra.mxu0 0
        %1202 = vmatpush.bf16.msra.mxu0 0
        %1203 = vmatpush.bf16.msra.mxu0 0
        %1204 = vmatpush.bf16.msra.mxu0 0
        %1205 = vmatpush.bf16.msra.mxu0 0
        %1206 = vmatpush.bf16.msra.mxu0 %v1188
        %1207 = vmatmul.bf16.gmra.mxu0 %v1185
        %v1208 = vpop.f32.mrf.mxu0
        %v1209 = vadd.f32 0.0, %v1208
        %v1210 = vpop.f32.mrf.mxu0
        %1211 = vdwg.mxu0
        %1212 = vmatpush.bf16.msra.mxu0 0
        %1213 = vmatpush.bf16.msra.mxu0 0
        %1214 = vmatpush.bf16.msra.mxu0 0
        %1215 = vmatpush.bf16.msra.mxu0 0
        %1216 = vmatpush.bf16.msra.mxu0 0
        %1217 = vmatpush.bf16.msra.mxu0 0
        %1218 = vmatpush.bf16.msra.mxu0 0
        %1219 = vmatpush.bf16.msra.mxu0 %v1191
        %1220 = vmatmul.bf16.gmra.mxu0 %v1185
        %v1221 = vpop.f32.mrf.mxu0
        %v1222 = vadd.f32 0.0, %v1221
        %v1223 = vpop.f32.mrf.mxu0
        %1224 = vdwg.mxu0
        %1225 = vmatpush.bf16.msra.mxu0 0
        %1226 = vmatpush.bf16.msra.mxu0 0
        %1227 = vmatpush.bf16.msra.mxu0 0
        %1228 = vmatpush.bf16.msra.mxu0 0
        %1229 = vmatpush.bf16.msra.mxu0 0
        %1230 = vmatpush.bf16.msra.mxu0 0
        %1231 = vmatpush.bf16.msra.mxu0 0
        %1232 = vmatpush.bf16.msra.mxu0 %v1194
        %1233 = vmatmul.bf16.gmra.mxu0 %v1185
        %v1234 = vpop.f32.mrf.mxu0
        %v1235 = vadd.f32 0.0, %v1234
        %v1236 = vpop.f32.mrf.mxu0
        %1237 = vdwg.mxu0
        %1238 = vmatpush.bf16.msra.mxu0 0
        %1239 = vmatpush.bf16.msra.mxu0 0
        %1240 = vmatpush.bf16.msra.mxu0 0
        %1241 = vmatpush.bf16.msra.mxu0 0
        %1242 = vmatpush.bf16.msra.mxu0 0
        %1243 = vmatpush.bf16.msra.mxu0 0
        %1244 = vmatpush.bf16.msra.mxu0 0
        %1245 = vmatpush.bf16.msra.mxu0 %v1197
        %1246 = vmatmul.bf16.gmra.mxu0 %v1185
        %v1247 = vpop.f32.mrf.mxu0
        %v1248 = vadd.f32 0.0, %v1247
        %v1249 = vpop.f32.mrf.mxu0
        %1250 = vdwg.mxu0
        %v1251 = vadd.f32 %v1163, %v1209
        %v1252 = vadd.f32 %v1164, %v1222
        %v1253 = vadd.f32 %v1165, %v1235
        %v1254 = vadd.f32 %v1166, %v1248
        %s1255 = scalar_lea.vmem %s1, 48
        %v1256 = vld [vmem:[%s1255] sm:$0xf]
        %1257 = vrot.lane.b32.xlu0 %v201, 1
        %v1258 = vpop.permute.xlu0 %1257
        %1259 = vrot.lane.b32.xlu0 %v202, 1
        %v1260 = vpop.permute.xlu0 %1259
        %1261 = vrot.lane.b32.xlu0 %v203, 1
        %v1262 = vpop.permute.xlu0 %1261
        %1263 = vrot.lane.b32.xlu0 %v204, 1
        %v1264 = vpop.permute.xlu0 %1263
        %1265 = vrot.lane.b32.xlu0 %v205, 1
        %v1266 = vpop.permute.xlu0 %1265
        %vm1267 = vcmask 7168
        %v1268 = vsel %vm1267, %v1258, %v1260
        %v1269 = vsel %vm1267, %v1260, %v1262
        %v1270 = vsel %vm1267, %v1262, %v1264
        %v1271 = vsel %vm1267, %v1264, %v1266
        %v1273 = vsel %vm221, %v1256, 0
        %v1276 = vand.u32 %v1268, %v228
        %v1279 = vand.u32 %v1269, %v228
        %v1282 = vand.u32 %v1270, %v228
        %v1285 = vand.u32 %v1271, %v228
        %1287 = vmatpush.bf16.msra.mxu0 0
        %1288 = vmatpush.bf16.msra.mxu0 0
        %1289 = vmatpush.bf16.msra.mxu0 0
        %1290 = vmatpush.bf16.msra.mxu0 0
        %1291 = vmatpush.bf16.msra.mxu0 0
        %1292 = vmatpush.bf16.msra.mxu0 0
        %1293 = vmatpush.bf16.msra.mxu0 0
        %1294 = vmatpush.bf16.msra.mxu0 %v1276
        %1295 = vmatmul.bf16.gmra.mxu0 %v1273
        %v1296 = vpop.f32.mrf.mxu0
        %v1297 = vadd.f32 0.0, %v1296
        %v1298 = vpop.f32.mrf.mxu0
        %1299 = vdwg.mxu0
        %1300 = vmatpush.bf16.msra.mxu0 0
        %1301 = vmatpush.bf16.msra.mxu0 0
        %1302 = vmatpush.bf16.msra.mxu0 0
        %1303 = vmatpush.bf16.msra.mxu0 0
        %1304 = vmatpush.bf16.msra.mxu0 0
        %1305 = vmatpush.bf16.msra.mxu0 0
        %1306 = vmatpush.bf16.msra.mxu0 0
        %1307 = vmatpush.bf16.msra.mxu0 %v1279
        %1308 = vmatmul.bf16.gmra.mxu0 %v1273
        %v1309 = vpop.f32.mrf.mxu0
        %v1310 = vadd.f32 0.0, %v1309
        %v1311 = vpop.f32.mrf.mxu0
        %1312 = vdwg.mxu0
        %1313 = vmatpush.bf16.msra.mxu0 0
        %1314 = vmatpush.bf16.msra.mxu0 0
        %1315 = vmatpush.bf16.msra.mxu0 0
        %1316 = vmatpush.bf16.msra.mxu0 0
        %1317 = vmatpush.bf16.msra.mxu0 0
        %1318 = vmatpush.bf16.msra.mxu0 0
        %1319 = vmatpush.bf16.msra.mxu0 0
        %1320 = vmatpush.bf16.msra.mxu0 %v1282
        %1321 = vmatmul.bf16.gmra.mxu0 %v1273
        %v1322 = vpop.f32.mrf.mxu0
        %v1323 = vadd.f32 0.0, %v1322
        %v1324 = vpop.f32.mrf.mxu0
        %1325 = vdwg.mxu0
        %1326 = vmatpush.bf16.msra.mxu0 0
        %1327 = vmatpush.bf16.msra.mxu0 0
        %1328 = vmatpush.bf16.msra.mxu0 0
        %1329 = vmatpush.bf16.msra.mxu0 0
        %1330 = vmatpush.bf16.msra.mxu0 0
        %1331 = vmatpush.bf16.msra.mxu0 0
        %1332 = vmatpush.bf16.msra.mxu0 0
        %1333 = vmatpush.bf16.msra.mxu0 %v1285
        %1334 = vmatmul.bf16.gmra.mxu0 %v1273
        %v1335 = vpop.f32.mrf.mxu0
        %v1336 = vadd.f32 0.0, %v1335
        %v1337 = vpop.f32.mrf.mxu0
        %1338 = vdwg.mxu0
        %v1339 = vadd.f32 %v1251, %v1297
        %v1340 = vadd.f32 %v1252, %v1310
        %v1341 = vadd.f32 %v1253, %v1323
        %v1342 = vadd.f32 %v1254, %v1336
        %v1343 = vld [vmem:[#allocation2 + $0x4] sm:$0xff]
        %v1344 = vld [vmem:[#allocation2 + $0xc] sm:$0xff]
        %v1345 = vld [vmem:[#allocation2 + $0x1c] sm:$0x11]
        %v1346 = vld [vmem:[#allocation2 + $0x24] sm:$0x11]
        %s1347 = scalar_lea.vmem %s1, 52
        %v1348 = vld [vmem:[%s1347] sm:$0xf]
        %v1353 = vunpack.c.l.b16 %v1343
        %v1354 = vunpack.c.h.b16 %v1343
        %v1355 = vunpack.c.l.b16 %v1344
        %v1356 = vunpack.c.h.b16 %v1344
        %v1357 = vunpack.c.l.b16 %v1345
        %v1358 = vunpack.c.h.b16 %v1345
        %v1359 = vunpack.c.l.b16 %v1346
        %v1360 = vunpack.c.h.b16 %v1346
        %v1361 = vpack.c.b16 %v1357, %v1353
        %v1362 = vpack.c.b16 %v1358, %v1354
        %v1363 = vpack.c.b16 %v1359, %v1355
        %v1364 = vpack.c.b16 %v1360, %v1356
        %v1366 = vsel %vm221, %v1348, 0
        %v1369 = vand.u32 %v1361, %v228
        %v1372 = vand.u32 %v1362, %v228
        %v1375 = vand.u32 %v1363, %v228
        %v1378 = vand.u32 %v1364, %v228
        %1380 = vmatpush.bf16.msra.mxu0 0
        %1381 = vmatpush.bf16.msra.mxu0 0
        %1382 = vmatpush.bf16.msra.mxu0 0
        %1383 = vmatpush.bf16.msra.mxu0 0
        %1384 = vmatpush.bf16.msra.mxu0 0
        %1385 = vmatpush.bf16.msra.mxu0 0
        %1386 = vmatpush.bf16.msra.mxu0 0
        %1387 = vmatpush.bf16.msra.mxu0 %v1369
        %1388 = vmatmul.bf16.gmra.mxu0 %v1366
        %v1389 = vpop.f32.mrf.mxu0
        %v1390 = vadd.f32 0.0, %v1389
        %v1391 = vpop.f32.mrf.mxu0
        %1392 = vdwg.mxu0
        %1393 = vmatpush.bf16.msra.mxu0 0
        %1394 = vmatpush.bf16.msra.mxu0 0
        %1395 = vmatpush.bf16.msra.mxu0 0
        %1396 = vmatpush.bf16.msra.mxu0 0
        %1397 = vmatpush.bf16.msra.mxu0 0
        %1398 = vmatpush.bf16.msra.mxu0 0
        %1399 = vmatpush.bf16.msra.mxu0 0
        %1400 = vmatpush.bf16.msra.mxu0 %v1372
        %1401 = vmatmul.bf16.gmra.mxu0 %v1366
        %v1402 = vpop.f32.mrf.mxu0
        %v1403 = vadd.f32 0.0, %v1402
        %v1404 = vpop.f32.mrf.mxu0
        %1405 = vdwg.mxu0
        %1406 = vmatpush.bf16.msra.mxu0 0
        %1407 = vmatpush.bf16.msra.mxu0 0
        %1408 = vmatpush.bf16.msra.mxu0 0
        %1409 = vmatpush.bf16.msra.mxu0 0
        %1410 = vmatpush.bf16.msra.mxu0 0
        %1411 = vmatpush.bf16.msra.mxu0 0
        %1412 = vmatpush.bf16.msra.mxu0 0
        %1413 = vmatpush.bf16.msra.mxu0 %v1375
        %1414 = vmatmul.bf16.gmra.mxu0 %v1366
        %v1415 = vpop.f32.mrf.mxu0
        %v1416 = vadd.f32 0.0, %v1415
        %v1417 = vpop.f32.mrf.mxu0
        %1418 = vdwg.mxu0
        %1419 = vmatpush.bf16.msra.mxu0 0
        %1420 = vmatpush.bf16.msra.mxu0 0
        %1421 = vmatpush.bf16.msra.mxu0 0
        %1422 = vmatpush.bf16.msra.mxu0 0
        %1423 = vmatpush.bf16.msra.mxu0 0
        %1424 = vmatpush.bf16.msra.mxu0 0
        %1425 = vmatpush.bf16.msra.mxu0 0
        %1426 = vmatpush.bf16.msra.mxu0 %v1378
        %1427 = vmatmul.bf16.gmra.mxu0 %v1366
        %v1428 = vpop.f32.mrf.mxu0
        %v1429 = vadd.f32 0.0, %v1428
        %v1430 = vpop.f32.mrf.mxu0
        %1431 = vdwg.mxu0
        %v1432 = vadd.f32 %v1339, %v1390
        %v1433 = vadd.f32 %v1340, %v1403
        %v1434 = vadd.f32 %v1341, %v1416
        %v1435 = vadd.f32 %v1342, %v1429
        %v1436 = vld [vmem:[#allocation2 + $0x4] sm:$0xff]
        %v1437 = vld [vmem:[#allocation2 + $0xc] sm:$0xff]
        %v1438 = vld [vmem:[#allocation2 + $0x14] sm:$0xf]
        %v1439 = vld [vmem:[#allocation2 + $0x1c] sm:$0x11]
        %v1440 = vld [vmem:[#allocation2 + $0x24] sm:$0x11]
        %v1441 = vld [vmem:[#allocation2 + $0x2c] sm:$0x1]
        %s1442 = scalar_lea.vmem %s1, 56
        %v1443 = vld [vmem:[%s1442] sm:$0xf]
        %v1450 = vunpack.c.l.b16 %v1436
        %v1451 = vunpack.c.h.b16 %v1436
        %v1452 = vunpack.c.l.b16 %v1437
        %v1453 = vunpack.c.h.b16 %v1437
        %v1454 = vunpack.c.l.b16 %v1438
        %v1455 = vunpack.c.l.b16 %v1439
        %v1456 = vunpack.c.h.b16 %v1439
        %v1457 = vunpack.c.l.b16 %v1440
        %v1458 = vunpack.c.h.b16 %v1440
        %v1459 = vunpack.c.l.b16 %v1441
        %v1460 = vpack.c.b16 %v1455, %v1450
        %v1461 = vpack.c.b16 %v1456, %v1451
        %v1462 = vpack.c.b16 %v1457, %v1452
        %v1463 = vpack.c.b16 %v1458, %v1453
        %v1464 = vpack.c.b16 %v1459, %v1454
        %1465 = vrot.lane.b32.xlu0 %v1460, 127
        %v1466 = vpop.permute.xlu0 %1465
        %1467 = vrot.lane.b32.xlu0 %v1461, 127
        %v1468 = vpop.permute.xlu0 %1467
        %1469 = vrot.lane.b32.xlu0 %v1462, 127
        %v1470 = vpop.permute.xlu0 %1469
        %1471 = vrot.lane.b32.xlu0 %v1463, 127
        %v1472 = vpop.permute.xlu0 %1471
        %1473 = vrot.lane.b32.xlu0 %v1464, 127
        %v1474 = vpop.permute.xlu0 %1473
        %vm1475 = vcmask 1039360
        %v1476 = vsel %vm1475, %v1466, %v1468
        %v1477 = vsel %vm1475, %v1468, %v1470
        %v1478 = vsel %vm1475, %v1470, %v1472
        %v1479 = vsel %vm1475, %v1472, %v1474
        %v1481 = vsel %vm221, %v1443, 0
        %v1484 = vand.u32 %v1476, %v228
        %v1487 = vand.u32 %v1477, %v228
        %v1490 = vand.u32 %v1478, %v228
        %v1493 = vand.u32 %v1479, %v228
        %1495 = vmatpush.bf16.msra.mxu0 0
        %1496 = vmatpush.bf16.msra.mxu0 0
        %1497 = vmatpush.bf16.msra.mxu0 0
        %1498 = vmatpush.bf16.msra.mxu0 0
        %1499 = vmatpush.bf16.msra.mxu0 0
        %1500 = vmatpush.bf16.msra.mxu0 0
        %1501 = vmatpush.bf16.msra.mxu0 0
        %1502 = vmatpush.bf16.msra.mxu0 %v1484
        %1503 = vmatmul.bf16.gmra.mxu0 %v1481
        %v1504 = vpop.f32.mrf.mxu0
        %v1505 = vadd.f32 0.0, %v1504
        %v1506 = vpop.f32.mrf.mxu0
        %1507 = vdwg.mxu0
        %1508 = vmatpush.bf16.msra.mxu0 0
        %1509 = vmatpush.bf16.msra.mxu0 0
        %1510 = vmatpush.bf16.msra.mxu0 0
        %1511 = vmatpush.bf16.msra.mxu0 0
        %1512 = vmatpush.bf16.msra.mxu0 0
        %1513 = vmatpush.bf16.msra.mxu0 0
        %1514 = vmatpush.bf16.msra.mxu0 0
        %1515 = vmatpush.bf16.msra.mxu0 %v1487
        %1516 = vmatmul.bf16.gmra.mxu0 %v1481
        %v1517 = vpop.f32.mrf.mxu0
        %v1518 = vadd.f32 0.0, %v1517
        %v1519 = vpop.f32.mrf.mxu0
        %1520 = vdwg.mxu0
        %1521 = vmatpush.bf16.msra.mxu0 0
        %1522 = vmatpush.bf16.msra.mxu0 0
        %1523 = vmatpush.bf16.msra.mxu0 0
        %1524 = vmatpush.bf16.msra.mxu0 0
        %1525 = vmatpush.bf16.msra.mxu0 0
        %1526 = vmatpush.bf16.msra.mxu0 0
        %1527 = vmatpush.bf16.msra.mxu0 0
        %1528 = vmatpush.bf16.msra.mxu0 %v1490
        %1529 = vmatmul.bf16.gmra.mxu0 %v1481
        %v1530 = vpop.f32.mrf.mxu0
        %v1531 = vadd.f32 0.0, %v1530
        %v1532 = vpop.f32.mrf.mxu0
        %1533 = vdwg.mxu0
        %1534 = vmatpush.bf16.msra.mxu0 0
        %1535 = vmatpush.bf16.msra.mxu0 0
        %1536 = vmatpush.bf16.msra.mxu0 0
        %1537 = vmatpush.bf16.msra.mxu0 0
        %1538 = vmatpush.bf16.msra.mxu0 0
        %1539 = vmatpush.bf16.msra.mxu0 0
        %1540 = vmatpush.bf16.msra.mxu0 0
        %1541 = vmatpush.bf16.msra.mxu0 %v1493
        %1542 = vmatmul.bf16.gmra.mxu0 %v1481
        %v1543 = vpop.f32.mrf.mxu0
        %v1544 = vadd.f32 0.0, %v1543
        %v1545 = vpop.f32.mrf.mxu0
        %1546 = vdwg.mxu0
        %v1547 = vadd.f32 %v1432, %v1505
        %v1548 = vadd.f32 %v1433, %v1518
        %v1549 = vadd.f32 %v1434, %v1531
        %v1550 = vadd.f32 %v1435, %v1544
        %s1551 = scalar_lea.vmem %s1, 60
        %v1552 = vld [vmem:[%s1551] sm:$0xf]
        %1553 = vrot.lane.b32.xlu0 %v1460, 119
        %v1554 = vpop.permute.xlu0 %1553
        %1555 = vrot.lane.b32.xlu0 %v1461, 119
        %v1556 = vpop.permute.xlu0 %1555
        %1557 = vrot.lane.b32.xlu0 %v1462, 119
        %v1558 = vpop.permute.xlu0 %1557
        %1559 = vrot.lane.b32.xlu0 %v1463, 119
        %v1560 = vpop.permute.xlu0 %1559
        %1561 = vrot.lane.b32.xlu0 %v1464, 119
        %v1562 = vpop.permute.xlu0 %1561
        %vm1563 = vcmask 973824
        %v1564 = vsel %vm1563, %v1554, %v1556
        %v1565 = vsel %vm1563, %v1556, %v1558
        %v1566 = vsel %vm1563, %v1558, %v1560
        %v1567 = vsel %vm1563, %v1560, %v1562
        %v1569 = vsel %vm221, %v1552, 0
        %v1572 = vand.u32 %v1564, %v228
        %v1575 = vand.u32 %v1565, %v228
        %v1578 = vand.u32 %v1566, %v228
        %v1581 = vand.u32 %v1567, %v228
        %1583 = vmatpush.bf16.msra.mxu0 0
        %1584 = vmatpush.bf16.msra.mxu0 0
        %1585 = vmatpush.bf16.msra.mxu0 0
        %1586 = vmatpush.bf16.msra.mxu0 0
        %1587 = vmatpush.bf16.msra.mxu0 0
        %1588 = vmatpush.bf16.msra.mxu0 0
        %1589 = vmatpush.bf16.msra.mxu0 0
        %1590 = vmatpush.bf16.msra.mxu0 %v1572
        %1591 = vmatmul.bf16.gmra.mxu0 %v1569
        %v1592 = vpop.f32.mrf.mxu0
        %v1593 = vadd.f32 0.0, %v1592
        %v1594 = vpop.f32.mrf.mxu0
        %1595 = vdwg.mxu0
        %1596 = vmatpush.bf16.msra.mxu0 0
        %1597 = vmatpush.bf16.msra.mxu0 0
        %1598 = vmatpush.bf16.msra.mxu0 0
        %1599 = vmatpush.bf16.msra.mxu0 0
        %1600 = vmatpush.bf16.msra.mxu0 0
        %1601 = vmatpush.bf16.msra.mxu0 0
        %1602 = vmatpush.bf16.msra.mxu0 0
        %1603 = vmatpush.bf16.msra.mxu0 %v1575
        %1604 = vmatmul.bf16.gmra.mxu0 %v1569
        %v1605 = vpop.f32.mrf.mxu0
        %v1606 = vadd.f32 0.0, %v1605
        %v1607 = vpop.f32.mrf.mxu0
        %1608 = vdwg.mxu0
        %1609 = vmatpush.bf16.msra.mxu0 0
        %1610 = vmatpush.bf16.msra.mxu0 0
        %1611 = vmatpush.bf16.msra.mxu0 0
        %1612 = vmatpush.bf16.msra.mxu0 0
        %1613 = vmatpush.bf16.msra.mxu0 0
        %1614 = vmatpush.bf16.msra.mxu0 0
        %1615 = vmatpush.bf16.msra.mxu0 0
        %1616 = vmatpush.bf16.msra.mxu0 %v1578
        %1617 = vmatmul.bf16.gmra.mxu0 %v1569
        %v1618 = vpop.f32.mrf.mxu0
        %v1619 = vadd.f32 0.0, %v1618
        %v1620 = vpop.f32.mrf.mxu0
        %1621 = vdwg.mxu0
        %1622 = vmatpush.bf16.msra.mxu0 0
        %1623 = vmatpush.bf16.msra.mxu0 0
        %1624 = vmatpush.bf16.msra.mxu0 0
        %1625 = vmatpush.bf16.msra.mxu0 0
        %1626 = vmatpush.bf16.msra.mxu0 0
        %1627 = vmatpush.bf16.msra.mxu0 0
        %1628 = vmatpush.bf16.msra.mxu0 0
        %1629 = vmatpush.bf16.msra.mxu0 %v1581
        %1630 = vmatmul.bf16.gmra.mxu0 %v1569
        %v1631 = vpop.f32.mrf.mxu0
        %v1632 = vadd.f32 0.0, %v1631
        %v1633 = vpop.f32.mrf.mxu0
        %1634 = vdwg.mxu0
        %v1635 = vadd.f32 %v1547, %v1593
        %v1636 = vadd.f32 %v1548, %v1606
        %v1637 = vadd.f32 %v1549, %v1619
        %v1638 = vadd.f32 %v1550, %v1632
        %s1639 = scalar_lea.vmem %s1, 64
        %v1640 = vld [vmem:[%s1639] sm:$0xf]
        %1641 = vrot.lane.b32.xlu0 %v1460, 118
        %v1642 = vpop.permute.xlu0 %1641
        %1643 = vrot.lane.b32.xlu0 %v1461, 118
        %v1644 = vpop.permute.xlu0 %1643
        %1645 = vrot.lane.b32.xlu0 %v1462, 118
        %v1646 = vpop.permute.xlu0 %1645
        %1647 = vrot.lane.b32.xlu0 %v1463, 118
        %v1648 = vpop.permute.xlu0 %1647
        %1649 = vrot.lane.b32.xlu0 %v1464, 118
        %v1650 = vpop.permute.xlu0 %1649
        %vm1651 = vcmask 965632
        %v1652 = vsel %vm1651, %v1642, %v1644
        %v1653 = vsel %vm1651, %v1644, %v1646
        %v1654 = vsel %vm1651, %v1646, %v1648
        %v1655 = vsel %vm1651, %v1648, %v1650
        %v1657 = vsel %vm221, %v1640, 0
        %v1660 = vand.u32 %v1652, %v228
        %v1663 = vand.u32 %v1653, %v228
        %v1666 = vand.u32 %v1654, %v228
        %v1669 = vand.u32 %v1655, %v228
        %1671 = vmatpush.bf16.msra.mxu0 0
        %1672 = vmatpush.bf16.msra.mxu0 0
        %1673 = vmatpush.bf16.msra.mxu0 0
        %1674 = vmatpush.bf16.msra.mxu0 0
        %1675 = vmatpush.bf16.msra.mxu0 0
        %1676 = vmatpush.bf16.msra.mxu0 0
        %1677 = vmatpush.bf16.msra.mxu0 0
        %1678 = vmatpush.bf16.msra.mxu0 %v1660
        %1679 = vmatmul.bf16.gmra.mxu0 %v1657
        %v1680 = vpop.f32.mrf.mxu0
        %v1681 = vadd.f32 0.0, %v1680
        %v1682 = vpop.f32.mrf.mxu0
        %1683 = vdwg.mxu0
        %1684 = vmatpush.bf16.msra.mxu0 0
        %1685 = vmatpush.bf16.msra.mxu0 0
        %1686 = vmatpush.bf16.msra.mxu0 0
        %1687 = vmatpush.bf16.msra.mxu0 0
        %1688 = vmatpush.bf16.msra.mxu0 0
        %1689 = vmatpush.bf16.msra.mxu0 0
        %1690 = vmatpush.bf16.msra.mxu0 0
        %1691 = vmatpush.bf16.msra.mxu0 %v1663
        %1692 = vmatmul.bf16.gmra.mxu0 %v1657
        %v1693 = vpop.f32.mrf.mxu0
        %v1694 = vadd.f32 0.0, %v1693
        %v1695 = vpop.f32.mrf.mxu0
        %1696 = vdwg.mxu0
        %1697 = vmatpush.bf16.msra.mxu0 0
        %1698 = vmatpush.bf16.msra.mxu0 0
        %1699 = vmatpush.bf16.msra.mxu0 0
        %1700 = vmatpush.bf16.msra.mxu0 0
        %1701 = vmatpush.bf16.msra.mxu0 0
        %1702 = vmatpush.bf16.msra.mxu0 0
        %1703 = vmatpush.bf16.msra.mxu0 0
        %1704 = vmatpush.bf16.msra.mxu0 %v1666
        %1705 = vmatmul.bf16.gmra.mxu0 %v1657
        %v1706 = vpop.f32.mrf.mxu0
        %v1707 = vadd.f32 0.0, %v1706
        %v1708 = vpop.f32.mrf.mxu0
        %1709 = vdwg.mxu0
        %1710 = vmatpush.bf16.msra.mxu0 0
        %1711 = vmatpush.bf16.msra.mxu0 0
        %1712 = vmatpush.bf16.msra.mxu0 0
        %1713 = vmatpush.bf16.msra.mxu0 0
        %1714 = vmatpush.bf16.msra.mxu0 0
        %1715 = vmatpush.bf16.msra.mxu0 0
        %1716 = vmatpush.bf16.msra.mxu0 0
        %1717 = vmatpush.bf16.msra.mxu0 %v1669
        %1718 = vmatmul.bf16.gmra.mxu0 %v1657
        %v1719 = vpop.f32.mrf.mxu0
        %v1720 = vadd.f32 0.0, %v1719
        %v1721 = vpop.f32.mrf.mxu0
        %1722 = vdwg.mxu0
        %v1723 = vadd.f32 %v1635, %v1681
        %v1724 = vadd.f32 %v1636, %v1694
        %v1725 = vadd.f32 %v1637, %v1707
        %v1726 = vadd.f32 %v1638, %v1720
        %s1727 = scalar_lea.vmem %s1, 68
        %v1728 = vld [vmem:[%s1727] sm:$0xf]
        %1729 = vrot.lane.b32.xlu0 %v1460, 117
        %v1730 = vpop.permute.xlu0 %1729
        %1731 = vrot.lane.b32.xlu0 %v1461, 117
        %v1732 = vpop.permute.xlu0 %1731
        %1733 = vrot.lane.b32.xlu0 %v1462, 117
        %v1734 = vpop.permute.xlu0 %1733
        %1735 = vrot.lane.b32.xlu0 %v1463, 117
        %v1736 = vpop.permute.xlu0 %1735
        %1737 = vrot.lane.b32.xlu0 %v1464, 117
        %v1738 = vpop.permute.xlu0 %1737
        %vm1739 = vcmask 957440
        %v1740 = vsel %vm1739, %v1730, %v1732
        %v1741 = vsel %vm1739, %v1732, %v1734
        %v1742 = vsel %vm1739, %v1734, %v1736
        %v1743 = vsel %vm1739, %v1736, %v1738
        %v1745 = vsel %vm221, %v1728, 0
        %v1748 = vand.u32 %v1740, %v228
        %v1751 = vand.u32 %v1741, %v228
        %v1754 = vand.u32 %v1742, %v228
        %v1757 = vand.u32 %v1743, %v228
        %1759 = vmatpush.bf16.msra.mxu0 0
        %1760 = vmatpush.bf16.msra.mxu0 0
        %1761 = vmatpush.bf16.msra.mxu0 0
        %1762 = vmatpush.bf16.msra.mxu0 0
        %1763 = vmatpush.bf16.msra.mxu0 0
        %1764 = vmatpush.bf16.msra.mxu0 0
        %1765 = vmatpush.bf16.msra.mxu0 0
        %1766 = vmatpush.bf16.msra.mxu0 %v1748
        %1767 = vmatmul.bf16.gmra.mxu0 %v1745
        %v1768 = vpop.f32.mrf.mxu0
        %v1769 = vadd.f32 0.0, %v1768
        %v1770 = vpop.f32.mrf.mxu0
        %1771 = vdwg.mxu0
        %1772 = vmatpush.bf16.msra.mxu0 0
        %1773 = vmatpush.bf16.msra.mxu0 0
        %1774 = vmatpush.bf16.msra.mxu0 0
        %1775 = vmatpush.bf16.msra.mxu0 0
        %1776 = vmatpush.bf16.msra.mxu0 0
        %1777 = vmatpush.bf16.msra.mxu0 0
        %1778 = vmatpush.bf16.msra.mxu0 0
        %1779 = vmatpush.bf16.msra.mxu0 %v1751
        %1780 = vmatmul.bf16.gmra.mxu0 %v1745
        %v1781 = vpop.f32.mrf.mxu0
        %v1782 = vadd.f32 0.0, %v1781
        %v1783 = vpop.f32.mrf.mxu0
        %1784 = vdwg.mxu0
        %1785 = vmatpush.bf16.msra.mxu0 0
        %1786 = vmatpush.bf16.msra.mxu0 0
        %1787 = vmatpush.bf16.msra.mxu0 0
        %1788 = vmatpush.bf16.msra.mxu0 0
        %1789 = vmatpush.bf16.msra.mxu0 0
        %1790 = vmatpush.bf16.msra.mxu0 0
        %1791 = vmatpush.bf16.msra.mxu0 0
        %1792 = vmatpush.bf16.msra.mxu0 %v1754
        %1793 = vmatmul.bf16.gmra.mxu0 %v1745
        %v1794 = vpop.f32.mrf.mxu0
        %v1795 = vadd.f32 0.0, %v1794
        %v1796 = vpop.f32.mrf.mxu0
        %1797 = vdwg.mxu0
        %1798 = vmatpush.bf16.msra.mxu0 0
        %1799 = vmatpush.bf16.msra.mxu0 0
        %1800 = vmatpush.bf16.msra.mxu0 0
        %1801 = vmatpush.bf16.msra.mxu0 0
        %1802 = vmatpush.bf16.msra.mxu0 0
        %1803 = vmatpush.bf16.msra.mxu0 0
        %1804 = vmatpush.bf16.msra.mxu0 0
        %1805 = vmatpush.bf16.msra.mxu0 %v1757
        %1806 = vmatmul.bf16.gmra.mxu0 %v1745
        %v1807 = vpop.f32.mrf.mxu0
        %v1808 = vadd.f32 0.0, %v1807
        %v1809 = vpop.f32.mrf.mxu0
        %1810 = vdwg.mxu0
        %v1811 = vadd.f32 %v1723, %v1769
        %v1812 = vadd.f32 %v1724, %v1782
        %v1813 = vadd.f32 %v1725, %v1795
        %v1814 = vadd.f32 %v1726, %v1808
        %s1815 = scalar_lea.vmem %s1, 72
        %v1816 = vld [vmem:[%s1815] sm:$0xf]
        %1817 = vrot.lane.b32.xlu0 %v1460, 39
        %v1818 = vpop.permute.xlu0 %1817
        %1819 = vrot.lane.b32.xlu0 %v1461, 39
        %v1820 = vpop.permute.xlu0 %1819
        %1821 = vrot.lane.b32.xlu0 %v1462, 39
        %v1822 = vpop.permute.xlu0 %1821
        %1823 = vrot.lane.b32.xlu0 %v1463, 39
        %v1824 = vpop.permute.xlu0 %1823
        %1825 = vrot.lane.b32.xlu0 %v1464, 39
        %v1826 = vpop.permute.xlu0 %1825
        %vm1827 = vcmask 318464
        %v1828 = vsel %vm1827, %v1818, %v1820
        %v1829 = vsel %vm1827, %v1820, %v1822
        %v1830 = vsel %vm1827, %v1822, %v1824
        %v1831 = vsel %vm1827, %v1824, %v1826
        %v1833 = vsel %vm221, %v1816, 0
        %v1836 = vand.u32 %v1828, %v228
        %v1839 = vand.u32 %v1829, %v228
        %v1842 = vand.u32 %v1830, %v228
        %v1845 = vand.u32 %v1831, %v228
        %1847 = vmatpush.bf16.msra.mxu0 0
        %1848 = vmatpush.bf16.msra.mxu0 0
        %1849 = vmatpush.bf16.msra.mxu0 0
        %1850 = vmatpush.bf16.msra.mxu0 0
        %1851 = vmatpush.bf16.msra.mxu0 0
        %1852 = vmatpush.bf16.msra.mxu0 0
        %1853 = vmatpush.bf16.msra.mxu0 0
        %1854 = vmatpush.bf16.msra.mxu0 %v1836
        %1855 = vmatmul.bf16.gmra.mxu0 %v1833
        %v1856 = vpop.f32.mrf.mxu0
        %v1857 = vadd.f32 0.0, %v1856
        %v1858 = vpop.f32.mrf.mxu0
        %1859 = vdwg.mxu0
        %1860 = vmatpush.bf16.msra.mxu0 0
        %1861 = vmatpush.bf16.msra.mxu0 0
        %1862 = vmatpush.bf16.msra.mxu0 0
        %1863 = vmatpush.bf16.msra.mxu0 0
        %1864 = vmatpush.bf16.msra.mxu0 0
        %1865 = vmatpush.bf16.msra.mxu0 0
        %1866 = vmatpush.bf16.msra.mxu0 0
        %1867 = vmatpush.bf16.msra.mxu0 %v1839
        %1868 = vmatmul.bf16.gmra.mxu0 %v1833
        %v1869 = vpop.f32.mrf.mxu0
        %v1870 = vadd.f32 0.0, %v1869
        %v1871 = vpop.f32.mrf.mxu0
        %1872 = vdwg.mxu0
        %1873 = vmatpush.bf16.msra.mxu0 0
        %1874 = vmatpush.bf16.msra.mxu0 0
        %1875 = vmatpush.bf16.msra.mxu0 0
        %1876 = vmatpush.bf16.msra.mxu0 0
        %1877 = vmatpush.bf16.msra.mxu0 0
        %1878 = vmatpush.bf16.msra.mxu0 0
        %1879 = vmatpush.bf16.msra.mxu0 0
        %1880 = vmatpush.bf16.msra.mxu0 %v1842
        %1881 = vmatmul.bf16.gmra.mxu0 %v1833
        %v1882 = vpop.f32.mrf.mxu0
        %v1883 = vadd.f32 0.0, %v1882
        %v1884 = vpop.f32.mrf.mxu0
        %1885 = vdwg.mxu0
        %1886 = vmatpush.bf16.msra.mxu0 0
        %1887 = vmatpush.bf16.msra.mxu0 0
        %1888 = vmatpush.bf16.msra.mxu0 0
        %1889 = vmatpush.bf16.msra.mxu0 0
        %1890 = vmatpush.bf16.msra.mxu0 0
        %1891 = vmatpush.bf16.msra.mxu0 0
        %1892 = vmatpush.bf16.msra.mxu0 0
        %1893 = vmatpush.bf16.msra.mxu0 %v1845
        %1894 = vmatmul.bf16.gmra.mxu0 %v1833
        %v1895 = vpop.f32.mrf.mxu0
        %v1896 = vadd.f32 0.0, %v1895
        %v1897 = vpop.f32.mrf.mxu0
        %1898 = vdwg.mxu0
        %v1899 = vadd.f32 %v1811, %v1857
        %v1900 = vadd.f32 %v1812, %v1870
        %v1901 = vadd.f32 %v1813, %v1883
        %v1902 = vadd.f32 %v1814, %v1896
        %s1903 = scalar_lea.vmem %s1, 76
        %v1904 = vld [vmem:[%s1903] sm:$0xf]
        %1905 = vrot.lane.b32.xlu0 %v1460, 38
        %v1906 = vpop.permute.xlu0 %1905
        %1907 = vrot.lane.b32.xlu0 %v1461, 38
        %v1908 = vpop.permute.xlu0 %1907
        %1909 = vrot.lane.b32.xlu0 %v1462, 38
        %v1910 = vpop.permute.xlu0 %1909
        %1911 = vrot.lane.b32.xlu0 %v1463, 38
        %v1912 = vpop.permute.xlu0 %1911
        %1913 = vrot.lane.b32.xlu0 %v1464, 38
        %v1914 = vpop.permute.xlu0 %1913
        %vm1915 = vcmask 310272
        %v1916 = vsel %vm1915, %v1906, %v1908
        %v1917 = vsel %vm1915, %v1908, %v1910
        %v1918 = vsel %vm1915, %v1910, %v1912
        %v1919 = vsel %vm1915, %v1912, %v1914
        %v1921 = vsel %vm221, %v1904, 0
        %v1924 = vand.u32 %v1916, %v228
        %v1927 = vand.u32 %v1917, %v228
        %v1930 = vand.u32 %v1918, %v228
        %v1933 = vand.u32 %v1919, %v228
        %1935 = vmatpush.bf16.msra.mxu0 0
        %1936 = vmatpush.bf16.msra.mxu0 0
        %1937 = vmatpush.bf16.msra.mxu0 0
        %1938 = vmatpush.bf16.msra.mxu0 0
        %1939 = vmatpush.bf16.msra.mxu0 0
        %1940 = vmatpush.bf16.msra.mxu0 0
        %1941 = vmatpush.bf16.msra.mxu0 0
        %1942 = vmatpush.bf16.msra.mxu0 %v1924
        %1943 = vmatmul.bf16.gmra.mxu0 %v1921
        %v1944 = vpop.f32.mrf.mxu0
        %v1945 = vadd.f32 0.0, %v1944
        %v1946 = vpop.f32.mrf.mxu0
        %1947 = vdwg.mxu0
        %1948 = vmatpush.bf16.msra.mxu0 0
        %1949 = vmatpush.bf16.msra.mxu0 0
        %1950 = vmatpush.bf16.msra.mxu0 0
        %1951 = vmatpush.bf16.msra.mxu0 0
        %1952 = vmatpush.bf16.msra.mxu0 0
        %1953 = vmatpush.bf16.msra.mxu0 0
        %1954 = vmatpush.bf16.msra.mxu0 0
        %1955 = vmatpush.bf16.msra.mxu0 %v1927
        %1956 = vmatmul.bf16.gmra.mxu0 %v1921
        %v1957 = vpop.f32.mrf.mxu0
        %v1958 = vadd.f32 0.0, %v1957
        %v1959 = vpop.f32.mrf.mxu0
        %1960 = vdwg.mxu0
        %1961 = vmatpush.bf16.msra.mxu0 0
        %1962 = vmatpush.bf16.msra.mxu0 0
        %1963 = vmatpush.bf16.msra.mxu0 0
        %1964 = vmatpush.bf16.msra.mxu0 0
        %1965 = vmatpush.bf16.msra.mxu0 0
        %1966 = vmatpush.bf16.msra.mxu0 0
        %1967 = vmatpush.bf16.msra.mxu0 0
        %1968 = vmatpush.bf16.msra.mxu0 %v1930
        %1969 = vmatmul.bf16.gmra.mxu0 %v1921
        %v1970 = vpop.f32.mrf.mxu0
        %v1971 = vadd.f32 0.0, %v1970
        %v1972 = vpop.f32.mrf.mxu0
        %1973 = vdwg.mxu0
        %1974 = vmatpush.bf16.msra.mxu0 0
        %1975 = vmatpush.bf16.msra.mxu0 0
        %1976 = vmatpush.bf16.msra.mxu0 0
        %1977 = vmatpush.bf16.msra.mxu0 0
        %1978 = vmatpush.bf16.msra.mxu0 0
        %1979 = vmatpush.bf16.msra.mxu0 0
        %1980 = vmatpush.bf16.msra.mxu0 0
        %1981 = vmatpush.bf16.msra.mxu0 %v1933
        %1982 = vmatmul.bf16.gmra.mxu0 %v1921
        %v1983 = vpop.f32.mrf.mxu0
        %v1984 = vadd.f32 0.0, %v1983
        %v1985 = vpop.f32.mrf.mxu0
        %1986 = vdwg.mxu0
        %v1987 = vadd.f32 %v1899, %v1945
        %v1988 = vadd.f32 %v1900, %v1958
        %v1989 = vadd.f32 %v1901, %v1971
        %v1990 = vadd.f32 %v1902, %v1984
        %s1991 = scalar_lea.vmem %s1, 80
        %v1992 = vld [vmem:[%s1991] sm:$0xf]
        %1993 = vrot.lane.b32.xlu0 %v1460, 37
        %v1994 = vpop.permute.xlu0 %1993
        %1995 = vrot.lane.b32.xlu0 %v1461, 37
        %v1996 = vpop.permute.xlu0 %1995
        %1997 = vrot.lane.b32.xlu0 %v1462, 37
        %v1998 = vpop.permute.xlu0 %1997
        %1999 = vrot.lane.b32.xlu0 %v1463, 37
        %v2000 = vpop.permute.xlu0 %1999
        %2001 = vrot.lane.b32.xlu0 %v1464, 37
        %v2002 = vpop.permute.xlu0 %2001
        %vm2003 = vcmask 302080
        %v2004 = vsel %vm2003, %v1994, %v1996
        %v2005 = vsel %vm2003, %v1996, %v1998
        %v2006 = vsel %vm2003, %v1998, %v2000
        %v2007 = vsel %vm2003, %v2000, %v2002
        %v2009 = vsel %vm221, %v1992, 0
        %v2012 = vand.u32 %v2004, %v228
        %v2015 = vand.u32 %v2005, %v228
        %v2018 = vand.u32 %v2006, %v228
        %v2021 = vand.u32 %v2007, %v228
        %2023 = vmatpush.bf16.msra.mxu0 0
        %2024 = vmatpush.bf16.msra.mxu0 0
        %2025 = vmatpush.bf16.msra.mxu0 0
        %2026 = vmatpush.bf16.msra.mxu0 0
        %2027 = vmatpush.bf16.msra.mxu0 0
        %2028 = vmatpush.bf16.msra.mxu0 0
        %2029 = vmatpush.bf16.msra.mxu0 0
        %2030 = vmatpush.bf16.msra.mxu0 %v2012
        %2031 = vmatmul.bf16.gmra.mxu0 %v2009
        %v2032 = vpop.f32.mrf.mxu0
        %v2033 = vadd.f32 0.0, %v2032
        %v2034 = vpop.f32.mrf.mxu0
        %2035 = vdwg.mxu0
        %2036 = vmatpush.bf16.msra.mxu0 0
        %2037 = vmatpush.bf16.msra.mxu0 0
        %2038 = vmatpush.bf16.msra.mxu0 0
        %2039 = vmatpush.bf16.msra.mxu0 0
        %2040 = vmatpush.bf16.msra.mxu0 0
        %2041 = vmatpush.bf16.msra.mxu0 0
        %2042 = vmatpush.bf16.msra.mxu0 0
        %2043 = vmatpush.bf16.msra.mxu0 %v2015
        %2044 = vmatmul.bf16.gmra.mxu0 %v2009
        %v2045 = vpop.f32.mrf.mxu0
        %v2046 = vadd.f32 0.0, %v2045
        %v2047 = vpop.f32.mrf.mxu0
        %2048 = vdwg.mxu0
        %2049 = vmatpush.bf16.msra.mxu0 0
        %2050 = vmatpush.bf16.msra.mxu0 0
        %2051 = vmatpush.bf16.msra.mxu0 0
        %2052 = vmatpush.bf16.msra.mxu0 0
        %2053 = vmatpush.bf16.msra.mxu0 0
        %2054 = vmatpush.bf16.msra.mxu0 0
        %2055 = vmatpush.bf16.msra.mxu0 0
        %2056 = vmatpush.bf16.msra.mxu0 %v2018
        %2057 = vmatmul.bf16.gmra.mxu0 %v2009
        %v2058 = vpop.f32.mrf.mxu0
        %v2059 = vadd.f32 0.0, %v2058
        %v2060 = vpop.f32.mrf.mxu0
        %2061 = vdwg.mxu0
        %2062 = vmatpush.bf16.msra.mxu0 0
        %2063 = vmatpush.bf16.msra.mxu0 0
        %2064 = vmatpush.bf16.msra.mxu0 0
        %2065 = vmatpush.bf16.msra.mxu0 0
        %2066 = vmatpush.bf16.msra.mxu0 0
        %2067 = vmatpush.bf16.msra.mxu0 0
        %2068 = vmatpush.bf16.msra.mxu0 0
        %2069 = vmatpush.bf16.msra.mxu0 %v2021
        %2070 = vmatmul.bf16.gmra.mxu0 %v2009
        %v2071 = vpop.f32.mrf.mxu0
        %v2072 = vadd.f32 0.0, %v2071
        %v2073 = vpop.f32.mrf.mxu0
        %2074 = vdwg.mxu0
        %v2075 = vadd.f32 %v1987, %v2033
        %v2076 = vadd.f32 %v1988, %v2046
        %v2077 = vadd.f32 %v1989, %v2059
        %v2078 = vadd.f32 %v1990, %v2072
        %s2079 = scalar_lea.vmem %s1, 84
        %v2080 = vld [vmem:[%s2079] sm:$0xf]
        %2081 = vrot.lane.b32.xlu0 %v1460, 29
        %v2082 = vpop.permute.xlu0 %2081
        %2083 = vrot.lane.b32.xlu0 %v1461, 29
        %v2084 = vpop.permute.xlu0 %2083
        %2085 = vrot.lane.b32.xlu0 %v1462, 29
        %v2086 = vpop.permute.xlu0 %2085
        %2087 = vrot.lane.b32.xlu0 %v1463, 29
        %v2088 = vpop.permute.xlu0 %2087
        %2089 = vrot.lane.b32.xlu0 %v1464, 29
        %v2090 = vpop.permute.xlu0 %2089
        %vm2091 = vcmask 236544
        %v2092 = vsel %vm2091, %v2082, %v2084
        %v2093 = vsel %vm2091, %v2084, %v2086
        %v2094 = vsel %vm2091, %v2086, %v2088
        %v2095 = vsel %vm2091, %v2088, %v2090
        %v2097 = vsel %vm221, %v2080, 0
        %v2100 = vand.u32 %v2092, %v228
        %v2103 = vand.u32 %v2093, %v228
        %v2106 = vand.u32 %v2094, %v228
        %v2109 = vand.u32 %v2095, %v228
        %2111 = vmatpush.bf16.msra.mxu0 0
        %2112 = vmatpush.bf16.msra.mxu0 0
        %2113 = vmatpush.bf16.msra.mxu0 0
        %2114 = vmatpush.bf16.msra.mxu0 0
        %2115 = vmatpush.bf16.msra.mxu0 0
        %2116 = vmatpush.bf16.msra.mxu0 0
        %2117 = vmatpush.bf16.msra.mxu0 0
        %2118 = vmatpush.bf16.msra.mxu0 %v2100
        %2119 = vmatmul.bf16.gmra.mxu0 %v2097
        %v2120 = vpop.f32.mrf.mxu0
        %v2121 = vadd.f32 0.0, %v2120
        %v2122 = vpop.f32.mrf.mxu0
        %2123 = vdwg.mxu0
        %2124 = vmatpush.bf16.msra.mxu0 0
        %2125 = vmatpush.bf16.msra.mxu0 0
        %2126 = vmatpush.bf16.msra.mxu0 0
        %2127 = vmatpush.bf16.msra.mxu0 0
        %2128 = vmatpush.bf16.msra.mxu0 0
        %2129 = vmatpush.bf16.msra.mxu0 0
        %2130 = vmatpush.bf16.msra.mxu0 0
        %2131 = vmatpush.bf16.msra.mxu0 %v2103
        %2132 = vmatmul.bf16.gmra.mxu0 %v2097
        %v2133 = vpop.f32.mrf.mxu0
        %v2134 = vadd.f32 0.0, %v2133
        %v2135 = vpop.f32.mrf.mxu0
        %2136 = vdwg.mxu0
        %2137 = vmatpush.bf16.msra.mxu0 0
        %2138 = vmatpush.bf16.msra.mxu0 0
        %2139 = vmatpush.bf16.msra.mxu0 0
        %2140 = vmatpush.bf16.msra.mxu0 0
        %2141 = vmatpush.bf16.msra.mxu0 0
        %2142 = vmatpush.bf16.msra.mxu0 0
        %2143 = vmatpush.bf16.msra.mxu0 0
        %2144 = vmatpush.bf16.msra.mxu0 %v2106
        %2145 = vmatmul.bf16.gmra.mxu0 %v2097
        %v2146 = vpop.f32.mrf.mxu0
        %v2147 = vadd.f32 0.0, %v2146
        %v2148 = vpop.f32.mrf.mxu0
        %2149 = vdwg.mxu0
        %2150 = vmatpush.bf16.msra.mxu0 0
        %2151 = vmatpush.bf16.msra.mxu0 0
        %2152 = vmatpush.bf16.msra.mxu0 0
        %2153 = vmatpush.bf16.msra.mxu0 0
        %2154 = vmatpush.bf16.msra.mxu0 0
        %2155 = vmatpush.bf16.msra.mxu0 0
        %2156 = vmatpush.bf16.msra.mxu0 0
        %2157 = vmatpush.bf16.msra.mxu0 %v2109
        %2158 = vmatmul.bf16.gmra.mxu0 %v2097
        %v2159 = vpop.f32.mrf.mxu0
        %v2160 = vadd.f32 0.0, %v2159
        %v2161 = vpop.f32.mrf.mxu0
        %2162 = vdwg.mxu0
        %v2163 = vadd.f32 %v2075, %v2121
        %v2164 = vadd.f32 %v2076, %v2134
        %v2165 = vadd.f32 %v2077, %v2147
        %v2166 = vadd.f32 %v2078, %v2160
        %s2167 = scalar_lea.vmem %s1, 88
        %v2168 = vld [vmem:[%s2167] sm:$0xf]
        %2169 = vrot.lane.b32.xlu0 %v1460, 28
        %v2170 = vpop.permute.xlu0 %2169
        %2171 = vrot.lane.b32.xlu0 %v1461, 28
        %v2172 = vpop.permute.xlu0 %2171
        %2173 = vrot.lane.b32.xlu0 %v1462, 28
        %v2174 = vpop.permute.xlu0 %2173
        %2175 = vrot.lane.b32.xlu0 %v1463, 28
        %v2176 = vpop.permute.xlu0 %2175
        %2177 = vrot.lane.b32.xlu0 %v1464, 28
        %v2178 = vpop.permute.xlu0 %2177
        %vm2179 = vcmask 228352
        %v2180 = vsel %vm2179, %v2170, %v2172
        %v2181 = vsel %vm2179, %v2172, %v2174
        %v2182 = vsel %vm2179, %v2174, %v2176
        %v2183 = vsel %vm2179, %v2176, %v2178
        %v2185 = vsel %vm221, %v2168, 0
        %v2188 = vand.u32 %v2180, %v228
        %v2191 = vand.u32 %v2181, %v228
        %v2194 = vand.u32 %v2182, %v228
        %v2197 = vand.u32 %v2183, %v228
        %2199 = vmatpush.bf16.msra.mxu0 0
        %2200 = vmatpush.bf16.msra.mxu0 0
        %2201 = vmatpush.bf16.msra.mxu0 0
        %2202 = vmatpush.bf16.msra.mxu0 0
        %2203 = vmatpush.bf16.msra.mxu0 0
        %2204 = vmatpush.bf16.msra.mxu0 0
        %2205 = vmatpush.bf16.msra.mxu0 0
        %2206 = vmatpush.bf16.msra.mxu0 %v2188
        %2207 = vmatmul.bf16.gmra.mxu0 %v2185
        %v2208 = vpop.f32.mrf.mxu0
        %v2209 = vadd.f32 0.0, %v2208
        %v2210 = vpop.f32.mrf.mxu0
        %2211 = vdwg.mxu0
        %2212 = vmatpush.bf16.msra.mxu0 0
        %2213 = vmatpush.bf16.msra.mxu0 0
        %2214 = vmatpush.bf16.msra.mxu0 0
        %2215 = vmatpush.bf16.msra.mxu0 0
        %2216 = vmatpush.bf16.msra.mxu0 0
        %2217 = vmatpush.bf16.msra.mxu0 0
        %2218 = vmatpush.bf16.msra.mxu0 0
        %2219 = vmatpush.bf16.msra.mxu0 %v2191
        %2220 = vmatmul.bf16.gmra.mxu0 %v2185
        %v2221 = vpop.f32.mrf.mxu0
        %v2222 = vadd.f32 0.0, %v2221
        %v2223 = vpop.f32.mrf.mxu0
        %2224 = vdwg.mxu0
        %2225 = vmatpush.bf16.msra.mxu0 0
        %2226 = vmatpush.bf16.msra.mxu0 0
        %2227 = vmatpush.bf16.msra.mxu0 0
        %2228 = vmatpush.bf16.msra.mxu0 0
        %2229 = vmatpush.bf16.msra.mxu0 0
        %2230 = vmatpush.bf16.msra.mxu0 0
        %2231 = vmatpush.bf16.msra.mxu0 0
        %2232 = vmatpush.bf16.msra.mxu0 %v2194
        %2233 = vmatmul.bf16.gmra.mxu0 %v2185
        %v2234 = vpop.f32.mrf.mxu0
        %v2235 = vadd.f32 0.0, %v2234
        %v2236 = vpop.f32.mrf.mxu0
        %2237 = vdwg.mxu0
        %2238 = vmatpush.bf16.msra.mxu0 0
        %2239 = vmatpush.bf16.msra.mxu0 0
        %2240 = vmatpush.bf16.msra.mxu0 0
        %2241 = vmatpush.bf16.msra.mxu0 0
        %2242 = vmatpush.bf16.msra.mxu0 0
        %2243 = vmatpush.bf16.msra.mxu0 0
        %2244 = vmatpush.bf16.msra.mxu0 0
        %2245 = vmatpush.bf16.msra.mxu0 %v2197
        %2246 = vmatmul.bf16.gmra.mxu0 %v2185
        %v2247 = vpop.f32.mrf.mxu0
        %v2248 = vadd.f32 0.0, %v2247
        %v2249 = vpop.f32.mrf.mxu0
        %2250 = vdwg.mxu0
        %v2251 = vadd.f32 %v2163, %v2209
        %v2252 = vadd.f32 %v2164, %v2222
        %v2253 = vadd.f32 %v2165, %v2235
        %v2254 = vadd.f32 %v2166, %v2248
        %s2255 = scalar_lea.vmem %s1, 92
        %v2256 = vld [vmem:[%s2255] sm:$0xf]
        %2257 = vrot.lane.b32.xlu0 %v1460, 27
        %v2258 = vpop.permute.xlu0 %2257
        %2259 = vrot.lane.b32.xlu0 %v1461, 27
        %v2260 = vpop.permute.xlu0 %2259
        %2261 = vrot.lane.b32.xlu0 %v1462, 27
        %v2262 = vpop.permute.xlu0 %2261
        %2263 = vrot.lane.b32.xlu0 %v1463, 27
        %v2264 = vpop.permute.xlu0 %2263
        %2265 = vrot.lane.b32.xlu0 %v1464, 27
        %v2266 = vpop.permute.xlu0 %2265
        %vm2267 = vcmask 220160
        %v2268 = vsel %vm2267, %v2258, %v2260
        %v2269 = vsel %vm2267, %v2260, %v2262
        %v2270 = vsel %vm2267, %v2262, %v2264
        %v2271 = vsel %vm2267, %v2264, %v2266
        %v2273 = vsel %vm221, %v2256, 0
        %v2276 = vand.u32 %v2268, %v228
        %v2279 = vand.u32 %v2269, %v228
        %v2282 = vand.u32 %v2270, %v228
        %v2285 = vand.u32 %v2271, %v228
        %2287 = vmatpush.bf16.msra.mxu0 0
        %2288 = vmatpush.bf16.msra.mxu0 0
        %2289 = vmatpush.bf16.msra.mxu0 0
        %2290 = vmatpush.bf16.msra.mxu0 0
        %2291 = vmatpush.bf16.msra.mxu0 0
        %2292 = vmatpush.bf16.msra.mxu0 0
        %2293 = vmatpush.bf16.msra.mxu0 0
        %2294 = vmatpush.bf16.msra.mxu0 %v2276
        %2295 = vmatmul.bf16.gmra.mxu0 %v2273
        %v2296 = vpop.f32.mrf.mxu0
        %v2297 = vadd.f32 0.0, %v2296
        %v2298 = vpop.f32.mrf.mxu0
        %2299 = vdwg.mxu0
        %2300 = vmatpush.bf16.msra.mxu0 0
        %2301 = vmatpush.bf16.msra.mxu0 0
        %2302 = vmatpush.bf16.msra.mxu0 0
        %2303 = vmatpush.bf16.msra.mxu0 0
        %2304 = vmatpush.bf16.msra.mxu0 0
        %2305 = vmatpush.bf16.msra.mxu0 0
        %2306 = vmatpush.bf16.msra.mxu0 0
        %2307 = vmatpush.bf16.msra.mxu0 %v2279
        %2308 = vmatmul.bf16.gmra.mxu0 %v2273
        %v2309 = vpop.f32.mrf.mxu0
        %v2310 = vadd.f32 0.0, %v2309
        %v2311 = vpop.f32.mrf.mxu0
        %2312 = vdwg.mxu0
        %2313 = vmatpush.bf16.msra.mxu0 0
        %2314 = vmatpush.bf16.msra.mxu0 0
        %2315 = vmatpush.bf16.msra.mxu0 0
        %2316 = vmatpush.bf16.msra.mxu0 0
        %2317 = vmatpush.bf16.msra.mxu0 0
        %2318 = vmatpush.bf16.msra.mxu0 0
        %2319 = vmatpush.bf16.msra.mxu0 0
        %2320 = vmatpush.bf16.msra.mxu0 %v2282
        %2321 = vmatmul.bf16.gmra.mxu0 %v2273
        %v2322 = vpop.f32.mrf.mxu0
        %v2323 = vadd.f32 0.0, %v2322
        %v2324 = vpop.f32.mrf.mxu0
        %2325 = vdwg.mxu0
        %2326 = vmatpush.bf16.msra.mxu0 0
        %2327 = vmatpush.bf16.msra.mxu0 0
        %2328 = vmatpush.bf16.msra.mxu0 0
        %2329 = vmatpush.bf16.msra.mxu0 0
        %2330 = vmatpush.bf16.msra.mxu0 0
        %2331 = vmatpush.bf16.msra.mxu0 0
        %2332 = vmatpush.bf16.msra.mxu0 0
        %2333 = vmatpush.bf16.msra.mxu0 %v2285
        %2334 = vmatmul.bf16.gmra.mxu0 %v2273
        %v2335 = vpop.f32.mrf.mxu0
        %v2336 = vadd.f32 0.0, %v2335
        %v2337 = vpop.f32.mrf.mxu0
        %2338 = vdwg.mxu0
        %v2339 = vadd.f32 %v2251, %v2297
        %v2340 = vadd.f32 %v2252, %v2310
        %v2341 = vadd.f32 %v2253, %v2323
        %v2342 = vadd.f32 %v2254, %v2336
        %s2343 = scalar_lea.vmem %s1, 96
        %v2344 = vld [vmem:[%s2343] sm:$0xf]
        %2345 = vrot.lane.b32.xlu0 %v1460, 19
        %v2346 = vpop.permute.xlu0 %2345
        %2347 = vrot.lane.b32.xlu0 %v1461, 19
        %v2348 = vpop.permute.xlu0 %2347
        %2349 = vrot.lane.b32.xlu0 %v1462, 19
        %v2350 = vpop.permute.xlu0 %2349
        %2351 = vrot.lane.b32.xlu0 %v1463, 19
        %v2352 = vpop.permute.xlu0 %2351
        %2353 = vrot.lane.b32.xlu0 %v1464, 19
        %v2354 = vpop.permute.xlu0 %2353
        %vm2355 = vcmask 154624
        %v2356 = vsel %vm2355, %v2346, %v2348
        %v2357 = vsel %vm2355, %v2348, %v2350
        %v2358 = vsel %vm2355, %v2350, %v2352
        %v2359 = vsel %vm2355, %v2352, %v2354
        %v2361 = vsel %vm221, %v2344, 0
        %v2364 = vand.u32 %v2356, %v228
        %v2367 = vand.u32 %v2357, %v228
        %v2370 = vand.u32 %v2358, %v228
        %v2373 = vand.u32 %v2359, %v228
        %2375 = vmatpush.bf16.msra.mxu0 0
        %2376 = vmatpush.bf16.msra.mxu0 0
        %2377 = vmatpush.bf16.msra.mxu0 0
        %2378 = vmatpush.bf16.msra.mxu0 0
        %2379 = vmatpush.bf16.msra.mxu0 0
        %2380 = vmatpush.bf16.msra.mxu0 0
        %2381 = vmatpush.bf16.msra.mxu0 0
        %2382 = vmatpush.bf16.msra.mxu0 %v2364
        %2383 = vmatmul.bf16.gmra.mxu0 %v2361
        %v2384 = vpop.f32.mrf.mxu0
        %v2385 = vadd.f32 0.0, %v2384
        %v2386 = vpop.f32.mrf.mxu0
        %2387 = vdwg.mxu0
        %2388 = vmatpush.bf16.msra.mxu0 0
        %2389 = vmatpush.bf16.msra.mxu0 0
        %2390 = vmatpush.bf16.msra.mxu0 0
        %2391 = vmatpush.bf16.msra.mxu0 0
        %2392 = vmatpush.bf16.msra.mxu0 0
        %2393 = vmatpush.bf16.msra.mxu0 0
        %2394 = vmatpush.bf16.msra.mxu0 0
        %2395 = vmatpush.bf16.msra.mxu0 %v2367
        %2396 = vmatmul.bf16.gmra.mxu0 %v2361
        %v2397 = vpop.f32.mrf.mxu0
        %v2398 = vadd.f32 0.0, %v2397
        %v2399 = vpop.f32.mrf.mxu0
        %2400 = vdwg.mxu0
        %2401 = vmatpush.bf16.msra.mxu0 0
        %2402 = vmatpush.bf16.msra.mxu0 0
        %2403 = vmatpush.bf16.msra.mxu0 0
        %2404 = vmatpush.bf16.msra.mxu0 0
        %2405 = vmatpush.bf16.msra.mxu0 0
        %2406 = vmatpush.bf16.msra.mxu0 0
        %2407 = vmatpush.bf16.msra.mxu0 0
        %2408 = vmatpush.bf16.msra.mxu0 %v2370
        %2409 = vmatmul.bf16.gmra.mxu0 %v2361
        %v2410 = vpop.f32.mrf.mxu0
        %v2411 = vadd.f32 0.0, %v2410
        %v2412 = vpop.f32.mrf.mxu0
        %2413 = vdwg.mxu0
        %2414 = vmatpush.bf16.msra.mxu0 0
        %2415 = vmatpush.bf16.msra.mxu0 0
        %2416 = vmatpush.bf16.msra.mxu0 0
        %2417 = vmatpush.bf16.msra.mxu0 0
        %2418 = vmatpush.bf16.msra.mxu0 0
        %2419 = vmatpush.bf16.msra.mxu0 0
        %2420 = vmatpush.bf16.msra.mxu0 0
        %2421 = vmatpush.bf16.msra.mxu0 %v2373
        %2422 = vmatmul.bf16.gmra.mxu0 %v2361
        %v2423 = vpop.f32.mrf.mxu0
        %v2424 = vadd.f32 0.0, %v2423
        %v2425 = vpop.f32.mrf.mxu0
        %2426 = vdwg.mxu0
        %v2427 = vadd.f32 %v2339, %v2385
        %v2428 = vadd.f32 %v2340, %v2398
        %v2429 = vadd.f32 %v2341, %v2411
        %v2430 = vadd.f32 %v2342, %v2424
        %s2431 = scalar_lea.vmem %s1, 100
        %v2432 = vld [vmem:[%s2431] sm:$0xf]
        %2433 = vrot.lane.b32.xlu0 %v1460, 18
        %v2434 = vpop.permute.xlu0 %2433
        %2435 = vrot.lane.b32.xlu0 %v1461, 18
        %v2436 = vpop.permute.xlu0 %2435
        %2437 = vrot.lane.b32.xlu0 %v1462, 18
        %v2438 = vpop.permute.xlu0 %2437
        %2439 = vrot.lane.b32.xlu0 %v1463, 18
        %v2440 = vpop.permute.xlu0 %2439
        %2441 = vrot.lane.b32.xlu0 %v1464, 18
        %v2442 = vpop.permute.xlu0 %2441
        %vm2443 = vcmask 146432
        %v2444 = vsel %vm2443, %v2434, %v2436
        %v2445 = vsel %vm2443, %v2436, %v2438
        %v2446 = vsel %vm2443, %v2438, %v2440
        %v2447 = vsel %vm2443, %v2440, %v2442
        %v2449 = vsel %vm221, %v2432, 0
        %v2452 = vand.u32 %v2444, %v228
        %v2455 = vand.u32 %v2445, %v228
        %v2458 = vand.u32 %v2446, %v228
        %v2461 = vand.u32 %v2447, %v228
        %2463 = vmatpush.bf16.msra.mxu0 0
        %2464 = vmatpush.bf16.msra.mxu0 0
        %2465 = vmatpush.bf16.msra.mxu0 0
        %2466 = vmatpush.bf16.msra.mxu0 0
        %2467 = vmatpush.bf16.msra.mxu0 0
        %2468 = vmatpush.bf16.msra.mxu0 0
        %2469 = vmatpush.bf16.msra.mxu0 0
        %2470 = vmatpush.bf16.msra.mxu0 %v2452
        %2471 = vmatmul.bf16.gmra.mxu0 %v2449
        %v2472 = vpop.f32.mrf.mxu0
        %v2473 = vadd.f32 0.0, %v2472
        %v2474 = vpop.f32.mrf.mxu0
        %2475 = vdwg.mxu0
        %2476 = vmatpush.bf16.msra.mxu0 0
        %2477 = vmatpush.bf16.msra.mxu0 0
        %2478 = vmatpush.bf16.msra.mxu0 0
        %2479 = vmatpush.bf16.msra.mxu0 0
        %2480 = vmatpush.bf16.msra.mxu0 0
        %2481 = vmatpush.bf16.msra.mxu0 0
        %2482 = vmatpush.bf16.msra.mxu0 0
        %2483 = vmatpush.bf16.msra.mxu0 %v2455
        %2484 = vmatmul.bf16.gmra.mxu0 %v2449
        %v2485 = vpop.f32.mrf.mxu0
        %v2486 = vadd.f32 0.0, %v2485
        %v2487 = vpop.f32.mrf.mxu0
        %2488 = vdwg.mxu0
        %2489 = vmatpush.bf16.msra.mxu0 0
        %2490 = vmatpush.bf16.msra.mxu0 0
        %2491 = vmatpush.bf16.msra.mxu0 0
        %2492 = vmatpush.bf16.msra.mxu0 0
        %2493 = vmatpush.bf16.msra.mxu0 0
        %2494 = vmatpush.bf16.msra.mxu0 0
        %2495 = vmatpush.bf16.msra.mxu0 0
        %2496 = vmatpush.bf16.msra.mxu0 %v2458
        %2497 = vmatmul.bf16.gmra.mxu0 %v2449
        %v2498 = vpop.f32.mrf.mxu0
        %v2499 = vadd.f32 0.0, %v2498
        %v2500 = vpop.f32.mrf.mxu0
        %2501 = vdwg.mxu0
        %2502 = vmatpush.bf16.msra.mxu0 0
        %2503 = vmatpush.bf16.msra.mxu0 0
        %2504 = vmatpush.bf16.msra.mxu0 0
        %2505 = vmatpush.bf16.msra.mxu0 0
        %2506 = vmatpush.bf16.msra.mxu0 0
        %2507 = vmatpush.bf16.msra.mxu0 0
        %2508 = vmatpush.bf16.msra.mxu0 0
        %2509 = vmatpush.bf16.msra.mxu0 %v2461
        %2510 = vmatmul.bf16.gmra.mxu0 %v2449
        %v2511 = vpop.f32.mrf.mxu0
        %v2512 = vadd.f32 0.0, %v2511
        %v2513 = vpop.f32.mrf.mxu0
        %2514 = vdwg.mxu0
        %v2515 = vadd.f32 %v2427, %v2473
        %v2516 = vadd.f32 %v2428, %v2486
        %v2517 = vadd.f32 %v2429, %v2499
        %v2518 = vadd.f32 %v2430, %v2512
        %s2519 = scalar_lea.vmem %s1, 104
        %v2520 = vld [vmem:[%s2519] sm:$0xf]
        %2521 = vrot.lane.b32.xlu0 %v1460, 17
        %v2522 = vpop.permute.xlu0 %2521
        %2523 = vrot.lane.b32.xlu0 %v1461, 17
        %v2524 = vpop.permute.xlu0 %2523
        %2525 = vrot.lane.b32.xlu0 %v1462, 17
        %v2526 = vpop.permute.xlu0 %2525
        %2527 = vrot.lane.b32.xlu0 %v1463, 17
        %v2528 = vpop.permute.xlu0 %2527
        %2529 = vrot.lane.b32.xlu0 %v1464, 17
        %v2530 = vpop.permute.xlu0 %2529
        %vm2531 = vcmask 138240
        %v2532 = vsel %vm2531, %v2522, %v2524
        %v2533 = vsel %vm2531, %v2524, %v2526
        %v2534 = vsel %vm2531, %v2526, %v2528
        %v2535 = vsel %vm2531, %v2528, %v2530
        %v2537 = vsel %vm221, %v2520, 0
        %v2540 = vand.u32 %v2532, %v228
        %v2543 = vand.u32 %v2533, %v228
        %v2546 = vand.u32 %v2534, %v228
        %v2549 = vand.u32 %v2535, %v228
        %2551 = vmatpush.bf16.msra.mxu0 0
        %2552 = vmatpush.bf16.msra.mxu0 0
        %2553 = vmatpush.bf16.msra.mxu0 0
        %2554 = vmatpush.bf16.msra.mxu0 0
        %2555 = vmatpush.bf16.msra.mxu0 0
        %2556 = vmatpush.bf16.msra.mxu0 0
        %2557 = vmatpush.bf16.msra.mxu0 0
        %2558 = vmatpush.bf16.msra.mxu0 %v2540
        %2559 = vmatmul.bf16.gmra.mxu0 %v2537
        %v2560 = vpop.f32.mrf.mxu0
        %v2561 = vadd.f32 0.0, %v2560
        %v2562 = vpop.f32.mrf.mxu0
        %2563 = vdwg.mxu0
        %2564 = vmatpush.bf16.msra.mxu0 0
        %2565 = vmatpush.bf16.msra.mxu0 0
        %2566 = vmatpush.bf16.msra.mxu0 0
        %2567 = vmatpush.bf16.msra.mxu0 0
        %2568 = vmatpush.bf16.msra.mxu0 0
        %2569 = vmatpush.bf16.msra.mxu0 0
        %2570 = vmatpush.bf16.msra.mxu0 0
        %2571 = vmatpush.bf16.msra.mxu0 %v2543
        %2572 = vmatmul.bf16.gmra.mxu0 %v2537
        %v2573 = vpop.f32.mrf.mxu0
        %v2574 = vadd.f32 0.0, %v2573
        %v2575 = vpop.f32.mrf.mxu0
        %2576 = vdwg.mxu0
        %2577 = vmatpush.bf16.msra.mxu0 0
        %2578 = vmatpush.bf16.msra.mxu0 0
        %2579 = vmatpush.bf16.msra.mxu0 0
        %2580 = vmatpush.bf16.msra.mxu0 0
        %2581 = vmatpush.bf16.msra.mxu0 0
        %2582 = vmatpush.bf16.msra.mxu0 0
        %2583 = vmatpush.bf16.msra.mxu0 0
        %2584 = vmatpush.bf16.msra.mxu0 %v2546
        %2585 = vmatmul.bf16.gmra.mxu0 %v2537
        %v2586 = vpop.f32.mrf.mxu0
        %v2587 = vadd.f32 0.0, %v2586
        %v2588 = vpop.f32.mrf.mxu0
        %2589 = vdwg.mxu0
        %2590 = vmatpush.bf16.msra.mxu0 0
        %2591 = vmatpush.bf16.msra.mxu0 0
        %2592 = vmatpush.bf16.msra.mxu0 0
        %2593 = vmatpush.bf16.msra.mxu0 0
        %2594 = vmatpush.bf16.msra.mxu0 0
        %2595 = vmatpush.bf16.msra.mxu0 0
        %2596 = vmatpush.bf16.msra.mxu0 0
        %2597 = vmatpush.bf16.msra.mxu0 %v2549
        %2598 = vmatmul.bf16.gmra.mxu0 %v2537
        %v2599 = vpop.f32.mrf.mxu0
        %v2600 = vadd.f32 0.0, %v2599
        %v2601 = vpop.f32.mrf.mxu0
        %2602 = vdwg.mxu0
        %v2603 = vadd.f32 %v2515, %v2561
        %v2604 = vadd.f32 %v2516, %v2574
        %v2605 = vadd.f32 %v2517, %v2587
        %v2606 = vadd.f32 %v2518, %v2600
        %vm2607 = vcmp.ge.f32.partialorder %v2603, 0.0
        %vm2608 = vcmp.ge.f32.partialorder %v2604, 0.0
        %vm2609 = vcmp.ge.f32.partialorder %v2605, 0.0
        %vm2610 = vcmp.ge.f32.partialorder %v2606, 0.0
        %v2611 = vmul.f32 %v2603, 0.01
        %v2612 = vmul.f32 %v2604, 0.01
        %v2613 = vmul.f32 %v2605, 0.01
        %v2614 = vmul.f32 %v2606, 0.01
        %v2615 = vsel %vm2607, %v2603, %v2611
        %v2616 = vsel %vm2608, %v2604, %v2612
        %v2617 = vsel %vm2609, %v2605, %v2613
        %v2618 = vsel %vm2610, %v2606, %v2614
        %v2619 = vunpack.c.l.bf16 %v1345
        %v2620 = vunpack.c.h.bf16 %v1345
        %v2621 = vunpack.c.l.bf16 %v1346
        %v2622 = vunpack.c.h.bf16 %v1346
        %vm2623 = vcmp.gt.f32.partialorder %v2619, 0.0
        %vm2624 = vcmp.gt.f32.partialorder %v2620, 0.0
        %vm2625 = vcmp.gt.f32.partialorder %v2621, 0.0
        %vm2626 = vcmp.gt.f32.partialorder %v2622, 0.0
        %v2627 = vsel %vm2623, 1, 0
        %v2628 = vsel %vm2624, 1, 0
        %v2629 = vsel %vm2625, 1, 0
        %v2630 = vsel %vm2626, 1, 0
        %v2631 = vperm.slane %v2627, 0
        %v2632 = vperm.slane %v2628, 0
        %v2633 = vperm.slane %v2629, 0
        %v2634 = vperm.slane %v2630, 0
        %vm2635 = vcmp.eq.s32.totalorder %v2631, 1
        %vm2636 = vcmp.eq.s32.totalorder %v2632, 1
        %vm2637 = vcmp.eq.s32.totalorder %v2633, 1
        %vm2638 = vcmp.eq.s32.totalorder %v2634, 1
        %v2639 = vsel %vm2635, %v2615, 0.0
        %v2640 = vsel %vm2636, %v2616, 0.0
        %v2641 = vsel %vm2637, %v2617, 0.0
        %v2642 = vsel %vm2638, %v2618, 0.0
        %v2643 = vsel %vm2623, 1.0, 0.0
        %v2644 = vsel %vm2624, 1.0, 0.0
        %v2645 = vsel %vm2625, 1.0, 0.0
        %v2646 = vsel %vm2626, 1.0, 0.0
        %v2647 = vpack.c.bf16 %v2640, %v2639
        %v2648 = vpack.c.bf16 %v2642, %v2641
        %v2649 = vpack.c.bf16 %v2644, %v2643
        %v2650 = vpack.c.bf16 %v2646, %v2645
        %2651 = vst [vmem:[%s121] sm:$0xff] %v2647
        %2652 = vst [vmem:[%s121 + $0x8] sm:$0xff] %v2648
        %vm2653 = vcmask 1040384
        %vm2654 = vsmask.f32 256
        %vm2655 = vmand %vm2653, %vm2654
        %vm2656 = vcmask 1044484
        %vm2657 = vsmask.f32 4352
        %vm2658 = vmand %vm2656, %vm2657
        %vm2659 = vmor %vm2658, %vm2655
        %v2660 = vld [vmem:[%s121 + $0x10] sm:$0x11]
        %v2661 = vsel %vm2659, %v2649, %v2660
        %2662 = vst [vmem:[%s121 + $0x10] sm:$0x11] %v2661
        %v2663 = vld [vmem:[%s121 + $0x18] sm:$0x11]
        %v2664 = vsel %vm2659, %v2650, %v2663
        %2665 = vst [vmem:[%s121 + $0x18] sm:$0x11] %v2664
        %v2666 = vadd.f32 %v2639, %v2640
        %v2667 = vadd.f32 %v2666, %v2641
        %v2668 = vadd.f32 %v2667, %v2642
        %2669 = vadd.xlane.f32.xlu0 %v2668
        %v2670 = vpop.xlane.xlu0 %2669
        %v2671 = vmul.f32 %v2639, %v2639
        %v2672 = vmul.f32 %v2640, %v2640
        %v2673 = vmul.f32 %v2641, %v2641
        %v2674 = vmul.f32 %v2642, %v2642
        %v2675 = vadd.f32 %v2671, %v2672
        %v2676 = vadd.f32 %v2675, %v2673
        %v2677 = vadd.f32 %v2676, %v2674
        %2678 = vadd.xlane.f32.xlu0 %v2677
        %v2679 = vpop.xlane.xlu0 %2678
        %2681 = vset.pattern.permute.xlu0 0
        %2682 = vperm.xlu0 %2681, %v2670
        %v2683 = vpop.permute.xlu0 %2682
        %2686 = vset.pattern.permute.xlu0 0
        %2687 = vperm.xlu0 %2686, %v2679
        %v2688 = vpop.permute.xlu0 %2687
        %2690 = vst [vmem:[%s135] sm:$0xff] %v2683
        %2691 = vst [vmem:[%s135 + $0x8] sm:$0xff] %v2688
        %s2692 = sand.u32 %s46, 1
        %s2693 = sand.u32 %s46, 1
        %s2694 = smul.addr %s2693, 32
        %s2695 = scalar_lea.vmem [#allocation4], %s2694
        %p2696 = scmp.lt.s32.totalorder %s15, 3
        %s2697 = scalar_select %p2696, %s15, 3
        %s2698 = smul.addr %s2697, 2
        %s2699 = smul.addr %s2698, 8
        %s2700 = scalar_lea.vmem %s3, %s2699
        // Predicated region
        $region44: #{upblock_forward.5} parent=23 // pred_check
          %p2701 = pneg %p56
        $region45: #{upblock_forward.5} parent=23 // pred_check_branch
          %2703 = sbr.rel (%p2701) target = $region47
        $region46: #{upblock_forward.5} parent=23 // pred_region
          %s2704 = sadd.s32 %s15, 1
          %s2705 = smul.u32 4, %s2704
          %s2706 = smul.addr %s2705, 4
          %s2707 = scalar_lea.vmem %s2, %s2706
          // Predicated region
          $region48: #{upblock_forward.5} parent=46 // pred_check
            _
          $region49: #{upblock_forward.5} parent=46 // pred_check_branch
            %2709 = sbr.rel (0) target = $region51
          $region50: #{upblock_forward.5} parent=46 // pred_region
            // Predicated region
            $region52: #{upblock_forward.5} parent=50 // pred_check
              _
            $region53: #{upblock_forward.5} parent=50 // pred_check_branch
              %2711 = sbr.rel (0) target = $region55
            $region54: #{upblock_forward.5} parent=50 // pred_region
              loop: start=0, step=1, limit=1
              $region56: #{upblock_forward.5} parent=54 // loop_pre_header
                _
              $region57: #{upblock_forward.5} parent=54 // loop_header
                %s2713 = sphi 0, %s2717
                %p2714 = scmp.ge.s32.totalorder %s2713, 1
                %s2718 = sphi %s2695, %s2695
                %s2719 = sphi %s2707, %s2707
              $region58: #{upblock_forward.5} parent=54 // loop_header_branch
                %2716 = sbr.rel (%p2714) target = $region62
              $region59: #{upblock_forward.5} parent=54 // loop_body
                %v2720 = vld [vmem:[%s2718] sm:$0xff]
                %2721 = vst [vmem:[%s2719] sm:$0xff] %v2720
                %v2722 = vld [vmem:[%s2718 + $0x8] sm:$0xff]
                %2723 = vst [vmem:[%s2719 + $0x8] sm:$0xff] %v2722
                %v2724 = vld [vmem:[%s2718 + $0x10] sm:$0xff]
                %2725 = vst [vmem:[%s2719 + $0x60] sm:$0xff] %v2724
                %v2726 = vld [vmem:[%s2718 + $0x18] sm:$0xff]
                %2727 = vst [vmem:[%s2719 + $0x68] sm:$0xff] %v2726
              $region60: #{upblock_forward.5} parent=54 // loop_footer
                %s2717 = sadd.s32 1, %s2713
              $region61: #{upblock_forward.5} parent=54 // loop_footer_branch
                %2712 = sbr.rel target = $region57
              $region62: #{upblock_forward.5} parent=54 // loop_exit
                _
            $region55: #{upblock_forward.5} parent=50 // pred_fallthru
              _
            // Predicated region
            $region63: #{upblock_forward.5} parent=50 // pred_check
              _
            $region64: #{upblock_forward.5} parent=50 // pred_check_branch
              %2729 = sbr.rel target = $region66
            $region65: #{upblock_forward.5} parent=50 // pred_region
              _
            $region66: #{upblock_forward.5} parent=50 // pred_fallthru
              _
          $region51: #{upblock_forward.5} parent=46 // pred_fallthru
            _
          %2730 = vnop
        $region47: #{upblock_forward.5} parent=23 // pred_fallthru
          _
        // Predicated region
        $region67: #{upblock_forward.5} parent=23 // pred_check
          %p2731 = pneg %p82
        $region68: #{upblock_forward.5} parent=23 // pred_check_branch
          %2733 = sbr.rel (%p2731) target = $region70
        $region69: #{upblock_forward.5} parent=23 // pred_region
          _
        $region70: #{upblock_forward.5} parent=23 // pred_fallthru
          _
      $region24: #{upblock_forward.5} parent=5 // pred_fallthru
        _
      %p2734 = scmp.le.s32.totalorder 2, %s10
      // Predicated region
      $region71: #{upblock_forward.5} parent=5 // pred_check
        %p2735 = pneg %p2734
      $region72: #{upblock_forward.5} parent=5 // pred_check_branch
        %2737 = sbr.rel (%p2735) target = $region74
      $region73: #{upblock_forward.5} parent=5 // pred_region
        %s2738 = ssub.s32 %s10, 2
        // Predicated region
        $region75: #{upblock_forward.5} parent=73 // pred_check
          %p2739 = pneg %p62
        $region76: #{upblock_forward.5} parent=73 // pred_check_branch
          %2741 = sbr.rel (%p2739) target = $region78
        $region77: #{upblock_forward.5} parent=73 // pred_region
          %s2742 = sand.u32 %s47, 1
          %s2743 = sand.u32 %s47, 1
          %s2744 = smul.addr %s2743, 32
          %s2745 = scalar_lea.vmem [#allocation4], %s2744
        $region78: #{upblock_forward.5} parent=73 // pred_fallthru
          _
        // Predicated region
        $region79: #{upblock_forward.5} parent=73 // pred_check
          %p2746 = pneg %p88
        $region80: #{upblock_forward.5} parent=73 // pred_check_branch
          %2748 = sbr.rel (%p2746) target = $region82
        $region81: #{upblock_forward.5} parent=73 // pred_region
          %p2749 = scmp.lt.s32.totalorder %s16, 3
          %s2750 = scalar_select %p2749, %s16, 3
          %s2751 = smul.addr %s2750, 2
          %s2752 = smul.addr %s2751, 8
          %s2753 = scalar_lea.vmem %s3, %s2752
        $region82: #{upblock_forward.5} parent=73 // pred_fallthru
          _
      $region74: #{upblock_forward.5} parent=5 // pred_fallthru
        _
    $region6: #{upblock_forward.5} parent=1 // loop_footer
      %s14 = sadd.s32 1, %s10
    $region7: #{upblock_forward.5} parent=1 // loop_footer_branch
      %9 = sbr.rel target = $region3
    $region8: #{upblock_forward.5} parent=1 // loop_exit
      _
  %2754 = vsyncmov [#allocation3]
  %s2755 = vpop.sfrf %2754
  %p2756 = scmp.eq.s32.totalorder %s2755, 0
  %p2757 = pneg %p2756
  %2759 = shalt.err (%p2757)

// kernel: upblock_forward.7
$region0: #{upblock_forward.7}
  #allocation0 [shape = 'u32[]', space=smem, size = 0x4, offset = 0x4, fixed_abs, tag = 'smem constant byte address 0x4 - core index']
  #allocation1 [shape = 'u32[72,128]{1,0:T(1,128)}', space=vmem, size = 0x9000, scoped, tag = 'internal scratch']
  #allocation2 [shape = 'bf16[9,768]{1,0:T(8,128)(2,1)}', space=vmem, size = 0x6000, scoped, tag = 'scratch operand']
  #allocation3 [shape = 's32[1]{0}', space=sflag, size = 0x4, scoped, tag = 'scratch operand']
  #allocation5 [shape = 's32[]', space=sflag, size = 0x4, offset = 0, fixed_abs, tag = 'sflag constant byte address 0x0 - dummy sync flag']
  %s0 = inlined_call_operand.vmem [shape: bf16[9,3072], index: 0, kind: input, shape index: {}]
  %s1 = inlined_call_operand.vmem [shape: bf16[9,8,9], index: 1, kind: input, shape index: {}]
  %s2 = inlined_call_operand.vmem [shape: bf16[9,3072], index: 2, kind: output, shape index: {0}]
  %s3 = inlined_call_operand.vmem [shape: f32[4,16,128], index: 3, kind: output, shape index: {1}]
  %4 = xla_tuple %s2, %s3
  %s5 = sld [smem:[#allocation0]]
  $region83: #{upblock_forward.7} parent=0
    _
  %s7 = ssub.s32 1, %s5
  %s8 = scalar_select 0, %s7, %s5
  $region1: #{upblock_forward.7} parent=0
    #allocation4 [shape = 'u8[32768]{0}', space=vmem, size = 0x8000, scoped, tag = 'output window, operand 0']
    loop: start=0, step=1, limit=6
    $region2: #{upblock_forward.7} parent=1 // loop_pre_header
      _
    $region3: #{upblock_forward.7} parent=1 // loop_header
      %s10 = sphi 0, %s14
      %p11 = scmp.ge.s32.totalorder %s10, 6
      %s18 = sphi 0, %s18
      %s20 = sphi 0, %s18
      %s21 = sphi 0, %s20
      %s35 = sphi 0, %s21
      %s43 = sphi 0, %s45
      %s46 = sphi 0, %s43
      %s47 = sphi 0, %s46
      %s63 = sphi 0, %s47
      %s69 = sphi 0, %s71
      %s72 = sphi 0, %s69
      %s73 = sphi 0, %s72
      %s89 = sphi 0, %s73
    $region4: #{upblock_forward.7} parent=1 // loop_header_branch
      %13 = sbr.rel (%p11) target = $region8
    $region5: #{upblock_forward.7} parent=1 // loop_body
      %s15 = ssub.s32 %s10, 1
      %s16 = ssub.s32 %s10, 2
      %s17 = sadd.s32 %s10, 1
      %s19 = sadd.s32 %s18, 1
      %p22 = scmp.eq.s32.totalorder %s10, 3
      %p23 = scmp.ne.s32.totalorder %s18, %s20
      %p24 = scmp.eq.s32.totalorder %s10, 0
      %p25 = por %p23, %p24
      %p26 = scmp.ne.s32.totalorder %s18, %s20
      %p27 = scmp.eq.s32.totalorder %s15, 3
      %p28 = por %p26, %p27
      %p29 = scmp.ne.s32.totalorder %s20, %s21
      %p30 = scmp.eq.s32.totalorder %s15, 0
      %p31 = por %p29, %p30
      %p32 = scmp.ne.s32.totalorder %s20, %s21
      %p33 = scmp.eq.s32.totalorder %s16, 3
      %p34 = por %p32, %p33
      %p36 = scmp.ne.s32.totalorder %s21, %s35
      %p37 = scmp.eq.s32.totalorder %s16, 0
      %p38 = por %p36, %p37
      %s39 = sadd.s32 %s10, 1
      %s40 = sadd.s32 %s17, 1
      %s41 = ssub.s32 %s39, %s40
      %p42 = scmp.eq.s32.totalorder %s41, 0
      %s44 = sadd.s32 %s43, 1
      %s45 = scalar_select %p42, %s43, %s44
      %p48 = pneg %p42
      %p49 = scmp.eq.s32.totalorder %s10, 3
      %p50 = por %p48, %p49
      %p51 = scmp.ne.s32.totalorder %s43, %s46
      %p52 = scmp.eq.s32.totalorder %s10, 0
      %p53 = por %p51, %p52
      %p54 = scmp.ne.s32.totalorder %s43, %s46
      %p55 = scmp.eq.s32.totalorder %s15, 3
      %p56 = por %p54, %p55
      %p57 = scmp.ne.s32.totalorder %s46, %s47
      %p58 = scmp.eq.s32.totalorder %s15, 0
      %p59 = por %p57, %p58
      %p60 = scmp.ne.s32.totalorder %s46, %s47
      %p61 = scmp.eq.s32.totalorder %s16, 3
      %p62 = por %p60, %p61
      %p64 = scmp.ne.s32.totalorder %s47, %s63
      %p65 = scmp.eq.s32.totalorder %s16, 0
      %p66 = por %p64, %p65
      %s67 = ssub.s32 %s10, %s17
      %p68 = scmp.eq.s32.totalorder %s67, 0
      %s70 = sadd.s32 %s69, 1
      %s71 = scalar_select %p68, %s69, %s70
      %p74 = pneg %p68
      %p75 = scmp.eq.s32.totalorder %s10, 3
      %p76 = por %p74, %p75
      %p77 = scmp.ne.s32.totalorder %s69, %s72
      %p78 = scmp.eq.s32.totalorder %s10, 0
      %p79 = por %p77, %p78
      %p80 = scmp.ne.s32.totalorder %s69, %s72
      %p81 = scmp.eq.s32.totalorder %s15, 3
      %p82 = por %p80, %p81
      %p83 = scmp.ne.s32.totalorder %s72, %s73
      %p84 = scmp.eq.s32.totalorder %s15, 0
      %p85 = por %p83, %p84
      %p86 = scmp.ne.s32.totalorder %s72, %s73
      %p87 = scmp.eq.s32.totalorder %s16, 3
      %p88 = por %p86, %p87
      %p90 = scmp.ne.s32.totalorder %s73, %s89
      %p91 = scmp.eq.s32.totalorder %s16, 0
      %p92 = por %p90, %p91
      %p93 = scmp.le.s32.totalorder 1, %s10
      %p94 = scmp.lt.s32.totalorder %s10, 5
      %p95 = pnand %p93, %p94
      %p96 = pneg %p95
      // Predicated region
      $region9: #{upblock_forward.7} parent=5 // pred_check
        _
      $region10: #{upblock_forward.7} parent=5 // pred_check_branch
        %98 = sbr.rel (%p95) target = $region12
      $region11: #{upblock_forward.7} parent=5 // pred_region
        %s99 = ssub.s32 %s10, 1
        // Predicated region
        $region13: #{upblock_forward.7} parent=11 // pred_check
          %p100 = pneg %p31
        $region14: #{upblock_forward.7} parent=11 // pred_check_branch
          %102 = sbr.rel (%p100) target = $region16
        $region15: #{upblock_forward.7} parent=11 // pred_region
          _
        $region16: #{upblock_forward.7} parent=11 // pred_fallthru
          _
      $region12: #{upblock_forward.7} parent=5 // pred_fallthru
        _
      %p103 = scmp.lt.s32.totalorder %s10, 4
      // Predicated region
      $region17: #{upblock_forward.7} parent=5 // pred_check
        %p104 = pneg %p103
      $region18: #{upblock_forward.7} parent=5 // pred_check_branch
        %106 = sbr.rel (%p104) target = $region20
      $region19: #{upblock_forward.7} parent=5 // pred_region
        _
      $region20: #{upblock_forward.7} parent=5 // pred_fallthru
        _
      %p107 = scmp.le.s32.totalorder 1, %s10
      %p108 = scmp.lt.s32.totalorder %s10, 5
      %p109 = pnand %p107, %p108
      %p110 = pneg %p109
      // Predicated region
      $region21: #{upblock_forward.7} parent=5 // pred_check
        _
      $region22: #{upblock_forward.7} parent=5 // pred_check_branch
        %112 = sbr.rel (%p109) target = $region24
      $region23: #{upblock_forward.7} parent=5 // pred_region
        %s113 = ssub.s32 %s10, 1
        %p114 = pneg %p31
        %p115 = pneg %p28
        %p116 = pneg %p59
        %p117 = pneg %p56
        %s118 = sand.u32 %s46, 1
        %s119 = sand.u32 %s46, 1
        %s120 = smul.addr %s119, 32
        %s121 = scalar_lea.vmem [#allocation4], %s120
        %p122 = pneg %p85
        %p123 = pneg %p82
        %p124 = scmp.lt.s32.totalorder %s15, 3
        %s125 = scalar_select %p124, %s15, 3
        %s126 = smul.addr %s125, 2
        %s127 = smul.addr %s126, 8
        %s128 = scalar_lea.vmem %s3, %s127
        %s129 = sadd.s32 %s15, 1
        %s130 = smul.u32 4, %s129
        %p131 = scmp.lt.s32.totalorder %s15, 3
        %s132 = scalar_select %p131, %s15, 3
        %s133 = smul.addr %s132, 2
        %s134 = smul.addr %s133, 8
        %s135 = scalar_lea.vmem %s3, %s134
        %s137 = sadd.s32 %s15, 1
        %s138 = smul.u32 %s137, 512
        %s139 = ssub.s32 %s138, 128
        %s140 = sshra.s32 %s139, 7
        %s141 = sand.u32 %s139, 127
        %s142 = smul.addr %s140, 4
        %s143 = scalar_lea.vmem %s0, %s142
        // Predicated region
        $region25: #{upblock_forward.7} parent=23 // pred_check
          _
        $region26: #{upblock_forward.7} parent=23 // pred_check_branch
          %145 = sbr.rel (0) target = $region28
        $region27: #{upblock_forward.7} parent=23 // pred_region
          loop: start=0, step=1, limit=1
          $region29: #{upblock_forward.7} parent=27 // loop_pre_header
            _
          $region30: #{upblock_forward.7} parent=27 // loop_header
            %s147 = sphi 0, %s151
            %p148 = scmp.ge.s32.totalorder %s147, 1
            %s152 = sphi %s143, %s143
            %s153 = sphi [#allocation2], [#allocation2]
          $region31: #{upblock_forward.7} parent=27 // loop_header_branch
            %150 = sbr.rel (%p148) target = $region35
          $region32: #{upblock_forward.7} parent=27 // loop_body
            %v154 = vld [vmem:[%s152] sm:$0xff]
            %155 = vst [vmem:[%s153] sm:$0xff] %v154
            %v156 = vld [vmem:[%s152 + $0x8] sm:$0xff]
            %157 = vst [vmem:[%s153 + $0x8] sm:$0xff] %v156
            %v158 = vld [vmem:[%s152 + $0x10] sm:$0xff]
            %159 = vst [vmem:[%s153 + $0x10] sm:$0xff] %v158
            %v160 = vld [vmem:[%s152 + $0x60] sm:$0xff]
            %161 = vst [vmem:[%s153 + $0x18] sm:$0xff] %v160
            %v162 = vld [vmem:[%s152 + $0x68] sm:$0xff]
            %163 = vst [vmem:[%s153 + $0x20] sm:$0xff] %v162
            %v164 = vld [vmem:[%s152 + $0x70] sm:$0xff]
            %165 = vst [vmem:[%s153 + $0x28] sm:$0xff] %v164
          $region33: #{upblock_forward.7} parent=27 // loop_footer
            %s151 = sadd.s32 1, %s147
          $region34: #{upblock_forward.7} parent=27 // loop_footer_branch
            %146 = sbr.rel target = $region30
          $region35: #{upblock_forward.7} parent=27 // loop_exit
            _
        $region28: #{upblock_forward.7} parent=23 // pred_fallthru
          _
        // Predicated region
        $region36: #{upblock_forward.7} parent=23 // pred_check
          _
        $region37: #{upblock_forward.7} parent=23 // pred_check_branch
          %167 = sbr.rel target = $region39
        $region38: #{upblock_forward.7} parent=23 // pred_region
          _
        $region39: #{upblock_forward.7} parent=23 // pred_fallthru
          _
        // Predicated region
        $region40: #{upblock_forward.7} parent=23 // pred_check
          _
        $region41: #{upblock_forward.7} parent=23 // pred_check_branch
          %170 = sbr.rel (0) target = $region43
        $region42: #{upblock_forward.7} parent=23 // pred_region
          %171 = vsyncadd [#allocation3], 768
        $region43: #{upblock_forward.7} parent=23 // pred_fallthru
          _
        %s172 = smul.u32 4, 2
        %s173 = smul.u32 %s172, 6
        %s174 = sshll.u32 %s173, 4
        %175 = dma.done [#allocation3], %s174
        %v176 = vld [vmem:[#allocation2] sm:$0xff]
        %v177 = vld [vmem:[#allocation2 + $0x8] sm:$0xff]
        %v178 = vld [vmem:[#allocation2 + $0x10] sm:$0xf]
        %v179 = vld [vmem:[#allocation2 + $0x18] sm:$0x11]
        %v180 = vld [vmem:[#allocation2 + $0x20] sm:$0x11]
        %v181 = vld [vmem:[#allocation2 + $0x28] sm:$0x1]
        %v182 = vld [vmem:[%s1] sm:$0xf]
        %s183 = scalar_lea.vmem %s1, 4
        %v184 = vld [vmem:[%s183] sm:$0xf]
        %v191 = vunpack.c.l.b16 %v176
        %v192 = vunpack.c.h.b16 %v176
        %v193 = vunpack.c.l.b16 %v177
        %v194 = vunpack.c.h.b16 %v177
        %v195 = vunpack.c.l.b16 %v178
        %v196 = vunpack.c.l.b16 %v179
        %v197 = vunpack.c.h.b16 %v179
        %v198 = vunpack.c.l.b16 %v180
        %v199 = vunpack.c.h.b16 %v180
        %v200 = vunpack.c.l.b16 %v181
        %v201 = vpack.c.b16 %v196, %v191
        %v202 = vpack.c.b16 %v197, %v192
        %v203 = vpack.c.b16 %v198, %v193
        %v204 = vpack.c.b16 %v199, %v194
        %v205 = vpack.c.b16 %v200, %v195
        %206 = vrot.lane.b32.xlu0 %v201, 10
        %v207 = vpop.permute.xlu0 %206
        %208 = vrot.lane.b32.xlu0 %v202, 10
        %v209 = vpop.permute.xlu0 %208
        %210 = vrot.lane.b32.xlu0 %v203, 10
        %v211 = vpop.permute.xlu0 %210
        %212 = vrot.lane.b32.xlu0 %v204, 10
        %v213 = vpop.permute.xlu0 %212
        %214 = vrot.lane.b32.xlu0 %v205, 10
        %v215 = vpop.permute.xlu0 %214
        %vm216 = vcmask 80896
        %v217 = vsel %vm216, %v207, %v209
        %v218 = vsel %vm216, %v209, %v211
        %v219 = vsel %vm216, %v211, %v213
        %v220 = vsel %vm216, %v213, %v215
        %vm221 = vcmask 72704
        %v223 = vsel %vm221, %v184, 0
        %vm225 = vcmask 1043456
        %vm226 = vcmask 1044480
        %v227 = vsel %vm225, 4294967295, 65535
        %v228 = vsel %vm226, %v227, 0
        %v230 = vand.u32 %v217, %v228
        %v233 = vand.u32 %v218, %v228
        %v236 = vand.u32 %v219, %v228
        %v239 = vand.u32 %v220, %v228
        %241 = vmatpush.bf16.msra.mxu0 0
        %242 = vmatpush.bf16.msra.mxu0 0
        %243 = vmatpush.bf16.msra.mxu0 0
        %244 = vmatpush.bf16.msra.mxu0 0
        %245 = vmatpush.bf16.msra.mxu0 0
        %246 = vmatpush.bf16.msra.mxu0 0
        %247 = vmatpush.bf16.msra.mxu0 0
        %248 = vmatpush.bf16.msra.mxu0 %v230
        %249 = vmatmul.bf16.gmra.mxu0 %v223
        %v250 = vpop.f32.mrf.mxu0
        %v251 = vadd.f32 0.0, %v250
        %v252 = vpop.f32.mrf.mxu0
        %253 = vdwg.mxu0
        %254 = vmatpush.bf16.msra.mxu0 0
        %255 = vmatpush.bf16.msra.mxu0 0
        %256 = vmatpush.bf16.msra.mxu0 0
        %257 = vmatpush.bf16.msra.mxu0 0
        %258 = vmatpush.bf16.msra.mxu0 0
        %259 = vmatpush.bf16.msra.mxu0 0
        %260 = vmatpush.bf16.msra.mxu0 0
        %261 = vmatpush.bf16.msra.mxu0 %v233
        %262 = vmatmul.bf16.gmra.mxu0 %v223
        %v263 = vpop.f32.mrf.mxu0
        %v264 = vadd.f32 0.0, %v263
        %v265 = vpop.f32.mrf.mxu0
        %266 = vdwg.mxu0
        %267 = vmatpush.bf16.msra.mxu0 0
        %268 = vmatpush.bf16.msra.mxu0 0
        %269 = vmatpush.bf16.msra.mxu0 0
        %270 = vmatpush.bf16.msra.mxu0 0
        %271 = vmatpush.bf16.msra.mxu0 0
        %272 = vmatpush.bf16.msra.mxu0 0
        %273 = vmatpush.bf16.msra.mxu0 0
        %274 = vmatpush.bf16.msra.mxu0 %v236
        %275 = vmatmul.bf16.gmra.mxu0 %v223
        %v276 = vpop.f32.mrf.mxu0
        %v277 = vadd.f32 0.0, %v276
        %v278 = vpop.f32.mrf.mxu0
        %279 = vdwg.mxu0
        %280 = vmatpush.bf16.msra.mxu0 0
        %281 = vmatpush.bf16.msra.mxu0 0
        %282 = vmatpush.bf16.msra.mxu0 0
        %283 = vmatpush.bf16.msra.mxu0 0
        %284 = vmatpush.bf16.msra.mxu0 0
        %285 = vmatpush.bf16.msra.mxu0 0
        %286 = vmatpush.bf16.msra.mxu0 0
        %287 = vmatpush.bf16.msra.mxu0 %v239
        %288 = vmatmul.bf16.gmra.mxu0 %v223
        %v289 = vpop.f32.mrf.mxu0
        %v290 = vadd.f32 0.0, %v289
        %v291 = vpop.f32.mrf.mxu0
        %292 = vdwg.mxu0
        %293 = vrot.lane.b32.xlu0 %v201, 11
        %v294 = vpop.permute.xlu0 %293
        %295 = vrot.lane.b32.xlu0 %v202, 11
        %v296 = vpop.permute.xlu0 %295
        %297 = vrot.lane.b32.xlu0 %v203, 11
        %v298 = vpop.permute.xlu0 %297
        %299 = vrot.lane.b32.xlu0 %v204, 11
        %v300 = vpop.permute.xlu0 %299
        %301 = vrot.lane.b32.xlu0 %v205, 11
        %v302 = vpop.permute.xlu0 %301
        %vm303 = vcmask 89088
        %v304 = vsel %vm303, %v294, %v296
        %v305 = vsel %vm303, %v296, %v298
        %v306 = vsel %vm303, %v298, %v300
        %v307 = vsel %vm303, %v300, %v302
        %v309 = vsel %vm221, %v182, 0
        %v312 = vand.u32 %v304, %v228
        %v315 = vand.u32 %v305, %v228
        %v318 = vand.u32 %v306, %v228
        %v321 = vand.u32 %v307, %v228
        %323 = vmatpush.bf16.msra.mxu0 0
        %324 = vmatpush.bf16.msra.mxu0 0
        %325 = vmatpush.bf16.msra.mxu0 0
        %326 = vmatpush.bf16.msra.mxu0 0
        %327 = vmatpush.bf16.msra.mxu0 0
        %328 = vmatpush.bf16.msra.mxu0 0
        %329 = vmatpush.bf16.msra.mxu0 0
        %330 = vmatpush.bf16.msra.mxu0 %v312
        %331 = vmatmul.bf16.gmra.mxu0 %v309
        %v332 = vpop.f32.mrf.mxu0
        %v333 = vadd.f32 %v251, %v332
        %v334 = vpop.f32.mrf.mxu0
        %335 = vdwg.mxu0
        %336 = vmatpush.bf16.msra.mxu0 0
        %337 = vmatpush.bf16.msra.mxu0 0
        %338 = vmatpush.bf16.msra.mxu0 0
        %339 = vmatpush.bf16.msra.mxu0 0
        %340 = vmatpush.bf16.msra.mxu0 0
        %341 = vmatpush.bf16.msra.mxu0 0
        %342 = vmatpush.bf16.msra.mxu0 0
        %343 = vmatpush.bf16.msra.mxu0 %v315
        %344 = vmatmul.bf16.gmra.mxu0 %v309
        %v345 = vpop.f32.mrf.mxu0
        %v346 = vadd.f32 %v264, %v345
        %v347 = vpop.f32.mrf.mxu0
        %348 = vdwg.mxu0
        %349 = vmatpush.bf16.msra.mxu0 0
        %350 = vmatpush.bf16.msra.mxu0 0
        %351 = vmatpush.bf16.msra.mxu0 0
        %352 = vmatpush.bf16.msra.mxu0 0
        %353 = vmatpush.bf16.msra.mxu0 0
        %354 = vmatpush.bf16.msra.mxu0 0
        %355 = vmatpush.bf16.msra.mxu0 0
        %356 = vmatpush.bf16.msra.mxu0 %v318
        %357 = vmatmul.bf16.gmra.mxu0 %v309
        %v358 = vpop.f32.mrf.mxu0
        %v359 = vadd.f32 %v277, %v358
        %v360 = vpop.f32.mrf.mxu0
        %361 = vdwg.mxu0
        %362 = vmatpush.bf16.msra.mxu0 0
        %363 = vmatpush.bf16.msra.mxu0 0
        %364 = vmatpush.bf16.msra.mxu0 0
        %365 = vmatpush.bf16.msra.mxu0 0
        %366 = vmatpush.bf16.msra.mxu0 0
        %367 = vmatpush.bf16.msra.mxu0 0
        %368 = vmatpush.bf16.msra.mxu0 0
        %369 = vmatpush.bf16.msra.mxu0 %v321
        %370 = vmatmul.bf16.gmra.mxu0 %v309
        %v371 = vpop.f32.mrf.mxu0
        %v372 = vadd.f32 %v290, %v371
        %v373 = vpop.f32.mrf.mxu0
        %374 = vdwg.mxu0
        %s375 = scalar_lea.vmem %s1, 8
        %v376 = vld [vmem:[%s375] sm:$0xf]
        %377 = vrot.lane.b32.xlu0 %v201, 9
        %v378 = vpop.permute.xlu0 %377
        %379 = vrot.lane.b32.xlu0 %v202, 9
        %v380 = vpop.permute.xlu0 %379
        %381 = vrot.lane.b32.xlu0 %v203, 9
        %v382 = vpop.permute.xlu0 %381
        %383 = vrot.lane.b32.xlu0 %v204, 9
        %v384 = vpop.permute.xlu0 %383
        %385 = vrot.lane.b32.xlu0 %v205, 9
        %v386 = vpop.permute.xlu0 %385
        %vm387 = vcmask 72704
        %v388 = vsel %vm387, %v378, %v380
        %v389 = vsel %vm387, %v380, %v382
        %v390 = vsel %vm387, %v382, %v384
        %v391 = vsel %vm387, %v384, %v386
        %v393 = vsel %vm221, %v376, 0
        %v396 = vand.u32 %v388, %v228
        %v399 = vand.u32 %v389, %v228
        %v402 = vand.u32 %v390, %v228
        %v405 = vand.u32 %v391, %v228
        %407 = vmatpush.bf16.msra.mxu0 0
        %408 = vmatpush.bf16.msra.mxu0 0
        %409 = vmatpush.bf16.msra.mxu0 0
        %410 = vmatpush.bf16.msra.mxu0 0
        %411 = vmatpush.bf16.msra.mxu0 0
        %412 = vmatpush.bf16.msra.mxu0 0
        %413 = vmatpush.bf16.msra.mxu0 0
        %414 = vmatpush.bf16.msra.mxu0 %v396
        %415 = vmatmul.bf16.gmra.mxu0 %v393
        %v416 = vpop.f32.mrf.mxu0
        %v417 = vadd.f32 0.0, %v416
        %v418 = vpop.f32.mrf.mxu0
        %419 = vdwg.mxu0
        %420 = vmatpush.bf16.msra.mxu0 0
        %421 = vmatpush.bf16.msra.mxu0 0
        %422 = vmatpush.bf16.msra.mxu0 0
        %423 = vmatpush.bf16.msra.mxu0 0
        %424 = vmatpush.bf16.msra.mxu0 0
        %425 = vmatpush.bf16.msra.mxu0 0
        %426 = vmatpush.bf16.msra.mxu0 0
        %427 = vmatpush.bf16.msra.mxu0 %v399
        %428 = vmatmul.bf16.gmra.mxu0 %v393
        %v429 = vpop.f32.mrf.mxu0
        %v430 = vadd.f32 0.0, %v429
        %v431 = vpop.f32.mrf.mxu0
        %432 = vdwg.mxu0
        %433 = vmatpush.bf16.msra.mxu0 0
        %434 = vmatpush.bf16.msra.mxu0 0
        %435 = vmatpush.bf16.msra.mxu0 0
        %436 = vmatpush.bf16.msra.mxu0 0
        %437 = vmatpush.bf16.msra.mxu0 0
        %438 = vmatpush.bf16.msra.mxu0 0
        %439 = vmatpush.bf16.msra.mxu0 0
        %440 = vmatpush.bf16.msra.mxu0 %v402
        %441 = vmatmul.bf16.gmra.mxu0 %v393
        %v442 = vpop.f32.mrf.mxu0
        %v443 = vadd.f32 0.0, %v442
        %v444 = vpop.f32.mrf.mxu0
        %445 = vdwg.mxu0
        %446 = vmatpush.bf16.msra.mxu0 0
        %447 = vmatpush.bf16.msra.mxu0 0
        %448 = vmatpush.bf16.msra.mxu0 0
        %449 = vmatpush.bf16.msra.mxu0 0
        %450 = vmatpush.bf16.msra.mxu0 0
        %451 = vmatpush.bf16.msra.mxu0 0
        %452 = vmatpush.bf16.msra.mxu0 0
        %453 = vmatpush.bf16.msra.mxu0 %v405
        %454 = vmatmul.bf16.gmra.mxu0 %v393
        %v455 = vpop.f32.mrf.mxu0
        %v456 = vadd.f32 0.0, %v455
        %v457 = vpop.f32.mrf.mxu0
        %458 = vdwg.mxu0
        %v459 = vadd.f32 %v333, %v417
        %v460 = vadd.f32 %v346, %v430
        %v461 = vadd.f32 %v359, %v443
        %v462 = vadd.f32 %v372, %v456
        %s463 = scalar_lea.vmem %s1, 12
        %v464 = vld [vmem:[%s463] sm:$0xf]
        %465 = vrot.lane.b32.xlu0 %v201, 1
        %v466 = vpop.permute.xlu0 %465
        %467 = vrot.lane.b32.xlu0 %v202, 1
        %v468 = vpop.permute.xlu0 %467
        %469 = vrot.lane.b32.xlu0 %v203, 1
        %v470 = vpop.permute.xlu0 %469
        %471 = vrot.lane.b32.xlu0 %v204, 1
        %v472 = vpop.permute.xlu0 %471
        %473 = vrot.lane.b32.xlu0 %v205, 1
        %v474 = vpop.permute.xlu0 %473
        %vm475 = vcmask 7168
        %v476 = vsel %vm475, %v466, %v468
        %v477 = vsel %vm475, %v468, %v470
        %v478 = vsel %vm475, %v470, %v472
        %v479 = vsel %vm475, %v472, %v474
        %v481 = vsel %vm221, %v464, 0
        %v484 = vand.u32 %v476, %v228
        %v487 = vand.u32 %v477, %v228
        %v490 = vand.u32 %v478, %v228
        %v493 = vand.u32 %v479, %v228
        %495 = vmatpush.bf16.msra.mxu0 0
        %496 = vmatpush.bf16.msra.mxu0 0
        %497 = vmatpush.bf16.msra.mxu0 0
        %498 = vmatpush.bf16.msra.mxu0 0
        %499 = vmatpush.bf16.msra.mxu0 0
        %500 = vmatpush.bf16.msra.mxu0 0
        %501 = vmatpush.bf16.msra.mxu0 0
        %502 = vmatpush.bf16.msra.mxu0 %v484
        %503 = vmatmul.bf16.gmra.mxu0 %v481
        %v504 = vpop.f32.mrf.mxu0
        %v505 = vadd.f32 0.0, %v504
        %v506 = vpop.f32.mrf.mxu0
        %507 = vdwg.mxu0
        %508 = vmatpush.bf16.msra.mxu0 0
        %509 = vmatpush.bf16.msra.mxu0 0
        %510 = vmatpush.bf16.msra.mxu0 0
        %511 = vmatpush.bf16.msra.mxu0 0
        %512 = vmatpush.bf16.msra.mxu0 0
        %513 = vmatpush.bf16.msra.mxu0 0
        %514 = vmatpush.bf16.msra.mxu0 0
        %515 = vmatpush.bf16.msra.mxu0 %v487
        %516 = vmatmul.bf16.gmra.mxu0 %v481
        %v517 = vpop.f32.mrf.mxu0
        %v518 = vadd.f32 0.0, %v517
        %v519 = vpop.f32.mrf.mxu0
        %520 = vdwg.mxu0
        %521 = vmatpush.bf16.msra.mxu0 0
        %522 = vmatpush.bf16.msra.mxu0 0
        %523 = vmatpush.bf16.msra.mxu0 0
        %524 = vmatpush.bf16.msra.mxu0 0
        %525 = vmatpush.bf16.msra.mxu0 0
        %526 = vmatpush.bf16.msra.mxu0 0
        %527 = vmatpush.bf16.msra.mxu0 0
        %528 = vmatpush.bf16.msra.mxu0 %v490
        %529 = vmatmul.bf16.gmra.mxu0 %v481
        %v530 = vpop.f32.mrf.mxu0
        %v531 = vadd.f32 0.0, %v530
        %v532 = vpop.f32.mrf.mxu0
        %533 = vdwg.mxu0
        %534 = vmatpush.bf16.msra.mxu0 0
        %535 = vmatpush.bf16.msra.mxu0 0
        %536 = vmatpush.bf16.msra.mxu0 0
        %537 = vmatpush.bf16.msra.mxu0 0
        %538 = vmatpush.bf16.msra.mxu0 0
        %539 = vmatpush.bf16.msra.mxu0 0
        %540 = vmatpush.bf16.msra.mxu0 0
        %541 = vmatpush.bf16.msra.mxu0 %v493
        %542 = vmatmul.bf16.gmra.mxu0 %v481
        %v543 = vpop.f32.mrf.mxu0
        %v544 = vadd.f32 0.0, %v543
        %v545 = vpop.f32.mrf.mxu0
        %546 = vdwg.mxu0
        %v547 = vadd.f32 %v459, %v505
        %v548 = vadd.f32 %v460, %v518
        %v549 = vadd.f32 %v461, %v531
        %v550 = vadd.f32 %v462, %v544
        %v551 = vld [vmem:[#allocation2 + $0x4] sm:$0xff]
        %v552 = vld [vmem:[#allocation2 + $0xc] sm:$0xff]
        %v553 = vld [vmem:[#allocation2 + $0x1c] sm:$0x11]
        %v554 = vld [vmem:[#allocation2 + $0x24] sm:$0x11]
        %s555 = scalar_lea.vmem %s1, 16
        %v556 = vld [vmem:[%s555] sm:$0xf]
        %v561 = vunpack.c.l.b16 %v551
        %v562 = vunpack.c.h.b16 %v551
        %v563 = vunpack.c.l.b16 %v552
        %v564 = vunpack.c.h.b16 %v552
        %v565 = vunpack.c.l.b16 %v553
        %v566 = vunpack.c.h.b16 %v553
        %v567 = vunpack.c.l.b16 %v554
        %v568 = vunpack.c.h.b16 %v554
        %v569 = vpack.c.b16 %v565, %v561
        %v570 = vpack.c.b16 %v566, %v562
        %v571 = vpack.c.b16 %v567, %v563
        %v572 = vpack.c.b16 %v568, %v564
        %v574 = vsel %vm221, %v556, 0
        %v577 = vand.u32 %v569, %v228
        %v580 = vand.u32 %v570, %v228
        %v583 = vand.u32 %v571, %v228
        %v586 = vand.u32 %v572, %v228
        %588 = vmatpush.bf16.msra.mxu0 0
        %589 = vmatpush.bf16.msra.mxu0 0
        %590 = vmatpush.bf16.msra.mxu0 0
        %591 = vmatpush.bf16.msra.mxu0 0
        %592 = vmatpush.bf16.msra.mxu0 0
        %593 = vmatpush.bf16.msra.mxu0 0
        %594 = vmatpush.bf16.msra.mxu0 0
        %595 = vmatpush.bf16.msra.mxu0 %v577
        %596 = vmatmul.bf16.gmra.mxu0 %v574
        %v597 = vpop.f32.mrf.mxu0
        %v598 = vadd.f32 0.0, %v597
        %v599 = vpop.f32.mrf.mxu0
        %600 = vdwg.mxu0
        %601 = vmatpush.bf16.msra.mxu0 0
        %602 = vmatpush.bf16.msra.mxu0 0
        %603 = vmatpush.bf16.msra.mxu0 0
        %604 = vmatpush.bf16.msra.mxu0 0
        %605 = vmatpush.bf16.msra.mxu0 0
        %606 = vmatpush.bf16.msra.mxu0 0
        %607 = vmatpush.bf16.msra.mxu0 0
        %608 = vmatpush.bf16.msra.mxu0 %v580
        %609 = vmatmul.bf16.gmra.mxu0 %v574
        %v610 = vpop.f32.mrf.mxu0
        %v611 = vadd.f32 0.0, %v610
        %v612 = vpop.f32.mrf.mxu0
        %613 = vdwg.mxu0
        %614 = vmatpush.bf16.msra.mxu0 0
        %615 = vmatpush.bf16.msra.mxu0 0
        %616 = vmatpush.bf16.msra.mxu0 0
        %617 = vmatpush.bf16.msra.mxu0 0
        %618 = vmatpush.bf16.msra.mxu0 0
        %619 = vmatpush.bf16.msra.mxu0 0
        %620 = vmatpush.bf16.msra.mxu0 0
        %621 = vmatpush.bf16.msra.mxu0 %v583
        %622 = vmatmul.bf16.gmra.mxu0 %v574
        %v623 = vpop.f32.mrf.mxu0
        %v624 = vadd.f32 0.0, %v623
        %v625 = vpop.f32.mrf.mxu0
        %626 = vdwg.mxu0
        %627 = vmatpush.bf16.msra.mxu0 0
        %628 = vmatpush.bf16.msra.mxu0 0
        %629 = vmatpush.bf16.msra.mxu0 0
        %630 = vmatpush.bf16.msra.mxu0 0
        %631 = vmatpush.bf16.msra.mxu0 0
        %632 = vmatpush.bf16.msra.mxu0 0
        %633 = vmatpush.bf16.msra.mxu0 0
        %634 = vmatpush.bf16.msra.mxu0 %v586
        %635 = vmatmul.bf16.gmra.mxu0 %v574
        %v636 = vpop.f32.mrf.mxu0
        %v637 = vadd.f32 0.0, %v636
        %v638 = vpop.f32.mrf.mxu0
        %639 = vdwg.mxu0
        %v640 = vadd.f32 %v547, %v598
        %v641 = vadd.f32 %v548, %v611
        %v642 = vadd.f32 %v549, %v624
        %v643 = vadd.f32 %v550, %v637
        %v644 = vld [vmem:[#allocation2 + $0x4] sm:$0xff]
        %v645 = vld [vmem:[#allocation2 + $0xc] sm:$0xff]
        %v646 = vld [vmem:[#allocation2 + $0x14] sm:$0xf]
        %v647 = vld [vmem:[#allocation2 + $0x1c] sm:$0x11]
        %v648 = vld [vmem:[#allocation2 + $0x24] sm:$0x11]
        %v649 = vld [vmem:[#allocation2 + $0x2c] sm:$0x1]
        %s650 = scalar_lea.vmem %s1, 20
        %v651 = vld [vmem:[%s650] sm:$0xf]
        %v658 = vunpack.c.l.b16 %v644
        %v659 = vunpack.c.h.b16 %v644
        %v660 = vunpack.c.l.b16 %v645
        %v661 = vunpack.c.h.b16 %v645
        %v662 = vunpack.c.l.b16 %v646
        %v663 = vunpack.c.l.b16 %v647
        %v664 = vunpack.c.h.b16 %v647
        %v665 = vunpack.c.l.b16 %v648
        %v666 = vunpack.c.h.b16 %v648
        %v667 = vunpack.c.l.b16 %v649
        %v668 = vpack.c.b16 %v663, %v658
        %v669 = vpack.c.b16 %v664, %v659
        %v670 = vpack.c.b16 %v665, %v660
        %v671 = vpack.c.b16 %v666, %v661
        %v672 = vpack.c.b16 %v667, %v662
        %673 = vrot.lane.b32.xlu0 %v668, 127
        %v674 = vpop.permute.xlu0 %673
        %675 = vrot.lane.b32.xlu0 %v669, 127
        %v676 = vpop.permute.xlu0 %675
        %677 = vrot.lane.b32.xlu0 %v670, 127
        %v678 = vpop.permute.xlu0 %677
        %679 = vrot.lane.b32.xlu0 %v671, 127
        %v680 = vpop.permute.xlu0 %679
        %681 = vrot.lane.b32.xlu0 %v672, 127
        %v682 = vpop.permute.xlu0 %681
        %vm683 = vcmask 1039360
        %v684 = vsel %vm683, %v674, %v676
        %v685 = vsel %vm683, %v676, %v678
        %v686 = vsel %vm683, %v678, %v680
        %v687 = vsel %vm683, %v680, %v682
        %v689 = vsel %vm221, %v651, 0
        %v692 = vand.u32 %v684, %v228
        %v695 = vand.u32 %v685, %v228
        %v698 = vand.u32 %v686, %v228
        %v701 = vand.u32 %v687, %v228
        %703 = vmatpush.bf16.msra.mxu0 0
        %704 = vmatpush.bf16.msra.mxu0 0
        %705 = vmatpush.bf16.msra.mxu0 0
        %706 = vmatpush.bf16.msra.mxu0 0
        %707 = vmatpush.bf16.msra.mxu0 0
        %708 = vmatpush.bf16.msra.mxu0 0
        %709 = vmatpush.bf16.msra.mxu0 0
        %710 = vmatpush.bf16.msra.mxu0 %v692
        %711 = vmatmul.bf16.gmra.mxu0 %v689
        %v712 = vpop.f32.mrf.mxu0
        %v713 = vadd.f32 0.0, %v712
        %v714 = vpop.f32.mrf.mxu0
        %715 = vdwg.mxu0
        %716 = vmatpush.bf16.msra.mxu0 0
        %717 = vmatpush.bf16.msra.mxu0 0
        %718 = vmatpush.bf16.msra.mxu0 0
        %719 = vmatpush.bf16.msra.mxu0 0
        %720 = vmatpush.bf16.msra.mxu0 0
        %721 = vmatpush.bf16.msra.mxu0 0
        %722 = vmatpush.bf16.msra.mxu0 0
        %723 = vmatpush.bf16.msra.mxu0 %v695
        %724 = vmatmul.bf16.gmra.mxu0 %v689
        %v725 = vpop.f32.mrf.mxu0
        %v726 = vadd.f32 0.0, %v725
        %v727 = vpop.f32.mrf.mxu0
        %728 = vdwg.mxu0
        %729 = vmatpush.bf16.msra.mxu0 0
        %730 = vmatpush.bf16.msra.mxu0 0
        %731 = vmatpush.bf16.msra.mxu0 0
        %732 = vmatpush.bf16.msra.mxu0 0
        %733 = vmatpush.bf16.msra.mxu0 0
        %734 = vmatpush.bf16.msra.mxu0 0
        %735 = vmatpush.bf16.msra.mxu0 0
        %736 = vmatpush.bf16.msra.mxu0 %v698
        %737 = vmatmul.bf16.gmra.mxu0 %v689
        %v738 = vpop.f32.mrf.mxu0
        %v739 = vadd.f32 0.0, %v738
        %v740 = vpop.f32.mrf.mxu0
        %741 = vdwg.mxu0
        %742 = vmatpush.bf16.msra.mxu0 0
        %743 = vmatpush.bf16.msra.mxu0 0
        %744 = vmatpush.bf16.msra.mxu0 0
        %745 = vmatpush.bf16.msra.mxu0 0
        %746 = vmatpush.bf16.msra.mxu0 0
        %747 = vmatpush.bf16.msra.mxu0 0
        %748 = vmatpush.bf16.msra.mxu0 0
        %749 = vmatpush.bf16.msra.mxu0 %v701
        %750 = vmatmul.bf16.gmra.mxu0 %v689
        %v751 = vpop.f32.mrf.mxu0
        %v752 = vadd.f32 0.0, %v751
        %v753 = vpop.f32.mrf.mxu0
        %754 = vdwg.mxu0
        %v755 = vadd.f32 %v640, %v713
        %v756 = vadd.f32 %v641, %v726
        %v757 = vadd.f32 %v642, %v739
        %v758 = vadd.f32 %v643, %v752
        %s759 = scalar_lea.vmem %s1, 24
        %v760 = vld [vmem:[%s759] sm:$0xf]
        %761 = vrot.lane.b32.xlu0 %v668, 119
        %v762 = vpop.permute.xlu0 %761
        %763 = vrot.lane.b32.xlu0 %v669, 119
        %v764 = vpop.permute.xlu0 %763
        %765 = vrot.lane.b32.xlu0 %v670, 119
        %v766 = vpop.permute.xlu0 %765
        %767 = vrot.lane.b32.xlu0 %v671, 119
        %v768 = vpop.permute.xlu0 %767
        %769 = vrot.lane.b32.xlu0 %v672, 119
        %v770 = vpop.permute.xlu0 %769
        %vm771 = vcmask 973824
        %v772 = vsel %vm771, %v762, %v764
        %v773 = vsel %vm771, %v764, %v766
        %v774 = vsel %vm771, %v766, %v768
        %v775 = vsel %vm771, %v768, %v770
        %v777 = vsel %vm221, %v760, 0
        %v780 = vand.u32 %v772, %v228
        %v783 = vand.u32 %v773, %v228
        %v786 = vand.u32 %v774, %v228
        %v789 = vand.u32 %v775, %v228
        %791 = vmatpush.bf16.msra.mxu0 0
        %792 = vmatpush.bf16.msra.mxu0 0
        %793 = vmatpush.bf16.msra.mxu0 0
        %794 = vmatpush.bf16.msra.mxu0 0
        %795 = vmatpush.bf16.msra.mxu0 0
        %796 = vmatpush.bf16.msra.mxu0 0
        %797 = vmatpush.bf16.msra.mxu0 0
        %798 = vmatpush.bf16.msra.mxu0 %v780
        %799 = vmatmul.bf16.gmra.mxu0 %v777
        %v800 = vpop.f32.mrf.mxu0
        %v801 = vadd.f32 0.0, %v800
        %v802 = vpop.f32.mrf.mxu0
        %803 = vdwg.mxu0
        %804 = vmatpush.bf16.msra.mxu0 0
        %805 = vmatpush.bf16.msra.mxu0 0
        %806 = vmatpush.bf16.msra.mxu0 0
        %807 = vmatpush.bf16.msra.mxu0 0
        %808 = vmatpush.bf16.msra.mxu0 0
        %809 = vmatpush.bf16.msra.mxu0 0
        %810 = vmatpush.bf16.msra.mxu0 0
        %811 = vmatpush.bf16.msra.mxu0 %v783
        %812 = vmatmul.bf16.gmra.mxu0 %v777
        %v813 = vpop.f32.mrf.mxu0
        %v814 = vadd.f32 0.0, %v813
        %v815 = vpop.f32.mrf.mxu0
        %816 = vdwg.mxu0
        %817 = vmatpush.bf16.msra.mxu0 0
        %818 = vmatpush.bf16.msra.mxu0 0
        %819 = vmatpush.bf16.msra.mxu0 0
        %820 = vmatpush.bf16.msra.mxu0 0
        %821 = vmatpush.bf16.msra.mxu0 0
        %822 = vmatpush.bf16.msra.mxu0 0
        %823 = vmatpush.bf16.msra.mxu0 0
        %824 = vmatpush.bf16.msra.mxu0 %v786
        %825 = vmatmul.bf16.gmra.mxu0 %v777
        %v826 = vpop.f32.mrf.mxu0
        %v827 = vadd.f32 0.0, %v826
        %v828 = vpop.f32.mrf.mxu0
        %829 = vdwg.mxu0
        %830 = vmatpush.bf16.msra.mxu0 0
        %831 = vmatpush.bf16.msra.mxu0 0
        %832 = vmatpush.bf16.msra.mxu0 0
        %833 = vmatpush.bf16.msra.mxu0 0
        %834 = vmatpush.bf16.msra.mxu0 0
        %835 = vmatpush.bf16.msra.mxu0 0
        %836 = vmatpush.bf16.msra.mxu0 0
        %837 = vmatpush.bf16.msra.mxu0 %v789
        %838 = vmatmul.bf16.gmra.mxu0 %v777
        %v839 = vpop.f32.mrf.mxu0
        %v840 = vadd.f32 0.0, %v839
        %v841 = vpop.f32.mrf.mxu0
        %842 = vdwg.mxu0
        %v843 = vadd.f32 %v755, %v801
        %v844 = vadd.f32 %v756, %v814
        %v845 = vadd.f32 %v757, %v827
        %v846 = vadd.f32 %v758, %v840
        %s847 = scalar_lea.vmem %s1, 28
        %v848 = vld [vmem:[%s847] sm:$0xf]
        %849 = vrot.lane.b32.xlu0 %v668, 118
        %v850 = vpop.permute.xlu0 %849
        %851 = vrot.lane.b32.xlu0 %v669, 118
        %v852 = vpop.permute.xlu0 %851
        %853 = vrot.lane.b32.xlu0 %v670, 118
        %v854 = vpop.permute.xlu0 %853
        %855 = vrot.lane.b32.xlu0 %v671, 118
        %v856 = vpop.permute.xlu0 %855
        %857 = vrot.lane.b32.xlu0 %v672, 118
        %v858 = vpop.permute.xlu0 %857
        %vm859 = vcmask 965632
        %v860 = vsel %vm859, %v850, %v852
        %v861 = vsel %vm859, %v852, %v854
        %v862 = vsel %vm859, %v854, %v856
        %v863 = vsel %vm859, %v856, %v858
        %v865 = vsel %vm221, %v848, 0
        %v868 = vand.u32 %v860, %v228
        %v871 = vand.u32 %v861, %v228
        %v874 = vand.u32 %v862, %v228
        %v877 = vand.u32 %v863, %v228
        %879 = vmatpush.bf16.msra.mxu0 0
        %880 = vmatpush.bf16.msra.mxu0 0
        %881 = vmatpush.bf16.msra.mxu0 0
        %882 = vmatpush.bf16.msra.mxu0 0
        %883 = vmatpush.bf16.msra.mxu0 0
        %884 = vmatpush.bf16.msra.mxu0 0
        %885 = vmatpush.bf16.msra.mxu0 0
        %886 = vmatpush.bf16.msra.mxu0 %v868
        %887 = vmatmul.bf16.gmra.mxu0 %v865
        %v888 = vpop.f32.mrf.mxu0
        %v889 = vadd.f32 0.0, %v888
        %v890 = vpop.f32.mrf.mxu0
        %891 = vdwg.mxu0
        %892 = vmatpush.bf16.msra.mxu0 0
        %893 = vmatpush.bf16.msra.mxu0 0
        %894 = vmatpush.bf16.msra.mxu0 0
        %895 = vmatpush.bf16.msra.mxu0 0
        %896 = vmatpush.bf16.msra.mxu0 0
        %897 = vmatpush.bf16.msra.mxu0 0
        %898 = vmatpush.bf16.msra.mxu0 0
        %899 = vmatpush.bf16.msra.mxu0 %v871
        %900 = vmatmul.bf16.gmra.mxu0 %v865
        %v901 = vpop.f32.mrf.mxu0
        %v902 = vadd.f32 0.0, %v901
        %v903 = vpop.f32.mrf.mxu0
        %904 = vdwg.mxu0
        %905 = vmatpush.bf16.msra.mxu0 0
        %906 = vmatpush.bf16.msra.mxu0 0
        %907 = vmatpush.bf16.msra.mxu0 0
        %908 = vmatpush.bf16.msra.mxu0 0
        %909 = vmatpush.bf16.msra.mxu0 0
        %910 = vmatpush.bf16.msra.mxu0 0
        %911 = vmatpush.bf16.msra.mxu0 0
        %912 = vmatpush.bf16.msra.mxu0 %v874
        %913 = vmatmul.bf16.gmra.mxu0 %v865
        %v914 = vpop.f32.mrf.mxu0
        %v915 = vadd.f32 0.0, %v914
        %v916 = vpop.f32.mrf.mxu0
        %917 = vdwg.mxu0
        %918 = vmatpush.bf16.msra.mxu0 0
        %919 = vmatpush.bf16.msra.mxu0 0
        %920 = vmatpush.bf16.msra.mxu0 0
        %921 = vmatpush.bf16.msra.mxu0 0
        %922 = vmatpush.bf16.msra.mxu0 0
        %923 = vmatpush.bf16.msra.mxu0 0
        %924 = vmatpush.bf16.msra.mxu0 0
        %925 = vmatpush.bf16.msra.mxu0 %v877
        %926 = vmatmul.bf16.gmra.mxu0 %v865
        %v927 = vpop.f32.mrf.mxu0
        %v928 = vadd.f32 0.0, %v927
        %v929 = vpop.f32.mrf.mxu0
        %930 = vdwg.mxu0
        %v931 = vadd.f32 %v843, %v889
        %v932 = vadd.f32 %v844, %v902
        %v933 = vadd.f32 %v845, %v915
        %v934 = vadd.f32 %v846, %v928
        %s935 = scalar_lea.vmem %s1, 32
        %v936 = vld [vmem:[%s935] sm:$0xf]
        %937 = vrot.lane.b32.xlu0 %v668, 117
        %v938 = vpop.permute.xlu0 %937
        %939 = vrot.lane.b32.xlu0 %v669, 117
        %v940 = vpop.permute.xlu0 %939
        %941 = vrot.lane.b32.xlu0 %v670, 117
        %v942 = vpop.permute.xlu0 %941
        %943 = vrot.lane.b32.xlu0 %v671, 117
        %v944 = vpop.permute.xlu0 %943
        %945 = vrot.lane.b32.xlu0 %v672, 117
        %v946 = vpop.permute.xlu0 %945
        %vm947 = vcmask 957440
        %v948 = vsel %vm947, %v938, %v940
        %v949 = vsel %vm947, %v940, %v942
        %v950 = vsel %vm947, %v942, %v944
        %v951 = vsel %vm947, %v944, %v946
        %v953 = vsel %vm221, %v936, 0
        %v956 = vand.u32 %v948, %v228
        %v959 = vand.u32 %v949, %v228
        %v962 = vand.u32 %v950, %v228
        %v965 = vand.u32 %v951, %v228
        %967 = vmatpush.bf16.msra.mxu0 0
        %968 = vmatpush.bf16.msra.mxu0 0
        %969 = vmatpush.bf16.msra.mxu0 0
        %970 = vmatpush.bf16.msra.mxu0 0
        %971 = vmatpush.bf16.msra.mxu0 0
        %972 = vmatpush.bf16.msra.mxu0 0
        %973 = vmatpush.bf16.msra.mxu0 0
        %974 = vmatpush.bf16.msra.mxu0 %v956
        %975 = vmatmul.bf16.gmra.mxu0 %v953
        %v976 = vpop.f32.mrf.mxu0
        %v977 = vadd.f32 0.0, %v976
        %v978 = vpop.f32.mrf.mxu0
        %979 = vdwg.mxu0
        %980 = vmatpush.bf16.msra.mxu0 0
        %981 = vmatpush.bf16.msra.mxu0 0
        %982 = vmatpush.bf16.msra.mxu0 0
        %983 = vmatpush.bf16.msra.mxu0 0
        %984 = vmatpush.bf16.msra.mxu0 0
        %985 = vmatpush.bf16.msra.mxu0 0
        %986 = vmatpush.bf16.msra.mxu0 0
        %987 = vmatpush.bf16.msra.mxu0 %v959
        %988 = vmatmul.bf16.gmra.mxu0 %v953
        %v989 = vpop.f32.mrf.mxu0
        %v990 = vadd.f32 0.0, %v989
        %v991 = vpop.f32.mrf.mxu0
        %992 = vdwg.mxu0
        %993 = vmatpush.bf16.msra.mxu0 0
        %994 = vmatpush.bf16.msra.mxu0 0
        %995 = vmatpush.bf16.msra.mxu0 0
        %996 = vmatpush.bf16.msra.mxu0 0
        %997 = vmatpush.bf16.msra.mxu0 0
        %998 = vmatpush.bf16.msra.mxu0 0
        %999 = vmatpush.bf16.msra.mxu0 0
        %1000 = vmatpush.bf16.msra.mxu0 %v962
        %1001 = vmatmul.bf16.gmra.mxu0 %v953
        %v1002 = vpop.f32.mrf.mxu0
        %v1003 = vadd.f32 0.0, %v1002
        %v1004 = vpop.f32.mrf.mxu0
        %1005 = vdwg.mxu0
        %1006 = vmatpush.bf16.msra.mxu0 0
        %1007 = vmatpush.bf16.msra.mxu0 0
        %1008 = vmatpush.bf16.msra.mxu0 0
        %1009 = vmatpush.bf16.msra.mxu0 0
        %1010 = vmatpush.bf16.msra.mxu0 0
        %1011 = vmatpush.bf16.msra.mxu0 0
        %1012 = vmatpush.bf16.msra.mxu0 0
        %1013 = vmatpush.bf16.msra.mxu0 %v965
        %1014 = vmatmul.bf16.gmra.mxu0 %v953
        %v1015 = vpop.f32.mrf.mxu0
        %v1016 = vadd.f32 0.0, %v1015
        %v1017 = vpop.f32.mrf.mxu0
        %1018 = vdwg.mxu0
        %v1019 = vadd.f32 %v931, %v977
        %v1020 = vadd.f32 %v932, %v990
        %v1021 = vadd.f32 %v933, %v1003
        %v1022 = vadd.f32 %v934, %v1016
        %vm1023 = vcmp.ge.f32.partialorder %v1019, 0.0
        %vm1024 = vcmp.ge.f32.partialorder %v1020, 0.0
        %vm1025 = vcmp.ge.f32.partialorder %v1021, 0.0
        %vm1026 = vcmp.ge.f32.partialorder %v1022, 0.0
        %v1027 = vmul.f32 %v1019, 0.01
        %v1028 = vmul.f32 %v1020, 0.01
        %v1029 = vmul.f32 %v1021, 0.01
        %v1030 = vmul.f32 %v1022, 0.01
        %v1031 = vsel %vm1023, %v1019, %v1027
        %v1032 = vsel %vm1024, %v1020, %v1028
        %v1033 = vsel %vm1025, %v1021, %v1029
        %v1034 = vsel %vm1026, %v1022, %v1030
        %v1035 = vunpack.c.l.bf16 %v553
        %v1036 = vunpack.c.h.bf16 %v553
        %v1037 = vunpack.c.l.bf16 %v554
        %v1038 = vunpack.c.h.bf16 %v554
        %vm1039 = vcmp.gt.f32.partialorder %v1035, 0.0
        %vm1040 = vcmp.gt.f32.partialorder %v1036, 0.0
        %vm1041 = vcmp.gt.f32.partialorder %v1037, 0.0
        %vm1042 = vcmp.gt.f32.partialorder %v1038, 0.0
        %v1043 = vsel %vm1039, 1, 0
        %v1044 = vsel %vm1040, 1, 0
        %v1045 = vsel %vm1041, 1, 0
        %v1046 = vsel %vm1042, 1, 0
        %v1047 = vperm.slane %v1043, 0
        %v1048 = vperm.slane %v1044, 0
        %v1049 = vperm.slane %v1045, 0
        %v1050 = vperm.slane %v1046, 0
        %vm1051 = vcmp.eq.s32.totalorder %v1047, 1
        %vm1052 = vcmp.eq.s32.totalorder %v1048, 1
        %vm1053 = vcmp.eq.s32.totalorder %v1049, 1
        %vm1054 = vcmp.eq.s32.totalorder %v1050, 1
        %v1055 = vsel %vm1051, %v1031, 0.0
        %v1056 = vsel %vm1052, %v1032, 0.0
        %v1057 = vsel %vm1053, %v1033, 0.0
        %v1058 = vsel %vm1054, %v1034, 0.0
        %v1059 = vsel %vm1039, 1.0, 0.0
        %v1060 = vsel %vm1040, 1.0, 0.0
        %v1061 = vsel %vm1041, 1.0, 0.0
        %v1062 = vsel %vm1042, 1.0, 0.0
        %v1063 = vpack.c.bf16 %v1056, %v1055
        %v1064 = vpack.c.bf16 %v1058, %v1057
        %v1065 = vpack.c.bf16 %v1060, %v1059
        %v1066 = vpack.c.bf16 %v1062, %v1061
        %1067 = vst [vmem:[%s121] sm:$0xff] %v1063
        %1068 = vst [vmem:[%s121 + $0x8] sm:$0xff] %v1064
        %vm1069 = vcmask 1040384
        %vm1070 = vsmask.f32 256
        %vm1071 = vmand %vm1069, %vm1070
        %vm1072 = vcmask 1044484
        %vm1073 = vsmask.f32 4352
        %vm1074 = vmand %vm1072, %vm1073
        %vm1075 = vmor %vm1074, %vm1071
        %v1076 = vld [vmem:[%s121 + $0x10] sm:$0x11]
        %v1077 = vsel %vm1075, %v1065, %v1076
        %1078 = vst [vmem:[%s121 + $0x10] sm:$0x11] %v1077
        %v1079 = vld [vmem:[%s121 + $0x18] sm:$0x11]
        %v1080 = vsel %vm1075, %v1066, %v1079
        %1081 = vst [vmem:[%s121 + $0x18] sm:$0x11] %v1080
        %v1082 = vadd.f32 %v1055, %v1056
        %v1083 = vadd.f32 %v1082, %v1057
        %v1084 = vadd.f32 %v1083, %v1058
        %1085 = vadd.xlane.f32.xlu0 %v1084
        %v1086 = vpop.xlane.xlu0 %1085
        %v1087 = vmul.f32 %v1055, %v1055
        %v1088 = vmul.f32 %v1056, %v1056
        %v1089 = vmul.f32 %v1057, %v1057
        %v1090 = vmul.f32 %v1058, %v1058
        %v1091 = vadd.f32 %v1087, %v1088
        %v1092 = vadd.f32 %v1091, %v1089
        %v1093 = vadd.f32 %v1092, %v1090
        %1094 = vadd.xlane.f32.xlu0 %v1093
        %v1095 = vpop.xlane.xlu0 %1094
        %1097 = vset.pattern.permute.xlu0 0
        %1098 = vperm.xlu0 %1097, %v1086
        %v1099 = vpop.permute.xlu0 %1098
        %1102 = vset.pattern.permute.xlu0 0
        %1103 = vperm.xlu0 %1102, %v1095
        %v1104 = vpop.permute.xlu0 %1103
        %1106 = vst [vmem:[%s135] sm:$0xff] %v1099
        %1107 = vst [vmem:[%s135 + $0x8] sm:$0xff] %v1104
        %s1108 = sand.u32 %s46, 1
        %s1109 = sand.u32 %s46, 1
        %s1110 = smul.addr %s1109, 32
        %s1111 = scalar_lea.vmem [#allocation4], %s1110
        %p1112 = scmp.lt.s32.totalorder %s15, 3
        %s1113 = scalar_select %p1112, %s15, 3
        %s1114 = smul.addr %s1113, 2
        %s1115 = smul.addr %s1114, 8
        %s1116 = scalar_lea.vmem %s3, %s1115
        // Predicated region
        $region44: #{upblock_forward.7} parent=23 // pred_check
          %p1117 = pneg %p56
        $region45: #{upblock_forward.7} parent=23 // pred_check_branch
          %1119 = sbr.rel (%p1117) target = $region47
        $region46: #{upblock_forward.7} parent=23 // pred_region
          %s1120 = sadd.s32 %s15, 1
          %s1121 = smul.u32 4, %s1120
          %s1122 = smul.addr %s1121, 4
          %s1123 = scalar_lea.vmem %s2, %s1122
          // Predicated region
          $region48: #{upblock_forward.7} parent=46 // pred_check
            _
          $region49: #{upblock_forward.7} parent=46 // pred_check_branch
            %1125 = sbr.rel (0) target = $region51
          $region50: #{upblock_forward.7} parent=46 // pred_region
            // Predicated region
            $region52: #{upblock_forward.7} parent=50 // pred_check
              _
            $region53: #{upblock_forward.7} parent=50 // pred_check_branch
              %1127 = sbr.rel (0) target = $region55
            $region54: #{upblock_forward.7} parent=50 // pred_region
              loop: start=0, step=1, limit=1
              $region56: #{upblock_forward.7} parent=54 // loop_pre_header
                _
              $region57: #{upblock_forward.7} parent=54 // loop_header
                %s1129 = sphi 0, %s1133
                %p1130 = scmp.ge.s32.totalorder %s1129, 1
                %s1134 = sphi %s1111, %s1111
                %s1135 = sphi %s1123, %s1123
              $region58: #{upblock_forward.7} parent=54 // loop_header_branch
                %1132 = sbr.rel (%p1130) target = $region62
              $region59: #{upblock_forward.7} parent=54 // loop_body
                %v1136 = vld [vmem:[%s1134] sm:$0xff]
                %1137 = vst [vmem:[%s1135] sm:$0xff] %v1136
                %v1138 = vld [vmem:[%s1134 + $0x8] sm:$0xff]
                %1139 = vst [vmem:[%s1135 + $0x8] sm:$0xff] %v1138
                %v1140 = vld [vmem:[%s1134 + $0x10] sm:$0xff]
                %1141 = vst [vmem:[%s1135 + $0x60] sm:$0xff] %v1140
                %v1142 = vld [vmem:[%s1134 + $0x18] sm:$0xff]
                %1143 = vst [vmem:[%s1135 + $0x68] sm:$0xff] %v1142
              $region60: #{upblock_forward.7} parent=54 // loop_footer
                %s1133 = sadd.s32 1, %s1129
              $region61: #{upblock_forward.7} parent=54 // loop_footer_branch
                %1128 = sbr.rel target = $region57
              $region62: #{upblock_forward.7} parent=54 // loop_exit
                _
            $region55: #{upblock_forward.7} parent=50 // pred_fallthru
              _
            // Predicated region
            $region63: #{upblock_forward.7} parent=50 // pred_check
              _
            $region64: #{upblock_forward.7} parent=50 // pred_check_branch
              %1145 = sbr.rel target = $region66
            $region65: #{upblock_forward.7} parent=50 // pred_region
              _
            $region66: #{upblock_forward.7} parent=50 // pred_fallthru
              _
          $region51: #{upblock_forward.7} parent=46 // pred_fallthru
            _
          %1146 = vnop
        $region47: #{upblock_forward.7} parent=23 // pred_fallthru
          _
        // Predicated region
        $region67: #{upblock_forward.7} parent=23 // pred_check
          %p1147 = pneg %p82
        $region68: #{upblock_forward.7} parent=23 // pred_check_branch
          %1149 = sbr.rel (%p1147) target = $region70
        $region69: #{upblock_forward.7} parent=23 // pred_region
          _
        $region70: #{upblock_forward.7} parent=23 // pred_fallthru
          _
      $region24: #{upblock_forward.7} parent=5 // pred_fallthru
        _
      %p1150 = scmp.le.s32.totalorder 2, %s10
      // Predicated region
      $region71: #{upblock_forward.7} parent=5 // pred_check
        %p1151 = pneg %p1150
      $region72: #{upblock_forward.7} parent=5 // pred_check_branch
        %1153 = sbr.rel (%p1151) target = $region74
      $region73: #{upblock_forward.7} parent=5 // pred_region
        %s1154 = ssub.s32 %s10, 2
        // Predicated region
        $region75: #{upblock_forward.7} parent=73 // pred_check
          %p1155 = pneg %p62
        $region76: #{upblock_forward.7} parent=73 // pred_check_branch
          %1157 = sbr.rel (%p1155) target = $region78
        $region77: #{upblock_forward.7} parent=73 // pred_region
          %s1158 = sand.u32 %s47, 1
          %s1159 = sand.u32 %s47, 1
          %s1160 = smul.addr %s1159, 32
          %s1161 = scalar_lea.vmem [#allocation4], %s1160
        $region78: #{upblock_forward.7} parent=73 // pred_fallthru
          _
        // Predicated region
        $region79: #{upblock_forward.7} parent=73 // pred_check
          %p1162 = pneg %p88
        $region80: #{upblock_forward.7} parent=73 // pred_check_branch
          %1164 = sbr.rel (%p1162) target = $region82
        $region81: #{upblock_forward.7} parent=73 // pred_region
          %p1165 = scmp.lt.s32.totalorder %s16, 3
          %s1166 = scalar_select %p1165, %s16, 3
          %s1167 = smul.addr %s1166, 2
          %s1168 = smul.addr %s1167, 8
          %s1169 = scalar_lea.vmem %s3, %s1168
        $region82: #{upblock_forward.7} parent=73 // pred_fallthru
          _
      $region74: #{upblock_forward.7} parent=5 // pred_fallthru
        _
    $region6: #{upblock_forward.7} parent=1 // loop_footer
      %s14 = sadd.s32 1, %s10
    $region7: #{upblock_forward.7} parent=1 // loop_footer_branch
      %9 = sbr.rel target = $region3
    $region8: #{upblock_forward.7} parent=1 // loop_exit
      _
  %1170 = vsyncmov [#allocation3]
  %s1171 = vpop.sfrf %1170
  %p1172 = scmp.eq.s32.totalorder %s1171, 0
  %p1173 = pneg %p1172
  %1175 = shalt.err (%p1173)

// kernel: upblock_forward.8
$region0: #{upblock_forward.8}
  #allocation0 [shape = 'u32[]', space=smem, size = 0x4, offset = 0x4, fixed_abs, tag = 'smem constant byte address 0x4 - core index']
  #allocation1 [shape = 'u32[72,128]{1,0:T(1,128)}', space=vmem, size = 0x9000, scoped, tag = 'internal scratch']
  #allocation2 [shape = 'bf16[9,768]{1,0:T(8,128)(2,1)}', space=vmem, size = 0x6000, scoped, tag = 'scratch operand']
  #allocation3 [shape = 's32[1]{0}', space=sflag, size = 0x4, scoped, tag = 'scratch operand']
  #allocation5 [shape = 's32[]', space=sflag, size = 0x4, offset = 0, fixed_abs, tag = 'sflag constant byte address 0x0 - dummy sync flag']
  %s0 = inlined_call_operand.vmem [shape: bf16[9,3072], index: 0, kind: input, shape index: {}]
  %s1 = inlined_call_operand.vmem [shape: bf16[9,8,9], index: 1, kind: input, shape index: {}]
  %s2 = inlined_call_operand.vmem [shape: bf16[9,3072], index: 2, kind: output, shape index: {0}]
  %s3 = inlined_call_operand.vmem [shape: f32[4,16,128], index: 3, kind: output, shape index: {1}]
  %4 = xla_tuple %s2, %s3
  %s5 = sld [smem:[#allocation0]]
  $region83: #{upblock_forward.8} parent=0
    _
  %s7 = ssub.s32 1, %s5
  %s8 = scalar_select 0, %s7, %s5
  $region1: #{upblock_forward.8} parent=0
    #allocation4 [shape = 'u8[32768]{0}', space=vmem, size = 0x8000, scoped, tag = 'output window, operand 0']
    loop: start=0, step=1, limit=6
    $region2: #{upblock_forward.8} parent=1 // loop_pre_header
      _
    $region3: #{upblock_forward.8} parent=1 // loop_header
      %s10 = sphi 0, %s14
      %p11 = scmp.ge.s32.totalorder %s10, 6
      %s18 = sphi 0, %s18
      %s20 = sphi 0, %s18
      %s21 = sphi 0, %s20
      %s35 = sphi 0, %s21
      %s43 = sphi 0, %s45
      %s46 = sphi 0, %s43
      %s47 = sphi 0, %s46
      %s63 = sphi 0, %s47
      %s69 = sphi 0, %s71
      %s72 = sphi 0, %s69
      %s73 = sphi 0, %s72
      %s89 = sphi 0, %s73
    $region4: #{upblock_forward.8} parent=1 // loop_header_branch
      %13 = sbr.rel (%p11) target = $region8
    $region5: #{upblock_forward.8} parent=1 // loop_body
      %s15 = ssub.s32 %s10, 1
      %s16 = ssub.s32 %s10, 2
      %s17 = sadd.s32 %s10, 1
      %s19 = sadd.s32 %s18, 1
      %p22 = scmp.eq.s32.totalorder %s10, 3
      %p23 = scmp.ne.s32.totalorder %s18, %s20
      %p24 = scmp.eq.s32.totalorder %s10, 0
      %p25 = por %p23, %p24
      %p26 = scmp.ne.s32.totalorder %s18, %s20
      %p27 = scmp.eq.s32.totalorder %s15, 3
      %p28 = por %p26, %p27
      %p29 = scmp.ne.s32.totalorder %s20, %s21
      %p30 = scmp.eq.s32.totalorder %s15, 0
      %p31 = por %p29, %p30
      %p32 = scmp.ne.s32.totalorder %s20, %s21
      %p33 = scmp.eq.s32.totalorder %s16, 3
      %p34 = por %p32, %p33
      %p36 = scmp.ne.s32.totalorder %s21, %s35
      %p37 = scmp.eq.s32.totalorder %s16, 0
      %p38 = por %p36, %p37
      %s39 = sadd.s32 %s10, 1
      %s40 = sadd.s32 %s17, 1
      %s41 = ssub.s32 %s39, %s40
      %p42 = scmp.eq.s32.totalorder %s41, 0
      %s44 = sadd.s32 %s43, 1
      %s45 = scalar_select %p42, %s43, %s44
      %p48 = pneg %p42
      %p49 = scmp.eq.s32.totalorder %s10, 3
      %p50 = por %p48, %p49
      %p51 = scmp.ne.s32.totalorder %s43, %s46
      %p52 = scmp.eq.s32.totalorder %s10, 0
      %p53 = por %p51, %p52
      %p54 = scmp.ne.s32.totalorder %s43, %s46
      %p55 = scmp.eq.s32.totalorder %s15, 3
      %p56 = por %p54, %p55
      %p57 = scmp.ne.s32.totalorder %s46, %s47
      %p58 = scmp.eq.s32.totalorder %s15, 0
      %p59 = por %p57, %p58
      %p60 = scmp.ne.s32.totalorder %s46, %s47
      %p61 = scmp.eq.s32.totalorder %s16, 3
      %p62 = por %p60, %p61
      %p64 = scmp.ne.s32.totalorder %s47, %s63
      %p65 = scmp.eq.s32.totalorder %s16, 0
      %p66 = por %p64, %p65
      %s67 = ssub.s32 %s10, %s17
      %p68 = scmp.eq.s32.totalorder %s67, 0
      %s70 = sadd.s32 %s69, 1
      %s71 = scalar_select %p68, %s69, %s70
      %p74 = pneg %p68
      %p75 = scmp.eq.s32.totalorder %s10, 3
      %p76 = por %p74, %p75
      %p77 = scmp.ne.s32.totalorder %s69, %s72
      %p78 = scmp.eq.s32.totalorder %s10, 0
      %p79 = por %p77, %p78
      %p80 = scmp.ne.s32.totalorder %s69, %s72
      %p81 = scmp.eq.s32.totalorder %s15, 3
      %p82 = por %p80, %p81
      %p83 = scmp.ne.s32.totalorder %s72, %s73
      %p84 = scmp.eq.s32.totalorder %s15, 0
      %p85 = por %p83, %p84
      %p86 = scmp.ne.s32.totalorder %s72, %s73
      %p87 = scmp.eq.s32.totalorder %s16, 3
      %p88 = por %p86, %p87
      %p90 = scmp.ne.s32.totalorder %s73, %s89
      %p91 = scmp.eq.s32.totalorder %s16, 0
      %p92 = por %p90, %p91
      %p93 = scmp.le.s32.totalorder 1, %s10
      %p94 = scmp.lt.s32.totalorder %s10, 5
      %p95 = pnand %p93, %p94
      %p96 = pneg %p95
      // Predicated region
      $region9: #{upblock_forward.8} parent=5 // pred_check
        _
      $region10: #{upblock_forward.8} parent=5 // pred_check_branch
        %98 = sbr.rel (%p95) target = $region12
      $region11: #{upblock_forward.8} parent=5 // pred_region
        %s99 = ssub.s32 %s10, 1
        // Predicated region
        $region13: #{upblock_forward.8} parent=11 // pred_check
          %p100 = pneg %p31
        $region14: #{upblock_forward.8} parent=11 // pred_check_branch
          %102 = sbr.rel (%p100) target = $region16
        $region15: #{upblock_forward.8} parent=11 // pred_region
          _
        $region16: #{upblock_forward.8} parent=11 // pred_fallthru
          _
      $region12: #{upblock_forward.8} parent=5 // pred_fallthru
        _
      %p103 = scmp.lt.s32.totalorder %s10, 4
      // Predicated region
      $region17: #{upblock_forward.8} parent=5 // pred_check
        %p104 = pneg %p103
      $region18: #{upblock_forward.8} parent=5 // pred_check_branch
        %106 = sbr.rel (%p104) target = $region20
      $region19: #{upblock_forward.8} parent=5 // pred_region
        _
      $region20: #{upblock_forward.8} parent=5 // pred_fallthru
        _
      %p107 = scmp.le.s32.totalorder 1, %s10
      %p108 = scmp.lt.s32.totalorder %s10, 5
      %p109 = pnand %p107, %p108
      %p110 = pneg %p109
      // Predicated region
      $region21: #{upblock_forward.8} parent=5 // pred_check
        _
      $region22: #{upblock_forward.8} parent=5 // pred_check_branch
        %112 = sbr.rel (%p109) target = $region24
      $region23: #{upblock_forward.8} parent=5 // pred_region
        %s113 = ssub.s32 %s10, 1
        %p114 = pneg %p31
        %p115 = pneg %p28
        %p116 = pneg %p59
        %p117 = pneg %p56
        %s118 = sand.u32 %s46, 1
        %s119 = sand.u32 %s46, 1
        %s120 = smul.addr %s119, 32
        %s121 = scalar_lea.vmem [#allocation4], %s120
        %p122 = pneg %p85
        %p123 = pneg %p82
        %p124 = scmp.lt.s32.totalorder %s15, 3
        %s125 = scalar_select %p124, %s15, 3
        %s126 = smul.addr %s125, 2
        %s127 = smul.addr %s126, 8
        %s128 = scalar_lea.vmem %s3, %s127
        %s129 = sadd.s32 %s15, 1
        %s130 = smul.u32 4, %s129
        %p131 = scmp.lt.s32.totalorder %s15, 3
        %s132 = scalar_select %p131, %s15, 3
        %s133 = smul.addr %s132, 2
        %s134 = smul.addr %s133, 8
        %s135 = scalar_lea.vmem %s3, %s134
        %s137 = sadd.s32 %s15, 1
        %s138 = smul.u32 %s137, 512
        %s139 = ssub.s32 %s138, 128
        %s140 = sshra.s32 %s139, 7
        %s141 = sand.u32 %s139, 127
        %s142 = smul.addr %s140, 4
        %s143 = scalar_lea.vmem %s0, %s142
        // Predicated region
        $region25: #{upblock_forward.8} parent=23 // pred_check
          _
        $region26: #{upblock_forward.8} parent=23 // pred_check_branch
          %145 = sbr.rel (0) target = $region28
        $region27: #{upblock_forward.8} parent=23 // pred_region
          loop: start=0, step=1, limit=1
          $region29: #{upblock_forward.8} parent=27 // loop_pre_header
            _
          $region30: #{upblock_forward.8} parent=27 // loop_header
            %s147 = sphi 0, %s151
            %p148 = scmp.ge.s32.totalorder %s147, 1
            %s152 = sphi %s143, %s143
            %s153 = sphi [#allocation2], [#allocation2]
          $region31: #{upblock_forward.8} parent=27 // loop_header_branch
            %150 = sbr.rel (%p148) target = $region35
          $region32: #{upblock_forward.8} parent=27 // loop_body
            %v154 = vld [vmem:[%s152] sm:$0xff]
            %155 = vst [vmem:[%s153] sm:$0xff] %v154
            %v156 = vld [vmem:[%s152 + $0x8] sm:$0xff]
            %157 = vst [vmem:[%s153 + $0x8] sm:$0xff] %v156
            %v158 = vld [vmem:[%s152 + $0x10] sm:$0xff]
            %159 = vst [vmem:[%s153 + $0x10] sm:$0xff] %v158
            %v160 = vld [vmem:[%s152 + $0x60] sm:$0xff]
            %161 = vst [vmem:[%s153 + $0x18] sm:$0xff] %v160
            %v162 = vld [vmem:[%s152 + $0x68] sm:$0xff]
            %163 = vst [vmem:[%s153 + $0x20] sm:$0xff] %v162
            %v164 = vld [vmem:[%s152 + $0x70] sm:$0xff]
            %165 = vst [vmem:[%s153 + $0x28] sm:$0xff] %v164
          $region33: #{upblock_forward.8} parent=27 // loop_footer
            %s151 = sadd.s32 1, %s147
          $region34: #{upblock_forward.8} parent=27 // loop_footer_branch
            %146 = sbr.rel target = $region30
          $region35: #{upblock_forward.8} parent=27 // loop_exit
            _
        $region28: #{upblock_forward.8} parent=23 // pred_fallthru
          _
        // Predicated region
        $region36: #{upblock_forward.8} parent=23 // pred_check
          _
        $region37: #{upblock_forward.8} parent=23 // pred_check_branch
          %167 = sbr.rel target = $region39
        $region38: #{upblock_forward.8} parent=23 // pred_region
          _
        $region39: #{upblock_forward.8} parent=23 // pred_fallthru
          _
        // Predicated region
        $region40: #{upblock_forward.8} parent=23 // pred_check
          _
        $region41: #{upblock_forward.8} parent=23 // pred_check_branch
          %170 = sbr.rel (0) target = $region43
        $region42: #{upblock_forward.8} parent=23 // pred_region
          %171 = vsyncadd [#allocation3], 768
        $region43: #{upblock_forward.8} parent=23 // pred_fallthru
          _
        %s172 = smul.u32 4, 2
        %s173 = smul.u32 %s172, 6
        %s174 = sshll.u32 %s173, 4
        %175 = dma.done [#allocation3], %s174
        %v176 = vld [vmem:[#allocation2] sm:$0xff]
        %v177 = vld [vmem:[#allocation2 + $0x8] sm:$0xff]
        %v178 = vld [vmem:[#allocation2 + $0x10] sm:$0xf]
        %v179 = vld [vmem:[#allocation2 + $0x18] sm:$0x11]
        %v180 = vld [vmem:[#allocation2 + $0x20] sm:$0x11]
        %v181 = vld [vmem:[#allocation2 + $0x28] sm:$0x1]
        %v182 = vld [vmem:[%s1] sm:$0xf]
        %s183 = scalar_lea.vmem %s1, 4
        %v184 = vld [vmem:[%s183] sm:$0xf]
        %v191 = vunpack.c.l.b16 %v176
        %v192 = vunpack.c.h.b16 %v176
        %v193 = vunpack.c.l.b16 %v177
        %v194 = vunpack.c.h.b16 %v177
        %v195 = vunpack.c.l.b16 %v178
        %v196 = vunpack.c.l.b16 %v179
        %v197 = vunpack.c.h.b16 %v179
        %v198 = vunpack.c.l.b16 %v180
        %v199 = vunpack.c.h.b16 %v180
        %v200 = vunpack.c.l.b16 %v181
        %v201 = vpack.c.b16 %v196, %v191
        %v202 = vpack.c.b16 %v197, %v192
        %v203 = vpack.c.b16 %v198, %v193
        %v204 = vpack.c.b16 %v199, %v194
        %v205 = vpack.c.b16 %v200, %v195
        %206 = vrot.lane.b32.xlu0 %v201, 100
        %v207 = vpop.permute.xlu0 %206
        %208 = vrot.lane.b32.xlu0 %v202, 100
        %v209 = vpop.permute.xlu0 %208
        %210 = vrot.lane.b32.xlu0 %v203, 100
        %v211 = vpop.permute.xlu0 %210
        %212 = vrot.lane.b32.xlu0 %v204, 100
        %v213 = vpop.permute.xlu0 %212
        %214 = vrot.lane.b32.xlu0 %v205, 100
        %v215 = vpop.permute.xlu0 %214
        %vm216 = vcmask 818176
        %v217 = vsel %vm216, %v207, %v209
        %v218 = vsel %vm216, %v209, %v211
        %v219 = vsel %vm216, %v211, %v213
        %v220 = vsel %vm216, %v213, %v215
        %vm221 = vcmask 72704
        %v223 = vsel %vm221, %v184, 0
        %vm225 = vcmask 1043456
        %vm226 = vcmask 1044480
        %v227 = vsel %vm225, 4294967295, 65535
        %v228 = vsel %vm226, %v227, 0
        %v230 = vand.u32 %v217, %v228
        %v233 = vand.u32 %v218, %v228
        %v236 = vand.u32 %v219, %v228
        %v239 = vand.u32 %v220, %v228
        %241 = vmatpush.bf16.msra.mxu0 0
        %242 = vmatpush.bf16.msra.mxu0 0
        %243 = vmatpush.bf16.msra.mxu0 0
        %244 = vmatpush.bf16.msra.mxu0 0
        %245 = vmatpush.bf16.msra.mxu0 0
        %246 = vmatpush.bf16.msra.mxu0 0
        %247 = vmatpush.bf16.msra.mxu0 0
        %248 = vmatpush.bf16.msra.mxu0 %v230
        %249 = vmatmul.bf16.gmra.mxu0 %v223
        %v250 = vpop.f32.mrf.mxu0
        %v251 = vadd.f32 0.0, %v250
        %v252 = vpop.f32.mrf.mxu0
        %253 = vdwg.mxu0
        %254 = vmatpush.bf16.msra.mxu0 0
        %255 = vmatpush.bf16.msra.mxu0 0
        %256 = vmatpush.bf16.msra.mxu0 0
        %257 = vmatpush.bf16.msra.mxu0 0
        %258 = vmatpush.bf16.msra.mxu0 0
        %259 = vmatpush.bf16.msra.mxu0 0
        %260 = vmatpush.bf16.msra.mxu0 0
        %261 = vmatpush.bf16.msra.mxu0 %v233
        %262 = vmatmul.bf16.gmra.mxu0 %v223
        %v263 = vpop.f32.mrf.mxu0
        %v264 = vadd.f32 0.0, %v263
        %v265 = vpop.f32.mrf.mxu0
        %266 = vdwg.mxu0
        %267 = vmatpush.bf16.msra.mxu0 0
        %268 = vmatpush.bf16.msra.mxu0 0
        %269 = vmatpush.bf16.msra.mxu0 0
        %270 = vmatpush.bf16.msra.mxu0 0
        %271 = vmatpush.bf16.msra.mxu0 0
        %272 = vmatpush.bf16.msra.mxu0 0
        %273 = vmatpush.bf16.msra.mxu0 0
        %274 = vmatpush.bf16.msra.mxu0 %v236
        %275 = vmatmul.bf16.gmra.mxu0 %v223
        %v276 = vpop.f32.mrf.mxu0
        %v277 = vadd.f32 0.0, %v276
        %v278 = vpop.f32.mrf.mxu0
        %279 = vdwg.mxu0
        %280 = vmatpush.bf16.msra.mxu0 0
        %281 = vmatpush.bf16.msra.mxu0 0
        %282 = vmatpush.bf16.msra.mxu0 0
        %283 = vmatpush.bf16.msra.mxu0 0
        %284 = vmatpush.bf16.msra.mxu0 0
        %285 = vmatpush.bf16.msra.mxu0 0
        %286 = vmatpush.bf16.msra.mxu0 0
        %287 = vmatpush.bf16.msra.mxu0 %v239
        %288 = vmatmul.bf16.gmra.mxu0 %v223
        %v289 = vpop.f32.mrf.mxu0
        %v290 = vadd.f32 0.0, %v289
        %v291 = vpop.f32.mrf.mxu0
        %292 = vdwg.mxu0
        %293 = vrot.lane.b32.xlu0 %v201, 101
        %v294 = vpop.permute.xlu0 %293
        %295 = vrot.lane.b32.xlu0 %v202, 101
        %v296 = vpop.permute.xlu0 %295
        %297 = vrot.lane.b32.xlu0 %v203, 101
        %v298 = vpop.permute.xlu0 %297
        %299 = vrot.lane.b32.xlu0 %v204, 101
        %v300 = vpop.permute.xlu0 %299
        %301 = vrot.lane.b32.xlu0 %v205, 101
        %v302 = vpop.permute.xlu0 %301
        %vm303 = vcmask 826368
        %v304 = vsel %vm303, %v294, %v296
        %v305 = vsel %vm303, %v296, %v298
        %v306 = vsel %vm303, %v298, %v300
        %v307 = vsel %vm303, %v300, %v302
        %v309 = vsel %vm221, %v182, 0
        %v312 = vand.u32 %v304, %v228
        %v315 = vand.u32 %v305, %v228
        %v318 = vand.u32 %v306, %v228
        %v321 = vand.u32 %v307, %v228
        %323 = vmatpush.bf16.msra.mxu0 0
        %324 = vmatpush.bf16.msra.mxu0 0
        %325 = vmatpush.bf16.msra.mxu0 0
        %326 = vmatpush.bf16.msra.mxu0 0
        %327 = vmatpush.bf16.msra.mxu0 0
        %328 = vmatpush.bf16.msra.mxu0 0
        %329 = vmatpush.bf16.msra.mxu0 0
        %330 = vmatpush.bf16.msra.mxu0 %v312
        %331 = vmatmul.bf16.gmra.mxu0 %v309
        %v332 = vpop.f32.mrf.mxu0
        %v333 = vadd.f32 %v251, %v332
        %v334 = vpop.f32.mrf.mxu0
        %335 = vdwg.mxu0
        %336 = vmatpush.bf16.msra.mxu0 0
        %337 = vmatpush.bf16.msra.mxu0 0
        %338 = vmatpush.bf16.msra.mxu0 0
        %339 = vmatpush.bf16.msra.mxu0 0
        %340 = vmatpush.bf16.msra.mxu0 0
        %341 = vmatpush.bf16.msra.mxu0 0
        %342 = vmatpush.bf16.msra.mxu0 0
        %343 = vmatpush.bf16.msra.mxu0 %v315
        %344 = vmatmul.bf16.gmra.mxu0 %v309
        %v345 = vpop.f32.mrf.mxu0
        %v346 = vadd.f32 %v264, %v345
        %v347 = vpop.f32.mrf.mxu0
        %348 = vdwg.mxu0
        %349 = vmatpush.bf16.msra.mxu0 0
        %350 = vmatpush.bf16.msra.mxu0 0
        %351 = vmatpush.bf16.msra.mxu0 0
        %352 = vmatpush.bf16.msra.mxu0 0
        %353 = vmatpush.bf16.msra.mxu0 0
        %354 = vmatpush.bf16.msra.mxu0 0
        %355 = vmatpush.bf16.msra.mxu0 0
        %356 = vmatpush.bf16.msra.mxu0 %v318
        %357 = vmatmul.bf16.gmra.mxu0 %v309
        %v358 = vpop.f32.mrf.mxu0
        %v359 = vadd.f32 %v277, %v358
        %v360 = vpop.f32.mrf.mxu0
        %361 = vdwg.mxu0
        %362 = vmatpush.bf16.msra.mxu0 0
        %363 = vmatpush.bf16.msra.mxu0 0
        %364 = vmatpush.bf16.msra.mxu0 0
        %365 = vmatpush.bf16.msra.mxu0 0
        %366 = vmatpush.bf16.msra.mxu0 0
        %367 = vmatpush.bf16.msra.mxu0 0
        %368 = vmatpush.bf16.msra.mxu0 0
        %369 = vmatpush.bf16.msra.mxu0 %v321
        %370 = vmatmul.bf16.gmra.mxu0 %v309
        %v371 = vpop.f32.mrf.mxu0
        %v372 = vadd.f32 %v290, %v371
        %v373 = vpop.f32.mrf.mxu0
        %374 = vdwg.mxu0
        %s375 = scalar_lea.vmem %s1, 8
        %v376 = vld [vmem:[%s375] sm:$0xf]
        %377 = vrot.lane.b32.xlu0 %v201, 99
        %v378 = vpop.permute.xlu0 %377
        %379 = vrot.lane.b32.xlu0 %v202, 99
        %v380 = vpop.permute.xlu0 %379
        %381 = vrot.lane.b32.xlu0 %v203, 99
        %v382 = vpop.permute.xlu0 %381
        %383 = vrot.lane.b32.xlu0 %v204, 99
        %v384 = vpop.permute.xlu0 %383
        %385 = vrot.lane.b32.xlu0 %v205, 99
        %v386 = vpop.permute.xlu0 %385
        %vm387 = vcmask 809984
        %v388 = vsel %vm387, %v378, %v380
        %v389 = vsel %vm387, %v380, %v382
        %v390 = vsel %vm387, %v382, %v384
        %v391 = vsel %vm387, %v384, %v386
        %v393 = vsel %vm221, %v376, 0
        %v396 = vand.u32 %v388, %v228
        %v399 = vand.u32 %v389, %v228
        %v402 = vand.u32 %v390, %v228
        %v405 = vand.u32 %v391, %v228
        %407 = vmatpush.bf16.msra.mxu0 0
        %408 = vmatpush.bf16.msra.mxu0 0
        %409 = vmatpush.bf16.msra.mxu0 0
        %410 = vmatpush.bf16.msra.mxu0 0
        %411 = vmatpush.bf16.msra.mxu0 0
        %412 = vmatpush.bf16.msra.mxu0 0
        %413 = vmatpush.bf16.msra.mxu0 0
        %414 = vmatpush.bf16.msra.mxu0 %v396
        %415 = vmatmul.bf16.gmra.mxu0 %v393
        %v416 = vpop.f32.mrf.mxu0
        %v417 = vadd.f32 0.0, %v416
        %v418 = vpop.f32.mrf.mxu0
        %419 = vdwg.mxu0
        %420 = vmatpush.bf16.msra.mxu0 0
        %421 = vmatpush.bf16.msra.mxu0 0
        %422 = vmatpush.bf16.msra.mxu0 0
        %423 = vmatpush.bf16.msra.mxu0 0
        %424 = vmatpush.bf16.msra.mxu0 0
        %425 = vmatpush.bf16.msra.mxu0 0
        %426 = vmatpush.bf16.msra.mxu0 0
        %427 = vmatpush.bf16.msra.mxu0 %v399
        %428 = vmatmul.bf16.gmra.mxu0 %v393
        %v429 = vpop.f32.mrf.mxu0
        %v430 = vadd.f32 0.0, %v429
        %v431 = vpop.f32.mrf.mxu0
        %432 = vdwg.mxu0
        %433 = vmatpush.bf16.msra.mxu0 0
        %434 = vmatpush.bf16.msra.mxu0 0
        %435 = vmatpush.bf16.msra.mxu0 0
        %436 = vmatpush.bf16.msra.mxu0 0
        %437 = vmatpush.bf16.msra.mxu0 0
        %438 = vmatpush.bf16.msra.mxu0 0
        %439 = vmatpush.bf16.msra.mxu0 0
        %440 = vmatpush.bf16.msra.mxu0 %v402
        %441 = vmatmul.bf16.gmra.mxu0 %v393
        %v442 = vpop.f32.mrf.mxu0
        %v443 = vadd.f32 0.0, %v442
        %v444 = vpop.f32.mrf.mxu0
        %445 = vdwg.mxu0
        %446 = vmatpush.bf16.msra.mxu0 0
        %447 = vmatpush.bf16.msra.mxu0 0
        %448 = vmatpush.bf16.msra.mxu0 0
        %449 = vmatpush.bf16.msra.mxu0 0
        %450 = vmatpush.bf16.msra.mxu0 0
        %451 = vmatpush.bf16.msra.mxu0 0
        %452 = vmatpush.bf16.msra.mxu0 0
        %453 = vmatpush.bf16.msra.mxu0 %v405
        %454 = vmatmul.bf16.gmra.mxu0 %v393
        %v455 = vpop.f32.mrf.mxu0
        %v456 = vadd.f32 0.0, %v455
        %v457 = vpop.f32.mrf.mxu0
        %458 = vdwg.mxu0
        %v459 = vadd.f32 %v333, %v417
        %v460 = vadd.f32 %v346, %v430
        %v461 = vadd.f32 %v359, %v443
        %v462 = vadd.f32 %v372, %v456
        %s463 = scalar_lea.vmem %s1, 12
        %v464 = vld [vmem:[%s463] sm:$0xf]
        %465 = vrot.lane.b32.xlu0 %v201, 1
        %v466 = vpop.permute.xlu0 %465
        %467 = vrot.lane.b32.xlu0 %v202, 1
        %v468 = vpop.permute.xlu0 %467
        %469 = vrot.lane.b32.xlu0 %v203, 1
        %v470 = vpop.permute.xlu0 %469
        %471 = vrot.lane.b32.xlu0 %v204, 1
        %v472 = vpop.permute.xlu0 %471
        %473 = vrot.lane.b32.xlu0 %v205, 1
        %v474 = vpop.permute.xlu0 %473
        %vm475 = vcmask 7168
        %v476 = vsel %vm475, %v466, %v468
        %v477 = vsel %vm475, %v468, %v470
        %v478 = vsel %vm475, %v470, %v472
        %v479 = vsel %vm475, %v472, %v474
        %v481 = vsel %vm221, %v464, 0
        %v484 = vand.u32 %v476, %v228
        %v487 = vand.u32 %v477, %v228
        %v490 = vand.u32 %v478, %v228
        %v493 = vand.u32 %v479, %v228
        %495 = vmatpush.bf16.msra.mxu0 0
        %496 = vmatpush.bf16.msra.mxu0 0
        %497 = vmatpush.bf16.msra.mxu0 0
        %498 = vmatpush.bf16.msra.mxu0 0
        %499 = vmatpush.bf16.msra.mxu0 0
        %500 = vmatpush.bf16.msra.mxu0 0
        %501 = vmatpush.bf16.msra.mxu0 0
        %502 = vmatpush.bf16.msra.mxu0 %v484
        %503 = vmatmul.bf16.gmra.mxu0 %v481
        %v504 = vpop.f32.mrf.mxu0
        %v505 = vadd.f32 0.0, %v504
        %v506 = vpop.f32.mrf.mxu0
        %507 = vdwg.mxu0
        %508 = vmatpush.bf16.msra.mxu0 0
        %509 = vmatpush.bf16.msra.mxu0 0
        %510 = vmatpush.bf16.msra.mxu0 0
        %511 = vmatpush.bf16.msra.mxu0 0
        %512 = vmatpush.bf16.msra.mxu0 0
        %513 = vmatpush.bf16.msra.mxu0 0
        %514 = vmatpush.bf16.msra.mxu0 0
        %515 = vmatpush.bf16.msra.mxu0 %v487
        %516 = vmatmul.bf16.gmra.mxu0 %v481
        %v517 = vpop.f32.mrf.mxu0
        %v518 = vadd.f32 0.0, %v517
        %v519 = vpop.f32.mrf.mxu0
        %520 = vdwg.mxu0
        %521 = vmatpush.bf16.msra.mxu0 0
        %522 = vmatpush.bf16.msra.mxu0 0
        %523 = vmatpush.bf16.msra.mxu0 0
        %524 = vmatpush.bf16.msra.mxu0 0
        %525 = vmatpush.bf16.msra.mxu0 0
        %526 = vmatpush.bf16.msra.mxu0 0
        %527 = vmatpush.bf16.msra.mxu0 0
        %528 = vmatpush.bf16.msra.mxu0 %v490
        %529 = vmatmul.bf16.gmra.mxu0 %v481
        %v530 = vpop.f32.mrf.mxu0
        %v531 = vadd.f32 0.0, %v530
        %v532 = vpop.f32.mrf.mxu0
        %533 = vdwg.mxu0
        %534 = vmatpush.bf16.msra.mxu0 0
        %535 = vmatpush.bf16.msra.mxu0 0
        %536 = vmatpush.bf16.msra.mxu0 0
        %537 = vmatpush.bf16.msra.mxu0 0
        %538 = vmatpush.bf16.msra.mxu0 0
        %539 = vmatpush.bf16.msra.mxu0 0
        %540 = vmatpush.bf16.msra.mxu0 0
        %541 = vmatpush.bf16.msra.mxu0 %v493
        %542 = vmatmul.bf16.gmra.mxu0 %v481
        %v543 = vpop.f32.mrf.mxu0
        %v544 = vadd.f32 0.0, %v543
        %v545 = vpop.f32.mrf.mxu0
        %546 = vdwg.mxu0
        %v547 = vadd.f32 %v459, %v505
        %v548 = vadd.f32 %v460, %v518
        %v549 = vadd.f32 %v461, %v531
        %v550 = vadd.f32 %v462, %v544
        %v551 = vld [vmem:[#allocation2 + $0x4] sm:$0xff]
        %v552 = vld [vmem:[#allocation2 + $0xc] sm:$0xff]
        %v553 = vld [vmem:[#allocation2 + $0x1c] sm:$0x11]
        %v554 = vld [vmem:[#allocation2 + $0x24] sm:$0x11]
        %s555 = scalar_lea.vmem %s1, 16
        %v556 = vld [vmem:[%s555] sm:$0xf]
        %v561 = vunpack.c.l.b16 %v551
        %v562 = vunpack.c.h.b16 %v551
        %v563 = vunpack.c.l.b16 %v552
        %v564 = vunpack.c.h.b16 %v552
        %v565 = vunpack.c.l.b16 %v553
        %v566 = vunpack.c.h.b16 %v553
        %v567 = vunpack.c.l.b16 %v554
        %v568 = vunpack.c.h.b16 %v554
        %v569 = vpack.c.b16 %v565, %v561
        %v570 = vpack.c.b16 %v566, %v562
        %v571 = vpack.c.b16 %v567, %v563
        %v572 = vpack.c.b16 %v568, %v564
        %v574 = vsel %vm221, %v556, 0
        %v577 = vand.u32 %v569, %v228
        %v580 = vand.u32 %v570, %v228
        %v583 = vand.u32 %v571, %v228
        %v586 = vand.u32 %v572, %v228
        %588 = vmatpush.bf16.msra.mxu0 0
        %589 = vmatpush.bf16.msra.mxu0 0
        %590 = vmatpush.bf16.msra.mxu0 0
        %591 = vmatpush.bf16.msra.mxu0 0
        %592 = vmatpush.bf16.msra.mxu0 0
        %593 = vmatpush.bf16.msra.mxu0 0
        %594 = vmatpush.bf16.msra.mxu0 0
        %595 = vmatpush.bf16.msra.mxu0 %v577
        %596 = vmatmul.bf16.gmra.mxu0 %v574
        %v597 = vpop.f32.mrf.mxu0
        %v598 = vadd.f32 0.0, %v597
        %v599 = vpop.f32.mrf.mxu0
        %600 = vdwg.mxu0
        %601 = vmatpush.bf16.msra.mxu0 0
        %602 = vmatpush.bf16.msra.mxu0 0
        %603 = vmatpush.bf16.msra.mxu0 0
        %604 = vmatpush.bf16.msra.mxu0 0
        %605 = vmatpush.bf16.msra.mxu0 0
        %606 = vmatpush.bf16.msra.mxu0 0
        %607 = vmatpush.bf16.msra.mxu0 0
        %608 = vmatpush.bf16.msra.mxu0 %v580
        %609 = vmatmul.bf16.gmra.mxu0 %v574
        %v610 = vpop.f32.mrf.mxu0
        %v611 = vadd.f32 0.0, %v610
        %v612 = vpop.f32.mrf.mxu0
        %613 = vdwg.mxu0
        %614 = vmatpush.bf16.msra.mxu0 0
        %615 = vmatpush.bf16.msra.mxu0 0
        %616 = vmatpush.bf16.msra.mxu0 0
        %617 = vmatpush.bf16.msra.mxu0 0
        %618 = vmatpush.bf16.msra.mxu0 0
        %619 = vmatpush.bf16.msra.mxu0 0
        %620 = vmatpush.bf16.msra.mxu0 0
        %621 = vmatpush.bf16.msra.mxu0 %v583
        %622 = vmatmul.bf16.gmra.mxu0 %v574
        %v623 = vpop.f32.mrf.mxu0
        %v624 = vadd.f32 0.0, %v623
        %v625 = vpop.f32.mrf.mxu0
        %626 = vdwg.mxu0
        %627 = vmatpush.bf16.msra.mxu0 0
        %628 = vmatpush.bf16.msra.mxu0 0
        %629 = vmatpush.bf16.msra.mxu0 0
        %630 = vmatpush.bf16.msra.mxu0 0
        %631 = vmatpush.bf16.msra.mxu0 0
        %632 = vmatpush.bf16.msra.mxu0 0
        %633 = vmatpush.bf16.msra.mxu0 0
        %634 = vmatpush.bf16.msra.mxu0 %v586
        %635 = vmatmul.bf16.gmra.mxu0 %v574
        %v636 = vpop.f32.mrf.mxu0
        %v637 = vadd.f32 0.0, %v636
        %v638 = vpop.f32.mrf.mxu0
        %639 = vdwg.mxu0
        %v640 = vadd.f32 %v547, %v598
        %v641 = vadd.f32 %v548, %v611
        %v642 = vadd.f32 %v549, %v624
        %v643 = vadd.f32 %v550, %v637
        %v644 = vld [vmem:[#allocation2 + $0x4] sm:$0xff]
        %v645 = vld [vmem:[#allocation2 + $0xc] sm:$0xff]
        %v646 = vld [vmem:[#allocation2 + $0x14] sm:$0xf]
        %v647 = vld [vmem:[#allocation2 + $0x1c] sm:$0x11]
        %v648 = vld [vmem:[#allocation2 + $0x24] sm:$0x11]
        %v649 = vld [vmem:[#allocation2 + $0x2c] sm:$0x1]
        %s650 = scalar_lea.vmem %s1, 20
        %v651 = vld [vmem:[%s650] sm:$0xf]
        %v658 = vunpack.c.l.b16 %v644
        %v659 = vunpack.c.h.b16 %v644
        %v660 = vunpack.c.l.b16 %v645
        %v661 = vunpack.c.h.b16 %v645
        %v662 = vunpack.c.l.b16 %v646
        %v663 = vunpack.c.l.b16 %v647
        %v664 = vunpack.c.h.b16 %v647
        %v665 = vunpack.c.l.b16 %v648
        %v666 = vunpack.c.h.b16 %v648
        %v667 = vunpack.c.l.b16 %v649
        %v668 = vpack.c.b16 %v663, %v658
        %v669 = vpack.c.b16 %v664, %v659
        %v670 = vpack.c.b16 %v665, %v660
        %v671 = vpack.c.b16 %v666, %v661
        %v672 = vpack.c.b16 %v667, %v662
        %673 = vrot.lane.b32.xlu0 %v668, 127
        %v674 = vpop.permute.xlu0 %673
        %675 = vrot.lane.b32.xlu0 %v669, 127
        %v676 = vpop.permute.xlu0 %675
        %677 = vrot.lane.b32.xlu0 %v670, 127
        %v678 = vpop.permute.xlu0 %677
        %679 = vrot.lane.b32.xlu0 %v671, 127
        %v680 = vpop.permute.xlu0 %679
        %681 = vrot.lane.b32.xlu0 %v672, 127
        %v682 = vpop.permute.xlu0 %681
        %vm683 = vcmask 1039360
        %v684 = vsel %vm683, %v674, %v676
        %v685 = vsel %vm683, %v676, %v678
        %v686 = vsel %vm683, %v678, %v680
        %v687 = vsel %vm683, %v680, %v682
        %v689 = vsel %vm221, %v651, 0
        %v692 = vand.u32 %v684, %v228
        %v695 = vand.u32 %v685, %v228
        %v698 = vand.u32 %v686, %v228
        %v701 = vand.u32 %v687, %v228
        %703 = vmatpush.bf16.msra.mxu0 0
        %704 = vmatpush.bf16.msra.mxu0 0
        %705 = vmatpush.bf16.msra.mxu0 0
        %706 = vmatpush.bf16.msra.mxu0 0
        %707 = vmatpush.bf16.msra.mxu0 0
        %708 = vmatpush.bf16.msra.mxu0 0
        %709 = vmatpush.bf16.msra.mxu0 0
        %710 = vmatpush.bf16.msra.mxu0 %v692
        %711 = vmatmul.bf16.gmra.mxu0 %v689
        %v712 = vpop.f32.mrf.mxu0
        %v713 = vadd.f32 0.0, %v712
        %v714 = vpop.f32.mrf.mxu0
        %715 = vdwg.mxu0
        %716 = vmatpush.bf16.msra.mxu0 0
        %717 = vmatpush.bf16.msra.mxu0 0
        %718 = vmatpush.bf16.msra.mxu0 0
        %719 = vmatpush.bf16.msra.mxu0 0
        %720 = vmatpush.bf16.msra.mxu0 0
        %721 = vmatpush.bf16.msra.mxu0 0
        %722 = vmatpush.bf16.msra.mxu0 0
        %723 = vmatpush.bf16.msra.mxu0 %v695
        %724 = vmatmul.bf16.gmra.mxu0 %v689
        %v725 = vpop.f32.mrf.mxu0
        %v726 = vadd.f32 0.0, %v725
        %v727 = vpop.f32.mrf.mxu0
        %728 = vdwg.mxu0
        %729 = vmatpush.bf16.msra.mxu0 0
        %730 = vmatpush.bf16.msra.mxu0 0
        %731 = vmatpush.bf16.msra.mxu0 0
        %732 = vmatpush.bf16.msra.mxu0 0
        %733 = vmatpush.bf16.msra.mxu0 0
        %734 = vmatpush.bf16.msra.mxu0 0
        %735 = vmatpush.bf16.msra.mxu0 0
        %736 = vmatpush.bf16.msra.mxu0 %v698
        %737 = vmatmul.bf16.gmra.mxu0 %v689
        %v738 = vpop.f32.mrf.mxu0
        %v739 = vadd.f32 0.0, %v738
        %v740 = vpop.f32.mrf.mxu0
        %741 = vdwg.mxu0
        %742 = vmatpush.bf16.msra.mxu0 0
        %743 = vmatpush.bf16.msra.mxu0 0
        %744 = vmatpush.bf16.msra.mxu0 0
        %745 = vmatpush.bf16.msra.mxu0 0
        %746 = vmatpush.bf16.msra.mxu0 0
        %747 = vmatpush.bf16.msra.mxu0 0
        %748 = vmatpush.bf16.msra.mxu0 0
        %749 = vmatpush.bf16.msra.mxu0 %v701
        %750 = vmatmul.bf16.gmra.mxu0 %v689
        %v751 = vpop.f32.mrf.mxu0
        %v752 = vadd.f32 0.0, %v751
        %v753 = vpop.f32.mrf.mxu0
        %754 = vdwg.mxu0
        %v755 = vadd.f32 %v640, %v713
        %v756 = vadd.f32 %v641, %v726
        %v757 = vadd.f32 %v642, %v739
        %v758 = vadd.f32 %v643, %v752
        %s759 = scalar_lea.vmem %s1, 24
        %v760 = vld [vmem:[%s759] sm:$0xf]
        %761 = vrot.lane.b32.xlu0 %v668, 29
        %v762 = vpop.permute.xlu0 %761
        %763 = vrot.lane.b32.xlu0 %v669, 29
        %v764 = vpop.permute.xlu0 %763
        %765 = vrot.lane.b32.xlu0 %v670, 29
        %v766 = vpop.permute.xlu0 %765
        %767 = vrot.lane.b32.xlu0 %v671, 29
        %v768 = vpop.permute.xlu0 %767
        %769 = vrot.lane.b32.xlu0 %v672, 29
        %v770 = vpop.permute.xlu0 %769
        %vm771 = vcmask 236544
        %v772 = vsel %vm771, %v762, %v764
        %v773 = vsel %vm771, %v764, %v766
        %v774 = vsel %vm771, %v766, %v768
        %v775 = vsel %vm771, %v768, %v770
        %v777 = vsel %vm221, %v760, 0
        %v780 = vand.u32 %v772, %v228
        %v783 = vand.u32 %v773, %v228
        %v786 = vand.u32 %v774, %v228
        %v789 = vand.u32 %v775, %v228
        %791 = vmatpush.bf16.msra.mxu0 0
        %792 = vmatpush.bf16.msra.mxu0 0
        %793 = vmatpush.bf16.msra.mxu0 0
        %794 = vmatpush.bf16.msra.mxu0 0
        %795 = vmatpush.bf16.msra.mxu0 0
        %796 = vmatpush.bf16.msra.mxu0 0
        %797 = vmatpush.bf16.msra.mxu0 0
        %798 = vmatpush.bf16.msra.mxu0 %v780
        %799 = vmatmul.bf16.gmra.mxu0 %v777
        %v800 = vpop.f32.mrf.mxu0
        %v801 = vadd.f32 0.0, %v800
        %v802 = vpop.f32.mrf.mxu0
        %803 = vdwg.mxu0
        %804 = vmatpush.bf16.msra.mxu0 0
        %805 = vmatpush.bf16.msra.mxu0 0
        %806 = vmatpush.bf16.msra.mxu0 0
        %807 = vmatpush.bf16.msra.mxu0 0
        %808 = vmatpush.bf16.msra.mxu0 0
        %809 = vmatpush.bf16.msra.mxu0 0
        %810 = vmatpush.bf16.msra.mxu0 0
        %811 = vmatpush.bf16.msra.mxu0 %v783
        %812 = vmatmul.bf16.gmra.mxu0 %v777
        %v813 = vpop.f32.mrf.mxu0
        %v814 = vadd.f32 0.0, %v813
        %v815 = vpop.f32.mrf.mxu0
        %816 = vdwg.mxu0
        %817 = vmatpush.bf16.msra.mxu0 0
        %818 = vmatpush.bf16.msra.mxu0 0
        %819 = vmatpush.bf16.msra.mxu0 0
        %820 = vmatpush.bf16.msra.mxu0 0
        %821 = vmatpush.bf16.msra.mxu0 0
        %822 = vmatpush.bf16.msra.mxu0 0
        %823 = vmatpush.bf16.msra.mxu0 0
        %824 = vmatpush.bf16.msra.mxu0 %v786
        %825 = vmatmul.bf16.gmra.mxu0 %v777
        %v826 = vpop.f32.mrf.mxu0
        %v827 = vadd.f32 0.0, %v826
        %v828 = vpop.f32.mrf.mxu0
        %829 = vdwg.mxu0
        %830 = vmatpush.bf16.msra.mxu0 0
        %831 = vmatpush.bf16.msra.mxu0 0
        %832 = vmatpush.bf16.msra.mxu0 0
        %833 = vmatpush.bf16.msra.mxu0 0
        %834 = vmatpush.bf16.msra.mxu0 0
        %835 = vmatpush.bf16.msra.mxu0 0
        %836 = vmatpush.bf16.msra.mxu0 0
        %837 = vmatpush.bf16.msra.mxu0 %v789
        %838 = vmatmul.bf16.gmra.mxu0 %v777
        %v839 = vpop.f32.mrf.mxu0
        %v840 = vadd.f32 0.0, %v839
        %v841 = vpop.f32.mrf.mxu0
        %842 = vdwg.mxu0
        %v843 = vadd.f32 %v755, %v801
        %v844 = vadd.f32 %v756, %v814
        %v845 = vadd.f32 %v757, %v827
        %v846 = vadd.f32 %v758, %v840
        %s847 = scalar_lea.vmem %s1, 28
        %v848 = vld [vmem:[%s847] sm:$0xf]
        %849 = vrot.lane.b32.xlu0 %v668, 28
        %v850 = vpop.permute.xlu0 %849
        %851 = vrot.lane.b32.xlu0 %v669, 28
        %v852 = vpop.permute.xlu0 %851
        %853 = vrot.lane.b32.xlu0 %v670, 28
        %v854 = vpop.permute.xlu0 %853
        %855 = vrot.lane.b32.xlu0 %v671, 28
        %v856 = vpop.permute.xlu0 %855
        %857 = vrot.lane.b32.xlu0 %v672, 28
        %v858 = vpop.permute.xlu0 %857
        %vm859 = vcmask 228352
        %v860 = vsel %vm859, %v850, %v852
        %v861 = vsel %vm859, %v852, %v854
        %v862 = vsel %vm859, %v854, %v856
        %v863 = vsel %vm859, %v856, %v858
        %v865 = vsel %vm221, %v848, 0
        %v868 = vand.u32 %v860, %v228
        %v871 = vand.u32 %v861, %v228
        %v874 = vand.u32 %v862, %v228
        %v877 = vand.u32 %v863, %v228
        %879 = vmatpush.bf16.msra.mxu0 0
        %880 = vmatpush.bf16.msra.mxu0 0
        %881 = vmatpush.bf16.msra.mxu0 0
        %882 = vmatpush.bf16.msra.mxu0 0
        %883 = vmatpush.bf16.msra.mxu0 0
        %884 = vmatpush.bf16.msra.mxu0 0
        %885 = vmatpush.bf16.msra.mxu0 0
        %886 = vmatpush.bf16.msra.mxu0 %v868
        %887 = vmatmul.bf16.gmra.mxu0 %v865
        %v888 = vpop.f32.mrf.mxu0
        %v889 = vadd.f32 0.0, %v888
        %v890 = vpop.f32.mrf.mxu0
        %891 = vdwg.mxu0
        %892 = vmatpush.bf16.msra.mxu0 0
        %893 = vmatpush.bf16.msra.mxu0 0
        %894 = vmatpush.bf16.msra.mxu0 0
        %895 = vmatpush.bf16.msra.mxu0 0
        %896 = vmatpush.bf16.msra.mxu0 0
        %897 = vmatpush.bf16.msra.mxu0 0
        %898 = vmatpush.bf16.msra.mxu0 0
        %899 = vmatpush.bf16.msra.mxu0 %v871
        %900 = vmatmul.bf16.gmra.mxu0 %v865
        %v901 = vpop.f32.mrf.mxu0
        %v902 = vadd.f32 0.0, %v901
        %v903 = vpop.f32.mrf.mxu0
        %904 = vdwg.mxu0
        %905 = vmatpush.bf16.msra.mxu0 0
        %906 = vmatpush.bf16.msra.mxu0 0
        %907 = vmatpush.bf16.msra.mxu0 0
        %908 = vmatpush.bf16.msra.mxu0 0
        %909 = vmatpush.bf16.msra.mxu0 0
        %910 = vmatpush.bf16.msra.mxu0 0
        %911 = vmatpush.bf16.msra.mxu0 0
        %912 = vmatpush.bf16.msra.mxu0 %v874
        %913 = vmatmul.bf16.gmra.mxu0 %v865
        %v914 = vpop.f32.mrf.mxu0
        %v915 = vadd.f32 0.0, %v914
        %v916 = vpop.f32.mrf.mxu0
        %917 = vdwg.mxu0
        %918 = vmatpush.bf16.msra.mxu0 0
        %919 = vmatpush.bf16.msra.mxu0 0
        %920 = vmatpush.bf16.msra.mxu0 0
        %921 = vmatpush.bf16.msra.mxu0 0
        %922 = vmatpush.bf16.msra.mxu0 0
        %923 = vmatpush.bf16.msra.mxu0 0
        %924 = vmatpush.bf16.msra.mxu0 0
        %925 = vmatpush.bf16.msra.mxu0 %v877
        %926 = vmatmul.bf16.gmra.mxu0 %v865
        %v927 = vpop.f32.mrf.mxu0
        %v928 = vadd.f32 0.0, %v927
        %v929 = vpop.f32.mrf.mxu0
        %930 = vdwg.mxu0
        %v931 = vadd.f32 %v843, %v889
        %v932 = vadd.f32 %v844, %v902
        %v933 = vadd.f32 %v845, %v915
        %v934 = vadd.f32 %v846, %v928
        %s935 = scalar_lea.vmem %s1, 32
        %v936 = vld [vmem:[%s935] sm:$0xf]
        %937 = vrot.lane.b32.xlu0 %v668, 27
        %v938 = vpop.permute.xlu0 %937
        %939 = vrot.lane.b32.xlu0 %v669, 27
        %v940 = vpop.permute.xlu0 %939
        %941 = vrot.lane.b32.xlu0 %v670, 27
        %v942 = vpop.permute.xlu0 %941
        %943 = vrot.lane.b32.xlu0 %v671, 27
        %v944 = vpop.permute.xlu0 %943
        %945 = vrot.lane.b32.xlu0 %v672, 27
        %v946 = vpop.permute.xlu0 %945
        %vm947 = vcmask 220160
        %v948 = vsel %vm947, %v938, %v940
        %v949 = vsel %vm947, %v940, %v942
        %v950 = vsel %vm947, %v942, %v944
        %v951 = vsel %vm947, %v944, %v946
        %v953 = vsel %vm221, %v936, 0
        %v956 = vand.u32 %v948, %v228
        %v959 = vand.u32 %v949, %v228
        %v962 = vand.u32 %v950, %v228
        %v965 = vand.u32 %v951, %v228
        %967 = vmatpush.bf16.msra.mxu0 0
        %968 = vmatpush.bf16.msra.mxu0 0
        %969 = vmatpush.bf16.msra.mxu0 0
        %970 = vmatpush.bf16.msra.mxu0 0
        %971 = vmatpush.bf16.msra.mxu0 0
        %972 = vmatpush.bf16.msra.mxu0 0
        %973 = vmatpush.bf16.msra.mxu0 0
        %974 = vmatpush.bf16.msra.mxu0 %v956
        %975 = vmatmul.bf16.gmra.mxu0 %v953
        %v976 = vpop.f32.mrf.mxu0
        %v977 = vadd.f32 0.0, %v976
        %v978 = vpop.f32.mrf.mxu0
        %979 = vdwg.mxu0
        %980 = vmatpush.bf16.msra.mxu0 0
        %981 = vmatpush.bf16.msra.mxu0 0
        %982 = vmatpush.bf16.msra.mxu0 0
        %983 = vmatpush.bf16.msra.mxu0 0
        %984 = vmatpush.bf16.msra.mxu0 0
        %985 = vmatpush.bf16.msra.mxu0 0
        %986 = vmatpush.bf16.msra.mxu0 0
        %987 = vmatpush.bf16.msra.mxu0 %v959
        %988 = vmatmul.bf16.gmra.mxu0 %v953
        %v989 = vpop.f32.mrf.mxu0
        %v990 = vadd.f32 0.0, %v989
        %v991 = vpop.f32.mrf.mxu0
        %992 = vdwg.mxu0
        %993 = vmatpush.bf16.msra.mxu0 0
        %994 = vmatpush.bf16.msra.mxu0 0
        %995 = vmatpush.bf16.msra.mxu0 0
        %996 = vmatpush.bf16.msra.mxu0 0
        %997 = vmatpush.bf16.msra.mxu0 0
        %998 = vmatpush.bf16.msra.mxu0 0
        %999 = vmatpush.bf16.msra.mxu0 0
        %1000 = vmatpush.bf16.msra.mxu0 %v962
        %1001 = vmatmul.bf16.gmra.mxu0 %v953
        %v1002 = vpop.f32.mrf.mxu0
        %v1003 = vadd.f32 0.0, %v1002
        %v1004 = vpop.f32.mrf.mxu0
        %1005 = vdwg.mxu0
        %1006 = vmatpush.bf16.msra.mxu0 0
        %1007 = vmatpush.bf16.msra.mxu0 0
        %1008 = vmatpush.bf16.msra.mxu0 0
        %1009 = vmatpush.bf16.msra.mxu0 0
        %1010 = vmatpush.bf16.msra.mxu0 0
        %1011 = vmatpush.bf16.msra.mxu0 0
        %1012 = vmatpush.bf16.msra.mxu0 0
        %1013 = vmatpush.bf16.msra.mxu0 %v965
        %1014 = vmatmul.bf16.gmra.mxu0 %v953
        %v1015 = vpop.f32.mrf.mxu0
        %v1016 = vadd.f32 0.0, %v1015
        %v1017 = vpop.f32.mrf.mxu0
        %1018 = vdwg.mxu0
        %v1019 = vadd.f32 %v931, %v977
        %v1020 = vadd.f32 %v932, %v990
        %v1021 = vadd.f32 %v933, %v1003
        %v1022 = vadd.f32 %v934, %v1016
        %vm1023 = vcmp.ge.f32.partialorder %v1019, 0.0
        %vm1024 = vcmp.ge.f32.partialorder %v1020, 0.0
        %vm1025 = vcmp.ge.f32.partialorder %v1021, 0.0
        %vm1026 = vcmp.ge.f32.partialorder %v1022, 0.0
        %v1027 = vmul.f32 %v1019, 0.01
        %v1028 = vmul.f32 %v1020, 0.01
        %v1029 = vmul.f32 %v1021, 0.01
        %v1030 = vmul.f32 %v1022, 0.01
        %v1031 = vsel %vm1023, %v1019, %v1027
        %v1032 = vsel %vm1024, %v1020, %v1028
        %v1033 = vsel %vm1025, %v1021, %v1029
        %v1034 = vsel %vm1026, %v1022, %v1030
        %v1035 = vunpack.c.l.bf16 %v553
        %v1036 = vunpack.c.h.bf16 %v553
        %v1037 = vunpack.c.l.bf16 %v554
        %v1038 = vunpack.c.h.bf16 %v554
        %vm1039 = vcmp.gt.f32.partialorder %v1035, 0.0
        %vm1040 = vcmp.gt.f32.partialorder %v1036, 0.0
        %vm1041 = vcmp.gt.f32.partialorder %v1037, 0.0
        %vm1042 = vcmp.gt.f32.partialorder %v1038, 0.0
        %v1043 = vsel %vm1039, 1, 0
        %v1044 = vsel %vm1040, 1, 0
        %v1045 = vsel %vm1041, 1, 0
        %v1046 = vsel %vm1042, 1, 0
        %v1047 = vperm.slane %v1043, 0
        %v1048 = vperm.slane %v1044, 0
        %v1049 = vperm.slane %v1045, 0
        %v1050 = vperm.slane %v1046, 0
        %vm1051 = vcmp.eq.s32.totalorder %v1047, 1
        %vm1052 = vcmp.eq.s32.totalorder %v1048, 1
        %vm1053 = vcmp.eq.s32.totalorder %v1049, 1
        %vm1054 = vcmp.eq.s32.totalorder %v1050, 1
        %v1055 = vsel %vm1051, %v1031, 0.0
        %v1056 = vsel %vm1052, %v1032, 0.0
        %v1057 = vsel %vm1053, %v1033, 0.0
        %v1058 = vsel %vm1054, %v1034, 0.0
        %v1059 = vsel %vm1039, 1.0, 0.0
        %v1060 = vsel %vm1040, 1.0, 0.0
        %v1061 = vsel %vm1041, 1.0, 0.0
        %v1062 = vsel %vm1042, 1.0, 0.0
        %v1063 = vpack.c.bf16 %v1056, %v1055
        %v1064 = vpack.c.bf16 %v1058, %v1057
        %v1065 = vpack.c.bf16 %v1060, %v1059
        %v1066 = vpack.c.bf16 %v1062, %v1061
        %1067 = vst [vmem:[%s121] sm:$0xff] %v1063
        %1068 = vst [vmem:[%s121 + $0x8] sm:$0xff] %v1064
        %vm1069 = vcmask 1040384
        %vm1070 = vsmask.f32 256
        %vm1071 = vmand %vm1069, %vm1070
        %vm1072 = vcmask 1044484
        %vm1073 = vsmask.f32 4352
        %vm1074 = vmand %vm1072, %vm1073
        %vm1075 = vmor %vm1074, %vm1071
        %v1076 = vld [vmem:[%s121 + $0x10] sm:$0x11]
        %v1077 = vsel %vm1075, %v1065, %v1076
        %1078 = vst [vmem:[%s121 + $0x10] sm:$0x11] %v1077
        %v1079 = vld [vmem:[%s121 + $0x18] sm:$0x11]
        %v1080 = vsel %vm1075, %v1066, %v1079
        %1081 = vst [vmem:[%s121 + $0x18] sm:$0x11] %v1080
        %v1082 = vadd.f32 %v1055, %v1056
        %v1083 = vadd.f32 %v1082, %v1057
        %v1084 = vadd.f32 %v1083, %v1058
        %1085 = vadd.xlane.f32.xlu0 %v1084
        %v1086 = vpop.xlane.xlu0 %1085
        %v1087 = vmul.f32 %v1055, %v1055
        %v1088 = vmul.f32 %v1056, %v1056
        %v1089 = vmul.f32 %v1057, %v1057
        %v1090 = vmul.f32 %v1058, %v1058
        %v1091 = vadd.f32 %v1087, %v1088
        %v1092 = vadd.f32 %v1091, %v1089
        %v1093 = vadd.f32 %v1092, %v1090
        %1094 = vadd.xlane.f32.xlu0 %v1093
        %v1095 = vpop.xlane.xlu0 %1094
        %1097 = vset.pattern.permute.xlu0 0
        %1098 = vperm.xlu0 %1097, %v1086
        %v1099 = vpop.permute.xlu0 %1098
        %1102 = vset.pattern.permute.xlu0 0
        %1103 = vperm.xlu0 %1102, %v1095
        %v1104 = vpop.permute.xlu0 %1103
        %1106 = vst [vmem:[%s135] sm:$0xff] %v1099
        %1107 = vst [vmem:[%s135 + $0x8] sm:$0xff] %v1104
        %s1108 = sand.u32 %s46, 1
        %s1109 = sand.u32 %s46, 1
        %s1110 = smul.addr %s1109, 32
        %s1111 = scalar_lea.vmem [#allocation4], %s1110
        %p1112 = scmp.lt.s32.totalorder %s15, 3
        %s1113 = scalar_select %p1112, %s15, 3
        %s1114 = smul.addr %s1113, 2
        %s1115 = smul.addr %s1114, 8
        %s1116 = scalar_lea.vmem %s3, %s1115
        // Predicated region
        $region44: #{upblock_forward.8} parent=23 // pred_check
          %p1117 = pneg %p56
        $region45: #{upblock_forward.8} parent=23 // pred_check_branch
          %1119 = sbr.rel (%p1117) target = $region47
        $region46: #{upblock_forward.8} parent=23 // pred_region
          %s1120 = sadd.s32 %s15, 1
          %s1121 = smul.u32 4, %s1120
          %s1122 = smul.addr %s1121, 4
          %s1123 = scalar_lea.vmem %s2, %s1122
          // Predicated region
          $region48: #{upblock_forward.8} parent=46 // pred_check
            _
          $region49: #{upblock_forward.8} parent=46 // pred_check_branch
            %1125 = sbr.rel (0) target = $region51
          $region50: #{upblock_forward.8} parent=46 // pred_region
            // Predicated region
            $region52: #{upblock_forward.8} parent=50 // pred_check
              _
            $region53: #{upblock_forward.8} parent=50 // pred_check_branch
              %1127 = sbr.rel (0) target = $region55
            $region54: #{upblock_forward.8} parent=50 // pred_region
              loop: start=0, step=1, limit=1
              $region56: #{upblock_forward.8} parent=54 // loop_pre_header
                _
              $region57: #{upblock_forward.8} parent=54 // loop_header
                %s1129 = sphi 0, %s1133
                %p1130 = scmp.ge.s32.totalorder %s1129, 1
                %s1134 = sphi %s1111, %s1111
                %s1135 = sphi %s1123, %s1123
              $region58: #{upblock_forward.8} parent=54 // loop_header_branch
                %1132 = sbr.rel (%p1130) target = $region62
              $region59: #{upblock_forward.8} parent=54 // loop_body
                %v1136 = vld [vmem:[%s1134] sm:$0xff]
                %1137 = vst [vmem:[%s1135] sm:$0xff] %v1136
                %v1138 = vld [vmem:[%s1134 + $0x8] sm:$0xff]
                %1139 = vst [vmem:[%s1135 + $0x8] sm:$0xff] %v1138
                %v1140 = vld [vmem:[%s1134 + $0x10] sm:$0xff]
                %1141 = vst [vmem:[%s1135 + $0x60] sm:$0xff] %v1140
                %v1142 = vld [vmem:[%s1134 + $0x18] sm:$0xff]
                %1143 = vst [vmem:[%s1135 + $0x68] sm:$0xff] %v1142
              $region60: #{upblock_forward.8} parent=54 // loop_footer
                %s1133 = sadd.s32 1, %s1129
              $region61: #{upblock_forward.8} parent=54 // loop_footer_branch
                %1128 = sbr.rel target = $region57
              $region62: #{upblock_forward.8} parent=54 // loop_exit
                _
            $region55: #{upblock_forward.8} parent=50 // pred_fallthru
              _
            // Predicated region
            $region63: #{upblock_forward.8} parent=50 // pred_check
              _
            $region64: #{upblock_forward.8} parent=50 // pred_check_branch
              %1145 = sbr.rel target = $region66
            $region65: #{upblock_forward.8} parent=50 // pred_region
              _
            $region66: #{upblock_forward.8} parent=50 // pred_fallthru
              _
          $region51: #{upblock_forward.8} parent=46 // pred_fallthru
            _
          %1146 = vnop
        $region47: #{upblock_forward.8} parent=23 // pred_fallthru
          _
        // Predicated region
        $region67: #{upblock_forward.8} parent=23 // pred_check
          %p1147 = pneg %p82
        $region68: #{upblock_forward.8} parent=23 // pred_check_branch
          %1149 = sbr.rel (%p1147) target = $region70
        $region69: #{upblock_forward.8} parent=23 // pred_region
          _
        $region70: #{upblock_forward.8} parent=23 // pred_fallthru
          _
      $region24: #{upblock_forward.8} parent=5 // pred_fallthru
        _
      %p1150 = scmp.le.s32.totalorder 2, %s10
      // Predicated region
      $region71: #{upblock_forward.8} parent=5 // pred_check
        %p1151 = pneg %p1150
      $region72: #{upblock_forward.8} parent=5 // pred_check_branch
        %1153 = sbr.rel (%p1151) target = $region74
      $region73: #{upblock_forward.8} parent=5 // pred_region
        %s1154 = ssub.s32 %s10, 2
        // Predicated region
        $region75: #{upblock_forward.8} parent=73 // pred_check
          %p1155 = pneg %p62
        $region76: #{upblock_forward.8} parent=73 // pred_check_branch
          %1157 = sbr.rel (%p1155) target = $region78
        $region77: #{upblock_forward.8} parent=73 // pred_region
          %s1158 = sand.u32 %s47, 1
          %s1159 = sand.u32 %s47, 1
          %s1160 = smul.addr %s1159, 32
          %s1161 = scalar_lea.vmem [#allocation4], %s1160
        $region78: #{upblock_forward.8} parent=73 // pred_fallthru
          _
        // Predicated region
        $region79: #{upblock_forward.8} parent=73 // pred_check
          %p1162 = pneg %p88
        $region80: #{upblock_forward.8} parent=73 // pred_check_branch
          %1164 = sbr.rel (%p1162) target = $region82
        $region81: #{upblock_forward.8} parent=73 // pred_region
          %p1165 = scmp.lt.s32.totalorder %s16, 3
          %s1166 = scalar_select %p1165, %s16, 3
          %s1167 = smul.addr %s1166, 2
          %s1168 = smul.addr %s1167, 8
          %s1169 = scalar_lea.vmem %s3, %s1168
        $region82: #{upblock_forward.8} parent=73 // pred_fallthru
          _
      $region74: #{upblock_forward.8} parent=5 // pred_fallthru
        _
    $region6: #{upblock_forward.8} parent=1 // loop_footer
      %s14 = sadd.s32 1, %s10
    $region7: #{upblock_forward.8} parent=1 // loop_footer_branch
      %9 = sbr.rel target = $region3
    $region8: #{upblock_forward.8} parent=1 // loop_exit
      _
  %1170 = vsyncmov [#allocation3]
  %s1171 = vpop.sfrf %1170
  %p1172 = scmp.eq.s32.totalorder %s1171, 0
  %p1173 = pneg %p1172
  %1175 = shalt.err (%p1173)

</llo_original>
